<compile_context>
chip_gen: v5e
topology: v5e:2x2
jax: 0.10.0
libtpu: 0.0.40
codegen_flags: <defaults>
</compile_context>

<pallas_src>
import jax
import jax.numpy as jnp
from jax.experimental import pallas as pl
from jax.experimental.pallas import tpu as pltpu

LATENT_DIM = 512
HIDDEN_DIM = 1024
BN_EPS = 1e-5
LRELU_SLOPE = 0.2


def _leaky_relu(h):
    return jnp.where(h >= 0, h, LRELU_SLOPE * h)


def _batchnorm_train(h, gamma, beta):
    # Training-mode BatchNorm1d: biased variance over the batch axis.
    # Single fused pass: var = E[h^2] - E[h]^2, computed in f32.
    mean = jnp.mean(h, axis=0, keepdims=True)
    mean_sq = jnp.mean(h * h, axis=0, keepdims=True)
    var = jnp.maximum(mean_sq - mean * mean, 0.0)
    inv = jax.lax.rsqrt(var + BN_EPS)
    return (h - mean) * inv * gamma + beta


def mlp_kernel(x_ref,
               w1_ref, b1_ref, g1_ref, be1_ref,
               b2_ref, g2_ref, be2_ref,
               b3_ref,
               w2_hbm, w3_hbm,
               o_ref,
               w2_vmem, w3_vmem, sem):
    # Kick off w2 / w3 HBM -> VMEM DMAs immediately; they land while the
    # layer-1 / layer-2 math below runs.
    cp_w2 = pltpu.make_async_copy(w2_hbm, w2_vmem, sem.at[0])
    cp_w3 = pltpu.make_async_copy(w3_hbm, w3_vmem, sem.at[1])
    cp_w2.start()
    cp_w3.start()

    x = x_ref[...].astype(jnp.bfloat16)

    # Layer 1: Linear -> LeakyReLU(0.2) -> BatchNorm1d
    h = jnp.dot(x, w1_ref[...], preferred_element_type=jnp.float32) + b1_ref[...]
    h = _leaky_relu(h)
    h = _batchnorm_train(h, g1_ref[...], be1_ref[...])

    # Layer 2: Linear -> LeakyReLU(0.2) -> BatchNorm1d
    cp_w2.wait()
    h = jnp.dot(h.astype(jnp.bfloat16), w2_vmem[...],
                preferred_element_type=jnp.float32) + b2_ref[...]
    h = _leaky_relu(h)
    h = _batchnorm_train(h, g2_ref[...], be2_ref[...])

    # Layer 3: Linear
    cp_w3.wait()
    out = jnp.dot(h.astype(jnp.bfloat16), w3_vmem[...],
                  preferred_element_type=jnp.float32) + b3_ref[...]
    o_ref[...] = out.astype(o_ref.dtype)


def simple_latent_generator(x, params):
    B = x.shape[0]
    hidden_dim = params["w2"].shape[0]
    out_dim = params["w3"].shape[1]
    vmem = pl.BlockSpec(memory_space=pltpu.MemorySpace.VMEM)
    hbm = pl.BlockSpec(memory_space=pl.ANY)
    return pl.pallas_call(
        mlp_kernel,
        out_shape=jax.ShapeDtypeStruct((B, out_dim), jnp.float32),
        in_specs=[vmem] * 9 + [hbm, hbm],
        out_specs=vmem,
        scratch_shapes=[
            pltpu.VMEM((hidden_dim, hidden_dim), jnp.bfloat16),  # w2 landing buf
            pltpu.VMEM((hidden_dim, out_dim), jnp.bfloat16),     # w3 landing buf
            pltpu.SemaphoreType.DMA((2,)),
        ],
    )(
        x,
        params["w1"], params["b1"], params["g1"], params["be1"],
        params["b2"], params["g2"], params["be2"],
        params["b3"],
        params["w2"], params["w3"],
    )


def init_params(key, input_dim=LATENT_DIM, output_dim=LATENT_DIM,
                hidden_dim=HIDDEN_DIM):
    """Deterministic init mimicking PyTorch Linear defaults (uniform +-1/sqrt(fan_in)).
    Weights stored pre-transposed as (in_dim, out_dim) in bfloat16; biases and
    BN affine params stay float32 (tiny, and elementwise math runs in f32)."""
    ks = jax.random.split(key, 6)

    def lin(kw, kb, fan_in, fan_out):
        bound = 1.0 / jnp.sqrt(fan_in)
        w = jax.random.uniform(kw, (fan_in, fan_out), jnp.float32, -bound, bound)
        b = jax.random.uniform(kb, (1, fan_out), jnp.float32, -bound, bound)
        return w.astype(jnp.bfloat16), b

    w1, b1 = lin(ks[0], ks[1], input_dim, hidden_dim)
    w2, b2 = lin(ks[2], ks[3], hidden_dim, hidden_dim)
    w3, b3 = lin(ks[4], ks[5], hidden_dim, output_dim)
    return {
        "w1": w1, "b1": b1,
        "g1": jnp.ones((1, hidden_dim), jnp.float32),
        "be1": jnp.zeros((1, hidden_dim), jnp.float32),
        "w2": w2, "b2": b2,
        "g2": jnp.ones((1, hidden_dim), jnp.float32),
        "be2": jnp.zeros((1, hidden_dim), jnp.float32),
        "w3": w3, "b3": b3,
    }


def reference_forward(x, p):
    """Pure-JAX reference mirroring the kernel's mixed precision:
    bf16 MXU operands, f32 accumulation, f32 elementwise/BN math."""
    def dot(a, w):
        return jnp.dot(a.astype(jnp.bfloat16), w,
                       preferred_element_type=jnp.float32)

    def bn(h, g, b):
        m = h.mean(0, keepdims=True)
        v = ((h - m) ** 2).mean(0, keepdims=True)
        return (h - m) * jax.lax.rsqrt(v + BN_EPS) * g + b

    h = dot(x, p["w1"]) + p["b1"]
    h = jnp.where(h >= 0, h, LRELU_SLOPE * h)
    h = bn(h, p["g1"], p["be1"])
    h = dot(h, p["w2"]) + p["b2"]
    h = jnp.where(h >= 0, h, LRELU_SLOPE * h)
    h = bn(h, p["g2"], p["be2"])
    return dot(h, p["w3"]) + p["b3"]


if __name__ == "__main__":
    key = jax.random.PRNGKey(0)
    kx, kp = jax.random.split(key)

    B = 8  # small batch (>1 required for training-mode BatchNorm1d)
    x = jax.random.normal(kx, (B, LATENT_DIM), jnp.float32)
    params = init_params(kp)

    out = simple_latent_generator(x, params)
    out = jax.block_until_ready(out)

    ref = reference_forward(x, params)
    assert out.shape == (B, LATENT_DIM)
    assert jnp.allclose(out, ref, atol=1e-2, rtol=1e-2), (
        float(jnp.max(jnp.abs(out - ref))))

    print("KERNEL_OK")
</pallas_src>

<mosaic_0001>
module attributes {stable_mosaic.version = 11 : i64} {
  func.func @mlp_kernel(%arg0: memref<8x512xf32, #tpu.memory_space<vmem>>, %arg1: memref<512x1024xbf16, #tpu.memory_space<vmem>>, %arg2: memref<1x1024xf32, #tpu.memory_space<vmem>>, %arg3: memref<1x1024xf32, #tpu.memory_space<vmem>>, %arg4: memref<1x1024xf32, #tpu.memory_space<vmem>>, %arg5: memref<1x1024xf32, #tpu.memory_space<vmem>>, %arg6: memref<1x1024xf32, #tpu.memory_space<vmem>>, %arg7: memref<1x1024xf32, #tpu.memory_space<vmem>>, %arg8: memref<1x512xf32, #tpu.memory_space<vmem>>, %arg9: memref<1024x1024xbf16, #tpu.memory_space<any>>, %arg10: memref<1024x512xbf16, #tpu.memory_space<any>>, %arg11: memref<8x512xf32, #tpu.memory_space<vmem>>, %arg12: memref<1024x1024xbf16, #tpu.memory_space<vmem>>, %arg13: memref<1024x512xbf16, #tpu.memory_space<vmem>>, %arg14: memref<2x!tpu.dma_semaphore, #tpu.memory_space<semaphore_mem>>) attributes {dimension_semantics = [], scalar_prefetch = 0 : i64, scratch_operands = 3 : i64, tpu.core_type = #tpu.core_type<tc>} {
    %c0_i32 = arith.constant 0 : i32
    %0 = tpu.memref_slice %arg14[%c0_i32] : memref<2x!tpu.dma_semaphore, #tpu.memory_space<semaphore_mem>> -> memref<1x!tpu.dma_semaphore, #tpu.memory_space<semaphore_mem>>
    %1 = tpu.memref_squeeze %0 : memref<1x!tpu.dma_semaphore, #tpu.memory_space<semaphore_mem>> -> memref<!tpu.dma_semaphore, #tpu.memory_space<semaphore_mem>>
    tpu.enqueue_dma source(%arg9 : memref<1024x1024xbf16, #tpu.memory_space<any>>) target(%arg12 : memref<1024x1024xbf16, #tpu.memory_space<vmem>>) target_semaphore(%1 : memref<!tpu.dma_semaphore, #tpu.memory_space<semaphore_mem>>)
    %c1_i32 = arith.constant 1 : i32
    %2 = tpu.memref_slice %arg14[%c1_i32] : memref<2x!tpu.dma_semaphore, #tpu.memory_space<semaphore_mem>> -> memref<1x!tpu.dma_semaphore, #tpu.memory_space<semaphore_mem>>
    %3 = tpu.memref_squeeze %2 : memref<1x!tpu.dma_semaphore, #tpu.memory_space<semaphore_mem>> -> memref<!tpu.dma_semaphore, #tpu.memory_space<semaphore_mem>>
    tpu.enqueue_dma source(%arg10 : memref<1024x512xbf16, #tpu.memory_space<any>>) target(%arg13 : memref<1024x512xbf16, #tpu.memory_space<vmem>>) target_semaphore(%3 : memref<!tpu.dma_semaphore, #tpu.memory_space<semaphore_mem>>)
    %c0 = arith.constant 0 : index
    %c0_0 = arith.constant 0 : index
    %4 = vector.load %arg0[%c0, %c0_0] : memref<8x512xf32, #tpu.memory_space<vmem>>, vector<8x512xf32>
    %5 = arith.truncf %4 : vector<8x512xf32> to vector<8x512xbf16>
    %c0_1 = arith.constant 0 : index
    %c0_2 = arith.constant 0 : index
    %6 = vector.load %arg1[%c0_1, %c0_2] : memref<512x1024xbf16, #tpu.memory_space<vmem>>, vector<512x1024xbf16>
    %cst = arith.constant dense<0.000000e+00> : vector<8x1024xf32>
    %7 = tpu.matmul %5, %6, %cst {dimension_numbers = #tpu.dot_dimension_numbers<[1], [0], [0], [1], [0, 0, 1, 1], [], []>} : vector<8x512xbf16>, vector<512x1024xbf16>, vector<8x1024xf32> -> vector<8x1024xf32>
    %c0_3 = arith.constant 0 : index
    %c0_4 = arith.constant 0 : index
    %8 = vector.load %arg2[%c0_3, %c0_4] : memref<1x1024xf32, #tpu.memory_space<vmem>>, vector<1x1024xf32>
    %9 = vector.broadcast %8 : vector<1x1024xf32> to vector<8x1024xf32>
    %10 = arith.addf %7, %9 : vector<8x1024xf32>
    %cst_5 = arith.constant 0.000000e+00 : f32
    %11 = vector.broadcast %cst_5 : f32 to vector<8x1024xf32>
    %12 = arith.cmpf oge, %10, %11 : vector<8x1024xf32>
    %cst_6 = arith.constant 2.000000e-01 : f32
    %13 = vector.broadcast %cst_6 : f32 to vector<8x1024xf32>
    %14 = arith.mulf %13, %10 : vector<8x1024xf32>
    %15 = arith.select %12, %10, %14 : vector<8x1024xi1>, vector<8x1024xf32>
    %c0_7 = arith.constant 0 : index
    %c0_8 = arith.constant 0 : index
    %16 = vector.load %arg3[%c0_7, %c0_8] : memref<1x1024xf32, #tpu.memory_space<vmem>>, vector<1x1024xf32>
    %c0_9 = arith.constant 0 : index
    %c0_10 = arith.constant 0 : index
    %17 = vector.load %arg4[%c0_9, %c0_10] : memref<1x1024xf32, #tpu.memory_space<vmem>>, vector<1x1024xf32>
    %cst_11 = arith.constant dense<0.000000e+00> : vector<1024xf32>
    %18 = vector.multi_reduction <add>, %15, %cst_11 [0] : vector<8x1024xf32> to vector<1024xf32>
    %19 = vector.shape_cast %18 : vector<1024xf32> to vector<1x1024xf32>
    %cst_12 = arith.constant 8.000000e+00 : f32
    %20 = vector.broadcast %cst_12 : f32 to vector<1x1024xf32>
    %21 = arith.divf %19, %20 : vector<1x1024xf32>
    %22 = arith.mulf %15, %15 : vector<8x1024xf32>
    %cst_13 = arith.constant dense<0.000000e+00> : vector<1024xf32>
    %23 = vector.multi_reduction <add>, %22, %cst_13 [0] : vector<8x1024xf32> to vector<1024xf32>
    %24 = vector.shape_cast %23 : vector<1024xf32> to vector<1x1024xf32>
    %cst_14 = arith.constant 8.000000e+00 : f32
    %25 = vector.broadcast %cst_14 : f32 to vector<1x1024xf32>
    %26 = arith.divf %24, %25 : vector<1x1024xf32>
    %27 = arith.mulf %21, %21 : vector<1x1024xf32>
    %28 = arith.subf %26, %27 : vector<1x1024xf32>
    %cst_15 = arith.constant 0.000000e+00 : f32
    %29 = vector.broadcast %cst_15 : f32 to vector<1x1024xf32>
    %30 = arith.maximumf %28, %29 : vector<1x1024xf32>
    %cst_16 = arith.constant 9.99999974E-6 : f32
    %31 = vector.broadcast %cst_16 : f32 to vector<1x1024xf32>
    %32 = arith.addf %30, %31 : vector<1x1024xf32>
    %33 = math.rsqrt %32 : vector<1x1024xf32>
    %34 = vector.broadcast %21 : vector<1x1024xf32> to vector<8x1024xf32>
    %35 = arith.subf %15, %34 : vector<8x1024xf32>
    %36 = vector.broadcast %33 : vector<1x1024xf32> to vector<8x1024xf32>
    %37 = arith.mulf %35, %36 : vector<8x1024xf32>
    %38 = vector.broadcast %16 : vector<1x1024xf32> to vector<8x1024xf32>
    %39 = arith.mulf %37, %38 : vector<8x1024xf32>
    %40 = vector.broadcast %17 : vector<1x1024xf32> to vector<8x1024xf32>
    %41 = arith.addf %39, %40 : vector<8x1024xf32>
    %c0_i32_17 = arith.constant 0 : i32
    %42 = tpu.memref_slice %arg14[%c0_i32_17] : memref<2x!tpu.dma_semaphore, #tpu.memory_space<semaphore_mem>> -> memref<1x!tpu.dma_semaphore, #tpu.memory_space<semaphore_mem>>
    %43 = tpu.memref_squeeze %42 : memref<1x!tpu.dma_semaphore, #tpu.memory_space<semaphore_mem>> -> memref<!tpu.dma_semaphore, #tpu.memory_space<semaphore_mem>>
    tpu.wait_dma2 semaphore(%43 : memref<!tpu.dma_semaphore, #tpu.memory_space<semaphore_mem>>) src(%arg9 : memref<1024x1024xbf16, #tpu.memory_space<any>>) dst(%arg12 : memref<1024x1024xbf16, #tpu.memory_space<vmem>>)
    %44 = arith.truncf %41 : vector<8x1024xf32> to vector<8x1024xbf16>
    %c0_18 = arith.constant 0 : index
    %c0_19 = arith.constant 0 : index
    %45 = vector.load %arg12[%c0_18, %c0_19] : memref<1024x1024xbf16, #tpu.memory_space<vmem>>, vector<1024x1024xbf16>
    %cst_20 = arith.constant dense<0.000000e+00> : vector<8x1024xf32>
    %46 = tpu.matmul %44, %45, %cst_20 {dimension_numbers = #tpu.dot_dimension_numbers<[1], [0], [0], [1], [0, 0, 1, 1], [], []>} : vector<8x1024xbf16>, vector<1024x1024xbf16>, vector<8x1024xf32> -> vector<8x1024xf32>
    %c0_21 = arith.constant 0 : index
    %c0_22 = arith.constant 0 : index
    %47 = vector.load %arg5[%c0_21, %c0_22] : memref<1x1024xf32, #tpu.memory_space<vmem>>, vector<1x1024xf32>
    %48 = vector.broadcast %47 : vector<1x1024xf32> to vector<8x1024xf32>
    %49 = arith.addf %46, %48 : vector<8x1024xf32>
    %cst_23 = arith.constant 0.000000e+00 : f32
    %50 = vector.broadcast %cst_23 : f32 to vector<8x1024xf32>
    %51 = arith.cmpf oge, %49, %50 : vector<8x1024xf32>
    %cst_24 = arith.constant 2.000000e-01 : f32
    %52 = vector.broadcast %cst_24 : f32 to vector<8x1024xf32>
    %53 = arith.mulf %52, %49 : vector<8x1024xf32>
    %54 = arith.select %51, %49, %53 : vector<8x1024xi1>, vector<8x1024xf32>
    %c0_25 = arith.constant 0 : index
    %c0_26 = arith.constant 0 : index
    %55 = vector.load %arg6[%c0_25, %c0_26] : memref<1x1024xf32, #tpu.memory_space<vmem>>, vector<1x1024xf32>
    %c0_27 = arith.constant 0 : index
    %c0_28 = arith.constant 0 : index
    %56 = vector.load %arg7[%c0_27, %c0_28] : memref<1x1024xf32, #tpu.memory_space<vmem>>, vector<1x1024xf32>
    %cst_29 = arith.constant dense<0.000000e+00> : vector<1024xf32>
    %57 = vector.multi_reduction <add>, %54, %cst_29 [0] : vector<8x1024xf32> to vector<1024xf32>
    %58 = vector.shape_cast %57 : vector<1024xf32> to vector<1x1024xf32>
    %cst_30 = arith.constant 8.000000e+00 : f32
    %59 = vector.broadcast %cst_30 : f32 to vector<1x1024xf32>
    %60 = arith.divf %58, %59 : vector<1x1024xf32>
    %61 = arith.mulf %54, %54 : vector<8x1024xf32>
    %cst_31 = arith.constant dense<0.000000e+00> : vector<1024xf32>
    %62 = vector.multi_reduction <add>, %61, %cst_31 [0] : vector<8x1024xf32> to vector<1024xf32>
    %63 = vector.shape_cast %62 : vector<1024xf32> to vector<1x1024xf32>
    %cst_32 = arith.constant 8.000000e+00 : f32
    %64 = vector.broadcast %cst_32 : f32 to vector<1x1024xf32>
    %65 = arith.divf %63, %64 : vector<1x1024xf32>
    %66 = arith.mulf %60, %60 : vector<1x1024xf32>
    %67 = arith.subf %65, %66 : vector<1x1024xf32>
    %cst_33 = arith.constant 0.000000e+00 : f32
    %68 = vector.broadcast %cst_33 : f32 to vector<1x1024xf32>
    %69 = arith.maximumf %67, %68 : vector<1x1024xf32>
    %cst_34 = arith.constant 9.99999974E-6 : f32
    %70 = vector.broadcast %cst_34 : f32 to vector<1x1024xf32>
    %71 = arith.addf %69, %70 : vector<1x1024xf32>
    %72 = math.rsqrt %71 : vector<1x1024xf32>
    %73 = vector.broadcast %60 : vector<1x1024xf32> to vector<8x1024xf32>
    %74 = arith.subf %54, %73 : vector<8x1024xf32>
    %75 = vector.broadcast %72 : vector<1x1024xf32> to vector<8x1024xf32>
    %76 = arith.mulf %74, %75 : vector<8x1024xf32>
    %77 = vector.broadcast %55 : vector<1x1024xf32> to vector<8x1024xf32>
    %78 = arith.mulf %76, %77 : vector<8x1024xf32>
    %79 = vector.broadcast %56 : vector<1x1024xf32> to vector<8x1024xf32>
    %80 = arith.addf %78, %79 : vector<8x1024xf32>
    %c1_i32_35 = arith.constant 1 : i32
    %81 = tpu.memref_slice %arg14[%c1_i32_35] : memref<2x!tpu.dma_semaphore, #tpu.memory_space<semaphore_mem>> -> memref<1x!tpu.dma_semaphore, #tpu.memory_space<semaphore_mem>>
    %82 = tpu.memref_squeeze %81 : memref<1x!tpu.dma_semaphore, #tpu.memory_space<semaphore_mem>> -> memref<!tpu.dma_semaphore, #tpu.memory_space<semaphore_mem>>
    tpu.wait_dma2 semaphore(%82 : memref<!tpu.dma_semaphore, #tpu.memory_space<semaphore_mem>>) src(%arg10 : memref<1024x512xbf16, #tpu.memory_space<any>>) dst(%arg13 : memref<1024x512xbf16, #tpu.memory_space<vmem>>)
    %83 = arith.truncf %80 : vector<8x1024xf32> to vector<8x1024xbf16>
    %c0_36 = arith.constant 0 : index
    %c0_37 = arith.constant 0 : index
    %84 = vector.load %arg13[%c0_36, %c0_37] : memref<1024x512xbf16, #tpu.memory_space<vmem>>, vector<1024x512xbf16>
    %cst_38 = arith.constant dense<0.000000e+00> : vector<8x512xf32>
    %85 = tpu.matmul %83, %84, %cst_38 {dimension_numbers = #tpu.dot_dimension_numbers<[1], [0], [0], [1], [0, 0, 1, 1], [], []>} : vector<8x1024xbf16>, vector<1024x512xbf16>, vector<8x512xf32> -> vector<8x512xf32>
    %c0_39 = arith.constant 0 : index
    %c0_40 = arith.constant 0 : index
    %86 = vector.load %arg8[%c0_39, %c0_40] : memref<1x512xf32, #tpu.memory_space<vmem>>, vector<1x512xf32>
    %87 = vector.broadcast %86 : vector<1x512xf32> to vector<8x512xf32>
    %88 = arith.addf %85, %87 : vector<8x512xf32>
    %c0_41 = arith.constant 0 : index
    %c0_42 = arith.constant 0 : index
    %89 = vector.load %arg11[%c0_41, %c0_42] : memref<8x512xf32, #tpu.memory_space<vmem>>, vector<8x512xf32>
    tpu.vector_store %arg11[%c0_41, %c0_42], %88 {strides = array<i32>} : memref<8x512xf32, #tpu.memory_space<vmem>>, vector<8x512xf32>,
    return
  }
}

</mosaic_0001>

<llo_original>
// kernel: tpu_custom_call.1
$region0: #{tpu_custom_call.1}
  #allocation0 [shape = 'u32[]', space=smem, size = 0x4, offset = 0x4, fixed_abs, tag = 'smem constant byte address 0x4 - core index']
  #allocation1 [shape = 'u32[72,128]{1,0:T(1,128)}', space=vmem, size = 0x9000, scoped, tag = 'internal scratch']
  #allocation2 [shape = 'bf16[1024,1024]{1,0:T(8,128)(2,1)}', space=vmem, size = 0x200000, scoped, tag = 'scratch operand']
  #allocation3 [shape = 'bf16[1024,512]{1,0:T(8,128)(2,1)}', space=vmem, size = 0x100000, scoped, tag = 'scratch operand']
  #allocation4 [shape = 's32[2]{0}', space=sflag, size = 0x8, scoped, tag = 'scratch operand']
  #allocation21 [shape = 's32[]', space=sflag, size = 0x4, offset = 0, fixed_abs, tag = 'sflag constant byte address 0x0 - dummy sync flag']
  #allocation22 [shape = 's32[]', space=sflag, size = 0x4, offset = 0, fixed_abs, tag = 'sflag constant byte address 0x0 - dummy sync flag']
  #allocation23 [shape = 'u32[]', space=smem, size = 0x4, offset = 0x44, fixed_abs, tag = 'smem constant byte address 0x44 - assertion arg 0']
  #allocation24 [shape = 'u32[]', space=smem, size = 0x4, offset = 0x48, fixed_abs, tag = 'smem constant byte address 0x48 - assertion arg 1']
  #allocation25 [shape = 's32[]', space=sflag, size = 0x4, offset = 0, fixed_abs, tag = 'sflag constant byte address 0x0 - dummy sync flag']
  #allocation26 [shape = 's32[]', space=sflag, size = 0x4, offset = 0, fixed_abs, tag = 'sflag constant byte address 0x0 - dummy sync flag']
  %s0 = inlined_call_operand.hbm [shape: f32[8,512], index: 0, kind: input, shape index: {}]
  %s1 = inlined_call_operand.hbm [shape: bf16[512,1024], index: 1, kind: input, shape index: {}]
  %s2 = inlined_call_operand.hbm [shape: f32[1,1024], index: 2, kind: input, shape index: {}]
  %s3 = inlined_call_operand.hbm [shape: f32[1,1024], index: 3, kind: input, shape index: {}]
  %s4 = inlined_call_operand.hbm [shape: f32[1,1024], index: 4, kind: input, shape index: {}]
  %s5 = inlined_call_operand.hbm [shape: f32[1,1024], index: 5, kind: input, shape index: {}]
  %s6 = inlined_call_operand.hbm [shape: f32[1,1024], index: 6, kind: input, shape index: {}]
  %s7 = inlined_call_operand.hbm [shape: f32[1,1024], index: 7, kind: input, shape index: {}]
  %s8 = inlined_call_operand.hbm [shape: f32[1,512], index: 8, kind: input, shape index: {}]
  %s9 = inlined_call_operand.hbm [shape: bf16[1024,1024], index: 9, kind: input, shape index: {}]
  %s10 = inlined_call_operand.hbm [shape: bf16[1024,512], index: 10, kind: input, shape index: {}]
  %s11 = inlined_call_operand.hbm [shape: f32[8,512], index: 11, kind: output, shape index: {}]
  %s12 = sld [smem:[#allocation0]]
  $region90: #{tpu_custom_call.1} parent=0
    _
  %s14 = ssub.s32 1, %s12
  %s15 = scalar_select 0, %s14, %s12
  $region1: #{tpu_custom_call.1} parent=0
    #allocation5 [shape = 'u8[16384]{0}', space=vmem, size = 0x4000, scoped, tag = 'input window, operand 0, single buffered']
    #allocation6 [shape = 's32[1]{0}', space=sflag, size = 0x4, scoped, tag = 'scoped memory for tpu_custom_call.1']
    #allocation7 [shape = 's32[1]{0}', space=sflag, size = 0x4, scoped, tag = 'scoped memory for tpu_custom_call.1']
    #allocation8 [shape = 'u8[1048576]{0}', space=vmem, size = 0x100000, scoped, tag = 'input window, operand 1, single buffered']
    #allocation9 [shape = 's32[1]{0}', space=sflag, size = 0x4, scoped, tag = 'scoped memory for tpu_custom_call.1']
    #allocation10 [shape = 'u8[4096]{0}', space=vmem, size = 0x1000, scoped, tag = 'input window, operand 2, single buffered']
    #allocation11 [shape = 'u8[4096]{0}', space=vmem, size = 0x1000, scoped, tag = 'input window, operand 3, single buffered']
    #allocation12 [shape = 's32[1]{0}', space=sflag, size = 0x4, scoped, tag = 'scoped memory for tpu_custom_call.1']
    #allocation13 [shape = 'u8[4096]{0}', space=vmem, size = 0x1000, scoped, tag = 'input window, operand 4, single buffered']
    #allocation14 [shape = 'u8[4096]{0}', space=vmem, size = 0x1000, scoped, tag = 'input window, operand 5, single buffered']
    #allocation15 [shape = 's32[1]{0}', space=sflag, size = 0x4, scoped, tag = 'scoped memory for tpu_custom_call.1']
    #allocation16 [shape = 'u8[4096]{0}', space=vmem, size = 0x1000, scoped, tag = 'input window, operand 6, single buffered']
    #allocation17 [shape = 'u8[4096]{0}', space=vmem, size = 0x1000, scoped, tag = 'input window, operand 7, single buffered']
    #allocation18 [shape = 's32[1]{0}', space=sflag, size = 0x4, scoped, tag = 'scoped memory for tpu_custom_call.1']
    #allocation19 [shape = 'u8[2048]{0}', space=vmem, size = 0x800, scoped, tag = 'input window, operand 8, single buffered']
    #allocation20 [shape = 'u8[16384]{0}', space=vmem, size = 0x4000, scoped, tag = 'output window, operand 0, single buffered']
    %16 = vsyncpa [#allocation6], 0
    %17 = vsyncpa [#allocation9], 0
    %18 = vsyncpa [#allocation12], 0
    %19 = vsyncpa [#allocation15], 0
    %20 = vsyncpa [#allocation18], 0
    %21 = vsyncpa [#allocation7], 0
    // Predicated region
    $region2: #{tpu_custom_call.1} parent=1 // pred_check
      _
    $region3: #{tpu_custom_call.1} parent=1 // pred_check_branch
      %23 = sbr.rel (0) target = $region5
    $region4: #{tpu_custom_call.1} parent=1 // pred_region
      %25 = vsyncadd [#allocation6], 0
      %s27 = sshll.u32 %s0, 4
      %s28 = int_to_ptr.hbm [resolvable:$true] %s27
      %s29 = sshll.u32 [#allocation5], 4
      %s30 = int_to_ptr.vmem [resolvable:$true] %s29
      %32 = dma.hbm_to_vmem [thread:$0]  %s28, 512, %s30, [#allocation6]
    $region5: #{tpu_custom_call.1} parent=1 // pred_fallthru
      _
    // Predicated region
    $region6: #{tpu_custom_call.1} parent=1 // pred_check
      _
    $region7: #{tpu_custom_call.1} parent=1 // pred_check_branch
      %34 = sbr.rel (0) target = $region9
    $region8: #{tpu_custom_call.1} parent=1 // pred_region
      %36 = vsyncadd [#allocation9], 0
      %s37 = sshll.u32 %s1, 4
      %s38 = int_to_ptr.hbm [resolvable:$true] %s37
      %s39 = sshll.u32 [#allocation8], 4
      %s40 = int_to_ptr.vmem [resolvable:$true] %s39
      %45 = dma.hbm_to_vmem [thread:$0]  %s38, 32768, %s40, [#allocation9], 512, 512, 32
    $region9: #{tpu_custom_call.1} parent=1 // pred_fallthru
      _
    // Predicated region
    $region10: #{tpu_custom_call.1} parent=1 // pred_check
      _
    $region11: #{tpu_custom_call.1} parent=1 // pred_check_branch
      %47 = sbr.rel (0) target = $region13
    $region12: #{tpu_custom_call.1} parent=1 // pred_region
      %49 = vsyncadd [#allocation9], 0
      %s51 = sshll.u32 %s2, 4
      %s52 = int_to_ptr.hbm [resolvable:$true] %s51
      %s53 = sshll.u32 [#allocation10], 4
      %s54 = int_to_ptr.vmem [resolvable:$true] %s53
      %56 = dma.hbm_to_vmem [thread:$0]  %s52, 128, %s54, [#allocation9]
    $region13: #{tpu_custom_call.1} parent=1 // pred_fallthru
      _
    // Predicated region
    $region14: #{tpu_custom_call.1} parent=1 // pred_check
      _
    $region15: #{tpu_custom_call.1} parent=1 // pred_check_branch
      %58 = sbr.rel (0) target = $region17
    $region16: #{tpu_custom_call.1} parent=1 // pred_region
      %60 = vsyncadd [#allocation12], 0
      %s62 = sshll.u32 %s3, 4
      %s63 = int_to_ptr.hbm [resolvable:$true] %s62
      %s64 = sshll.u32 [#allocation11], 4
      %s65 = int_to_ptr.vmem [resolvable:$true] %s64
      %67 = dma.hbm_to_vmem [thread:$0]  %s63, 128, %s65, [#allocation12]
    $region17: #{tpu_custom_call.1} parent=1 // pred_fallthru
      _
    // Predicated region
    $region18: #{tpu_custom_call.1} parent=1 // pred_check
      _
    $region19: #{tpu_custom_call.1} parent=1 // pred_check_branch
      %69 = sbr.rel (0) target = $region21
    $region20: #{tpu_custom_call.1} parent=1 // pred_region
      %71 = vsyncadd [#allocation12], 0
      %s73 = sshll.u32 %s4, 4
      %s74 = int_to_ptr.hbm [resolvable:$true] %s73
      %s75 = sshll.u32 [#allocation13], 4
      %s76 = int_to_ptr.vmem [resolvable:$true] %s75
      %78 = dma.hbm_to_vmem [thread:$0]  %s74, 128, %s76, [#allocation12]
    $region21: #{tpu_custom_call.1} parent=1 // pred_fallthru
      _
    // Predicated region
    $region22: #{tpu_custom_call.1} parent=1 // pred_check
      _
    $region23: #{tpu_custom_call.1} parent=1 // pred_check_branch
      %80 = sbr.rel (0) target = $region25
    $region24: #{tpu_custom_call.1} parent=1 // pred_region
      %82 = vsyncadd [#allocation15], 0
      %s84 = sshll.u32 %s5, 4
      %s85 = int_to_ptr.hbm [resolvable:$true] %s84
      %s86 = sshll.u32 [#allocation14], 4
      %s87 = int_to_ptr.vmem [resolvable:$true] %s86
      %89 = dma.hbm_to_vmem [thread:$0]  %s85, 128, %s87, [#allocation15]
    $region25: #{tpu_custom_call.1} parent=1 // pred_fallthru
      _
    // Predicated region
    $region26: #{tpu_custom_call.1} parent=1 // pred_check
      _
    $region27: #{tpu_custom_call.1} parent=1 // pred_check_branch
      %91 = sbr.rel (0) target = $region29
    $region28: #{tpu_custom_call.1} parent=1 // pred_region
      %93 = vsyncadd [#allocation15], 0
      %s95 = sshll.u32 %s6, 4
      %s96 = int_to_ptr.hbm [resolvable:$true] %s95
      %s97 = sshll.u32 [#allocation16], 4
      %s98 = int_to_ptr.vmem [resolvable:$true] %s97
      %100 = dma.hbm_to_vmem [thread:$0]  %s96, 128, %s98, [#allocation15]
    $region29: #{tpu_custom_call.1} parent=1 // pred_fallthru
      _
    // Predicated region
    $region30: #{tpu_custom_call.1} parent=1 // pred_check
      _
    $region31: #{tpu_custom_call.1} parent=1 // pred_check_branch
      %102 = sbr.rel (0) target = $region33
    $region32: #{tpu_custom_call.1} parent=1 // pred_region
      %104 = vsyncadd [#allocation18], 0
      %s106 = sshll.u32 %s7, 4
      %s107 = int_to_ptr.hbm [resolvable:$true] %s106
      %s108 = sshll.u32 [#allocation17], 4
      %s109 = int_to_ptr.vmem [resolvable:$true] %s108
      %111 = dma.hbm_to_vmem [thread:$0]  %s107, 128, %s109, [#allocation18]
    $region33: #{tpu_custom_call.1} parent=1 // pred_fallthru
      _
    // Predicated region
    $region34: #{tpu_custom_call.1} parent=1 // pred_check
      _
    $region35: #{tpu_custom_call.1} parent=1 // pred_check_branch
      %113 = sbr.rel (0) target = $region37
    $region36: #{tpu_custom_call.1} parent=1 // pred_region
      %115 = vsyncadd [#allocation18], 0
      %s117 = sshll.u32 %s8, 4
      %s118 = int_to_ptr.hbm [resolvable:$true] %s117
      %s119 = sshll.u32 [#allocation19], 4
      %s120 = int_to_ptr.vmem [resolvable:$true] %s119
      %122 = dma.hbm_to_vmem [thread:$0]  %s118, 64, %s120, [#allocation18]
    $region37: #{tpu_custom_call.1} parent=1 // pred_fallthru
      _
    // Predicated region
    $region38: #{tpu_custom_call.1} parent=1 // pred_check
      _
    $region39: #{tpu_custom_call.1} parent=1 // pred_check_branch
      %124 = sbr.rel (0) target = $region41
    $region40: #{tpu_custom_call.1} parent=1 // pred_region
      %126 = dma.done [#allocation6], 512
    $region41: #{tpu_custom_call.1} parent=1 // pred_fallthru
      _
    // Predicated region
    $region42: #{tpu_custom_call.1} parent=1 // pred_check
      _
    $region43: #{tpu_custom_call.1} parent=1 // pred_check_branch
      %128 = sbr.rel (0) target = $region45
    $region44: #{tpu_custom_call.1} parent=1 // pred_region
      %130 = dma.done [#allocation9], 32768
    $region45: #{tpu_custom_call.1} parent=1 // pred_fallthru
      _
    // Predicated region
    $region46: #{tpu_custom_call.1} parent=1 // pred_check
      _
    $region47: #{tpu_custom_call.1} parent=1 // pred_check_branch
      %132 = sbr.rel (0) target = $region49
    $region48: #{tpu_custom_call.1} parent=1 // pred_region
      %134 = dma.done [#allocation9], 128
    $region49: #{tpu_custom_call.1} parent=1 // pred_fallthru
      _
    // Predicated region
    $region50: #{tpu_custom_call.1} parent=1 // pred_check
      _
    $region51: #{tpu_custom_call.1} parent=1 // pred_check_branch
      %136 = sbr.rel (0) target = $region53
    $region52: #{tpu_custom_call.1} parent=1 // pred_region
      %138 = dma.done [#allocation12], 128
    $region53: #{tpu_custom_call.1} parent=1 // pred_fallthru
      _
    // Predicated region
    $region54: #{tpu_custom_call.1} parent=1 // pred_check
      _
    $region55: #{tpu_custom_call.1} parent=1 // pred_check_branch
      %140 = sbr.rel (0) target = $region57
    $region56: #{tpu_custom_call.1} parent=1 // pred_region
      %142 = dma.done [#allocation12], 128
    $region57: #{tpu_custom_call.1} parent=1 // pred_fallthru
      _
    // Predicated region
    $region58: #{tpu_custom_call.1} parent=1 // pred_check
      _
    $region59: #{tpu_custom_call.1} parent=1 // pred_check_branch
      %144 = sbr.rel (0) target = $region61
    $region60: #{tpu_custom_call.1} parent=1 // pred_region
      %146 = dma.done [#allocation15], 128
    $region61: #{tpu_custom_call.1} parent=1 // pred_fallthru
      _
    // Predicated region
    $region62: #{tpu_custom_call.1} parent=1 // pred_check
      _
    $region63: #{tpu_custom_call.1} parent=1 // pred_check_branch
      %148 = sbr.rel (0) target = $region65
    $region64: #{tpu_custom_call.1} parent=1 // pred_region
      %150 = dma.done [#allocation15], 128
    $region65: #{tpu_custom_call.1} parent=1 // pred_fallthru
      _
    // Predicated region
    $region66: #{tpu_custom_call.1} parent=1 // pred_check
      _
    $region67: #{tpu_custom_call.1} parent=1 // pred_check_branch
      %152 = sbr.rel (0) target = $region69
    $region68: #{tpu_custom_call.1} parent=1 // pred_region
      %154 = dma.done [#allocation18], 128
    $region69: #{tpu_custom_call.1} parent=1 // pred_fallthru
      _
    // Predicated region
    $region70: #{tpu_custom_call.1} parent=1 // pred_check
      _
    $region71: #{tpu_custom_call.1} parent=1 // pred_check_branch
      %156 = sbr.rel (0) target = $region73
    $region72: #{tpu_custom_call.1} parent=1 // pred_region
      %158 = dma.done [#allocation18], 64
    $region73: #{tpu_custom_call.1} parent=1 // pred_fallthru
      _
    // Predicated region
    $region74: #{tpu_custom_call.1} parent=1 // pred_check
      _
    $region75: #{tpu_custom_call.1} parent=1 // pred_check_branch
      %160 = sbr.rel target = $region77
    $region76: #{tpu_custom_call.1} parent=1 // pred_region
      %161 = sst [smem:[#allocation23]] [#allocation22]
      %162 = sst [smem:[#allocation24]] [#allocation21]
    $region77: #{tpu_custom_call.1} parent=1 // pred_fallthru
      _
    %164 = shalt.err (0)
    %s166 = sshll.u32 %s9, 4
    %s167 = int_to_ptr.hbm [resolvable:$true] %s166
    %s168 = sshll.u32 [#allocation2], 4
    %s169 = int_to_ptr.vmem [resolvable:$true] %s168
    %171 = dma.hbm_to_vmem [thread:$0]  %s167, 65536, %s169, [#allocation4]
    %s172 = scalar_lea.sflag [#allocation4], 1
    // Predicated region
    $region78: #{tpu_custom_call.1} parent=1 // pred_check
      _
    $region79: #{tpu_custom_call.1} parent=1 // pred_check_branch
      %174 = sbr.rel target = $region81
    $region80: #{tpu_custom_call.1} parent=1 // pred_region
      %175 = sst [smem:[#allocation23]] [#allocation26]
      %176 = sst [smem:[#allocation24]] [#allocation25]
    $region81: #{tpu_custom_call.1} parent=1 // pred_fallthru
      _
    %178 = shalt.err (0)
    %s180 = sshll.u32 %s10, 4
    %s181 = int_to_ptr.hbm [resolvable:$true] %s180
    %s182 = sshll.u32 [#allocation3], 4
    %s183 = int_to_ptr.vmem [resolvable:$true] %s182
    %185 = dma.hbm_to_vmem [thread:$0]  %s181, 32768, %s183, %s172
    %v186 = vld [vmem:[#allocation5] sm:$0xff]
    %v187 = vld [vmem:[#allocation5 + $0x8] sm:$0xff]
    %v188 = vld [vmem:[#allocation5 + $0x10] sm:$0xff]
    %v189 = vld [vmem:[#allocation5 + $0x18] sm:$0xff]
    %v190 = vpack.c.bf16 %v186, %v186
    %v191 = vpack.c.bf16 %v187, %v187
    %v192 = vpack.c.bf16 %v188, %v188
    %v193 = vpack.c.bf16 %v189, %v189
    %v194 = vld [vmem:[#allocation8] sm:$0xff]
    %v195 = vld [vmem:[#allocation8 + $0x8] sm:$0xff]
    %v196 = vld [vmem:[#allocation8 + $0x10] sm:$0xff]
    %v197 = vld [vmem:[#allocation8 + $0x18] sm:$0xff]
    %v198 = vld [vmem:[#allocation8 + $0x20] sm:$0xff]
    %v199 = vld [vmem:[#allocation8 + $0x28] sm:$0xff]
    %v200 = vld [vmem:[#allocation8 + $0x30] sm:$0xff]
    %v201 = vld [vmem:[#allocation8 + $0x38] sm:$0xff]
    %v202 = vld [vmem:[#allocation8 + $0x40] sm:$0xff]
    %v203 = vld [vmem:[#allocation8 + $0x48] sm:$0xff]
    %v204 = vld [vmem:[#allocation8 + $0x50] sm:$0xff]
    %v205 = vld [vmem:[#allocation8 + $0x58] sm:$0xff]
    %v206 = vld [vmem:[#allocation8 + $0x60] sm:$0xff]
    %v207 = vld [vmem:[#allocation8 + $0x68] sm:$0xff]
    %v208 = vld [vmem:[#allocation8 + $0x70] sm:$0xff]
    %v209 = vld [vmem:[#allocation8 + $0x78] sm:$0xff]
    %v210 = vld [vmem:[#allocation8 + $0x80] sm:$0xff]
    %v211 = vld [vmem:[#allocation8 + $0x88] sm:$0xff]
    %v212 = vld [vmem:[#allocation8 + $0x90] sm:$0xff]
    %v213 = vld [vmem:[#allocation8 + $0x98] sm:$0xff]
    %v214 = vld [vmem:[#allocation8 + $0xa0] sm:$0xff]
    %v215 = vld [vmem:[#allocation8 + $0xa8] sm:$0xff]
    %v216 = vld [vmem:[#allocation8 + $0xb0] sm:$0xff]
    %v217 = vld [vmem:[#allocation8 + $0xb8] sm:$0xff]
    %v218 = vld [vmem:[#allocation8 + $0xc0] sm:$0xff]
    %v219 = vld [vmem:[#allocation8 + $0xc8] sm:$0xff]
    %v220 = vld [vmem:[#allocation8 + $0xd0] sm:$0xff]
    %v221 = vld [vmem:[#allocation8 + $0xd8] sm:$0xff]
    %v222 = vld [vmem:[#allocation8 + $0xe0] sm:$0xff]
    %v223 = vld [vmem:[#allocation8 + $0xe8] sm:$0xff]
    %v224 = vld [vmem:[#allocation8 + $0xf0] sm:$0xff]
    %v225 = vld [vmem:[#allocation8 + $0xf8] sm:$0xff]
    %v226 = vld [vmem:[#allocation8 + $0x100] sm:$0xff]
    %v227 = vld [vmem:[#allocation8 + $0x108] sm:$0xff]
    %v228 = vld [vmem:[#allocation8 + $0x110] sm:$0xff]
    %v229 = vld [vmem:[#allocation8 + $0x118] sm:$0xff]
    %v230 = vld [vmem:[#allocation8 + $0x120] sm:$0xff]
    %v231 = vld [vmem:[#allocation8 + $0x128] sm:$0xff]
    %v232 = vld [vmem:[#allocation8 + $0x130] sm:$0xff]
    %v233 = vld [vmem:[#allocation8 + $0x138] sm:$0xff]
    %v234 = vld [vmem:[#allocation8 + $0x140] sm:$0xff]
    %v235 = vld [vmem:[#allocation8 + $0x148] sm:$0xff]
    %v236 = vld [vmem:[#allocation8 + $0x150] sm:$0xff]
    %v237 = vld [vmem:[#allocation8 + $0x158] sm:$0xff]
    %v238 = vld [vmem:[#allocation8 + $0x160] sm:$0xff]
    %v239 = vld [vmem:[#allocation8 + $0x168] sm:$0xff]
    %v240 = vld [vmem:[#allocation8 + $0x170] sm:$0xff]
    %v241 = vld [vmem:[#allocation8 + $0x178] sm:$0xff]
    %v242 = vld [vmem:[#allocation8 + $0x180] sm:$0xff]
    %v243 = vld [vmem:[#allocation8 + $0x188] sm:$0xff]
    %v244 = vld [vmem:[#allocation8 + $0x190] sm:$0xff]
    %v245 = vld [vmem:[#allocation8 + $0x198] sm:$0xff]
    %v246 = vld [vmem:[#allocation8 + $0x1a0] sm:$0xff]
    %v247 = vld [vmem:[#allocation8 + $0x1a8] sm:$0xff]
    %v248 = vld [vmem:[#allocation8 + $0x1b0] sm:$0xff]
    %v249 = vld [vmem:[#allocation8 + $0x1b8] sm:$0xff]
    %v250 = vld [vmem:[#allocation8 + $0x1c0] sm:$0xff]
    %v251 = vld [vmem:[#allocation8 + $0x1c8] sm:$0xff]
    %v252 = vld [vmem:[#allocation8 + $0x1d0] sm:$0xff]
    %v253 = vld [vmem:[#allocation8 + $0x1d8] sm:$0xff]
    %v254 = vld [vmem:[#allocation8 + $0x1e0] sm:$0xff]
    %v255 = vld [vmem:[#allocation8 + $0x1e8] sm:$0xff]
    %v256 = vld [vmem:[#allocation8 + $0x1f0] sm:$0xff]
    %v257 = vld [vmem:[#allocation8 + $0x1f8] sm:$0xff]
    %v258 = vld [vmem:[#allocation8 + $0x200] sm:$0xff]
    %v259 = vld [vmem:[#allocation8 + $0x208] sm:$0xff]
    %v260 = vld [vmem:[#allocation8 + $0x210] sm:$0xff]
    %v261 = vld [vmem:[#allocation8 + $0x218] sm:$0xff]
    %v262 = vld [vmem:[#allocation8 + $0x220] sm:$0xff]
    %v263 = vld [vmem:[#allocation8 + $0x228] sm:$0xff]
    %v264 = vld [vmem:[#allocation8 + $0x230] sm:$0xff]
    %v265 = vld [vmem:[#allocation8 + $0x238] sm:$0xff]
    %v266 = vld [vmem:[#allocation8 + $0x240] sm:$0xff]
    %v267 = vld [vmem:[#allocation8 + $0x248] sm:$0xff]
    %v268 = vld [vmem:[#allocation8 + $0x250] sm:$0xff]
    %v269 = vld [vmem:[#allocation8 + $0x258] sm:$0xff]
    %v270 = vld [vmem:[#allocation8 + $0x260] sm:$0xff]
    %v271 = vld [vmem:[#allocation8 + $0x268] sm:$0xff]
    %v272 = vld [vmem:[#allocation8 + $0x270] sm:$0xff]
    %v273 = vld [vmem:[#allocation8 + $0x278] sm:$0xff]
    %v274 = vld [vmem:[#allocation8 + $0x280] sm:$0xff]
    %v275 = vld [vmem:[#allocation8 + $0x288] sm:$0xff]
    %v276 = vld [vmem:[#allocation8 + $0x290] sm:$0xff]
    %v277 = vld [vmem:[#allocation8 + $0x298] sm:$0xff]
    %v278 = vld [vmem:[#allocation8 + $0x2a0] sm:$0xff]
    %v279 = vld [vmem:[#allocation8 + $0x2a8] sm:$0xff]
    %v280 = vld [vmem:[#allocation8 + $0x2b0] sm:$0xff]
    %v281 = vld [vmem:[#allocation8 + $0x2b8] sm:$0xff]
    %v282 = vld [vmem:[#allocation8 + $0x2c0] sm:$0xff]
    %v283 = vld [vmem:[#allocation8 + $0x2c8] sm:$0xff]
    %v284 = vld [vmem:[#allocation8 + $0x2d0] sm:$0xff]
    %v285 = vld [vmem:[#allocation8 + $0x2d8] sm:$0xff]
    %v286 = vld [vmem:[#allocation8 + $0x2e0] sm:$0xff]
    %v287 = vld [vmem:[#allocation8 + $0x2e8] sm:$0xff]
    %v288 = vld [vmem:[#allocation8 + $0x2f0] sm:$0xff]
    %v289 = vld [vmem:[#allocation8 + $0x2f8] sm:$0xff]
    %v290 = vld [vmem:[#allocation8 + $0x300] sm:$0xff]
    %v291 = vld [vmem:[#allocation8 + $0x308] sm:$0xff]
    %v292 = vld [vmem:[#allocation8 + $0x310] sm:$0xff]
    %v293 = vld [vmem:[#allocation8 + $0x318] sm:$0xff]
    %v294 = vld [vmem:[#allocation8 + $0x320] sm:$0xff]
    %v295 = vld [vmem:[#allocation8 + $0x328] sm:$0xff]
    %v296 = vld [vmem:[#allocation8 + $0x330] sm:$0xff]
    %v297 = vld [vmem:[#allocation8 + $0x338] sm:$0xff]
    %v298 = vld [vmem:[#allocation8 + $0x340] sm:$0xff]
    %v299 = vld [vmem:[#allocation8 + $0x348] sm:$0xff]
    %v300 = vld [vmem:[#allocation8 + $0x350] sm:$0xff]
    %v301 = vld [vmem:[#allocation8 + $0x358] sm:$0xff]
    %v302 = vld [vmem:[#allocation8 + $0x360] sm:$0xff]
    %v303 = vld [vmem:[#allocation8 + $0x368] sm:$0xff]
    %v304 = vld [vmem:[#allocation8 + $0x370] sm:$0xff]
    %v305 = vld [vmem:[#allocation8 + $0x378] sm:$0xff]
    %v306 = vld [vmem:[#allocation8 + $0x380] sm:$0xff]
    %v307 = vld [vmem:[#allocation8 + $0x388] sm:$0xff]
    %v308 = vld [vmem:[#allocation8 + $0x390] sm:$0xff]
    %v309 = vld [vmem:[#allocation8 + $0x398] sm:$0xff]
    %v310 = vld [vmem:[#allocation8 + $0x3a0] sm:$0xff]
    %v311 = vld [vmem:[#allocation8 + $0x3a8] sm:$0xff]
    %v312 = vld [vmem:[#allocation8 + $0x3b0] sm:$0xff]
    %v313 = vld [vmem:[#allocation8 + $0x3b8] sm:$0xff]
    %v314 = vld [vmem:[#allocation8 + $0x3c0] sm:$0xff]
    %v315 = vld [vmem:[#allocation8 + $0x3c8] sm:$0xff]
    %v316 = vld [vmem:[#allocation8 + $0x3d0] sm:$0xff]
    %v317 = vld [vmem:[#allocation8 + $0x3d8] sm:$0xff]
    %v318 = vld [vmem:[#allocation8 + $0x3e0] sm:$0xff]
    %v319 = vld [vmem:[#allocation8 + $0x3e8] sm:$0xff]
    %v320 = vld [vmem:[#allocation8 + $0x3f0] sm:$0xff]
    %v321 = vld [vmem:[#allocation8 + $0x3f8] sm:$0xff]
    %v322 = vld [vmem:[#allocation8 + $0x400] sm:$0xff]
    %v323 = vld [vmem:[#allocation8 + $0x408] sm:$0xff]
    %v324 = vld [vmem:[#allocation8 + $0x410] sm:$0xff]
    %v325 = vld [vmem:[#allocation8 + $0x418] sm:$0xff]
    %v326 = vld [vmem:[#allocation8 + $0x420] sm:$0xff]
    %v327 = vld [vmem:[#allocation8 + $0x428] sm:$0xff]
    %v328 = vld [vmem:[#allocation8 + $0x430] sm:$0xff]
    %v329 = vld [vmem:[#allocation8 + $0x438] sm:$0xff]
    %v330 = vld [vmem:[#allocation8 + $0x440] sm:$0xff]
    %v331 = vld [vmem:[#allocation8 + $0x448] sm:$0xff]
    %v332 = vld [vmem:[#allocation8 + $0x450] sm:$0xff]
    %v333 = vld [vmem:[#allocation8 + $0x458] sm:$0xff]
    %v334 = vld [vmem:[#allocation8 + $0x460] sm:$0xff]
    %v335 = vld [vmem:[#allocation8 + $0x468] sm:$0xff]
    %v336 = vld [vmem:[#allocation8 + $0x470] sm:$0xff]
    %v337 = vld [vmem:[#allocation8 + $0x478] sm:$0xff]
    %v338 = vld [vmem:[#allocation8 + $0x480] sm:$0xff]
    %v339 = vld [vmem:[#allocation8 + $0x488] sm:$0xff]
    %v340 = vld [vmem:[#allocation8 + $0x490] sm:$0xff]
    %v341 = vld [vmem:[#allocation8 + $0x498] sm:$0xff]
    %v342 = vld [vmem:[#allocation8 + $0x4a0] sm:$0xff]
    %v343 = vld [vmem:[#allocation8 + $0x4a8] sm:$0xff]
    %v344 = vld [vmem:[#allocation8 + $0x4b0] sm:$0xff]
    %v345 = vld [vmem:[#allocation8 + $0x4b8] sm:$0xff]
    %v346 = vld [vmem:[#allocation8 + $0x4c0] sm:$0xff]
    %v347 = vld [vmem:[#allocation8 + $0x4c8] sm:$0xff]
    %v348 = vld [vmem:[#allocation8 + $0x4d0] sm:$0xff]
    %v349 = vld [vmem:[#allocation8 + $0x4d8] sm:$0xff]
    %v350 = vld [vmem:[#allocation8 + $0x4e0] sm:$0xff]
    %v351 = vld [vmem:[#allocation8 + $0x4e8] sm:$0xff]
    %v352 = vld [vmem:[#allocation8 + $0x4f0] sm:$0xff]
    %v353 = vld [vmem:[#allocation8 + $0x4f8] sm:$0xff]
    %v354 = vld [vmem:[#allocation8 + $0x500] sm:$0xff]
    %v355 = vld [vmem:[#allocation8 + $0x508] sm:$0xff]
    %v356 = vld [vmem:[#allocation8 + $0x510] sm:$0xff]
    %v357 = vld [vmem:[#allocation8 + $0x518] sm:$0xff]
    %v358 = vld [vmem:[#allocation8 + $0x520] sm:$0xff]
    %v359 = vld [vmem:[#allocation8 + $0x528] sm:$0xff]
    %v360 = vld [vmem:[#allocation8 + $0x530] sm:$0xff]
    %v361 = vld [vmem:[#allocation8 + $0x538] sm:$0xff]
    %v362 = vld [vmem:[#allocation8 + $0x540] sm:$0xff]
    %v363 = vld [vmem:[#allocation8 + $0x548] sm:$0xff]
    %v364 = vld [vmem:[#allocation8 + $0x550] sm:$0xff]
    %v365 = vld [vmem:[#allocation8 + $0x558] sm:$0xff]
    %v366 = vld [vmem:[#allocation8 + $0x560] sm:$0xff]
    %v367 = vld [vmem:[#allocation8 + $0x568] sm:$0xff]
    %v368 = vld [vmem:[#allocation8 + $0x570] sm:$0xff]
    %v369 = vld [vmem:[#allocation8 + $0x578] sm:$0xff]
    %v370 = vld [vmem:[#allocation8 + $0x580] sm:$0xff]
    %v371 = vld [vmem:[#allocation8 + $0x588] sm:$0xff]
    %v372 = vld [vmem:[#allocation8 + $0x590] sm:$0xff]
    %v373 = vld [vmem:[#allocation8 + $0x598] sm:$0xff]
    %v374 = vld [vmem:[#allocation8 + $0x5a0] sm:$0xff]
    %v375 = vld [vmem:[#allocation8 + $0x5a8] sm:$0xff]
    %v376 = vld [vmem:[#allocation8 + $0x5b0] sm:$0xff]
    %v377 = vld [vmem:[#allocation8 + $0x5b8] sm:$0xff]
    %v378 = vld [vmem:[#allocation8 + $0x5c0] sm:$0xff]
    %v379 = vld [vmem:[#allocation8 + $0x5c8] sm:$0xff]
    %v380 = vld [vmem:[#allocation8 + $0x5d0] sm:$0xff]
    %v381 = vld [vmem:[#allocation8 + $0x5d8] sm:$0xff]
    %v382 = vld [vmem:[#allocation8 + $0x5e0] sm:$0xff]
    %v383 = vld [vmem:[#allocation8 + $0x5e8] sm:$0xff]
    %v384 = vld [vmem:[#allocation8 + $0x5f0] sm:$0xff]
    %v385 = vld [vmem:[#allocation8 + $0x5f8] sm:$0xff]
    %v386 = vld [vmem:[#allocation8 + $0x600] sm:$0xff]
    %v387 = vld [vmem:[#allocation8 + $0x608] sm:$0xff]
    %v388 = vld [vmem:[#allocation8 + $0x610] sm:$0xff]
    %v389 = vld [vmem:[#allocation8 + $0x618] sm:$0xff]
    %v390 = vld [vmem:[#allocation8 + $0x620] sm:$0xff]
    %v391 = vld [vmem:[#allocation8 + $0x628] sm:$0xff]
    %v392 = vld [vmem:[#allocation8 + $0x630] sm:$0xff]
    %v393 = vld [vmem:[#allocation8 + $0x638] sm:$0xff]
    %v394 = vld [vmem:[#allocation8 + $0x640] sm:$0xff]
    %v395 = vld [vmem:[#allocation8 + $0x648] sm:$0xff]
    %v396 = vld [vmem:[#allocation8 + $0x650] sm:$0xff]
    %v397 = vld [vmem:[#allocation8 + $0x658] sm:$0xff]
    %v398 = vld [vmem:[#allocation8 + $0x660] sm:$0xff]
    %v399 = vld [vmem:[#allocation8 + $0x668] sm:$0xff]
    %v400 = vld [vmem:[#allocation8 + $0x670] sm:$0xff]
    %v401 = vld [vmem:[#allocation8 + $0x678] sm:$0xff]
    %v402 = vld [vmem:[#allocation8 + $0x680] sm:$0xff]
    %v403 = vld [vmem:[#allocation8 + $0x688] sm:$0xff]
    %v404 = vld [vmem:[#allocation8 + $0x690] sm:$0xff]
    %v405 = vld [vmem:[#allocation8 + $0x698] sm:$0xff]
    %v406 = vld [vmem:[#allocation8 + $0x6a0] sm:$0xff]
    %v407 = vld [vmem:[#allocation8 + $0x6a8] sm:$0xff]
    %v408 = vld [vmem:[#allocation8 + $0x6b0] sm:$0xff]
    %v409 = vld [vmem:[#allocation8 + $0x6b8] sm:$0xff]
    %v410 = vld [vmem:[#allocation8 + $0x6c0] sm:$0xff]
    %v411 = vld [vmem:[#allocation8 + $0x6c8] sm:$0xff]
    %v412 = vld [vmem:[#allocation8 + $0x6d0] sm:$0xff]
    %v413 = vld [vmem:[#allocation8 + $0x6d8] sm:$0xff]
    %v414 = vld [vmem:[#allocation8 + $0x6e0] sm:$0xff]
    %v415 = vld [vmem:[#allocation8 + $0x6e8] sm:$0xff]
    %v416 = vld [vmem:[#allocation8 + $0x6f0] sm:$0xff]
    %v417 = vld [vmem:[#allocation8 + $0x6f8] sm:$0xff]
    %v418 = vld [vmem:[#allocation8 + $0x700] sm:$0xff]
    %v419 = vld [vmem:[#allocation8 + $0x708] sm:$0xff]
    %v420 = vld [vmem:[#allocation8 + $0x710] sm:$0xff]
    %v421 = vld [vmem:[#allocation8 + $0x718] sm:$0xff]
    %v422 = vld [vmem:[#allocation8 + $0x720] sm:$0xff]
    %v423 = vld [vmem:[#allocation8 + $0x728] sm:$0xff]
    %v424 = vld [vmem:[#allocation8 + $0x730] sm:$0xff]
    %v425 = vld [vmem:[#allocation8 + $0x738] sm:$0xff]
    %v426 = vld [vmem:[#allocation8 + $0x740] sm:$0xff]
    %v427 = vld [vmem:[#allocation8 + $0x748] sm:$0xff]
    %v428 = vld [vmem:[#allocation8 + $0x750] sm:$0xff]
    %v429 = vld [vmem:[#allocation8 + $0x758] sm:$0xff]
    %v430 = vld [vmem:[#allocation8 + $0x760] sm:$0xff]
    %v431 = vld [vmem:[#allocation8 + $0x768] sm:$0xff]
    %v432 = vld [vmem:[#allocation8 + $0x770] sm:$0xff]
    %v433 = vld [vmem:[#allocation8 + $0x778] sm:$0xff]
    %v434 = vld [vmem:[#allocation8 + $0x780] sm:$0xff]
    %v435 = vld [vmem:[#allocation8 + $0x788] sm:$0xff]
    %v436 = vld [vmem:[#allocation8 + $0x790] sm:$0xff]
    %v437 = vld [vmem:[#allocation8 + $0x798] sm:$0xff]
    %v438 = vld [vmem:[#allocation8 + $0x7a0] sm:$0xff]
    %v439 = vld [vmem:[#allocation8 + $0x7a8] sm:$0xff]
    %v440 = vld [vmem:[#allocation8 + $0x7b0] sm:$0xff]
    %v441 = vld [vmem:[#allocation8 + $0x7b8] sm:$0xff]
    %v442 = vld [vmem:[#allocation8 + $0x7c0] sm:$0xff]
    %v443 = vld [vmem:[#allocation8 + $0x7c8] sm:$0xff]
    %v444 = vld [vmem:[#allocation8 + $0x7d0] sm:$0xff]
    %v445 = vld [vmem:[#allocation8 + $0x7d8] sm:$0xff]
    %v446 = vld [vmem:[#allocation8 + $0x7e0] sm:$0xff]
    %v447 = vld [vmem:[#allocation8 + $0x7e8] sm:$0xff]
    %v448 = vld [vmem:[#allocation8 + $0x7f0] sm:$0xff]
    %v449 = vld [vmem:[#allocation8 + $0x7f8] sm:$0xff]
    %v450 = vld [vmem:[#allocation10] sm:$0xff]
    %v452 = vperm.slane %v450, 0
    %v453 = vperm.slane %v450, 1
    %v454 = vperm.slane %v450, 2
    %v455 = vperm.slane %v450, 3
    %v456 = vperm.slane %v450, 4
    %v457 = vperm.slane %v450, 5
    %v458 = vperm.slane %v450, 6
    %v459 = vperm.slane %v450, 7
    %v724 = vunpack.c.l.b16 %v194
    %v725 = vunpack.c.h.b16 %v194
    %v726 = vunpack.c.l.b16 %v195
    %v727 = vunpack.c.h.b16 %v195
    %v728 = vunpack.c.l.b16 %v196
    %v729 = vunpack.c.h.b16 %v196
    %v730 = vunpack.c.l.b16 %v197
    %v731 = vunpack.c.h.b16 %v197
    %v732 = vunpack.c.l.b16 %v198
    %v733 = vunpack.c.h.b16 %v198
    %v734 = vunpack.c.l.b16 %v199
    %v735 = vunpack.c.h.b16 %v199
    %v736 = vunpack.c.l.b16 %v200
    %v737 = vunpack.c.h.b16 %v200
    %v738 = vunpack.c.l.b16 %v201
    %v739 = vunpack.c.h.b16 %v201
    %v740 = vunpack.c.l.b16 %v202
    %v741 = vunpack.c.h.b16 %v202
    %v742 = vunpack.c.l.b16 %v203
    %v743 = vunpack.c.h.b16 %v203
    %v744 = vunpack.c.l.b16 %v204
    %v745 = vunpack.c.h.b16 %v204
    %v746 = vunpack.c.l.b16 %v205
    %v747 = vunpack.c.h.b16 %v205
    %v748 = vunpack.c.l.b16 %v206
    %v749 = vunpack.c.h.b16 %v206
    %v750 = vunpack.c.l.b16 %v207
    %v751 = vunpack.c.h.b16 %v207
    %v752 = vunpack.c.l.b16 %v208
    %v753 = vunpack.c.h.b16 %v208
    %v754 = vunpack.c.l.b16 %v209
    %v755 = vunpack.c.h.b16 %v209
    %v756 = vunpack.c.l.b16 %v210
    %v757 = vunpack.c.h.b16 %v210
    %v758 = vunpack.c.l.b16 %v211
    %v759 = vunpack.c.h.b16 %v211
    %v760 = vunpack.c.l.b16 %v212
    %v761 = vunpack.c.h.b16 %v212
    %v762 = vunpack.c.l.b16 %v213
    %v763 = vunpack.c.h.b16 %v213
    %v764 = vunpack.c.l.b16 %v214
    %v765 = vunpack.c.h.b16 %v214
    %v766 = vunpack.c.l.b16 %v215
    %v767 = vunpack.c.h.b16 %v215
    %v768 = vunpack.c.l.b16 %v216
    %v769 = vunpack.c.h.b16 %v216
    %v770 = vunpack.c.l.b16 %v217
    %v771 = vunpack.c.h.b16 %v217
    %v772 = vunpack.c.l.b16 %v218
    %v773 = vunpack.c.h.b16 %v218
    %v774 = vunpack.c.l.b16 %v219
    %v775 = vunpack.c.h.b16 %v219
    %v776 = vunpack.c.l.b16 %v220
    %v777 = vunpack.c.h.b16 %v220
    %v778 = vunpack.c.l.b16 %v221
    %v779 = vunpack.c.h.b16 %v221
    %v780 = vunpack.c.l.b16 %v222
    %v781 = vunpack.c.h.b16 %v222
    %v782 = vunpack.c.l.b16 %v223
    %v783 = vunpack.c.h.b16 %v223
    %v784 = vunpack.c.l.b16 %v224
    %v785 = vunpack.c.h.b16 %v224
    %v786 = vunpack.c.l.b16 %v225
    %v787 = vunpack.c.h.b16 %v225
    %v788 = vunpack.c.l.b16 %v226
    %v789 = vunpack.c.h.b16 %v226
    %v790 = vunpack.c.l.b16 %v227
    %v791 = vunpack.c.h.b16 %v227
    %v792 = vunpack.c.l.b16 %v228
    %v793 = vunpack.c.h.b16 %v228
    %v794 = vunpack.c.l.b16 %v229
    %v795 = vunpack.c.h.b16 %v229
    %v796 = vunpack.c.l.b16 %v230
    %v797 = vunpack.c.h.b16 %v230
    %v798 = vunpack.c.l.b16 %v231
    %v799 = vunpack.c.h.b16 %v231
    %v800 = vunpack.c.l.b16 %v232
    %v801 = vunpack.c.h.b16 %v232
    %v802 = vunpack.c.l.b16 %v233
    %v803 = vunpack.c.h.b16 %v233
    %v804 = vunpack.c.l.b16 %v234
    %v805 = vunpack.c.h.b16 %v234
    %v806 = vunpack.c.l.b16 %v235
    %v807 = vunpack.c.h.b16 %v235
    %v808 = vunpack.c.l.b16 %v236
    %v809 = vunpack.c.h.b16 %v236
    %v810 = vunpack.c.l.b16 %v237
    %v811 = vunpack.c.h.b16 %v237
    %v812 = vunpack.c.l.b16 %v238
    %v813 = vunpack.c.h.b16 %v238
    %v814 = vunpack.c.l.b16 %v239
    %v815 = vunpack.c.h.b16 %v239
    %v816 = vunpack.c.l.b16 %v240
    %v817 = vunpack.c.h.b16 %v240
    %v818 = vunpack.c.l.b16 %v241
    %v819 = vunpack.c.h.b16 %v241
    %v820 = vunpack.c.l.b16 %v242
    %v821 = vunpack.c.h.b16 %v242
    %v822 = vunpack.c.l.b16 %v243
    %v823 = vunpack.c.h.b16 %v243
    %v824 = vunpack.c.l.b16 %v244
    %v825 = vunpack.c.h.b16 %v244
    %v826 = vunpack.c.l.b16 %v245
    %v827 = vunpack.c.h.b16 %v245
    %v828 = vunpack.c.l.b16 %v246
    %v829 = vunpack.c.h.b16 %v246
    %v830 = vunpack.c.l.b16 %v247
    %v831 = vunpack.c.h.b16 %v247
    %v832 = vunpack.c.l.b16 %v248
    %v833 = vunpack.c.h.b16 %v248
    %v834 = vunpack.c.l.b16 %v249
    %v835 = vunpack.c.h.b16 %v249
    %v836 = vunpack.c.l.b16 %v250
    %v837 = vunpack.c.h.b16 %v250
    %v838 = vunpack.c.l.b16 %v251
    %v839 = vunpack.c.h.b16 %v251
    %v840 = vunpack.c.l.b16 %v252
    %v841 = vunpack.c.h.b16 %v252
    %v842 = vunpack.c.l.b16 %v253
    %v843 = vunpack.c.h.b16 %v253
    %v844 = vunpack.c.l.b16 %v254
    %v845 = vunpack.c.h.b16 %v254
    %v846 = vunpack.c.l.b16 %v255
    %v847 = vunpack.c.h.b16 %v255
    %v848 = vunpack.c.l.b16 %v256
    %v849 = vunpack.c.h.b16 %v256
    %v850 = vunpack.c.l.b16 %v257
    %v851 = vunpack.c.h.b16 %v257
    %v852 = vunpack.c.l.b16 %v258
    %v853 = vunpack.c.h.b16 %v258
    %v854 = vunpack.c.l.b16 %v259
    %v855 = vunpack.c.h.b16 %v259
    %v856 = vunpack.c.l.b16 %v260
    %v857 = vunpack.c.h.b16 %v260
    %v858 = vunpack.c.l.b16 %v261
    %v859 = vunpack.c.h.b16 %v261
    %v860 = vunpack.c.l.b16 %v262
    %v861 = vunpack.c.h.b16 %v262
    %v862 = vunpack.c.l.b16 %v263
    %v863 = vunpack.c.h.b16 %v263
    %v864 = vunpack.c.l.b16 %v264
    %v865 = vunpack.c.h.b16 %v264
    %v866 = vunpack.c.l.b16 %v265
    %v867 = vunpack.c.h.b16 %v265
    %v868 = vunpack.c.l.b16 %v266
    %v869 = vunpack.c.h.b16 %v266
    %v870 = vunpack.c.l.b16 %v267
    %v871 = vunpack.c.h.b16 %v267
    %v872 = vunpack.c.l.b16 %v268
    %v873 = vunpack.c.h.b16 %v268
    %v874 = vunpack.c.l.b16 %v269
    %v875 = vunpack.c.h.b16 %v269
    %v876 = vunpack.c.l.b16 %v270
    %v877 = vunpack.c.h.b16 %v270
    %v878 = vunpack.c.l.b16 %v271
    %v879 = vunpack.c.h.b16 %v271
    %v880 = vunpack.c.l.b16 %v272
    %v881 = vunpack.c.h.b16 %v272
    %v882 = vunpack.c.l.b16 %v273
    %v883 = vunpack.c.h.b16 %v273
    %v884 = vunpack.c.l.b16 %v274
    %v885 = vunpack.c.h.b16 %v274
    %v886 = vunpack.c.l.b16 %v275
    %v887 = vunpack.c.h.b16 %v275
    %v888 = vunpack.c.l.b16 %v276
    %v889 = vunpack.c.h.b16 %v276
    %v890 = vunpack.c.l.b16 %v277
    %v891 = vunpack.c.h.b16 %v277
    %v892 = vunpack.c.l.b16 %v278
    %v893 = vunpack.c.h.b16 %v278
    %v894 = vunpack.c.l.b16 %v279
    %v895 = vunpack.c.h.b16 %v279
    %v896 = vunpack.c.l.b16 %v280
    %v897 = vunpack.c.h.b16 %v280
    %v898 = vunpack.c.l.b16 %v281
    %v899 = vunpack.c.h.b16 %v281
    %v900 = vunpack.c.l.b16 %v282
    %v901 = vunpack.c.h.b16 %v282
    %v902 = vunpack.c.l.b16 %v283
    %v903 = vunpack.c.h.b16 %v283
    %v904 = vunpack.c.l.b16 %v284
    %v905 = vunpack.c.h.b16 %v284
    %v906 = vunpack.c.l.b16 %v285
    %v907 = vunpack.c.h.b16 %v285
    %v908 = vunpack.c.l.b16 %v286
    %v909 = vunpack.c.h.b16 %v286
    %v910 = vunpack.c.l.b16 %v287
    %v911 = vunpack.c.h.b16 %v287
    %v912 = vunpack.c.l.b16 %v288
    %v913 = vunpack.c.h.b16 %v288
    %v914 = vunpack.c.l.b16 %v289
    %v915 = vunpack.c.h.b16 %v289
    %v916 = vunpack.c.l.b16 %v290
    %v917 = vunpack.c.h.b16 %v290
    %v918 = vunpack.c.l.b16 %v291
    %v919 = vunpack.c.h.b16 %v291
    %v920 = vunpack.c.l.b16 %v292
    %v921 = vunpack.c.h.b16 %v292
    %v922 = vunpack.c.l.b16 %v293
    %v923 = vunpack.c.h.b16 %v293
    %v924 = vunpack.c.l.b16 %v294
    %v925 = vunpack.c.h.b16 %v294
    %v926 = vunpack.c.l.b16 %v295
    %v927 = vunpack.c.h.b16 %v295
    %v928 = vunpack.c.l.b16 %v296
    %v929 = vunpack.c.h.b16 %v296
    %v930 = vunpack.c.l.b16 %v297
    %v931 = vunpack.c.h.b16 %v297
    %v932 = vunpack.c.l.b16 %v298
    %v933 = vunpack.c.h.b16 %v298
    %v934 = vunpack.c.l.b16 %v299
    %v935 = vunpack.c.h.b16 %v299
    %v936 = vunpack.c.l.b16 %v300
    %v937 = vunpack.c.h.b16 %v300
    %v938 = vunpack.c.l.b16 %v301
    %v939 = vunpack.c.h.b16 %v301
    %v940 = vunpack.c.l.b16 %v302
    %v941 = vunpack.c.h.b16 %v302
    %v942 = vunpack.c.l.b16 %v303
    %v943 = vunpack.c.h.b16 %v303
    %v944 = vunpack.c.l.b16 %v304
    %v945 = vunpack.c.h.b16 %v304
    %v946 = vunpack.c.l.b16 %v305
    %v947 = vunpack.c.h.b16 %v305
    %v948 = vunpack.c.l.b16 %v306
    %v949 = vunpack.c.h.b16 %v306
    %v950 = vunpack.c.l.b16 %v307
    %v951 = vunpack.c.h.b16 %v307
    %v952 = vunpack.c.l.b16 %v308
    %v953 = vunpack.c.h.b16 %v308
    %v954 = vunpack.c.l.b16 %v309
    %v955 = vunpack.c.h.b16 %v309
    %v956 = vunpack.c.l.b16 %v310
    %v957 = vunpack.c.h.b16 %v310
    %v958 = vunpack.c.l.b16 %v311
    %v959 = vunpack.c.h.b16 %v311
    %v960 = vunpack.c.l.b16 %v312
    %v961 = vunpack.c.h.b16 %v312
    %v962 = vunpack.c.l.b16 %v313
    %v963 = vunpack.c.h.b16 %v313
    %v964 = vunpack.c.l.b16 %v314
    %v965 = vunpack.c.h.b16 %v314
    %v966 = vunpack.c.l.b16 %v315
    %v967 = vunpack.c.h.b16 %v315
    %v968 = vunpack.c.l.b16 %v316
    %v969 = vunpack.c.h.b16 %v316
    %v970 = vunpack.c.l.b16 %v317
    %v971 = vunpack.c.h.b16 %v317
    %v972 = vunpack.c.l.b16 %v318
    %v973 = vunpack.c.h.b16 %v318
    %v974 = vunpack.c.l.b16 %v319
    %v975 = vunpack.c.h.b16 %v319
    %v976 = vunpack.c.l.b16 %v320
    %v977 = vunpack.c.h.b16 %v320
    %v978 = vunpack.c.l.b16 %v321
    %v979 = vunpack.c.h.b16 %v321
    %v980 = vunpack.c.l.b16 %v322
    %v981 = vunpack.c.h.b16 %v322
    %v982 = vunpack.c.l.b16 %v323
    %v983 = vunpack.c.h.b16 %v323
    %v984 = vunpack.c.l.b16 %v324
    %v985 = vunpack.c.h.b16 %v324
    %v986 = vunpack.c.l.b16 %v325
    %v987 = vunpack.c.h.b16 %v325
    %v988 = vunpack.c.l.b16 %v326
    %v989 = vunpack.c.h.b16 %v326
    %v990 = vunpack.c.l.b16 %v327
    %v991 = vunpack.c.h.b16 %v327
    %v992 = vunpack.c.l.b16 %v328
    %v993 = vunpack.c.h.b16 %v328
    %v994 = vunpack.c.l.b16 %v329
    %v995 = vunpack.c.h.b16 %v329
    %v996 = vunpack.c.l.b16 %v330
    %v997 = vunpack.c.h.b16 %v330
    %v998 = vunpack.c.l.b16 %v331
    %v999 = vunpack.c.h.b16 %v331
    %v1000 = vunpack.c.l.b16 %v332
    %v1001 = vunpack.c.h.b16 %v332
    %v1002 = vunpack.c.l.b16 %v333
    %v1003 = vunpack.c.h.b16 %v333
    %v1004 = vunpack.c.l.b16 %v334
    %v1005 = vunpack.c.h.b16 %v334
    %v1006 = vunpack.c.l.b16 %v335
    %v1007 = vunpack.c.h.b16 %v335
    %v1008 = vunpack.c.l.b16 %v336
    %v1009 = vunpack.c.h.b16 %v336
    %v1010 = vunpack.c.l.b16 %v337
    %v1011 = vunpack.c.h.b16 %v337
    %v1012 = vunpack.c.l.b16 %v338
    %v1013 = vunpack.c.h.b16 %v338
    %v1014 = vunpack.c.l.b16 %v339
    %v1015 = vunpack.c.h.b16 %v339
    %v1016 = vunpack.c.l.b16 %v340
    %v1017 = vunpack.c.h.b16 %v340
    %v1018 = vunpack.c.l.b16 %v341
    %v1019 = vunpack.c.h.b16 %v341
    %v1020 = vunpack.c.l.b16 %v342
    %v1021 = vunpack.c.h.b16 %v342
    %v1022 = vunpack.c.l.b16 %v343
    %v1023 = vunpack.c.h.b16 %v343
    %v1024 = vunpack.c.l.b16 %v344
    %v1025 = vunpack.c.h.b16 %v344
    %v1026 = vunpack.c.l.b16 %v345
    %v1027 = vunpack.c.h.b16 %v345
    %v1028 = vunpack.c.l.b16 %v346
    %v1029 = vunpack.c.h.b16 %v346
    %v1030 = vunpack.c.l.b16 %v347
    %v1031 = vunpack.c.h.b16 %v347
    %v1032 = vunpack.c.l.b16 %v348
    %v1033 = vunpack.c.h.b16 %v348
    %v1034 = vunpack.c.l.b16 %v349
    %v1035 = vunpack.c.h.b16 %v349
    %v1036 = vunpack.c.l.b16 %v350
    %v1037 = vunpack.c.h.b16 %v350
    %v1038 = vunpack.c.l.b16 %v351
    %v1039 = vunpack.c.h.b16 %v351
    %v1040 = vunpack.c.l.b16 %v352
    %v1041 = vunpack.c.h.b16 %v352
    %v1042 = vunpack.c.l.b16 %v353
    %v1043 = vunpack.c.h.b16 %v353
    %v1044 = vunpack.c.l.b16 %v354
    %v1045 = vunpack.c.h.b16 %v354
    %v1046 = vunpack.c.l.b16 %v355
    %v1047 = vunpack.c.h.b16 %v355
    %v1048 = vunpack.c.l.b16 %v356
    %v1049 = vunpack.c.h.b16 %v356
    %v1050 = vunpack.c.l.b16 %v357
    %v1051 = vunpack.c.h.b16 %v357
    %v1052 = vunpack.c.l.b16 %v358
    %v1053 = vunpack.c.h.b16 %v358
    %v1054 = vunpack.c.l.b16 %v359
    %v1055 = vunpack.c.h.b16 %v359
    %v1056 = vunpack.c.l.b16 %v360
    %v1057 = vunpack.c.h.b16 %v360
    %v1058 = vunpack.c.l.b16 %v361
    %v1059 = vunpack.c.h.b16 %v361
    %v1060 = vunpack.c.l.b16 %v362
    %v1061 = vunpack.c.h.b16 %v362
    %v1062 = vunpack.c.l.b16 %v363
    %v1063 = vunpack.c.h.b16 %v363
    %v1064 = vunpack.c.l.b16 %v364
    %v1065 = vunpack.c.h.b16 %v364
    %v1066 = vunpack.c.l.b16 %v365
    %v1067 = vunpack.c.h.b16 %v365
    %v1068 = vunpack.c.l.b16 %v366
    %v1069 = vunpack.c.h.b16 %v366
    %v1070 = vunpack.c.l.b16 %v367
    %v1071 = vunpack.c.h.b16 %v367
    %v1072 = vunpack.c.l.b16 %v368
    %v1073 = vunpack.c.h.b16 %v368
    %v1074 = vunpack.c.l.b16 %v369
    %v1075 = vunpack.c.h.b16 %v369
    %v1076 = vunpack.c.l.b16 %v370
    %v1077 = vunpack.c.h.b16 %v370
    %v1078 = vunpack.c.l.b16 %v371
    %v1079 = vunpack.c.h.b16 %v371
    %v1080 = vunpack.c.l.b16 %v372
    %v1081 = vunpack.c.h.b16 %v372
    %v1082 = vunpack.c.l.b16 %v373
    %v1083 = vunpack.c.h.b16 %v373
    %v1084 = vunpack.c.l.b16 %v374
    %v1085 = vunpack.c.h.b16 %v374
    %v1086 = vunpack.c.l.b16 %v375
    %v1087 = vunpack.c.h.b16 %v375
    %v1088 = vunpack.c.l.b16 %v376
    %v1089 = vunpack.c.h.b16 %v376
    %v1090 = vunpack.c.l.b16 %v377
    %v1091 = vunpack.c.h.b16 %v377
    %v1092 = vunpack.c.l.b16 %v378
    %v1093 = vunpack.c.h.b16 %v378
    %v1094 = vunpack.c.l.b16 %v379
    %v1095 = vunpack.c.h.b16 %v379
    %v1096 = vunpack.c.l.b16 %v380
    %v1097 = vunpack.c.h.b16 %v380
    %v1098 = vunpack.c.l.b16 %v381
    %v1099 = vunpack.c.h.b16 %v381
    %v1100 = vunpack.c.l.b16 %v382
    %v1101 = vunpack.c.h.b16 %v382
    %v1102 = vunpack.c.l.b16 %v383
    %v1103 = vunpack.c.h.b16 %v383
    %v1104 = vunpack.c.l.b16 %v384
    %v1105 = vunpack.c.h.b16 %v384
    %v1106 = vunpack.c.l.b16 %v385
    %v1107 = vunpack.c.h.b16 %v385
    %v1108 = vunpack.c.l.b16 %v386
    %v1109 = vunpack.c.h.b16 %v386
    %v1110 = vunpack.c.l.b16 %v387
    %v1111 = vunpack.c.h.b16 %v387
    %v1112 = vunpack.c.l.b16 %v388
    %v1113 = vunpack.c.h.b16 %v388
    %v1114 = vunpack.c.l.b16 %v389
    %v1115 = vunpack.c.h.b16 %v389
    %v1116 = vunpack.c.l.b16 %v390
    %v1117 = vunpack.c.h.b16 %v390
    %v1118 = vunpack.c.l.b16 %v391
    %v1119 = vunpack.c.h.b16 %v391
    %v1120 = vunpack.c.l.b16 %v392
    %v1121 = vunpack.c.h.b16 %v392
    %v1122 = vunpack.c.l.b16 %v393
    %v1123 = vunpack.c.h.b16 %v393
    %v1124 = vunpack.c.l.b16 %v394
    %v1125 = vunpack.c.h.b16 %v394
    %v1126 = vunpack.c.l.b16 %v395
    %v1127 = vunpack.c.h.b16 %v395
    %v1128 = vunpack.c.l.b16 %v396
    %v1129 = vunpack.c.h.b16 %v396
    %v1130 = vunpack.c.l.b16 %v397
    %v1131 = vunpack.c.h.b16 %v397
    %v1132 = vunpack.c.l.b16 %v398
    %v1133 = vunpack.c.h.b16 %v398
    %v1134 = vunpack.c.l.b16 %v399
    %v1135 = vunpack.c.h.b16 %v399
    %v1136 = vunpack.c.l.b16 %v400
    %v1137 = vunpack.c.h.b16 %v400
    %v1138 = vunpack.c.l.b16 %v401
    %v1139 = vunpack.c.h.b16 %v401
    %v1140 = vunpack.c.l.b16 %v402
    %v1141 = vunpack.c.h.b16 %v402
    %v1142 = vunpack.c.l.b16 %v403
    %v1143 = vunpack.c.h.b16 %v403
    %v1144 = vunpack.c.l.b16 %v404
    %v1145 = vunpack.c.h.b16 %v404
    %v1146 = vunpack.c.l.b16 %v405
    %v1147 = vunpack.c.h.b16 %v405
    %v1148 = vunpack.c.l.b16 %v406
    %v1149 = vunpack.c.h.b16 %v406
    %v1150 = vunpack.c.l.b16 %v407
    %v1151 = vunpack.c.h.b16 %v407
    %v1152 = vunpack.c.l.b16 %v408
    %v1153 = vunpack.c.h.b16 %v408
    %v1154 = vunpack.c.l.b16 %v409
    %v1155 = vunpack.c.h.b16 %v409
    %v1156 = vunpack.c.l.b16 %v410
    %v1157 = vunpack.c.h.b16 %v410
    %v1158 = vunpack.c.l.b16 %v411
    %v1159 = vunpack.c.h.b16 %v411
    %v1160 = vunpack.c.l.b16 %v412
    %v1161 = vunpack.c.h.b16 %v412
    %v1162 = vunpack.c.l.b16 %v413
    %v1163 = vunpack.c.h.b16 %v413
    %v1164 = vunpack.c.l.b16 %v414
    %v1165 = vunpack.c.h.b16 %v414
    %v1166 = vunpack.c.l.b16 %v415
    %v1167 = vunpack.c.h.b16 %v415
    %v1168 = vunpack.c.l.b16 %v416
    %v1169 = vunpack.c.h.b16 %v416
    %v1170 = vunpack.c.l.b16 %v417
    %v1171 = vunpack.c.h.b16 %v417
    %v1172 = vunpack.c.l.b16 %v418
    %v1173 = vunpack.c.h.b16 %v418
    %v1174 = vunpack.c.l.b16 %v419
    %v1175 = vunpack.c.h.b16 %v419
    %v1176 = vunpack.c.l.b16 %v420
    %v1177 = vunpack.c.h.b16 %v420
    %v1178 = vunpack.c.l.b16 %v421
    %v1179 = vunpack.c.h.b16 %v421
    %v1180 = vunpack.c.l.b16 %v422
    %v1181 = vunpack.c.h.b16 %v422
    %v1182 = vunpack.c.l.b16 %v423
    %v1183 = vunpack.c.h.b16 %v423
    %v1184 = vunpack.c.l.b16 %v424
    %v1185 = vunpack.c.h.b16 %v424
    %v1186 = vunpack.c.l.b16 %v425
    %v1187 = vunpack.c.h.b16 %v425
    %v1188 = vunpack.c.l.b16 %v426
    %v1189 = vunpack.c.h.b16 %v426
    %v1190 = vunpack.c.l.b16 %v427
    %v1191 = vunpack.c.h.b16 %v427
    %v1192 = vunpack.c.l.b16 %v428
    %v1193 = vunpack.c.h.b16 %v428
    %v1194 = vunpack.c.l.b16 %v429
    %v1195 = vunpack.c.h.b16 %v429
    %v1196 = vunpack.c.l.b16 %v430
    %v1197 = vunpack.c.h.b16 %v430
    %v1198 = vunpack.c.l.b16 %v431
    %v1199 = vunpack.c.h.b16 %v431
    %v1200 = vunpack.c.l.b16 %v432
    %v1201 = vunpack.c.h.b16 %v432
    %v1202 = vunpack.c.l.b16 %v433
    %v1203 = vunpack.c.h.b16 %v433
    %v1204 = vunpack.c.l.b16 %v434
    %v1205 = vunpack.c.h.b16 %v434
    %v1206 = vunpack.c.l.b16 %v435
    %v1207 = vunpack.c.h.b16 %v435
    %v1208 = vunpack.c.l.b16 %v436
    %v1209 = vunpack.c.h.b16 %v436
    %v1210 = vunpack.c.l.b16 %v437
    %v1211 = vunpack.c.h.b16 %v437
    %v1212 = vunpack.c.l.b16 %v438
    %v1213 = vunpack.c.h.b16 %v438
    %v1214 = vunpack.c.l.b16 %v439
    %v1215 = vunpack.c.h.b16 %v439
    %v1216 = vunpack.c.l.b16 %v440
    %v1217 = vunpack.c.h.b16 %v440
    %v1218 = vunpack.c.l.b16 %v441
    %v1219 = vunpack.c.h.b16 %v441
    %v1220 = vunpack.c.l.b16 %v442
    %v1221 = vunpack.c.h.b16 %v442
    %v1222 = vunpack.c.l.b16 %v443
    %v1223 = vunpack.c.h.b16 %v443
    %v1224 = vunpack.c.l.b16 %v444
    %v1225 = vunpack.c.h.b16 %v444
    %v1226 = vunpack.c.l.b16 %v445
    %v1227 = vunpack.c.h.b16 %v445
    %v1228 = vunpack.c.l.b16 %v446
    %v1229 = vunpack.c.h.b16 %v446
    %v1230 = vunpack.c.l.b16 %v447
    %v1231 = vunpack.c.h.b16 %v447
    %v1232 = vunpack.c.l.b16 %v448
    %v1233 = vunpack.c.h.b16 %v448
    %v1234 = vunpack.c.l.b16 %v449
    %v1235 = vunpack.c.h.b16 %v449
    %v1236 = vpack.c.b16 %v732, %v724
    %v1237 = vpack.c.b16 %v733, %v725
    %v1238 = vpack.c.b16 %v734, %v726
    %v1239 = vpack.c.b16 %v735, %v727
    %v1240 = vpack.c.b16 %v736, %v728
    %v1241 = vpack.c.b16 %v737, %v729
    %v1242 = vpack.c.b16 %v738, %v730
    %v1243 = vpack.c.b16 %v739, %v731
    %v1244 = vpack.c.b16 %v748, %v740
    %v1245 = vpack.c.b16 %v749, %v741
    %v1246 = vpack.c.b16 %v750, %v742
    %v1247 = vpack.c.b16 %v751, %v743
    %v1248 = vpack.c.b16 %v752, %v744
    %v1249 = vpack.c.b16 %v753, %v745
    %v1250 = vpack.c.b16 %v754, %v746
    %v1251 = vpack.c.b16 %v755, %v747
    %v1252 = vpack.c.b16 %v764, %v756
    %v1253 = vpack.c.b16 %v765, %v757
    %v1254 = vpack.c.b16 %v766, %v758
    %v1255 = vpack.c.b16 %v767, %v759
    %v1256 = vpack.c.b16 %v768, %v760
    %v1257 = vpack.c.b16 %v769, %v761
    %v1258 = vpack.c.b16 %v770, %v762
    %v1259 = vpack.c.b16 %v771, %v763
    %v1260 = vpack.c.b16 %v780, %v772
    %v1261 = vpack.c.b16 %v781, %v773
    %v1262 = vpack.c.b16 %v782, %v774
    %v1263 = vpack.c.b16 %v783, %v775
    %v1264 = vpack.c.b16 %v784, %v776
    %v1265 = vpack.c.b16 %v785, %v777
    %v1266 = vpack.c.b16 %v786, %v778
    %v1267 = vpack.c.b16 %v787, %v779
    %v1268 = vpack.c.b16 %v796, %v788
    %v1269 = vpack.c.b16 %v797, %v789
    %v1270 = vpack.c.b16 %v798, %v790
    %v1271 = vpack.c.b16 %v799, %v791
    %v1272 = vpack.c.b16 %v800, %v792
    %v1273 = vpack.c.b16 %v801, %v793
    %v1274 = vpack.c.b16 %v802, %v794
    %v1275 = vpack.c.b16 %v803, %v795
    %v1276 = vpack.c.b16 %v812, %v804
    %v1277 = vpack.c.b16 %v813, %v805
    %v1278 = vpack.c.b16 %v814, %v806
    %v1279 = vpack.c.b16 %v815, %v807
    %v1280 = vpack.c.b16 %v816, %v808
    %v1281 = vpack.c.b16 %v817, %v809
    %v1282 = vpack.c.b16 %v818, %v810
    %v1283 = vpack.c.b16 %v819, %v811
    %v1284 = vpack.c.b16 %v828, %v820
    %v1285 = vpack.c.b16 %v829, %v821
    %v1286 = vpack.c.b16 %v830, %v822
    %v1287 = vpack.c.b16 %v831, %v823
    %v1288 = vpack.c.b16 %v832, %v824
    %v1289 = vpack.c.b16 %v833, %v825
    %v1290 = vpack.c.b16 %v834, %v826
    %v1291 = vpack.c.b16 %v835, %v827
    %v1292 = vpack.c.b16 %v844, %v836
    %v1293 = vpack.c.b16 %v845, %v837
    %v1294 = vpack.c.b16 %v846, %v838
    %v1295 = vpack.c.b16 %v847, %v839
    %v1296 = vpack.c.b16 %v848, %v840
    %v1297 = vpack.c.b16 %v849, %v841
    %v1298 = vpack.c.b16 %v850, %v842
    %v1299 = vpack.c.b16 %v851, %v843
    %v1300 = vpack.c.b16 %v860, %v852
    %v1301 = vpack.c.b16 %v861, %v853
    %v1302 = vpack.c.b16 %v862, %v854
    %v1303 = vpack.c.b16 %v863, %v855
    %v1304 = vpack.c.b16 %v864, %v856
    %v1305 = vpack.c.b16 %v865, %v857
    %v1306 = vpack.c.b16 %v866, %v858
    %v1307 = vpack.c.b16 %v867, %v859
    %v1308 = vpack.c.b16 %v876, %v868
    %v1309 = vpack.c.b16 %v877, %v869
    %v1310 = vpack.c.b16 %v878, %v870
    %v1311 = vpack.c.b16 %v879, %v871
    %v1312 = vpack.c.b16 %v880, %v872
    %v1313 = vpack.c.b16 %v881, %v873
    %v1314 = vpack.c.b16 %v882, %v874
    %v1315 = vpack.c.b16 %v883, %v875
    %v1316 = vpack.c.b16 %v892, %v884
    %v1317 = vpack.c.b16 %v893, %v885
    %v1318 = vpack.c.b16 %v894, %v886
    %v1319 = vpack.c.b16 %v895, %v887
    %v1320 = vpack.c.b16 %v896, %v888
    %v1321 = vpack.c.b16 %v897, %v889
    %v1322 = vpack.c.b16 %v898, %v890
    %v1323 = vpack.c.b16 %v899, %v891
    %v1324 = vpack.c.b16 %v908, %v900
    %v1325 = vpack.c.b16 %v909, %v901
    %v1326 = vpack.c.b16 %v910, %v902
    %v1327 = vpack.c.b16 %v911, %v903
    %v1328 = vpack.c.b16 %v912, %v904
    %v1329 = vpack.c.b16 %v913, %v905
    %v1330 = vpack.c.b16 %v914, %v906
    %v1331 = vpack.c.b16 %v915, %v907
    %v1332 = vpack.c.b16 %v924, %v916
    %v1333 = vpack.c.b16 %v925, %v917
    %v1334 = vpack.c.b16 %v926, %v918
    %v1335 = vpack.c.b16 %v927, %v919
    %v1336 = vpack.c.b16 %v928, %v920
    %v1337 = vpack.c.b16 %v929, %v921
    %v1338 = vpack.c.b16 %v930, %v922
    %v1339 = vpack.c.b16 %v931, %v923
    %v1340 = vpack.c.b16 %v940, %v932
    %v1341 = vpack.c.b16 %v941, %v933
    %v1342 = vpack.c.b16 %v942, %v934
    %v1343 = vpack.c.b16 %v943, %v935
    %v1344 = vpack.c.b16 %v944, %v936
    %v1345 = vpack.c.b16 %v945, %v937
    %v1346 = vpack.c.b16 %v946, %v938
    %v1347 = vpack.c.b16 %v947, %v939
    %v1348 = vpack.c.b16 %v956, %v948
    %v1349 = vpack.c.b16 %v957, %v949
    %v1350 = vpack.c.b16 %v958, %v950
    %v1351 = vpack.c.b16 %v959, %v951
    %v1352 = vpack.c.b16 %v960, %v952
    %v1353 = vpack.c.b16 %v961, %v953
    %v1354 = vpack.c.b16 %v962, %v954
    %v1355 = vpack.c.b16 %v963, %v955
    %v1356 = vpack.c.b16 %v972, %v964
    %v1357 = vpack.c.b16 %v973, %v965
    %v1358 = vpack.c.b16 %v974, %v966
    %v1359 = vpack.c.b16 %v975, %v967
    %v1360 = vpack.c.b16 %v976, %v968
    %v1361 = vpack.c.b16 %v977, %v969
    %v1362 = vpack.c.b16 %v978, %v970
    %v1363 = vpack.c.b16 %v979, %v971
    %v1364 = vpack.c.b16 %v988, %v980
    %v1365 = vpack.c.b16 %v989, %v981
    %v1366 = vpack.c.b16 %v990, %v982
    %v1367 = vpack.c.b16 %v991, %v983
    %v1368 = vpack.c.b16 %v992, %v984
    %v1369 = vpack.c.b16 %v993, %v985
    %v1370 = vpack.c.b16 %v994, %v986
    %v1371 = vpack.c.b16 %v995, %v987
    %v1372 = vpack.c.b16 %v1004, %v996
    %v1373 = vpack.c.b16 %v1005, %v997
    %v1374 = vpack.c.b16 %v1006, %v998
    %v1375 = vpack.c.b16 %v1007, %v999
    %v1376 = vpack.c.b16 %v1008, %v1000
    %v1377 = vpack.c.b16 %v1009, %v1001
    %v1378 = vpack.c.b16 %v1010, %v1002
    %v1379 = vpack.c.b16 %v1011, %v1003
    %v1380 = vpack.c.b16 %v1020, %v1012
    %v1381 = vpack.c.b16 %v1021, %v1013
    %v1382 = vpack.c.b16 %v1022, %v1014
    %v1383 = vpack.c.b16 %v1023, %v1015
    %v1384 = vpack.c.b16 %v1024, %v1016
    %v1385 = vpack.c.b16 %v1025, %v1017
    %v1386 = vpack.c.b16 %v1026, %v1018
    %v1387 = vpack.c.b16 %v1027, %v1019
    %v1388 = vpack.c.b16 %v1036, %v1028
    %v1389 = vpack.c.b16 %v1037, %v1029
    %v1390 = vpack.c.b16 %v1038, %v1030
    %v1391 = vpack.c.b16 %v1039, %v1031
    %v1392 = vpack.c.b16 %v1040, %v1032
    %v1393 = vpack.c.b16 %v1041, %v1033
    %v1394 = vpack.c.b16 %v1042, %v1034
    %v1395 = vpack.c.b16 %v1043, %v1035
    %v1396 = vpack.c.b16 %v1052, %v1044
    %v1397 = vpack.c.b16 %v1053, %v1045
    %v1398 = vpack.c.b16 %v1054, %v1046
    %v1399 = vpack.c.b16 %v1055, %v1047
    %v1400 = vpack.c.b16 %v1056, %v1048
    %v1401 = vpack.c.b16 %v1057, %v1049
    %v1402 = vpack.c.b16 %v1058, %v1050
    %v1403 = vpack.c.b16 %v1059, %v1051
    %v1404 = vpack.c.b16 %v1068, %v1060
    %v1405 = vpack.c.b16 %v1069, %v1061
    %v1406 = vpack.c.b16 %v1070, %v1062
    %v1407 = vpack.c.b16 %v1071, %v1063
    %v1408 = vpack.c.b16 %v1072, %v1064
    %v1409 = vpack.c.b16 %v1073, %v1065
    %v1410 = vpack.c.b16 %v1074, %v1066
    %v1411 = vpack.c.b16 %v1075, %v1067
    %v1412 = vpack.c.b16 %v1084, %v1076
    %v1413 = vpack.c.b16 %v1085, %v1077
    %v1414 = vpack.c.b16 %v1086, %v1078
    %v1415 = vpack.c.b16 %v1087, %v1079
    %v1416 = vpack.c.b16 %v1088, %v1080
    %v1417 = vpack.c.b16 %v1089, %v1081
    %v1418 = vpack.c.b16 %v1090, %v1082
    %v1419 = vpack.c.b16 %v1091, %v1083
    %v1420 = vpack.c.b16 %v1100, %v1092
    %v1421 = vpack.c.b16 %v1101, %v1093
    %v1422 = vpack.c.b16 %v1102, %v1094
    %v1423 = vpack.c.b16 %v1103, %v1095
    %v1424 = vpack.c.b16 %v1104, %v1096
    %v1425 = vpack.c.b16 %v1105, %v1097
    %v1426 = vpack.c.b16 %v1106, %v1098
    %v1427 = vpack.c.b16 %v1107, %v1099
    %v1428 = vpack.c.b16 %v1116, %v1108
    %v1429 = vpack.c.b16 %v1117, %v1109
    %v1430 = vpack.c.b16 %v1118, %v1110
    %v1431 = vpack.c.b16 %v1119, %v1111
    %v1432 = vpack.c.b16 %v1120, %v1112
    %v1433 = vpack.c.b16 %v1121, %v1113
    %v1434 = vpack.c.b16 %v1122, %v1114
    %v1435 = vpack.c.b16 %v1123, %v1115
    %v1436 = vpack.c.b16 %v1132, %v1124
    %v1437 = vpack.c.b16 %v1133, %v1125
    %v1438 = vpack.c.b16 %v1134, %v1126
    %v1439 = vpack.c.b16 %v1135, %v1127
    %v1440 = vpack.c.b16 %v1136, %v1128
    %v1441 = vpack.c.b16 %v1137, %v1129
    %v1442 = vpack.c.b16 %v1138, %v1130
    %v1443 = vpack.c.b16 %v1139, %v1131
    %v1444 = vpack.c.b16 %v1148, %v1140
    %v1445 = vpack.c.b16 %v1149, %v1141
    %v1446 = vpack.c.b16 %v1150, %v1142
    %v1447 = vpack.c.b16 %v1151, %v1143
    %v1448 = vpack.c.b16 %v1152, %v1144
    %v1449 = vpack.c.b16 %v1153, %v1145
    %v1450 = vpack.c.b16 %v1154, %v1146
    %v1451 = vpack.c.b16 %v1155, %v1147
    %v1452 = vpack.c.b16 %v1164, %v1156
    %v1453 = vpack.c.b16 %v1165, %v1157
    %v1454 = vpack.c.b16 %v1166, %v1158
    %v1455 = vpack.c.b16 %v1167, %v1159
    %v1456 = vpack.c.b16 %v1168, %v1160
    %v1457 = vpack.c.b16 %v1169, %v1161
    %v1458 = vpack.c.b16 %v1170, %v1162
    %v1459 = vpack.c.b16 %v1171, %v1163
    %v1460 = vpack.c.b16 %v1180, %v1172
    %v1461 = vpack.c.b16 %v1181, %v1173
    %v1462 = vpack.c.b16 %v1182, %v1174
    %v1463 = vpack.c.b16 %v1183, %v1175
    %v1464 = vpack.c.b16 %v1184, %v1176
    %v1465 = vpack.c.b16 %v1185, %v1177
    %v1466 = vpack.c.b16 %v1186, %v1178
    %v1467 = vpack.c.b16 %v1187, %v1179
    %v1468 = vpack.c.b16 %v1196, %v1188
    %v1469 = vpack.c.b16 %v1197, %v1189
    %v1470 = vpack.c.b16 %v1198, %v1190
    %v1471 = vpack.c.b16 %v1199, %v1191
    %v1472 = vpack.c.b16 %v1200, %v1192
    %v1473 = vpack.c.b16 %v1201, %v1193
    %v1474 = vpack.c.b16 %v1202, %v1194
    %v1475 = vpack.c.b16 %v1203, %v1195
    %v1476 = vpack.c.b16 %v1212, %v1204
    %v1477 = vpack.c.b16 %v1213, %v1205
    %v1478 = vpack.c.b16 %v1214, %v1206
    %v1479 = vpack.c.b16 %v1215, %v1207
    %v1480 = vpack.c.b16 %v1216, %v1208
    %v1481 = vpack.c.b16 %v1217, %v1209
    %v1482 = vpack.c.b16 %v1218, %v1210
    %v1483 = vpack.c.b16 %v1219, %v1211
    %v1484 = vpack.c.b16 %v1228, %v1220
    %v1485 = vpack.c.b16 %v1229, %v1221
    %v1486 = vpack.c.b16 %v1230, %v1222
    %v1487 = vpack.c.b16 %v1231, %v1223
    %v1488 = vpack.c.b16 %v1232, %v1224
    %v1489 = vpack.c.b16 %v1233, %v1225
    %v1490 = vpack.c.b16 %v1234, %v1226
    %v1491 = vpack.c.b16 %v1235, %v1227
    %1748 = vmatpush.bf16.msra.mxu0 %v1292
    %1749 = vmatpush.bf16.msra.mxu0 %v1284
    %1750 = vmatpush.bf16.msra.mxu0 %v1276
    %1751 = vmatpush.bf16.msra.mxu0 %v1268
    %1752 = vmatpush.bf16.msra.mxu0 %v1260
    %1753 = vmatpush.bf16.msra.mxu0 %v1252
    %1754 = vmatpush.bf16.msra.mxu0 %v1244
    %1755 = vmatpush.bf16.msra.mxu0 %v1236
    %1756 = vmatmul.bf16.gmra.mxu0 %v190
    %v1757 = vpop.f32.mrf.mxu0
    %v1758 = vadd.f32 %v452, %v1757
    %v1759 = vpop.f32.mrf.mxu0
    %1760 = vdwg.mxu0
    %1761 = vmatpush.bf16.msra.mxu0 %v1356
    %1762 = vmatpush.bf16.msra.mxu0 %v1348
    %1763 = vmatpush.bf16.msra.mxu0 %v1340
    %1764 = vmatpush.bf16.msra.mxu0 %v1332
    %1765 = vmatpush.bf16.msra.mxu0 %v1324
    %1766 = vmatpush.bf16.msra.mxu0 %v1316
    %1767 = vmatpush.bf16.msra.mxu0 %v1308
    %1768 = vmatpush.bf16.msra.mxu0 %v1300
    %1769 = vmatmul.bf16.gmra.mxu0 %v191
    %v1770 = vpop.f32.mrf.mxu0
    %v1771 = vadd.f32 %v1758, %v1770
    %v1772 = vpop.f32.mrf.mxu0
    %1773 = vdwg.mxu0
    %1774 = vmatpush.bf16.msra.mxu0 %v1420
    %1775 = vmatpush.bf16.msra.mxu0 %v1412
    %1776 = vmatpush.bf16.msra.mxu0 %v1404
    %1777 = vmatpush.bf16.msra.mxu0 %v1396
    %1778 = vmatpush.bf16.msra.mxu0 %v1388
    %1779 = vmatpush.bf16.msra.mxu0 %v1380
    %1780 = vmatpush.bf16.msra.mxu0 %v1372
    %1781 = vmatpush.bf16.msra.mxu0 %v1364
    %1782 = vmatmul.bf16.gmra.mxu0 %v192
    %v1783 = vpop.f32.mrf.mxu0
    %v1784 = vadd.f32 %v1771, %v1783
    %v1785 = vpop.f32.mrf.mxu0
    %1786 = vdwg.mxu0
    %1787 = vmatpush.bf16.msra.mxu0 %v1484
    %1788 = vmatpush.bf16.msra.mxu0 %v1476
    %1789 = vmatpush.bf16.msra.mxu0 %v1468
    %1790 = vmatpush.bf16.msra.mxu0 %v1460
    %1791 = vmatpush.bf16.msra.mxu0 %v1452
    %1792 = vmatpush.bf16.msra.mxu0 %v1444
    %1793 = vmatpush.bf16.msra.mxu0 %v1436
    %1794 = vmatpush.bf16.msra.mxu0 %v1428
    %1795 = vmatmul.bf16.gmra.mxu0 %v193
    %v1796 = vpop.f32.mrf.mxu0
    %v1797 = vadd.f32 %v1784, %v1796
    %v1798 = vpop.f32.mrf.mxu0
    %1799 = vdwg.mxu0
    %1800 = vmatpush.bf16.msra.mxu0 %v1293
    %1801 = vmatpush.bf16.msra.mxu0 %v1285
    %1802 = vmatpush.bf16.msra.mxu0 %v1277
    %1803 = vmatpush.bf16.msra.mxu0 %v1269
    %1804 = vmatpush.bf16.msra.mxu0 %v1261
    %1805 = vmatpush.bf16.msra.mxu0 %v1253
    %1806 = vmatpush.bf16.msra.mxu0 %v1245
    %1807 = vmatpush.bf16.msra.mxu0 %v1237
    %1808 = vmatmul.bf16.gmra.mxu0 %v190
    %v1809 = vpop.f32.mrf.mxu0
    %v1810 = vadd.f32 %v453, %v1809
    %v1811 = vpop.f32.mrf.mxu0
    %1812 = vdwg.mxu0
    %1813 = vmatpush.bf16.msra.mxu0 %v1357
    %1814 = vmatpush.bf16.msra.mxu0 %v1349
    %1815 = vmatpush.bf16.msra.mxu0 %v1341
    %1816 = vmatpush.bf16.msra.mxu0 %v1333
    %1817 = vmatpush.bf16.msra.mxu0 %v1325
    %1818 = vmatpush.bf16.msra.mxu0 %v1317
    %1819 = vmatpush.bf16.msra.mxu0 %v1309
    %1820 = vmatpush.bf16.msra.mxu0 %v1301
    %1821 = vmatmul.bf16.gmra.mxu0 %v191
    %v1822 = vpop.f32.mrf.mxu0
    %v1823 = vadd.f32 %v1810, %v1822
    %v1824 = vpop.f32.mrf.mxu0
    %1825 = vdwg.mxu0
    %1826 = vmatpush.bf16.msra.mxu0 %v1421
    %1827 = vmatpush.bf16.msra.mxu0 %v1413
    %1828 = vmatpush.bf16.msra.mxu0 %v1405
    %1829 = vmatpush.bf16.msra.mxu0 %v1397
    %1830 = vmatpush.bf16.msra.mxu0 %v1389
    %1831 = vmatpush.bf16.msra.mxu0 %v1381
    %1832 = vmatpush.bf16.msra.mxu0 %v1373
    %1833 = vmatpush.bf16.msra.mxu0 %v1365
    %1834 = vmatmul.bf16.gmra.mxu0 %v192
    %v1835 = vpop.f32.mrf.mxu0
    %v1836 = vadd.f32 %v1823, %v1835
    %v1837 = vpop.f32.mrf.mxu0
    %1838 = vdwg.mxu0
    %1839 = vmatpush.bf16.msra.mxu0 %v1485
    %1840 = vmatpush.bf16.msra.mxu0 %v1477
    %1841 = vmatpush.bf16.msra.mxu0 %v1469
    %1842 = vmatpush.bf16.msra.mxu0 %v1461
    %1843 = vmatpush.bf16.msra.mxu0 %v1453
    %1844 = vmatpush.bf16.msra.mxu0 %v1445
    %1845 = vmatpush.bf16.msra.mxu0 %v1437
    %1846 = vmatpush.bf16.msra.mxu0 %v1429
    %1847 = vmatmul.bf16.gmra.mxu0 %v193
    %v1848 = vpop.f32.mrf.mxu0
    %v1849 = vadd.f32 %v1836, %v1848
    %v1850 = vpop.f32.mrf.mxu0
    %1851 = vdwg.mxu0
    %1852 = vmatpush.bf16.msra.mxu0 %v1294
    %1853 = vmatpush.bf16.msra.mxu0 %v1286
    %1854 = vmatpush.bf16.msra.mxu0 %v1278
    %1855 = vmatpush.bf16.msra.mxu0 %v1270
    %1856 = vmatpush.bf16.msra.mxu0 %v1262
    %1857 = vmatpush.bf16.msra.mxu0 %v1254
    %1858 = vmatpush.bf16.msra.mxu0 %v1246
    %1859 = vmatpush.bf16.msra.mxu0 %v1238
    %1860 = vmatmul.bf16.gmra.mxu0 %v190
    %v1861 = vpop.f32.mrf.mxu0
    %v1862 = vadd.f32 %v454, %v1861
    %v1863 = vpop.f32.mrf.mxu0
    %1864 = vdwg.mxu0
    %1865 = vmatpush.bf16.msra.mxu0 %v1358
    %1866 = vmatpush.bf16.msra.mxu0 %v1350
    %1867 = vmatpush.bf16.msra.mxu0 %v1342
    %1868 = vmatpush.bf16.msra.mxu0 %v1334
    %1869 = vmatpush.bf16.msra.mxu0 %v1326
    %1870 = vmatpush.bf16.msra.mxu0 %v1318
    %1871 = vmatpush.bf16.msra.mxu0 %v1310
    %1872 = vmatpush.bf16.msra.mxu0 %v1302
    %1873 = vmatmul.bf16.gmra.mxu0 %v191
    %v1874 = vpop.f32.mrf.mxu0
    %v1875 = vadd.f32 %v1862, %v1874
    %v1876 = vpop.f32.mrf.mxu0
    %1877 = vdwg.mxu0
    %1878 = vmatpush.bf16.msra.mxu0 %v1422
    %1879 = vmatpush.bf16.msra.mxu0 %v1414
    %1880 = vmatpush.bf16.msra.mxu0 %v1406
    %1881 = vmatpush.bf16.msra.mxu0 %v1398
    %1882 = vmatpush.bf16.msra.mxu0 %v1390
    %1883 = vmatpush.bf16.msra.mxu0 %v1382
    %1884 = vmatpush.bf16.msra.mxu0 %v1374
    %1885 = vmatpush.bf16.msra.mxu0 %v1366
    %1886 = vmatmul.bf16.gmra.mxu0 %v192
    %v1887 = vpop.f32.mrf.mxu0
    %v1888 = vadd.f32 %v1875, %v1887
    %v1889 = vpop.f32.mrf.mxu0
    %1890 = vdwg.mxu0
    %1891 = vmatpush.bf16.msra.mxu0 %v1486
    %1892 = vmatpush.bf16.msra.mxu0 %v1478
    %1893 = vmatpush.bf16.msra.mxu0 %v1470
    %1894 = vmatpush.bf16.msra.mxu0 %v1462
    %1895 = vmatpush.bf16.msra.mxu0 %v1454
    %1896 = vmatpush.bf16.msra.mxu0 %v1446
    %1897 = vmatpush.bf16.msra.mxu0 %v1438
    %1898 = vmatpush.bf16.msra.mxu0 %v1430
    %1899 = vmatmul.bf16.gmra.mxu0 %v193
    %v1900 = vpop.f32.mrf.mxu0
    %v1901 = vadd.f32 %v1888, %v1900
    %v1902 = vpop.f32.mrf.mxu0
    %1903 = vdwg.mxu0
    %1904 = vmatpush.bf16.msra.mxu0 %v1295
    %1905 = vmatpush.bf16.msra.mxu0 %v1287
    %1906 = vmatpush.bf16.msra.mxu0 %v1279
    %1907 = vmatpush.bf16.msra.mxu0 %v1271
    %1908 = vmatpush.bf16.msra.mxu0 %v1263
    %1909 = vmatpush.bf16.msra.mxu0 %v1255
    %1910 = vmatpush.bf16.msra.mxu0 %v1247
    %1911 = vmatpush.bf16.msra.mxu0 %v1239
    %1912 = vmatmul.bf16.gmra.mxu0 %v190
    %v1913 = vpop.f32.mrf.mxu0
    %v1914 = vadd.f32 %v455, %v1913
    %v1915 = vpop.f32.mrf.mxu0
    %1916 = vdwg.mxu0
    %1917 = vmatpush.bf16.msra.mxu0 %v1359
    %1918 = vmatpush.bf16.msra.mxu0 %v1351
    %1919 = vmatpush.bf16.msra.mxu0 %v1343
    %1920 = vmatpush.bf16.msra.mxu0 %v1335
    %1921 = vmatpush.bf16.msra.mxu0 %v1327
    %1922 = vmatpush.bf16.msra.mxu0 %v1319
    %1923 = vmatpush.bf16.msra.mxu0 %v1311
    %1924 = vmatpush.bf16.msra.mxu0 %v1303
    %1925 = vmatmul.bf16.gmra.mxu0 %v191
    %v1926 = vpop.f32.mrf.mxu0
    %v1927 = vadd.f32 %v1914, %v1926
    %v1928 = vpop.f32.mrf.mxu0
    %1929 = vdwg.mxu0
    %1930 = vmatpush.bf16.msra.mxu0 %v1423
    %1931 = vmatpush.bf16.msra.mxu0 %v1415
    %1932 = vmatpush.bf16.msra.mxu0 %v1407
    %1933 = vmatpush.bf16.msra.mxu0 %v1399
    %1934 = vmatpush.bf16.msra.mxu0 %v1391
    %1935 = vmatpush.bf16.msra.mxu0 %v1383
    %1936 = vmatpush.bf16.msra.mxu0 %v1375
    %1937 = vmatpush.bf16.msra.mxu0 %v1367
    %1938 = vmatmul.bf16.gmra.mxu0 %v192
    %v1939 = vpop.f32.mrf.mxu0
    %v1940 = vadd.f32 %v1927, %v1939
    %v1941 = vpop.f32.mrf.mxu0
    %1942 = vdwg.mxu0
    %1943 = vmatpush.bf16.msra.mxu0 %v1487
    %1944 = vmatpush.bf16.msra.mxu0 %v1479
    %1945 = vmatpush.bf16.msra.mxu0 %v1471
    %1946 = vmatpush.bf16.msra.mxu0 %v1463
    %1947 = vmatpush.bf16.msra.mxu0 %v1455
    %1948 = vmatpush.bf16.msra.mxu0 %v1447
    %1949 = vmatpush.bf16.msra.mxu0 %v1439
    %1950 = vmatpush.bf16.msra.mxu0 %v1431
    %1951 = vmatmul.bf16.gmra.mxu0 %v193
    %v1952 = vpop.f32.mrf.mxu0
    %v1953 = vadd.f32 %v1940, %v1952
    %v1954 = vpop.f32.mrf.mxu0
    %1955 = vdwg.mxu0
    %1956 = vmatpush.bf16.msra.mxu0 %v1296
    %1957 = vmatpush.bf16.msra.mxu0 %v1288
    %1958 = vmatpush.bf16.msra.mxu0 %v1280
    %1959 = vmatpush.bf16.msra.mxu0 %v1272
    %1960 = vmatpush.bf16.msra.mxu0 %v1264
    %1961 = vmatpush.bf16.msra.mxu0 %v1256
    %1962 = vmatpush.bf16.msra.mxu0 %v1248
    %1963 = vmatpush.bf16.msra.mxu0 %v1240
    %1964 = vmatmul.bf16.gmra.mxu0 %v190
    %v1965 = vpop.f32.mrf.mxu0
    %v1966 = vadd.f32 %v456, %v1965
    %v1967 = vpop.f32.mrf.mxu0
    %1968 = vdwg.mxu0
    %1969 = vmatpush.bf16.msra.mxu0 %v1360
    %1970 = vmatpush.bf16.msra.mxu0 %v1352
    %1971 = vmatpush.bf16.msra.mxu0 %v1344
    %1972 = vmatpush.bf16.msra.mxu0 %v1336
    %1973 = vmatpush.bf16.msra.mxu0 %v1328
    %1974 = vmatpush.bf16.msra.mxu0 %v1320
    %1975 = vmatpush.bf16.msra.mxu0 %v1312
    %1976 = vmatpush.bf16.msra.mxu0 %v1304
    %1977 = vmatmul.bf16.gmra.mxu0 %v191
    %v1978 = vpop.f32.mrf.mxu0
    %v1979 = vadd.f32 %v1966, %v1978
    %v1980 = vpop.f32.mrf.mxu0
    %1981 = vdwg.mxu0
    %1982 = vmatpush.bf16.msra.mxu0 %v1424
    %1983 = vmatpush.bf16.msra.mxu0 %v1416
    %1984 = vmatpush.bf16.msra.mxu0 %v1408
    %1985 = vmatpush.bf16.msra.mxu0 %v1400
    %1986 = vmatpush.bf16.msra.mxu0 %v1392
    %1987 = vmatpush.bf16.msra.mxu0 %v1384
    %1988 = vmatpush.bf16.msra.mxu0 %v1376
    %1989 = vmatpush.bf16.msra.mxu0 %v1368
    %1990 = vmatmul.bf16.gmra.mxu0 %v192
    %v1991 = vpop.f32.mrf.mxu0
    %v1992 = vadd.f32 %v1979, %v1991
    %v1993 = vpop.f32.mrf.mxu0
    %1994 = vdwg.mxu0
    %1995 = vmatpush.bf16.msra.mxu0 %v1488
    %1996 = vmatpush.bf16.msra.mxu0 %v1480
    %1997 = vmatpush.bf16.msra.mxu0 %v1472
    %1998 = vmatpush.bf16.msra.mxu0 %v1464
    %1999 = vmatpush.bf16.msra.mxu0 %v1456
    %2000 = vmatpush.bf16.msra.mxu0 %v1448
    %2001 = vmatpush.bf16.msra.mxu0 %v1440
    %2002 = vmatpush.bf16.msra.mxu0 %v1432
    %2003 = vmatmul.bf16.gmra.mxu0 %v193
    %v2004 = vpop.f32.mrf.mxu0
    %v2005 = vadd.f32 %v1992, %v2004
    %v2006 = vpop.f32.mrf.mxu0
    %2007 = vdwg.mxu0
    %2008 = vmatpush.bf16.msra.mxu0 %v1297
    %2009 = vmatpush.bf16.msra.mxu0 %v1289
    %2010 = vmatpush.bf16.msra.mxu0 %v1281
    %2011 = vmatpush.bf16.msra.mxu0 %v1273
    %2012 = vmatpush.bf16.msra.mxu0 %v1265
    %2013 = vmatpush.bf16.msra.mxu0 %v1257
    %2014 = vmatpush.bf16.msra.mxu0 %v1249
    %2015 = vmatpush.bf16.msra.mxu0 %v1241
    %2016 = vmatmul.bf16.gmra.mxu0 %v190
    %v2017 = vpop.f32.mrf.mxu0
    %v2018 = vadd.f32 %v457, %v2017
    %v2019 = vpop.f32.mrf.mxu0
    %2020 = vdwg.mxu0
    %2021 = vmatpush.bf16.msra.mxu0 %v1361
    %2022 = vmatpush.bf16.msra.mxu0 %v1353
    %2023 = vmatpush.bf16.msra.mxu0 %v1345
    %2024 = vmatpush.bf16.msra.mxu0 %v1337
    %2025 = vmatpush.bf16.msra.mxu0 %v1329
    %2026 = vmatpush.bf16.msra.mxu0 %v1321
    %2027 = vmatpush.bf16.msra.mxu0 %v1313
    %2028 = vmatpush.bf16.msra.mxu0 %v1305
    %2029 = vmatmul.bf16.gmra.mxu0 %v191
    %v2030 = vpop.f32.mrf.mxu0
    %v2031 = vadd.f32 %v2018, %v2030
    %v2032 = vpop.f32.mrf.mxu0
    %2033 = vdwg.mxu0
    %2034 = vmatpush.bf16.msra.mxu0 %v1425
    %2035 = vmatpush.bf16.msra.mxu0 %v1417
    %2036 = vmatpush.bf16.msra.mxu0 %v1409
    %2037 = vmatpush.bf16.msra.mxu0 %v1401
    %2038 = vmatpush.bf16.msra.mxu0 %v1393
    %2039 = vmatpush.bf16.msra.mxu0 %v1385
    %2040 = vmatpush.bf16.msra.mxu0 %v1377
    %2041 = vmatpush.bf16.msra.mxu0 %v1369
    %2042 = vmatmul.bf16.gmra.mxu0 %v192
    %v2043 = vpop.f32.mrf.mxu0
    %v2044 = vadd.f32 %v2031, %v2043
    %v2045 = vpop.f32.mrf.mxu0
    %2046 = vdwg.mxu0
    %2047 = vmatpush.bf16.msra.mxu0 %v1489
    %2048 = vmatpush.bf16.msra.mxu0 %v1481
    %2049 = vmatpush.bf16.msra.mxu0 %v1473
    %2050 = vmatpush.bf16.msra.mxu0 %v1465
    %2051 = vmatpush.bf16.msra.mxu0 %v1457
    %2052 = vmatpush.bf16.msra.mxu0 %v1449
    %2053 = vmatpush.bf16.msra.mxu0 %v1441
    %2054 = vmatpush.bf16.msra.mxu0 %v1433
    %2055 = vmatmul.bf16.gmra.mxu0 %v193
    %v2056 = vpop.f32.mrf.mxu0
    %v2057 = vadd.f32 %v2044, %v2056
    %v2058 = vpop.f32.mrf.mxu0
    %2059 = vdwg.mxu0
    %2060 = vmatpush.bf16.msra.mxu0 %v1298
    %2061 = vmatpush.bf16.msra.mxu0 %v1290
    %2062 = vmatpush.bf16.msra.mxu0 %v1282
    %2063 = vmatpush.bf16.msra.mxu0 %v1274
    %2064 = vmatpush.bf16.msra.mxu0 %v1266
    %2065 = vmatpush.bf16.msra.mxu0 %v1258
    %2066 = vmatpush.bf16.msra.mxu0 %v1250
    %2067 = vmatpush.bf16.msra.mxu0 %v1242
    %2068 = vmatmul.bf16.gmra.mxu0 %v190
    %v2069 = vpop.f32.mrf.mxu0
    %v2070 = vadd.f32 %v458, %v2069
    %v2071 = vpop.f32.mrf.mxu0
    %2072 = vdwg.mxu0
    %2073 = vmatpush.bf16.msra.mxu0 %v1362
    %2074 = vmatpush.bf16.msra.mxu0 %v1354
    %2075 = vmatpush.bf16.msra.mxu0 %v1346
    %2076 = vmatpush.bf16.msra.mxu0 %v1338
    %2077 = vmatpush.bf16.msra.mxu0 %v1330
    %2078 = vmatpush.bf16.msra.mxu0 %v1322
    %2079 = vmatpush.bf16.msra.mxu0 %v1314
    %2080 = vmatpush.bf16.msra.mxu0 %v1306
    %2081 = vmatmul.bf16.gmra.mxu0 %v191
    %v2082 = vpop.f32.mrf.mxu0
    %v2083 = vadd.f32 %v2070, %v2082
    %v2084 = vpop.f32.mrf.mxu0
    %2085 = vdwg.mxu0
    %2086 = vmatpush.bf16.msra.mxu0 %v1426
    %2087 = vmatpush.bf16.msra.mxu0 %v1418
    %2088 = vmatpush.bf16.msra.mxu0 %v1410
    %2089 = vmatpush.bf16.msra.mxu0 %v1402
    %2090 = vmatpush.bf16.msra.mxu0 %v1394
    %2091 = vmatpush.bf16.msra.mxu0 %v1386
    %2092 = vmatpush.bf16.msra.mxu0 %v1378
    %2093 = vmatpush.bf16.msra.mxu0 %v1370
    %2094 = vmatmul.bf16.gmra.mxu0 %v192
    %v2095 = vpop.f32.mrf.mxu0
    %v2096 = vadd.f32 %v2083, %v2095
    %v2097 = vpop.f32.mrf.mxu0
    %2098 = vdwg.mxu0
    %2099 = vmatpush.bf16.msra.mxu0 %v1490
    %2100 = vmatpush.bf16.msra.mxu0 %v1482
    %2101 = vmatpush.bf16.msra.mxu0 %v1474
    %2102 = vmatpush.bf16.msra.mxu0 %v1466
    %2103 = vmatpush.bf16.msra.mxu0 %v1458
    %2104 = vmatpush.bf16.msra.mxu0 %v1450
    %2105 = vmatpush.bf16.msra.mxu0 %v1442
    %2106 = vmatpush.bf16.msra.mxu0 %v1434
    %2107 = vmatmul.bf16.gmra.mxu0 %v193
    %v2108 = vpop.f32.mrf.mxu0
    %v2109 = vadd.f32 %v2096, %v2108
    %v2110 = vpop.f32.mrf.mxu0
    %2111 = vdwg.mxu0
    %2112 = vmatpush.bf16.msra.mxu0 %v1299
    %2113 = vmatpush.bf16.msra.mxu0 %v1291
    %2114 = vmatpush.bf16.msra.mxu0 %v1283
    %2115 = vmatpush.bf16.msra.mxu0 %v1275
    %2116 = vmatpush.bf16.msra.mxu0 %v1267
    %2117 = vmatpush.bf16.msra.mxu0 %v1259
    %2118 = vmatpush.bf16.msra.mxu0 %v1251
    %2119 = vmatpush.bf16.msra.mxu0 %v1243
    %2120 = vmatmul.bf16.gmra.mxu0 %v190
    %v2121 = vpop.f32.mrf.mxu0
    %v2122 = vadd.f32 %v459, %v2121
    %v2123 = vpop.f32.mrf.mxu0
    %2124 = vdwg.mxu0
    %2125 = vmatpush.bf16.msra.mxu0 %v1363
    %2126 = vmatpush.bf16.msra.mxu0 %v1355
    %2127 = vmatpush.bf16.msra.mxu0 %v1347
    %2128 = vmatpush.bf16.msra.mxu0 %v1339
    %2129 = vmatpush.bf16.msra.mxu0 %v1331
    %2130 = vmatpush.bf16.msra.mxu0 %v1323
    %2131 = vmatpush.bf16.msra.mxu0 %v1315
    %2132 = vmatpush.bf16.msra.mxu0 %v1307
    %2133 = vmatmul.bf16.gmra.mxu0 %v191
    %v2134 = vpop.f32.mrf.mxu0
    %v2135 = vadd.f32 %v2122, %v2134
    %v2136 = vpop.f32.mrf.mxu0
    %2137 = vdwg.mxu0
    %2138 = vmatpush.bf16.msra.mxu0 %v1427
    %2139 = vmatpush.bf16.msra.mxu0 %v1419
    %2140 = vmatpush.bf16.msra.mxu0 %v1411
    %2141 = vmatpush.bf16.msra.mxu0 %v1403
    %2142 = vmatpush.bf16.msra.mxu0 %v1395
    %2143 = vmatpush.bf16.msra.mxu0 %v1387
    %2144 = vmatpush.bf16.msra.mxu0 %v1379
    %2145 = vmatpush.bf16.msra.mxu0 %v1371
    %2146 = vmatmul.bf16.gmra.mxu0 %v192
    %v2147 = vpop.f32.mrf.mxu0
    %v2148 = vadd.f32 %v2135, %v2147
    %v2149 = vpop.f32.mrf.mxu0
    %2150 = vdwg.mxu0
    %2151 = vmatpush.bf16.msra.mxu0 %v1491
    %2152 = vmatpush.bf16.msra.mxu0 %v1483
    %2153 = vmatpush.bf16.msra.mxu0 %v1475
    %2154 = vmatpush.bf16.msra.mxu0 %v1467
    %2155 = vmatpush.bf16.msra.mxu0 %v1459
    %2156 = vmatpush.bf16.msra.mxu0 %v1451
    %2157 = vmatpush.bf16.msra.mxu0 %v1443
    %2158 = vmatpush.bf16.msra.mxu0 %v1435
    %2159 = vmatmul.bf16.gmra.mxu0 %v193
    %v2160 = vpop.f32.mrf.mxu0
    %v2161 = vadd.f32 %v2148, %v2160
    %v2162 = vpop.f32.mrf.mxu0
    %2163 = vdwg.mxu0
    %vm2164 = vcmp.ge.f32.partialorder %v1797, 0.0
    %vm2165 = vcmp.ge.f32.partialorder %v1849, 0.0
    %vm2166 = vcmp.ge.f32.partialorder %v1901, 0.0
    %vm2167 = vcmp.ge.f32.partialorder %v1953, 0.0
    %vm2168 = vcmp.ge.f32.partialorder %v2005, 0.0
    %vm2169 = vcmp.ge.f32.partialorder %v2057, 0.0
    %vm2170 = vcmp.ge.f32.partialorder %v2109, 0.0
    %vm2171 = vcmp.ge.f32.partialorder %v2161, 0.0
    %v2172 = vmul.f32 %v1797, 0.2
    %v2173 = vmul.f32 %v1849, 0.2
    %v2174 = vmul.f32 %v1901, 0.2
    %v2175 = vmul.f32 %v1953, 0.2
    %v2176 = vmul.f32 %v2005, 0.2
    %v2177 = vmul.f32 %v2057, 0.2
    %v2178 = vmul.f32 %v2109, 0.2
    %v2179 = vmul.f32 %v2161, 0.2
    %v2180 = vsel %vm2164, %v1797, %v2172
    %v2181 = vsel %vm2165, %v1849, %v2173
    %v2182 = vsel %vm2166, %v1901, %v2174
    %v2183 = vsel %vm2167, %v1953, %v2175
    %v2184 = vsel %vm2168, %v2005, %v2176
    %v2185 = vsel %vm2169, %v2057, %v2177
    %v2186 = vsel %vm2170, %v2109, %v2178
    %v2187 = vsel %vm2171, %v2161, %v2179
    %v2188 = vld [vmem:[#allocation11] sm:$0xff]
    %v2189 = vld [vmem:[#allocation13] sm:$0xff]
    %v2190 = vrot.slane %v2180, 4
    %v2191 = vadd.f32 %v2180, %v2190
    %v2192 = vrot.slane %v2191, 2
    %v2193 = vadd.f32 %v2191, %v2192
    %v2194 = vrot.slane %v2193, 1
    %v2195 = vadd.f32 %v2193, %v2194
    %v2196 = vrot.slane %v2181, 4
    %v2197 = vadd.f32 %v2181, %v2196
    %v2198 = vrot.slane %v2197, 2
    %v2199 = vadd.f32 %v2197, %v2198
    %v2200 = vrot.slane %v2199, 1
    %v2201 = vadd.f32 %v2199, %v2200
    %v2202 = vrot.slane %v2182, 4
    %v2203 = vadd.f32 %v2182, %v2202
    %v2204 = vrot.slane %v2203, 2
    %v2205 = vadd.f32 %v2203, %v2204
    %v2206 = vrot.slane %v2205, 1
    %v2207 = vadd.f32 %v2205, %v2206
    %v2208 = vrot.slane %v2183, 4
    %v2209 = vadd.f32 %v2183, %v2208
    %v2210 = vrot.slane %v2209, 2
    %v2211 = vadd.f32 %v2209, %v2210
    %v2212 = vrot.slane %v2211, 1
    %v2213 = vadd.f32 %v2211, %v2212
    %v2214 = vrot.slane %v2184, 4
    %v2215 = vadd.f32 %v2184, %v2214
    %v2216 = vrot.slane %v2215, 2
    %v2217 = vadd.f32 %v2215, %v2216
    %v2218 = vrot.slane %v2217, 1
    %v2219 = vadd.f32 %v2217, %v2218
    %v2220 = vrot.slane %v2185, 4
    %v2221 = vadd.f32 %v2185, %v2220
    %v2222 = vrot.slane %v2221, 2
    %v2223 = vadd.f32 %v2221, %v2222
    %v2224 = vrot.slane %v2223, 1
    %v2225 = vadd.f32 %v2223, %v2224
    %v2226 = vrot.slane %v2186, 4
    %v2227 = vadd.f32 %v2186, %v2226
    %v2228 = vrot.slane %v2227, 2
    %v2229 = vadd.f32 %v2227, %v2228
    %v2230 = vrot.slane %v2229, 1
    %v2231 = vadd.f32 %v2229, %v2230
    %v2232 = vrot.slane %v2187, 4
    %v2233 = vadd.f32 %v2187, %v2232
    %v2234 = vrot.slane %v2233, 2
    %v2235 = vadd.f32 %v2233, %v2234
    %v2236 = vrot.slane %v2235, 1
    %v2237 = vadd.f32 %v2235, %v2236
    %v2238 = vrcp.pop 8.0
    %v2239 = vmul.f32 8.0, %v2238
    %v2240 = vsub.f32 1.0, %v2239
    %v2241 = vmul.f32 %v2238, %v2240
    %v2242 = vadd.f32 %v2238, %v2241
    %vm2243 = vweird.f32 %v2238
    %v2244 = vsel %vm2243, %v2238, %v2242
    %v2245 = vmul.f32 %v2195, %v2244
    %v2246 = vmul.f32 %v2201, %v2244
    %v2247 = vmul.f32 %v2207, %v2244
    %v2248 = vmul.f32 %v2213, %v2244
    %v2249 = vmul.f32 %v2219, %v2244
    %v2250 = vmul.f32 %v2225, %v2244
    %v2251 = vmul.f32 %v2231, %v2244
    %v2252 = vmul.f32 %v2237, %v2244
    %v2253 = vmul.f32 %v2180, %v2180
    %v2254 = vmul.f32 %v2181, %v2181
    %v2255 = vmul.f32 %v2182, %v2182
    %v2256 = vmul.f32 %v2183, %v2183
    %v2257 = vmul.f32 %v2184, %v2184
    %v2258 = vmul.f32 %v2185, %v2185
    %v2259 = vmul.f32 %v2186, %v2186
    %v2260 = vmul.f32 %v2187, %v2187
    %v2261 = vrot.slane %v2253, 4
    %v2262 = vadd.f32 %v2253, %v2261
    %v2263 = vrot.slane %v2262, 2
    %v2264 = vadd.f32 %v2262, %v2263
    %v2265 = vrot.slane %v2264, 1
    %v2266 = vadd.f32 %v2264, %v2265
    %v2267 = vrot.slane %v2254, 4
    %v2268 = vadd.f32 %v2254, %v2267
    %v2269 = vrot.slane %v2268, 2
    %v2270 = vadd.f32 %v2268, %v2269
    %v2271 = vrot.slane %v2270, 1
    %v2272 = vadd.f32 %v2270, %v2271
    %v2273 = vrot.slane %v2255, 4
    %v2274 = vadd.f32 %v2255, %v2273
    %v2275 = vrot.slane %v2274, 2
    %v2276 = vadd.f32 %v2274, %v2275
    %v2277 = vrot.slane %v2276, 1
    %v2278 = vadd.f32 %v2276, %v2277
    %v2279 = vrot.slane %v2256, 4
    %v2280 = vadd.f32 %v2256, %v2279
    %v2281 = vrot.slane %v2280, 2
    %v2282 = vadd.f32 %v2280, %v2281
    %v2283 = vrot.slane %v2282, 1
    %v2284 = vadd.f32 %v2282, %v2283
    %v2285 = vrot.slane %v2257, 4
    %v2286 = vadd.f32 %v2257, %v2285
    %v2287 = vrot.slane %v2286, 2
    %v2288 = vadd.f32 %v2286, %v2287
    %v2289 = vrot.slane %v2288, 1
    %v2290 = vadd.f32 %v2288, %v2289
    %v2291 = vrot.slane %v2258, 4
    %v2292 = vadd.f32 %v2258, %v2291
    %v2293 = vrot.slane %v2292, 2
    %v2294 = vadd.f32 %v2292, %v2293
    %v2295 = vrot.slane %v2294, 1
    %v2296 = vadd.f32 %v2294, %v2295
    %v2297 = vrot.slane %v2259, 4
    %v2298 = vadd.f32 %v2259, %v2297
    %v2299 = vrot.slane %v2298, 2
    %v2300 = vadd.f32 %v2298, %v2299
    %v2301 = vrot.slane %v2300, 1
    %v2302 = vadd.f32 %v2300, %v2301
    %v2303 = vrot.slane %v2260, 4
    %v2304 = vadd.f32 %v2260, %v2303
    %v2305 = vrot.slane %v2304, 2
    %v2306 = vadd.f32 %v2304, %v2305
    %v2307 = vrot.slane %v2306, 1
    %v2308 = vadd.f32 %v2306, %v2307
    %v2309 = vmul.f32 %v2266, %v2244
    %v2310 = vmul.f32 %v2272, %v2244
    %v2311 = vmul.f32 %v2278, %v2244
    %v2312 = vmul.f32 %v2284, %v2244
    %v2313 = vmul.f32 %v2290, %v2244
    %v2314 = vmul.f32 %v2296, %v2244
    %v2315 = vmul.f32 %v2302, %v2244
    %v2316 = vmul.f32 %v2308, %v2244
    %v2317 = vmul.f32 %v2245, %v2245
    %v2318 = vmul.f32 %v2246, %v2246
    %v2319 = vmul.f32 %v2247, %v2247
    %v2320 = vmul.f32 %v2248, %v2248
    %v2321 = vmul.f32 %v2249, %v2249
    %v2322 = vmul.f32 %v2250, %v2250
    %v2323 = vmul.f32 %v2251, %v2251
    %v2324 = vmul.f32 %v2252, %v2252
    %v2325 = vsub.f32 %v2309, %v2317
    %v2326 = vsub.f32 %v2310, %v2318
    %v2327 = vsub.f32 %v2311, %v2319
    %v2328 = vsub.f32 %v2312, %v2320
    %v2329 = vsub.f32 %v2313, %v2321
    %v2330 = vsub.f32 %v2314, %v2322
    %v2331 = vsub.f32 %v2315, %v2323
    %v2332 = vsub.f32 %v2316, %v2324
    %v2333 = vmax.f32 %v2325, 0.0
    %v2334 = vmax.f32 %v2326, 0.0
    %v2335 = vmax.f32 %v2327, 0.0
    %v2336 = vmax.f32 %v2328, 0.0
    %v2337 = vmax.f32 %v2329, 0.0
    %v2338 = vmax.f32 %v2330, 0.0
    %v2339 = vmax.f32 %v2331, 0.0
    %v2340 = vmax.f32 %v2332, 0.0
    %v2341 = vadd.f32 %v2333, 1e-05
    %v2342 = vadd.f32 %v2334, 1e-05
    %v2343 = vadd.f32 %v2335, 1e-05
    %v2344 = vadd.f32 %v2336, 1e-05
    %v2345 = vadd.f32 %v2337, 1e-05
    %v2346 = vadd.f32 %v2338, 1e-05
    %v2347 = vadd.f32 %v2339, 1e-05
    %v2348 = vadd.f32 %v2340, 1e-05
    %v2349 = vrsqrt.pop %v2341
    %v2350 = vmul.f32 %v2349, %v2341
    %v2351 = vmul.f32 %v2350, %v2349
    %v2352 = vmul.f32 0.5, %v2351
    %v2353 = vsub.f32 1.5, %v2352
    %v2354 = vmul.f32 %v2349, %v2353
    %vm2355 = vweird.f32 %v2341
    %vm2356 = vweird.f32 %v2349
    %vm2357 = vmor %vm2355, %vm2356
    %v2358 = vsel %vm2357, %v2349, %v2354
    %v2359 = vrsqrt.pop %v2342
    %v2360 = vmul.f32 %v2359, %v2342
    %v2361 = vmul.f32 %v2360, %v2359
    %v2362 = vmul.f32 0.5, %v2361
    %v2363 = vsub.f32 1.5, %v2362
    %v2364 = vmul.f32 %v2359, %v2363
    %vm2365 = vweird.f32 %v2342
    %vm2366 = vweird.f32 %v2359
    %vm2367 = vmor %vm2365, %vm2366
    %v2368 = vsel %vm2367, %v2359, %v2364
    %v2369 = vrsqrt.pop %v2343
    %v2370 = vmul.f32 %v2369, %v2343
    %v2371 = vmul.f32 %v2370, %v2369
    %v2372 = vmul.f32 0.5, %v2371
    %v2373 = vsub.f32 1.5, %v2372
    %v2374 = vmul.f32 %v2369, %v2373
    %vm2375 = vweird.f32 %v2343
    %vm2376 = vweird.f32 %v2369
    %vm2377 = vmor %vm2375, %vm2376
    %v2378 = vsel %vm2377, %v2369, %v2374
    %v2379 = vrsqrt.pop %v2344
    %v2380 = vmul.f32 %v2379, %v2344
    %v2381 = vmul.f32 %v2380, %v2379
    %v2382 = vmul.f32 0.5, %v2381
    %v2383 = vsub.f32 1.5, %v2382
    %v2384 = vmul.f32 %v2379, %v2383
    %vm2385 = vweird.f32 %v2344
    %vm2386 = vweird.f32 %v2379
    %vm2387 = vmor %vm2385, %vm2386
    %v2388 = vsel %vm2387, %v2379, %v2384
    %v2389 = vrsqrt.pop %v2345
    %v2390 = vmul.f32 %v2389, %v2345
    %v2391 = vmul.f32 %v2390, %v2389
    %v2392 = vmul.f32 0.5, %v2391
    %v2393 = vsub.f32 1.5, %v2392
    %v2394 = vmul.f32 %v2389, %v2393
    %vm2395 = vweird.f32 %v2345
    %vm2396 = vweird.f32 %v2389
    %vm2397 = vmor %vm2395, %vm2396
    %v2398 = vsel %vm2397, %v2389, %v2394
    %v2399 = vrsqrt.pop %v2346
    %v2400 = vmul.f32 %v2399, %v2346
    %v2401 = vmul.f32 %v2400, %v2399
    %v2402 = vmul.f32 0.5, %v2401
    %v2403 = vsub.f32 1.5, %v2402
    %v2404 = vmul.f32 %v2399, %v2403
    %vm2405 = vweird.f32 %v2346
    %vm2406 = vweird.f32 %v2399
    %vm2407 = vmor %vm2405, %vm2406
    %v2408 = vsel %vm2407, %v2399, %v2404
    %v2409 = vrsqrt.pop %v2347
    %v2410 = vmul.f32 %v2409, %v2347
    %v2411 = vmul.f32 %v2410, %v2409
    %v2412 = vmul.f32 0.5, %v2411
    %v2413 = vsub.f32 1.5, %v2412
    %v2414 = vmul.f32 %v2409, %v2413
    %vm2415 = vweird.f32 %v2347
    %vm2416 = vweird.f32 %v2409
    %vm2417 = vmor %vm2415, %vm2416
    %v2418 = vsel %vm2417, %v2409, %v2414
    %v2419 = vrsqrt.pop %v2348
    %v2420 = vmul.f32 %v2419, %v2348
    %v2421 = vmul.f32 %v2420, %v2419
    %v2422 = vmul.f32 0.5, %v2421
    %v2423 = vsub.f32 1.5, %v2422
    %v2424 = vmul.f32 %v2419, %v2423
    %vm2425 = vweird.f32 %v2348
    %vm2426 = vweird.f32 %v2419
    %vm2427 = vmor %vm2425, %vm2426
    %v2428 = vsel %vm2427, %v2419, %v2424
    %v2429 = vsub.f32 %v2180, %v2245
    %v2430 = vsub.f32 %v2181, %v2246
    %v2431 = vsub.f32 %v2182, %v2247
    %v2432 = vsub.f32 %v2183, %v2248
    %v2433 = vsub.f32 %v2184, %v2249
    %v2434 = vsub.f32 %v2185, %v2250
    %v2435 = vsub.f32 %v2186, %v2251
    %v2436 = vsub.f32 %v2187, %v2252
    %v2437 = vmul.f32 %v2429, %v2358
    %v2438 = vmul.f32 %v2430, %v2368
    %v2439 = vmul.f32 %v2431, %v2378
    %v2440 = vmul.f32 %v2432, %v2388
    %v2441 = vmul.f32 %v2433, %v2398
    %v2442 = vmul.f32 %v2434, %v2408
    %v2443 = vmul.f32 %v2435, %v2418
    %v2444 = vmul.f32 %v2436, %v2428
    %v2446 = vperm.slane %v2188, 0
    %v2447 = vperm.slane %v2188, 1
    %v2448 = vperm.slane %v2188, 2
    %v2449 = vperm.slane %v2188, 3
    %v2450 = vperm.slane %v2188, 4
    %v2451 = vperm.slane %v2188, 5
    %v2452 = vperm.slane %v2188, 6
    %v2453 = vperm.slane %v2188, 7
    %v2462 = vmul.f32 %v2437, %v2446
    %v2463 = vmul.f32 %v2438, %v2447
    %v2464 = vmul.f32 %v2439, %v2448
    %v2465 = vmul.f32 %v2440, %v2449
    %v2466 = vmul.f32 %v2441, %v2450
    %v2467 = vmul.f32 %v2442, %v2451
    %v2468 = vmul.f32 %v2443, %v2452
    %v2469 = vmul.f32 %v2444, %v2453
    %v2471 = vperm.slane %v2189, 0
    %v2472 = vperm.slane %v2189, 1
    %v2473 = vperm.slane %v2189, 2
    %v2474 = vperm.slane %v2189, 3
    %v2475 = vperm.slane %v2189, 4
    %v2476 = vperm.slane %v2189, 5
    %v2477 = vperm.slane %v2189, 6
    %v2478 = vperm.slane %v2189, 7
    %v2487 = vadd.f32 %v2462, %v2471
    %v2488 = vadd.f32 %v2463, %v2472
    %v2489 = vadd.f32 %v2464, %v2473
    %v2490 = vadd.f32 %v2465, %v2474
    %v2491 = vadd.f32 %v2466, %v2475
    %v2492 = vadd.f32 %v2467, %v2476
    %v2493 = vadd.f32 %v2468, %v2477
    %v2494 = vadd.f32 %v2469, %v2478
    %s2495 = smul.u32 4, 128
    %s2496 = smul.u32 %s2495, 8
    %s2497 = sshll.u32 %s2496, 4
    %2498 = dma.done [#allocation4], %s2497
    %v2499 = vpack.c.bf16 %v2487, %v2487
    %v2500 = vpack.c.bf16 %v2488, %v2488
    %v2501 = vpack.c.bf16 %v2489, %v2489
    %v2502 = vpack.c.bf16 %v2490, %v2490
    %v2503 = vpack.c.bf16 %v2491, %v2491
    %v2504 = vpack.c.bf16 %v2492, %v2492
    %v2505 = vpack.c.bf16 %v2493, %v2493
    %v2506 = vpack.c.bf16 %v2494, %v2494
    %v2507 = vld [vmem:[#allocation2] sm:$0xff]
    %v2508 = vld [vmem:[#allocation2 + $0x8] sm:$0xff]
    %v2509 = vld [vmem:[#allocation2 + $0x10] sm:$0xff]
    %v2510 = vld [vmem:[#allocation2 + $0x18] sm:$0xff]
    %v2511 = vld [vmem:[#allocation2 + $0x20] sm:$0xff]
    %v2512 = vld [vmem:[#allocation2 + $0x28] sm:$0xff]
    %v2513 = vld [vmem:[#allocation2 + $0x30] sm:$0xff]
    %v2514 = vld [vmem:[#allocation2 + $0x38] sm:$0xff]
    %v2515 = vld [vmem:[#allocation2 + $0x40] sm:$0xff]
    %v2516 = vld [vmem:[#allocation2 + $0x48] sm:$0xff]
    %v2517 = vld [vmem:[#allocation2 + $0x50] sm:$0xff]
    %v2518 = vld [vmem:[#allocation2 + $0x58] sm:$0xff]
    %v2519 = vld [vmem:[#allocation2 + $0x60] sm:$0xff]
    %v2520 = vld [vmem:[#allocation2 + $0x68] sm:$0xff]
    %v2521 = vld [vmem:[#allocation2 + $0x70] sm:$0xff]
    %v2522 = vld [vmem:[#allocation2 + $0x78] sm:$0xff]
    %v2523 = vld [vmem:[#allocation2 + $0x80] sm:$0xff]
    %v2524 = vld [vmem:[#allocation2 + $0x88] sm:$0xff]
    %v2525 = vld [vmem:[#allocation2 + $0x90] sm:$0xff]
    %v2526 = vld [vmem:[#allocation2 + $0x98] sm:$0xff]
    %v2527 = vld [vmem:[#allocation2 + $0xa0] sm:$0xff]
    %v2528 = vld [vmem:[#allocation2 + $0xa8] sm:$0xff]
    %v2529 = vld [vmem:[#allocation2 + $0xb0] sm:$0xff]
    %v2530 = vld [vmem:[#allocation2 + $0xb8] sm:$0xff]
    %v2531 = vld [vmem:[#allocation2 + $0xc0] sm:$0xff]
    %v2532 = vld [vmem:[#allocation2 + $0xc8] sm:$0xff]
    %v2533 = vld [vmem:[#allocation2 + $0xd0] sm:$0xff]
    %v2534 = vld [vmem:[#allocation2 + $0xd8] sm:$0xff]
    %v2535 = vld [vmem:[#allocation2 + $0xe0] sm:$0xff]
    %v2536 = vld [vmem:[#allocation2 + $0xe8] sm:$0xff]
    %v2537 = vld [vmem:[#allocation2 + $0xf0] sm:$0xff]
    %v2538 = vld [vmem:[#allocation2 + $0xf8] sm:$0xff]
    %v2539 = vld [vmem:[#allocation2 + $0x100] sm:$0xff]
    %v2540 = vld [vmem:[#allocation2 + $0x108] sm:$0xff]
    %v2541 = vld [vmem:[#allocation2 + $0x110] sm:$0xff]
    %v2542 = vld [vmem:[#allocation2 + $0x118] sm:$0xff]
    %v2543 = vld [vmem:[#allocation2 + $0x120] sm:$0xff]
    %v2544 = vld [vmem:[#allocation2 + $0x128] sm:$0xff]
    %v2545 = vld [vmem:[#allocation2 + $0x130] sm:$0xff]
    %v2546 = vld [vmem:[#allocation2 + $0x138] sm:$0xff]
    %v2547 = vld [vmem:[#allocation2 + $0x140] sm:$0xff]
    %v2548 = vld [vmem:[#allocation2 + $0x148] sm:$0xff]
    %v2549 = vld [vmem:[#allocation2 + $0x150] sm:$0xff]
    %v2550 = vld [vmem:[#allocation2 + $0x158] sm:$0xff]
    %v2551 = vld [vmem:[#allocation2 + $0x160] sm:$0xff]
    %v2552 = vld [vmem:[#allocation2 + $0x168] sm:$0xff]
    %v2553 = vld [vmem:[#allocation2 + $0x170] sm:$0xff]
    %v2554 = vld [vmem:[#allocation2 + $0x178] sm:$0xff]
    %v2555 = vld [vmem:[#allocation2 + $0x180] sm:$0xff]
    %v2556 = vld [vmem:[#allocation2 + $0x188] sm:$0xff]
    %v2557 = vld [vmem:[#allocation2 + $0x190] sm:$0xff]
    %v2558 = vld [vmem:[#allocation2 + $0x198] sm:$0xff]
    %v2559 = vld [vmem:[#allocation2 + $0x1a0] sm:$0xff]
    %v2560 = vld [vmem:[#allocation2 + $0x1a8] sm:$0xff]
    %v2561 = vld [vmem:[#allocation2 + $0x1b0] sm:$0xff]
    %v2562 = vld [vmem:[#allocation2 + $0x1b8] sm:$0xff]
    %v2563 = vld [vmem:[#allocation2 + $0x1c0] sm:$0xff]
    %v2564 = vld [vmem:[#allocation2 + $0x1c8] sm:$0xff]
    %v2565 = vld [vmem:[#allocation2 + $0x1d0] sm:$0xff]
    %v2566 = vld [vmem:[#allocation2 + $0x1d8] sm:$0xff]
    %v2567 = vld [vmem:[#allocation2 + $0x1e0] sm:$0xff]
    %v2568 = vld [vmem:[#allocation2 + $0x1e8] sm:$0xff]
    %v2569 = vld [vmem:[#allocation2 + $0x1f0] sm:$0xff]
    %v2570 = vld [vmem:[#allocation2 + $0x1f8] sm:$0xff]
    %v2571 = vld [vmem:[#allocation2 + $0x200] sm:$0xff]
    %v2572 = vld [vmem:[#allocation2 + $0x208] sm:$0xff]
    %v2573 = vld [vmem:[#allocation2 + $0x210] sm:$0xff]
    %v2574 = vld [vmem:[#allocation2 + $0x218] sm:$0xff]
    %v2575 = vld [vmem:[#allocation2 + $0x220] sm:$0xff]
    %v2576 = vld [vmem:[#allocation2 + $0x228] sm:$0xff]
    %v2577 = vld [vmem:[#allocation2 + $0x230] sm:$0xff]
    %v2578 = vld [vmem:[#allocation2 + $0x238] sm:$0xff]
    %v2579 = vld [vmem:[#allocation2 + $0x240] sm:$0xff]
    %v2580 = vld [vmem:[#allocation2 + $0x248] sm:$0xff]
    %v2581 = vld [vmem:[#allocation2 + $0x250] sm:$0xff]
    %v2582 = vld [vmem:[#allocation2 + $0x258] sm:$0xff]
    %v2583 = vld [vmem:[#allocation2 + $0x260] sm:$0xff]
    %v2584 = vld [vmem:[#allocation2 + $0x268] sm:$0xff]
    %v2585 = vld [vmem:[#allocation2 + $0x270] sm:$0xff]
    %v2586 = vld [vmem:[#allocation2 + $0x278] sm:$0xff]
    %v2587 = vld [vmem:[#allocation2 + $0x280] sm:$0xff]
    %v2588 = vld [vmem:[#allocation2 + $0x288] sm:$0xff]
    %v2589 = vld [vmem:[#allocation2 + $0x290] sm:$0xff]
    %v2590 = vld [vmem:[#allocation2 + $0x298] sm:$0xff]
    %v2591 = vld [vmem:[#allocation2 + $0x2a0] sm:$0xff]
    %v2592 = vld [vmem:[#allocation2 + $0x2a8] sm:$0xff]
    %v2593 = vld [vmem:[#allocation2 + $0x2b0] sm:$0xff]
    %v2594 = vld [vmem:[#allocation2 + $0x2b8] sm:$0xff]
    %v2595 = vld [vmem:[#allocation2 + $0x2c0] sm:$0xff]
    %v2596 = vld [vmem:[#allocation2 + $0x2c8] sm:$0xff]
    %v2597 = vld [vmem:[#allocation2 + $0x2d0] sm:$0xff]
    %v2598 = vld [vmem:[#allocation2 + $0x2d8] sm:$0xff]
    %v2599 = vld [vmem:[#allocation2 + $0x2e0] sm:$0xff]
    %v2600 = vld [vmem:[#allocation2 + $0x2e8] sm:$0xff]
    %v2601 = vld [vmem:[#allocation2 + $0x2f0] sm:$0xff]
    %v2602 = vld [vmem:[#allocation2 + $0x2f8] sm:$0xff]
    %v2603 = vld [vmem:[#allocation2 + $0x300] sm:$0xff]
    %v2604 = vld [vmem:[#allocation2 + $0x308] sm:$0xff]
    %v2605 = vld [vmem:[#allocation2 + $0x310] sm:$0xff]
    %v2606 = vld [vmem:[#allocation2 + $0x318] sm:$0xff]
    %v2607 = vld [vmem:[#allocation2 + $0x320] sm:$0xff]
    %v2608 = vld [vmem:[#allocation2 + $0x328] sm:$0xff]
    %v2609 = vld [vmem:[#allocation2 + $0x330] sm:$0xff]
    %v2610 = vld [vmem:[#allocation2 + $0x338] sm:$0xff]
    %v2611 = vld [vmem:[#allocation2 + $0x340] sm:$0xff]
    %v2612 = vld [vmem:[#allocation2 + $0x348] sm:$0xff]
    %v2613 = vld [vmem:[#allocation2 + $0x350] sm:$0xff]
    %v2614 = vld [vmem:[#allocation2 + $0x358] sm:$0xff]
    %v2615 = vld [vmem:[#allocation2 + $0x360] sm:$0xff]
    %v2616 = vld [vmem:[#allocation2 + $0x368] sm:$0xff]
    %v2617 = vld [vmem:[#allocation2 + $0x370] sm:$0xff]
    %v2618 = vld [vmem:[#allocation2 + $0x378] sm:$0xff]
    %v2619 = vld [vmem:[#allocation2 + $0x380] sm:$0xff]
    %v2620 = vld [vmem:[#allocation2 + $0x388] sm:$0xff]
    %v2621 = vld [vmem:[#allocation2 + $0x390] sm:$0xff]
    %v2622 = vld [vmem:[#allocation2 + $0x398] sm:$0xff]
    %v2623 = vld [vmem:[#allocation2 + $0x3a0] sm:$0xff]
    %v2624 = vld [vmem:[#allocation2 + $0x3a8] sm:$0xff]
    %v2625 = vld [vmem:[#allocation2 + $0x3b0] sm:$0xff]
    %v2626 = vld [vmem:[#allocation2 + $0x3b8] sm:$0xff]
    %v2627 = vld [vmem:[#allocation2 + $0x3c0] sm:$0xff]
    %v2628 = vld [vmem:[#allocation2 + $0x3c8] sm:$0xff]
    %v2629 = vld [vmem:[#allocation2 + $0x3d0] sm:$0xff]
    %v2630 = vld [vmem:[#allocation2 + $0x3d8] sm:$0xff]
    %v2631 = vld [vmem:[#allocation2 + $0x3e0] sm:$0xff]
    %v2632 = vld [vmem:[#allocation2 + $0x3e8] sm:$0xff]
    %v2633 = vld [vmem:[#allocation2 + $0x3f0] sm:$0xff]
    %v2634 = vld [vmem:[#allocation2 + $0x3f8] sm:$0xff]
    %v2635 = vld [vmem:[#allocation2 + $0x400] sm:$0xff]
    %v2636 = vld [vmem:[#allocation2 + $0x408] sm:$0xff]
    %v2637 = vld [vmem:[#allocation2 + $0x410] sm:$0xff]
    %v2638 = vld [vmem:[#allocation2 + $0x418] sm:$0xff]
    %v2639 = vld [vmem:[#allocation2 + $0x420] sm:$0xff]
    %v2640 = vld [vmem:[#allocation2 + $0x428] sm:$0xff]
    %v2641 = vld [vmem:[#allocation2 + $0x430] sm:$0xff]
    %v2642 = vld [vmem:[#allocation2 + $0x438] sm:$0xff]
    %v2643 = vld [vmem:[#allocation2 + $0x440] sm:$0xff]
    %v2644 = vld [vmem:[#allocation2 + $0x448] sm:$0xff]
    %v2645 = vld [vmem:[#allocation2 + $0x450] sm:$0xff]
    %v2646 = vld [vmem:[#allocation2 + $0x458] sm:$0xff]
    %v2647 = vld [vmem:[#allocation2 + $0x460] sm:$0xff]
    %v2648 = vld [vmem:[#allocation2 + $0x468] sm:$0xff]
    %v2649 = vld [vmem:[#allocation2 + $0x470] sm:$0xff]
    %v2650 = vld [vmem:[#allocation2 + $0x478] sm:$0xff]
    %v2651 = vld [vmem:[#allocation2 + $0x480] sm:$0xff]
    %v2652 = vld [vmem:[#allocation2 + $0x488] sm:$0xff]
    %v2653 = vld [vmem:[#allocation2 + $0x490] sm:$0xff]
    %v2654 = vld [vmem:[#allocation2 + $0x498] sm:$0xff]
    %v2655 = vld [vmem:[#allocation2 + $0x4a0] sm:$0xff]
    %v2656 = vld [vmem:[#allocation2 + $0x4a8] sm:$0xff]
    %v2657 = vld [vmem:[#allocation2 + $0x4b0] sm:$0xff]
    %v2658 = vld [vmem:[#allocation2 + $0x4b8] sm:$0xff]
    %v2659 = vld [vmem:[#allocation2 + $0x4c0] sm:$0xff]
    %v2660 = vld [vmem:[#allocation2 + $0x4c8] sm:$0xff]
    %v2661 = vld [vmem:[#allocation2 + $0x4d0] sm:$0xff]
    %v2662 = vld [vmem:[#allocation2 + $0x4d8] sm:$0xff]
    %v2663 = vld [vmem:[#allocation2 + $0x4e0] sm:$0xff]
    %v2664 = vld [vmem:[#allocation2 + $0x4e8] sm:$0xff]
    %v2665 = vld [vmem:[#allocation2 + $0x4f0] sm:$0xff]
    %v2666 = vld [vmem:[#allocation2 + $0x4f8] sm:$0xff]
    %v2667 = vld [vmem:[#allocation2 + $0x500] sm:$0xff]
    %v2668 = vld [vmem:[#allocation2 + $0x508] sm:$0xff]
    %v2669 = vld [vmem:[#allocation2 + $0x510] sm:$0xff]
    %v2670 = vld [vmem:[#allocation2 + $0x518] sm:$0xff]
    %v2671 = vld [vmem:[#allocation2 + $0x520] sm:$0xff]
    %v2672 = vld [vmem:[#allocation2 + $0x528] sm:$0xff]
    %v2673 = vld [vmem:[#allocation2 + $0x530] sm:$0xff]
    %v2674 = vld [vmem:[#allocation2 + $0x538] sm:$0xff]
    %v2675 = vld [vmem:[#allocation2 + $0x540] sm:$0xff]
    %v2676 = vld [vmem:[#allocation2 + $0x548] sm:$0xff]
    %v2677 = vld [vmem:[#allocation2 + $0x550] sm:$0xff]
    %v2678 = vld [vmem:[#allocation2 + $0x558] sm:$0xff]
    %v2679 = vld [vmem:[#allocation2 + $0x560] sm:$0xff]
    %v2680 = vld [vmem:[#allocation2 + $0x568] sm:$0xff]
    %v2681 = vld [vmem:[#allocation2 + $0x570] sm:$0xff]
    %v2682 = vld [vmem:[#allocation2 + $0x578] sm:$0xff]
    %v2683 = vld [vmem:[#allocation2 + $0x580] sm:$0xff]
    %v2684 = vld [vmem:[#allocation2 + $0x588] sm:$0xff]
    %v2685 = vld [vmem:[#allocation2 + $0x590] sm:$0xff]
    %v2686 = vld [vmem:[#allocation2 + $0x598] sm:$0xff]
    %v2687 = vld [vmem:[#allocation2 + $0x5a0] sm:$0xff]
    %v2688 = vld [vmem:[#allocation2 + $0x5a8] sm:$0xff]
    %v2689 = vld [vmem:[#allocation2 + $0x5b0] sm:$0xff]
    %v2690 = vld [vmem:[#allocation2 + $0x5b8] sm:$0xff]
    %v2691 = vld [vmem:[#allocation2 + $0x5c0] sm:$0xff]
    %v2692 = vld [vmem:[#allocation2 + $0x5c8] sm:$0xff]
    %v2693 = vld [vmem:[#allocation2 + $0x5d0] sm:$0xff]
    %v2694 = vld [vmem:[#allocation2 + $0x5d8] sm:$0xff]
    %v2695 = vld [vmem:[#allocation2 + $0x5e0] sm:$0xff]
    %v2696 = vld [vmem:[#allocation2 + $0x5e8] sm:$0xff]
    %v2697 = vld [vmem:[#allocation2 + $0x5f0] sm:$0xff]
    %v2698 = vld [vmem:[#allocation2 + $0x5f8] sm:$0xff]
    %v2699 = vld [vmem:[#allocation2 + $0x600] sm:$0xff]
    %v2700 = vld [vmem:[#allocation2 + $0x608] sm:$0xff]
    %v2701 = vld [vmem:[#allocation2 + $0x610] sm:$0xff]
    %v2702 = vld [vmem:[#allocation2 + $0x618] sm:$0xff]
    %v2703 = vld [vmem:[#allocation2 + $0x620] sm:$0xff]
    %v2704 = vld [vmem:[#allocation2 + $0x628] sm:$0xff]
    %v2705 = vld [vmem:[#allocation2 + $0x630] sm:$0xff]
    %v2706 = vld [vmem:[#allocation2 + $0x638] sm:$0xff]
    %v2707 = vld [vmem:[#allocation2 + $0x640] sm:$0xff]
    %v2708 = vld [vmem:[#allocation2 + $0x648] sm:$0xff]
    %v2709 = vld [vmem:[#allocation2 + $0x650] sm:$0xff]
    %v2710 = vld [vmem:[#allocation2 + $0x658] sm:$0xff]
    %v2711 = vld [vmem:[#allocation2 + $0x660] sm:$0xff]
    %v2712 = vld [vmem:[#allocation2 + $0x668] sm:$0xff]
    %v2713 = vld [vmem:[#allocation2 + $0x670] sm:$0xff]
    %v2714 = vld [vmem:[#allocation2 + $0x678] sm:$0xff]
    %v2715 = vld [vmem:[#allocation2 + $0x680] sm:$0xff]
    %v2716 = vld [vmem:[#allocation2 + $0x688] sm:$0xff]
    %v2717 = vld [vmem:[#allocation2 + $0x690] sm:$0xff]
    %v2718 = vld [vmem:[#allocation2 + $0x698] sm:$0xff]
    %v2719 = vld [vmem:[#allocation2 + $0x6a0] sm:$0xff]
    %v2720 = vld [vmem:[#allocation2 + $0x6a8] sm:$0xff]
    %v2721 = vld [vmem:[#allocation2 + $0x6b0] sm:$0xff]
    %v2722 = vld [vmem:[#allocation2 + $0x6b8] sm:$0xff]
    %v2723 = vld [vmem:[#allocation2 + $0x6c0] sm:$0xff]
    %v2724 = vld [vmem:[#allocation2 + $0x6c8] sm:$0xff]
    %v2725 = vld [vmem:[#allocation2 + $0x6d0] sm:$0xff]
    %v2726 = vld [vmem:[#allocation2 + $0x6d8] sm:$0xff]
    %v2727 = vld [vmem:[#allocation2 + $0x6e0] sm:$0xff]
    %v2728 = vld [vmem:[#allocation2 + $0x6e8] sm:$0xff]
    %v2729 = vld [vmem:[#allocation2 + $0x6f0] sm:$0xff]
    %v2730 = vld [vmem:[#allocation2 + $0x6f8] sm:$0xff]
    %v2731 = vld [vmem:[#allocation2 + $0x700] sm:$0xff]
    %v2732 = vld [vmem:[#allocation2 + $0x708] sm:$0xff]
    %v2733 = vld [vmem:[#allocation2 + $0x710] sm:$0xff]
    %v2734 = vld [vmem:[#allocation2 + $0x718] sm:$0xff]
    %v2735 = vld [vmem:[#allocation2 + $0x720] sm:$0xff]
    %v2736 = vld [vmem:[#allocation2 + $0x728] sm:$0xff]
    %v2737 = vld [vmem:[#allocation2 + $0x730] sm:$0xff]
    %v2738 = vld [vmem:[#allocation2 + $0x738] sm:$0xff]
    %v2739 = vld [vmem:[#allocation2 + $0x740] sm:$0xff]
    %v2740 = vld [vmem:[#allocation2 + $0x748] sm:$0xff]
    %v2741 = vld [vmem:[#allocation2 + $0x750] sm:$0xff]
    %v2742 = vld [vmem:[#allocation2 + $0x758] sm:$0xff]
    %v2743 = vld [vmem:[#allocation2 + $0x760] sm:$0xff]
    %v2744 = vld [vmem:[#allocation2 + $0x768] sm:$0xff]
    %v2745 = vld [vmem:[#allocation2 + $0x770] sm:$0xff]
    %v2746 = vld [vmem:[#allocation2 + $0x778] sm:$0xff]
    %v2747 = vld [vmem:[#allocation2 + $0x780] sm:$0xff]
    %v2748 = vld [vmem:[#allocation2 + $0x788] sm:$0xff]
    %v2749 = vld [vmem:[#allocation2 + $0x790] sm:$0xff]
    %v2750 = vld [vmem:[#allocation2 + $0x798] sm:$0xff]
    %v2751 = vld [vmem:[#allocation2 + $0x7a0] sm:$0xff]
    %v2752 = vld [vmem:[#allocation2 + $0x7a8] sm:$0xff]
    %v2753 = vld [vmem:[#allocation2 + $0x7b0] sm:$0xff]
    %v2754 = vld [vmem:[#allocation2 + $0x7b8] sm:$0xff]
    %v2755 = vld [vmem:[#allocation2 + $0x7c0] sm:$0xff]
    %v2756 = vld [vmem:[#allocation2 + $0x7c8] sm:$0xff]
    %v2757 = vld [vmem:[#allocation2 + $0x7d0] sm:$0xff]
    %v2758 = vld [vmem:[#allocation2 + $0x7d8] sm:$0xff]
    %v2759 = vld [vmem:[#allocation2 + $0x7e0] sm:$0xff]
    %v2760 = vld [vmem:[#allocation2 + $0x7e8] sm:$0xff]
    %v2761 = vld [vmem:[#allocation2 + $0x7f0] sm:$0xff]
    %v2762 = vld [vmem:[#allocation2 + $0x7f8] sm:$0xff]
    %v2763 = vld [vmem:[#allocation2 + $0x800] sm:$0xff]
    %v2764 = vld [vmem:[#allocation2 + $0x808] sm:$0xff]
    %v2765 = vld [vmem:[#allocation2 + $0x810] sm:$0xff]
    %v2766 = vld [vmem:[#allocation2 + $0x818] sm:$0xff]
    %v2767 = vld [vmem:[#allocation2 + $0x820] sm:$0xff]
    %v2768 = vld [vmem:[#allocation2 + $0x828] sm:$0xff]
    %v2769 = vld [vmem:[#allocation2 + $0x830] sm:$0xff]
    %v2770 = vld [vmem:[#allocation2 + $0x838] sm:$0xff]
    %v2771 = vld [vmem:[#allocation2 + $0x840] sm:$0xff]
    %v2772 = vld [vmem:[#allocation2 + $0x848] sm:$0xff]
    %v2773 = vld [vmem:[#allocation2 + $0x850] sm:$0xff]
    %v2774 = vld [vmem:[#allocation2 + $0x858] sm:$0xff]
    %v2775 = vld [vmem:[#allocation2 + $0x860] sm:$0xff]
    %v2776 = vld [vmem:[#allocation2 + $0x868] sm:$0xff]
    %v2777 = vld [vmem:[#allocation2 + $0x870] sm:$0xff]
    %v2778 = vld [vmem:[#allocation2 + $0x878] sm:$0xff]
    %v2779 = vld [vmem:[#allocation2 + $0x880] sm:$0xff]
    %v2780 = vld [vmem:[#allocation2 + $0x888] sm:$0xff]
    %v2781 = vld [vmem:[#allocation2 + $0x890] sm:$0xff]
    %v2782 = vld [vmem:[#allocation2 + $0x898] sm:$0xff]
    %v2783 = vld [vmem:[#allocation2 + $0x8a0] sm:$0xff]
    %v2784 = vld [vmem:[#allocation2 + $0x8a8] sm:$0xff]
    %v2785 = vld [vmem:[#allocation2 + $0x8b0] sm:$0xff]
    %v2786 = vld [vmem:[#allocation2 + $0x8b8] sm:$0xff]
    %v2787 = vld [vmem:[#allocation2 + $0x8c0] sm:$0xff]
    %v2788 = vld [vmem:[#allocation2 + $0x8c8] sm:$0xff]
    %v2789 = vld [vmem:[#allocation2 + $0x8d0] sm:$0xff]
    %v2790 = vld [vmem:[#allocation2 + $0x8d8] sm:$0xff]
    %v2791 = vld [vmem:[#allocation2 + $0x8e0] sm:$0xff]
    %v2792 = vld [vmem:[#allocation2 + $0x8e8] sm:$0xff]
    %v2793 = vld [vmem:[#allocation2 + $0x8f0] sm:$0xff]
    %v2794 = vld [vmem:[#allocation2 + $0x8f8] sm:$0xff]
    %v2795 = vld [vmem:[#allocation2 + $0x900] sm:$0xff]
    %v2796 = vld [vmem:[#allocation2 + $0x908] sm:$0xff]
    %v2797 = vld [vmem:[#allocation2 + $0x910] sm:$0xff]
    %v2798 = vld [vmem:[#allocation2 + $0x918] sm:$0xff]
    %v2799 = vld [vmem:[#allocation2 + $0x920] sm:$0xff]
    %v2800 = vld [vmem:[#allocation2 + $0x928] sm:$0xff]
    %v2801 = vld [vmem:[#allocation2 + $0x930] sm:$0xff]
    %v2802 = vld [vmem:[#allocation2 + $0x938] sm:$0xff]
    %v2803 = vld [vmem:[#allocation2 + $0x940] sm:$0xff]
    %v2804 = vld [vmem:[#allocation2 + $0x948] sm:$0xff]
    %v2805 = vld [vmem:[#allocation2 + $0x950] sm:$0xff]
    %v2806 = vld [vmem:[#allocation2 + $0x958] sm:$0xff]
    %v2807 = vld [vmem:[#allocation2 + $0x960] sm:$0xff]
    %v2808 = vld [vmem:[#allocation2 + $0x968] sm:$0xff]
    %v2809 = vld [vmem:[#allocation2 + $0x970] sm:$0xff]
    %v2810 = vld [vmem:[#allocation2 + $0x978] sm:$0xff]
    %v2811 = vld [vmem:[#allocation2 + $0x980] sm:$0xff]
    %v2812 = vld [vmem:[#allocation2 + $0x988] sm:$0xff]
    %v2813 = vld [vmem:[#allocation2 + $0x990] sm:$0xff]
    %v2814 = vld [vmem:[#allocation2 + $0x998] sm:$0xff]
    %v2815 = vld [vmem:[#allocation2 + $0x9a0] sm:$0xff]
    %v2816 = vld [vmem:[#allocation2 + $0x9a8] sm:$0xff]
    %v2817 = vld [vmem:[#allocation2 + $0x9b0] sm:$0xff]
    %v2818 = vld [vmem:[#allocation2 + $0x9b8] sm:$0xff]
    %v2819 = vld [vmem:[#allocation2 + $0x9c0] sm:$0xff]
    %v2820 = vld [vmem:[#allocation2 + $0x9c8] sm:$0xff]
    %v2821 = vld [vmem:[#allocation2 + $0x9d0] sm:$0xff]
    %v2822 = vld [vmem:[#allocation2 + $0x9d8] sm:$0xff]
    %v2823 = vld [vmem:[#allocation2 + $0x9e0] sm:$0xff]
    %v2824 = vld [vmem:[#allocation2 + $0x9e8] sm:$0xff]
    %v2825 = vld [vmem:[#allocation2 + $0x9f0] sm:$0xff]
    %v2826 = vld [vmem:[#allocation2 + $0x9f8] sm:$0xff]
    %v2827 = vld [vmem:[#allocation2 + $0xa00] sm:$0xff]
    %v2828 = vld [vmem:[#allocation2 + $0xa08] sm:$0xff]
    %v2829 = vld [vmem:[#allocation2 + $0xa10] sm:$0xff]
    %v2830 = vld [vmem:[#allocation2 + $0xa18] sm:$0xff]
    %v2831 = vld [vmem:[#allocation2 + $0xa20] sm:$0xff]
    %v2832 = vld [vmem:[#allocation2 + $0xa28] sm:$0xff]
    %v2833 = vld [vmem:[#allocation2 + $0xa30] sm:$0xff]
    %v2834 = vld [vmem:[#allocation2 + $0xa38] sm:$0xff]
    %v2835 = vld [vmem:[#allocation2 + $0xa40] sm:$0xff]
    %v2836 = vld [vmem:[#allocation2 + $0xa48] sm:$0xff]
    %v2837 = vld [vmem:[#allocation2 + $0xa50] sm:$0xff]
    %v2838 = vld [vmem:[#allocation2 + $0xa58] sm:$0xff]
    %v2839 = vld [vmem:[#allocation2 + $0xa60] sm:$0xff]
    %v2840 = vld [vmem:[#allocation2 + $0xa68] sm:$0xff]
    %v2841 = vld [vmem:[#allocation2 + $0xa70] sm:$0xff]
    %v2842 = vld [vmem:[#allocation2 + $0xa78] sm:$0xff]
    %v2843 = vld [vmem:[#allocation2 + $0xa80] sm:$0xff]
    %v2844 = vld [vmem:[#allocation2 + $0xa88] sm:$0xff]
    %v2845 = vld [vmem:[#allocation2 + $0xa90] sm:$0xff]
    %v2846 = vld [vmem:[#allocation2 + $0xa98] sm:$0xff]
    %v2847 = vld [vmem:[#allocation2 + $0xaa0] sm:$0xff]
    %v2848 = vld [vmem:[#allocation2 + $0xaa8] sm:$0xff]
    %v2849 = vld [vmem:[#allocation2 + $0xab0] sm:$0xff]
    %v2850 = vld [vmem:[#allocation2 + $0xab8] sm:$0xff]
    %v2851 = vld [vmem:[#allocation2 + $0xac0] sm:$0xff]
    %v2852 = vld [vmem:[#allocation2 + $0xac8] sm:$0xff]
    %v2853 = vld [vmem:[#allocation2 + $0xad0] sm:$0xff]
    %v2854 = vld [vmem:[#allocation2 + $0xad8] sm:$0xff]
    %v2855 = vld [vmem:[#allocation2 + $0xae0] sm:$0xff]
    %v2856 = vld [vmem:[#allocation2 + $0xae8] sm:$0xff]
    %v2857 = vld [vmem:[#allocation2 + $0xaf0] sm:$0xff]
    %v2858 = vld [vmem:[#allocation2 + $0xaf8] sm:$0xff]
    %v2859 = vld [vmem:[#allocation2 + $0xb00] sm:$0xff]
    %v2860 = vld [vmem:[#allocation2 + $0xb08] sm:$0xff]
    %v2861 = vld [vmem:[#allocation2 + $0xb10] sm:$0xff]
    %v2862 = vld [vmem:[#allocation2 + $0xb18] sm:$0xff]
    %v2863 = vld [vmem:[#allocation2 + $0xb20] sm:$0xff]
    %v2864 = vld [vmem:[#allocation2 + $0xb28] sm:$0xff]
    %v2865 = vld [vmem:[#allocation2 + $0xb30] sm:$0xff]
    %v2866 = vld [vmem:[#allocation2 + $0xb38] sm:$0xff]
    %v2867 = vld [vmem:[#allocation2 + $0xb40] sm:$0xff]
    %v2868 = vld [vmem:[#allocation2 + $0xb48] sm:$0xff]
    %v2869 = vld [vmem:[#allocation2 + $0xb50] sm:$0xff]
    %v2870 = vld [vmem:[#allocation2 + $0xb58] sm:$0xff]
    %v2871 = vld [vmem:[#allocation2 + $0xb60] sm:$0xff]
    %v2872 = vld [vmem:[#allocation2 + $0xb68] sm:$0xff]
    %v2873 = vld [vmem:[#allocation2 + $0xb70] sm:$0xff]
    %v2874 = vld [vmem:[#allocation2 + $0xb78] sm:$0xff]
    %v2875 = vld [vmem:[#allocation2 + $0xb80] sm:$0xff]
    %v2876 = vld [vmem:[#allocation2 + $0xb88] sm:$0xff]
    %v2877 = vld [vmem:[#allocation2 + $0xb90] sm:$0xff]
    %v2878 = vld [vmem:[#allocation2 + $0xb98] sm:$0xff]
    %v2879 = vld [vmem:[#allocation2 + $0xba0] sm:$0xff]
    %v2880 = vld [vmem:[#allocation2 + $0xba8] sm:$0xff]
    %v2881 = vld [vmem:[#allocation2 + $0xbb0] sm:$0xff]
    %v2882 = vld [vmem:[#allocation2 + $0xbb8] sm:$0xff]
    %v2883 = vld [vmem:[#allocation2 + $0xbc0] sm:$0xff]
    %v2884 = vld [vmem:[#allocation2 + $0xbc8] sm:$0xff]
    %v2885 = vld [vmem:[#allocation2 + $0xbd0] sm:$0xff]
    %v2886 = vld [vmem:[#allocation2 + $0xbd8] sm:$0xff]
    %v2887 = vld [vmem:[#allocation2 + $0xbe0] sm:$0xff]
    %v2888 = vld [vmem:[#allocation2 + $0xbe8] sm:$0xff]
    %v2889 = vld [vmem:[#allocation2 + $0xbf0] sm:$0xff]
    %v2890 = vld [vmem:[#allocation2 + $0xbf8] sm:$0xff]
    %v2891 = vld [vmem:[#allocation2 + $0xc00] sm:$0xff]
    %v2892 = vld [vmem:[#allocation2 + $0xc08] sm:$0xff]
    %v2893 = vld [vmem:[#allocation2 + $0xc10] sm:$0xff]
    %v2894 = vld [vmem:[#allocation2 + $0xc18] sm:$0xff]
    %v2895 = vld [vmem:[#allocation2 + $0xc20] sm:$0xff]
    %v2896 = vld [vmem:[#allocation2 + $0xc28] sm:$0xff]
    %v2897 = vld [vmem:[#allocation2 + $0xc30] sm:$0xff]
    %v2898 = vld [vmem:[#allocation2 + $0xc38] sm:$0xff]
    %v2899 = vld [vmem:[#allocation2 + $0xc40] sm:$0xff]
    %v2900 = vld [vmem:[#allocation2 + $0xc48] sm:$0xff]
    %v2901 = vld [vmem:[#allocation2 + $0xc50] sm:$0xff]
    %v2902 = vld [vmem:[#allocation2 + $0xc58] sm:$0xff]
    %v2903 = vld [vmem:[#allocation2 + $0xc60] sm:$0xff]
    %v2904 = vld [vmem:[#allocation2 + $0xc68] sm:$0xff]
    %v2905 = vld [vmem:[#allocation2 + $0xc70] sm:$0xff]
    %v2906 = vld [vmem:[#allocation2 + $0xc78] sm:$0xff]
    %v2907 = vld [vmem:[#allocation2 + $0xc80] sm:$0xff]
    %v2908 = vld [vmem:[#allocation2 + $0xc88] sm:$0xff]
    %v2909 = vld [vmem:[#allocation2 + $0xc90] sm:$0xff]
    %v2910 = vld [vmem:[#allocation2 + $0xc98] sm:$0xff]
    %v2911 = vld [vmem:[#allocation2 + $0xca0] sm:$0xff]
    %v2912 = vld [vmem:[#allocation2 + $0xca8] sm:$0xff]
    %v2913 = vld [vmem:[#allocation2 + $0xcb0] sm:$0xff]
    %v2914 = vld [vmem:[#allocation2 + $0xcb8] sm:$0xff]
    %v2915 = vld [vmem:[#allocation2 + $0xcc0] sm:$0xff]
    %v2916 = vld [vmem:[#allocation2 + $0xcc8] sm:$0xff]
    %v2917 = vld [vmem:[#allocation2 + $0xcd0] sm:$0xff]
    %v2918 = vld [vmem:[#allocation2 + $0xcd8] sm:$0xff]
    %v2919 = vld [vmem:[#allocation2 + $0xce0] sm:$0xff]
    %v2920 = vld [vmem:[#allocation2 + $0xce8] sm:$0xff]
    %v2921 = vld [vmem:[#allocation2 + $0xcf0] sm:$0xff]
    %v2922 = vld [vmem:[#allocation2 + $0xcf8] sm:$0xff]
    %v2923 = vld [vmem:[#allocation2 + $0xd00] sm:$0xff]
    %v2924 = vld [vmem:[#allocation2 + $0xd08] sm:$0xff]
    %v2925 = vld [vmem:[#allocation2 + $0xd10] sm:$0xff]
    %v2926 = vld [vmem:[#allocation2 + $0xd18] sm:$0xff]
    %v2927 = vld [vmem:[#allocation2 + $0xd20] sm:$0xff]
    %v2928 = vld [vmem:[#allocation2 + $0xd28] sm:$0xff]
    %v2929 = vld [vmem:[#allocation2 + $0xd30] sm:$0xff]
    %v2930 = vld [vmem:[#allocation2 + $0xd38] sm:$0xff]
    %v2931 = vld [vmem:[#allocation2 + $0xd40] sm:$0xff]
    %v2932 = vld [vmem:[#allocation2 + $0xd48] sm:$0xff]
    %v2933 = vld [vmem:[#allocation2 + $0xd50] sm:$0xff]
    %v2934 = vld [vmem:[#allocation2 + $0xd58] sm:$0xff]
    %v2935 = vld [vmem:[#allocation2 + $0xd60] sm:$0xff]
    %v2936 = vld [vmem:[#allocation2 + $0xd68] sm:$0xff]
    %v2937 = vld [vmem:[#allocation2 + $0xd70] sm:$0xff]
    %v2938 = vld [vmem:[#allocation2 + $0xd78] sm:$0xff]
    %v2939 = vld [vmem:[#allocation2 + $0xd80] sm:$0xff]
    %v2940 = vld [vmem:[#allocation2 + $0xd88] sm:$0xff]
    %v2941 = vld [vmem:[#allocation2 + $0xd90] sm:$0xff]
    %v2942 = vld [vmem:[#allocation2 + $0xd98] sm:$0xff]
    %v2943 = vld [vmem:[#allocation2 + $0xda0] sm:$0xff]
    %v2944 = vld [vmem:[#allocation2 + $0xda8] sm:$0xff]
    %v2945 = vld [vmem:[#allocation2 + $0xdb0] sm:$0xff]
    %v2946 = vld [vmem:[#allocation2 + $0xdb8] sm:$0xff]
    %v2947 = vld [vmem:[#allocation2 + $0xdc0] sm:$0xff]
    %v2948 = vld [vmem:[#allocation2 + $0xdc8] sm:$0xff]
    %v2949 = vld [vmem:[#allocation2 + $0xdd0] sm:$0xff]
    %v2950 = vld [vmem:[#allocation2 + $0xdd8] sm:$0xff]
    %v2951 = vld [vmem:[#allocation2 + $0xde0] sm:$0xff]
    %v2952 = vld [vmem:[#allocation2 + $0xde8] sm:$0xff]
    %v2953 = vld [vmem:[#allocation2 + $0xdf0] sm:$0xff]
    %v2954 = vld [vmem:[#allocation2 + $0xdf8] sm:$0xff]
    %v2955 = vld [vmem:[#allocation2 + $0xe00] sm:$0xff]
    %v2956 = vld [vmem:[#allocation2 + $0xe08] sm:$0xff]
    %v2957 = vld [vmem:[#allocation2 + $0xe10] sm:$0xff]
    %v2958 = vld [vmem:[#allocation2 + $0xe18] sm:$0xff]
    %v2959 = vld [vmem:[#allocation2 + $0xe20] sm:$0xff]
    %v2960 = vld [vmem:[#allocation2 + $0xe28] sm:$0xff]
    %v2961 = vld [vmem:[#allocation2 + $0xe30] sm:$0xff]
    %v2962 = vld [vmem:[#allocation2 + $0xe38] sm:$0xff]
    %v2963 = vld [vmem:[#allocation2 + $0xe40] sm:$0xff]
    %v2964 = vld [vmem:[#allocation2 + $0xe48] sm:$0xff]
    %v2965 = vld [vmem:[#allocation2 + $0xe50] sm:$0xff]
    %v2966 = vld [vmem:[#allocation2 + $0xe58] sm:$0xff]
    %v2967 = vld [vmem:[#allocation2 + $0xe60] sm:$0xff]
    %v2968 = vld [vmem:[#allocation2 + $0xe68] sm:$0xff]
    %v2969 = vld [vmem:[#allocation2 + $0xe70] sm:$0xff]
    %v2970 = vld [vmem:[#allocation2 + $0xe78] sm:$0xff]
    %v2971 = vld [vmem:[#allocation2 + $0xe80] sm:$0xff]
    %v2972 = vld [vmem:[#allocation2 + $0xe88] sm:$0xff]
    %v2973 = vld [vmem:[#allocation2 + $0xe90] sm:$0xff]
    %v2974 = vld [vmem:[#allocation2 + $0xe98] sm:$0xff]
    %v2975 = vld [vmem:[#allocation2 + $0xea0] sm:$0xff]
    %v2976 = vld [vmem:[#allocation2 + $0xea8] sm:$0xff]
    %v2977 = vld [vmem:[#allocation2 + $0xeb0] sm:$0xff]
    %v2978 = vld [vmem:[#allocation2 + $0xeb8] sm:$0xff]
    %v2979 = vld [vmem:[#allocation2 + $0xec0] sm:$0xff]
    %v2980 = vld [vmem:[#allocation2 + $0xec8] sm:$0xff]
    %v2981 = vld [vmem:[#allocation2 + $0xed0] sm:$0xff]
    %v2982 = vld [vmem:[#allocation2 + $0xed8] sm:$0xff]
    %v2983 = vld [vmem:[#allocation2 + $0xee0] sm:$0xff]
    %v2984 = vld [vmem:[#allocation2 + $0xee8] sm:$0xff]
    %v2985 = vld [vmem:[#allocation2 + $0xef0] sm:$0xff]
    %v2986 = vld [vmem:[#allocation2 + $0xef8] sm:$0xff]
    %v2987 = vld [vmem:[#allocation2 + $0xf00] sm:$0xff]
    %v2988 = vld [vmem:[#allocation2 + $0xf08] sm:$0xff]
    %v2989 = vld [vmem:[#allocation2 + $0xf10] sm:$0xff]
    %v2990 = vld [vmem:[#allocation2 + $0xf18] sm:$0xff]
    %v2991 = vld [vmem:[#allocation2 + $0xf20] sm:$0xff]
    %v2992 = vld [vmem:[#allocation2 + $0xf28] sm:$0xff]
    %v2993 = vld [vmem:[#allocation2 + $0xf30] sm:$0xff]
    %v2994 = vld [vmem:[#allocation2 + $0xf38] sm:$0xff]
    %v2995 = vld [vmem:[#allocation2 + $0xf40] sm:$0xff]
    %v2996 = vld [vmem:[#allocation2 + $0xf48] sm:$0xff]
    %v2997 = vld [vmem:[#allocation2 + $0xf50] sm:$0xff]
    %v2998 = vld [vmem:[#allocation2 + $0xf58] sm:$0xff]
    %v2999 = vld [vmem:[#allocation2 + $0xf60] sm:$0xff]
    %v3000 = vld [vmem:[#allocation2 + $0xf68] sm:$0xff]
    %v3001 = vld [vmem:[#allocation2 + $0xf70] sm:$0xff]
    %v3002 = vld [vmem:[#allocation2 + $0xf78] sm:$0xff]
    %v3003 = vld [vmem:[#allocation2 + $0xf80] sm:$0xff]
    %v3004 = vld [vmem:[#allocation2 + $0xf88] sm:$0xff]
    %v3005 = vld [vmem:[#allocation2 + $0xf90] sm:$0xff]
    %v3006 = vld [vmem:[#allocation2 + $0xf98] sm:$0xff]
    %v3007 = vld [vmem:[#allocation2 + $0xfa0] sm:$0xff]
    %v3008 = vld [vmem:[#allocation2 + $0xfa8] sm:$0xff]
    %v3009 = vld [vmem:[#allocation2 + $0xfb0] sm:$0xff]
    %v3010 = vld [vmem:[#allocation2 + $0xfb8] sm:$0xff]
    %v3011 = vld [vmem:[#allocation2 + $0xfc0] sm:$0xff]
    %v3012 = vld [vmem:[#allocation2 + $0xfc8] sm:$0xff]
    %v3013 = vld [vmem:[#allocation2 + $0xfd0] sm:$0xff]
    %v3014 = vld [vmem:[#allocation2 + $0xfd8] sm:$0xff]
    %v3015 = vld [vmem:[#allocation2 + $0xfe0] sm:$0xff]
    %v3016 = vld [vmem:[#allocation2 + $0xfe8] sm:$0xff]
    %v3017 = vld [vmem:[#allocation2 + $0xff0] sm:$0xff]
    %v3018 = vld [vmem:[#allocation2 + $0xff8] sm:$0xff]
    %v3019 = vld [vmem:[#allocation14] sm:$0xff]
    %v3021 = vperm.slane %v3019, 0
    %v3022 = vperm.slane %v3019, 1
    %v3023 = vperm.slane %v3019, 2
    %v3024 = vperm.slane %v3019, 3
    %v3025 = vperm.slane %v3019, 4
    %v3026 = vperm.slane %v3019, 5
    %v3027 = vperm.slane %v3019, 6
    %v3028 = vperm.slane %v3019, 7
    %v3549 = vunpack.c.l.b16 %v2507
    %v3550 = vunpack.c.h.b16 %v2507
    %v3551 = vunpack.c.l.b16 %v2508
    %v3552 = vunpack.c.h.b16 %v2508
    %v3553 = vunpack.c.l.b16 %v2509
    %v3554 = vunpack.c.h.b16 %v2509
    %v3555 = vunpack.c.l.b16 %v2510
    %v3556 = vunpack.c.h.b16 %v2510
    %v3557 = vunpack.c.l.b16 %v2511
    %v3558 = vunpack.c.h.b16 %v2511
    %v3559 = vunpack.c.l.b16 %v2512
    %v3560 = vunpack.c.h.b16 %v2512
    %v3561 = vunpack.c.l.b16 %v2513
    %v3562 = vunpack.c.h.b16 %v2513
    %v3563 = vunpack.c.l.b16 %v2514
    %v3564 = vunpack.c.h.b16 %v2514
    %v3565 = vunpack.c.l.b16 %v2515
    %v3566 = vunpack.c.h.b16 %v2515
    %v3567 = vunpack.c.l.b16 %v2516
    %v3568 = vunpack.c.h.b16 %v2516
    %v3569 = vunpack.c.l.b16 %v2517
    %v3570 = vunpack.c.h.b16 %v2517
    %v3571 = vunpack.c.l.b16 %v2518
    %v3572 = vunpack.c.h.b16 %v2518
    %v3573 = vunpack.c.l.b16 %v2519
    %v3574 = vunpack.c.h.b16 %v2519
    %v3575 = vunpack.c.l.b16 %v2520
    %v3576 = vunpack.c.h.b16 %v2520
    %v3577 = vunpack.c.l.b16 %v2521
    %v3578 = vunpack.c.h.b16 %v2521
    %v3579 = vunpack.c.l.b16 %v2522
    %v3580 = vunpack.c.h.b16 %v2522
    %v3581 = vunpack.c.l.b16 %v2523
    %v3582 = vunpack.c.h.b16 %v2523
    %v3583 = vunpack.c.l.b16 %v2524
    %v3584 = vunpack.c.h.b16 %v2524
    %v3585 = vunpack.c.l.b16 %v2525
    %v3586 = vunpack.c.h.b16 %v2525
    %v3587 = vunpack.c.l.b16 %v2526
    %v3588 = vunpack.c.h.b16 %v2526
    %v3589 = vunpack.c.l.b16 %v2527
    %v3590 = vunpack.c.h.b16 %v2527
    %v3591 = vunpack.c.l.b16 %v2528
    %v3592 = vunpack.c.h.b16 %v2528
    %v3593 = vunpack.c.l.b16 %v2529
    %v3594 = vunpack.c.h.b16 %v2529
    %v3595 = vunpack.c.l.b16 %v2530
    %v3596 = vunpack.c.h.b16 %v2530
    %v3597 = vunpack.c.l.b16 %v2531
    %v3598 = vunpack.c.h.b16 %v2531
    %v3599 = vunpack.c.l.b16 %v2532
    %v3600 = vunpack.c.h.b16 %v2532
    %v3601 = vunpack.c.l.b16 %v2533
    %v3602 = vunpack.c.h.b16 %v2533
    %v3603 = vunpack.c.l.b16 %v2534
    %v3604 = vunpack.c.h.b16 %v2534
    %v3605 = vunpack.c.l.b16 %v2535
    %v3606 = vunpack.c.h.b16 %v2535
    %v3607 = vunpack.c.l.b16 %v2536
    %v3608 = vunpack.c.h.b16 %v2536
    %v3609 = vunpack.c.l.b16 %v2537
    %v3610 = vunpack.c.h.b16 %v2537
    %v3611 = vunpack.c.l.b16 %v2538
    %v3612 = vunpack.c.h.b16 %v2538
    %v3613 = vunpack.c.l.b16 %v2539
    %v3614 = vunpack.c.h.b16 %v2539
    %v3615 = vunpack.c.l.b16 %v2540
    %v3616 = vunpack.c.h.b16 %v2540
    %v3617 = vunpack.c.l.b16 %v2541
    %v3618 = vunpack.c.h.b16 %v2541
    %v3619 = vunpack.c.l.b16 %v2542
    %v3620 = vunpack.c.h.b16 %v2542
    %v3621 = vunpack.c.l.b16 %v2543
    %v3622 = vunpack.c.h.b16 %v2543
    %v3623 = vunpack.c.l.b16 %v2544
    %v3624 = vunpack.c.h.b16 %v2544
    %v3625 = vunpack.c.l.b16 %v2545
    %v3626 = vunpack.c.h.b16 %v2545
    %v3627 = vunpack.c.l.b16 %v2546
    %v3628 = vunpack.c.h.b16 %v2546
    %v3629 = vunpack.c.l.b16 %v2547
    %v3630 = vunpack.c.h.b16 %v2547
    %v3631 = vunpack.c.l.b16 %v2548
    %v3632 = vunpack.c.h.b16 %v2548
    %v3633 = vunpack.c.l.b16 %v2549
    %v3634 = vunpack.c.h.b16 %v2549
    %v3635 = vunpack.c.l.b16 %v2550
    %v3636 = vunpack.c.h.b16 %v2550
    %v3637 = vunpack.c.l.b16 %v2551
    %v3638 = vunpack.c.h.b16 %v2551
    %v3639 = vunpack.c.l.b16 %v2552
    %v3640 = vunpack.c.h.b16 %v2552
    %v3641 = vunpack.c.l.b16 %v2553
    %v3642 = vunpack.c.h.b16 %v2553
    %v3643 = vunpack.c.l.b16 %v2554
    %v3644 = vunpack.c.h.b16 %v2554
    %v3645 = vunpack.c.l.b16 %v2555
    %v3646 = vunpack.c.h.b16 %v2555
    %v3647 = vunpack.c.l.b16 %v2556
    %v3648 = vunpack.c.h.b16 %v2556
    %v3649 = vunpack.c.l.b16 %v2557
    %v3650 = vunpack.c.h.b16 %v2557
    %v3651 = vunpack.c.l.b16 %v2558
    %v3652 = vunpack.c.h.b16 %v2558
    %v3653 = vunpack.c.l.b16 %v2559
    %v3654 = vunpack.c.h.b16 %v2559
    %v3655 = vunpack.c.l.b16 %v2560
    %v3656 = vunpack.c.h.b16 %v2560
    %v3657 = vunpack.c.l.b16 %v2561
    %v3658 = vunpack.c.h.b16 %v2561
    %v3659 = vunpack.c.l.b16 %v2562
    %v3660 = vunpack.c.h.b16 %v2562
    %v3661 = vunpack.c.l.b16 %v2563
    %v3662 = vunpack.c.h.b16 %v2563
    %v3663 = vunpack.c.l.b16 %v2564
    %v3664 = vunpack.c.h.b16 %v2564
    %v3665 = vunpack.c.l.b16 %v2565
    %v3666 = vunpack.c.h.b16 %v2565
    %v3667 = vunpack.c.l.b16 %v2566
    %v3668 = vunpack.c.h.b16 %v2566
    %v3669 = vunpack.c.l.b16 %v2567
    %v3670 = vunpack.c.h.b16 %v2567
    %v3671 = vunpack.c.l.b16 %v2568
    %v3672 = vunpack.c.h.b16 %v2568
    %v3673 = vunpack.c.l.b16 %v2569
    %v3674 = vunpack.c.h.b16 %v2569
    %v3675 = vunpack.c.l.b16 %v2570
    %v3676 = vunpack.c.h.b16 %v2570
    %v3677 = vunpack.c.l.b16 %v2571
    %v3678 = vunpack.c.h.b16 %v2571
    %v3679 = vunpack.c.l.b16 %v2572
    %v3680 = vunpack.c.h.b16 %v2572
    %v3681 = vunpack.c.l.b16 %v2573
    %v3682 = vunpack.c.h.b16 %v2573
    %v3683 = vunpack.c.l.b16 %v2574
    %v3684 = vunpack.c.h.b16 %v2574
    %v3685 = vunpack.c.l.b16 %v2575
    %v3686 = vunpack.c.h.b16 %v2575
    %v3687 = vunpack.c.l.b16 %v2576
    %v3688 = vunpack.c.h.b16 %v2576
    %v3689 = vunpack.c.l.b16 %v2577
    %v3690 = vunpack.c.h.b16 %v2577
    %v3691 = vunpack.c.l.b16 %v2578
    %v3692 = vunpack.c.h.b16 %v2578
    %v3693 = vunpack.c.l.b16 %v2579
    %v3694 = vunpack.c.h.b16 %v2579
    %v3695 = vunpack.c.l.b16 %v2580
    %v3696 = vunpack.c.h.b16 %v2580
    %v3697 = vunpack.c.l.b16 %v2581
    %v3698 = vunpack.c.h.b16 %v2581
    %v3699 = vunpack.c.l.b16 %v2582
    %v3700 = vunpack.c.h.b16 %v2582
    %v3701 = vunpack.c.l.b16 %v2583
    %v3702 = vunpack.c.h.b16 %v2583
    %v3703 = vunpack.c.l.b16 %v2584
    %v3704 = vunpack.c.h.b16 %v2584
    %v3705 = vunpack.c.l.b16 %v2585
    %v3706 = vunpack.c.h.b16 %v2585
    %v3707 = vunpack.c.l.b16 %v2586
    %v3708 = vunpack.c.h.b16 %v2586
    %v3709 = vunpack.c.l.b16 %v2587
    %v3710 = vunpack.c.h.b16 %v2587
    %v3711 = vunpack.c.l.b16 %v2588
    %v3712 = vunpack.c.h.b16 %v2588
    %v3713 = vunpack.c.l.b16 %v2589
    %v3714 = vunpack.c.h.b16 %v2589
    %v3715 = vunpack.c.l.b16 %v2590
    %v3716 = vunpack.c.h.b16 %v2590
    %v3717 = vunpack.c.l.b16 %v2591
    %v3718 = vunpack.c.h.b16 %v2591
    %v3719 = vunpack.c.l.b16 %v2592
    %v3720 = vunpack.c.h.b16 %v2592
    %v3721 = vunpack.c.l.b16 %v2593
    %v3722 = vunpack.c.h.b16 %v2593
    %v3723 = vunpack.c.l.b16 %v2594
    %v3724 = vunpack.c.h.b16 %v2594
    %v3725 = vunpack.c.l.b16 %v2595
    %v3726 = vunpack.c.h.b16 %v2595
    %v3727 = vunpack.c.l.b16 %v2596
    %v3728 = vunpack.c.h.b16 %v2596
    %v3729 = vunpack.c.l.b16 %v2597
    %v3730 = vunpack.c.h.b16 %v2597
    %v3731 = vunpack.c.l.b16 %v2598
    %v3732 = vunpack.c.h.b16 %v2598
    %v3733 = vunpack.c.l.b16 %v2599
    %v3734 = vunpack.c.h.b16 %v2599
    %v3735 = vunpack.c.l.b16 %v2600
    %v3736 = vunpack.c.h.b16 %v2600
    %v3737 = vunpack.c.l.b16 %v2601
    %v3738 = vunpack.c.h.b16 %v2601
    %v3739 = vunpack.c.l.b16 %v2602
    %v3740 = vunpack.c.h.b16 %v2602
    %v3741 = vunpack.c.l.b16 %v2603
    %v3742 = vunpack.c.h.b16 %v2603
    %v3743 = vunpack.c.l.b16 %v2604
    %v3744 = vunpack.c.h.b16 %v2604
    %v3745 = vunpack.c.l.b16 %v2605
    %v3746 = vunpack.c.h.b16 %v2605
    %v3747 = vunpack.c.l.b16 %v2606
    %v3748 = vunpack.c.h.b16 %v2606
    %v3749 = vunpack.c.l.b16 %v2607
    %v3750 = vunpack.c.h.b16 %v2607
    %v3751 = vunpack.c.l.b16 %v2608
    %v3752 = vunpack.c.h.b16 %v2608
    %v3753 = vunpack.c.l.b16 %v2609
    %v3754 = vunpack.c.h.b16 %v2609
    %v3755 = vunpack.c.l.b16 %v2610
    %v3756 = vunpack.c.h.b16 %v2610
    %v3757 = vunpack.c.l.b16 %v2611
    %v3758 = vunpack.c.h.b16 %v2611
    %v3759 = vunpack.c.l.b16 %v2612
    %v3760 = vunpack.c.h.b16 %v2612
    %v3761 = vunpack.c.l.b16 %v2613
    %v3762 = vunpack.c.h.b16 %v2613
    %v3763 = vunpack.c.l.b16 %v2614
    %v3764 = vunpack.c.h.b16 %v2614
    %v3765 = vunpack.c.l.b16 %v2615
    %v3766 = vunpack.c.h.b16 %v2615
    %v3767 = vunpack.c.l.b16 %v2616
    %v3768 = vunpack.c.h.b16 %v2616
    %v3769 = vunpack.c.l.b16 %v2617
    %v3770 = vunpack.c.h.b16 %v2617
    %v3771 = vunpack.c.l.b16 %v2618
    %v3772 = vunpack.c.h.b16 %v2618
    %v3773 = vunpack.c.l.b16 %v2619
    %v3774 = vunpack.c.h.b16 %v2619
    %v3775 = vunpack.c.l.b16 %v2620
    %v3776 = vunpack.c.h.b16 %v2620
    %v3777 = vunpack.c.l.b16 %v2621
    %v3778 = vunpack.c.h.b16 %v2621
    %v3779 = vunpack.c.l.b16 %v2622
    %v3780 = vunpack.c.h.b16 %v2622
    %v3781 = vunpack.c.l.b16 %v2623
    %v3782 = vunpack.c.h.b16 %v2623
    %v3783 = vunpack.c.l.b16 %v2624
    %v3784 = vunpack.c.h.b16 %v2624
    %v3785 = vunpack.c.l.b16 %v2625
    %v3786 = vunpack.c.h.b16 %v2625
    %v3787 = vunpack.c.l.b16 %v2626
    %v3788 = vunpack.c.h.b16 %v2626
    %v3789 = vunpack.c.l.b16 %v2627
    %v3790 = vunpack.c.h.b16 %v2627
    %v3791 = vunpack.c.l.b16 %v2628
    %v3792 = vunpack.c.h.b16 %v2628
    %v3793 = vunpack.c.l.b16 %v2629
    %v3794 = vunpack.c.h.b16 %v2629
    %v3795 = vunpack.c.l.b16 %v2630
    %v3796 = vunpack.c.h.b16 %v2630
    %v3797 = vunpack.c.l.b16 %v2631
    %v3798 = vunpack.c.h.b16 %v2631
    %v3799 = vunpack.c.l.b16 %v2632
    %v3800 = vunpack.c.h.b16 %v2632
    %v3801 = vunpack.c.l.b16 %v2633
    %v3802 = vunpack.c.h.b16 %v2633
    %v3803 = vunpack.c.l.b16 %v2634
    %v3804 = vunpack.c.h.b16 %v2634
    %v3805 = vunpack.c.l.b16 %v2635
    %v3806 = vunpack.c.h.b16 %v2635
    %v3807 = vunpack.c.l.b16 %v2636
    %v3808 = vunpack.c.h.b16 %v2636
    %v3809 = vunpack.c.l.b16 %v2637
    %v3810 = vunpack.c.h.b16 %v2637
    %v3811 = vunpack.c.l.b16 %v2638
    %v3812 = vunpack.c.h.b16 %v2638
    %v3813 = vunpack.c.l.b16 %v2639
    %v3814 = vunpack.c.h.b16 %v2639
    %v3815 = vunpack.c.l.b16 %v2640
    %v3816 = vunpack.c.h.b16 %v2640
    %v3817 = vunpack.c.l.b16 %v2641
    %v3818 = vunpack.c.h.b16 %v2641
    %v3819 = vunpack.c.l.b16 %v2642
    %v3820 = vunpack.c.h.b16 %v2642
    %v3821 = vunpack.c.l.b16 %v2643
    %v3822 = vunpack.c.h.b16 %v2643
    %v3823 = vunpack.c.l.b16 %v2644
    %v3824 = vunpack.c.h.b16 %v2644
    %v3825 = vunpack.c.l.b16 %v2645
    %v3826 = vunpack.c.h.b16 %v2645
    %v3827 = vunpack.c.l.b16 %v2646
    %v3828 = vunpack.c.h.b16 %v2646
    %v3829 = vunpack.c.l.b16 %v2647
    %v3830 = vunpack.c.h.b16 %v2647
    %v3831 = vunpack.c.l.b16 %v2648
    %v3832 = vunpack.c.h.b16 %v2648
    %v3833 = vunpack.c.l.b16 %v2649
    %v3834 = vunpack.c.h.b16 %v2649
    %v3835 = vunpack.c.l.b16 %v2650
    %v3836 = vunpack.c.h.b16 %v2650
    %v3837 = vunpack.c.l.b16 %v2651
    %v3838 = vunpack.c.h.b16 %v2651
    %v3839 = vunpack.c.l.b16 %v2652
    %v3840 = vunpack.c.h.b16 %v2652
    %v3841 = vunpack.c.l.b16 %v2653
    %v3842 = vunpack.c.h.b16 %v2653
    %v3843 = vunpack.c.l.b16 %v2654
    %v3844 = vunpack.c.h.b16 %v2654
    %v3845 = vunpack.c.l.b16 %v2655
    %v3846 = vunpack.c.h.b16 %v2655
    %v3847 = vunpack.c.l.b16 %v2656
    %v3848 = vunpack.c.h.b16 %v2656
    %v3849 = vunpack.c.l.b16 %v2657
    %v3850 = vunpack.c.h.b16 %v2657
    %v3851 = vunpack.c.l.b16 %v2658
    %v3852 = vunpack.c.h.b16 %v2658
    %v3853 = vunpack.c.l.b16 %v2659
    %v3854 = vunpack.c.h.b16 %v2659
    %v3855 = vunpack.c.l.b16 %v2660
    %v3856 = vunpack.c.h.b16 %v2660
    %v3857 = vunpack.c.l.b16 %v2661
    %v3858 = vunpack.c.h.b16 %v2661
    %v3859 = vunpack.c.l.b16 %v2662
    %v3860 = vunpack.c.h.b16 %v2662
    %v3861 = vunpack.c.l.b16 %v2663
    %v3862 = vunpack.c.h.b16 %v2663
    %v3863 = vunpack.c.l.b16 %v2664
    %v3864 = vunpack.c.h.b16 %v2664
    %v3865 = vunpack.c.l.b16 %v2665
    %v3866 = vunpack.c.h.b16 %v2665
    %v3867 = vunpack.c.l.b16 %v2666
    %v3868 = vunpack.c.h.b16 %v2666
    %v3869 = vunpack.c.l.b16 %v2667
    %v3870 = vunpack.c.h.b16 %v2667
    %v3871 = vunpack.c.l.b16 %v2668
    %v3872 = vunpack.c.h.b16 %v2668
    %v3873 = vunpack.c.l.b16 %v2669
    %v3874 = vunpack.c.h.b16 %v2669
    %v3875 = vunpack.c.l.b16 %v2670
    %v3876 = vunpack.c.h.b16 %v2670
    %v3877 = vunpack.c.l.b16 %v2671
    %v3878 = vunpack.c.h.b16 %v2671
    %v3879 = vunpack.c.l.b16 %v2672
    %v3880 = vunpack.c.h.b16 %v2672
    %v3881 = vunpack.c.l.b16 %v2673
    %v3882 = vunpack.c.h.b16 %v2673
    %v3883 = vunpack.c.l.b16 %v2674
    %v3884 = vunpack.c.h.b16 %v2674
    %v3885 = vunpack.c.l.b16 %v2675
    %v3886 = vunpack.c.h.b16 %v2675
    %v3887 = vunpack.c.l.b16 %v2676
    %v3888 = vunpack.c.h.b16 %v2676
    %v3889 = vunpack.c.l.b16 %v2677
    %v3890 = vunpack.c.h.b16 %v2677
    %v3891 = vunpack.c.l.b16 %v2678
    %v3892 = vunpack.c.h.b16 %v2678
    %v3893 = vunpack.c.l.b16 %v2679
    %v3894 = vunpack.c.h.b16 %v2679
    %v3895 = vunpack.c.l.b16 %v2680
    %v3896 = vunpack.c.h.b16 %v2680
    %v3897 = vunpack.c.l.b16 %v2681
    %v3898 = vunpack.c.h.b16 %v2681
    %v3899 = vunpack.c.l.b16 %v2682
    %v3900 = vunpack.c.h.b16 %v2682
    %v3901 = vunpack.c.l.b16 %v2683
    %v3902 = vunpack.c.h.b16 %v2683
    %v3903 = vunpack.c.l.b16 %v2684
    %v3904 = vunpack.c.h.b16 %v2684
    %v3905 = vunpack.c.l.b16 %v2685
    %v3906 = vunpack.c.h.b16 %v2685
    %v3907 = vunpack.c.l.b16 %v2686
    %v3908 = vunpack.c.h.b16 %v2686
    %v3909 = vunpack.c.l.b16 %v2687
    %v3910 = vunpack.c.h.b16 %v2687
    %v3911 = vunpack.c.l.b16 %v2688
    %v3912 = vunpack.c.h.b16 %v2688
    %v3913 = vunpack.c.l.b16 %v2689
    %v3914 = vunpack.c.h.b16 %v2689
    %v3915 = vunpack.c.l.b16 %v2690
    %v3916 = vunpack.c.h.b16 %v2690
    %v3917 = vunpack.c.l.b16 %v2691
    %v3918 = vunpack.c.h.b16 %v2691
    %v3919 = vunpack.c.l.b16 %v2692
    %v3920 = vunpack.c.h.b16 %v2692
    %v3921 = vunpack.c.l.b16 %v2693
    %v3922 = vunpack.c.h.b16 %v2693
    %v3923 = vunpack.c.l.b16 %v2694
    %v3924 = vunpack.c.h.b16 %v2694
    %v3925 = vunpack.c.l.b16 %v2695
    %v3926 = vunpack.c.h.b16 %v2695
    %v3927 = vunpack.c.l.b16 %v2696
    %v3928 = vunpack.c.h.b16 %v2696
    %v3929 = vunpack.c.l.b16 %v2697
    %v3930 = vunpack.c.h.b16 %v2697
    %v3931 = vunpack.c.l.b16 %v2698
    %v3932 = vunpack.c.h.b16 %v2698
    %v3933 = vunpack.c.l.b16 %v2699
    %v3934 = vunpack.c.h.b16 %v2699
    %v3935 = vunpack.c.l.b16 %v2700
    %v3936 = vunpack.c.h.b16 %v2700
    %v3937 = vunpack.c.l.b16 %v2701
    %v3938 = vunpack.c.h.b16 %v2701
    %v3939 = vunpack.c.l.b16 %v2702
    %v3940 = vunpack.c.h.b16 %v2702
    %v3941 = vunpack.c.l.b16 %v2703
    %v3942 = vunpack.c.h.b16 %v2703
    %v3943 = vunpack.c.l.b16 %v2704
    %v3944 = vunpack.c.h.b16 %v2704
    %v3945 = vunpack.c.l.b16 %v2705
    %v3946 = vunpack.c.h.b16 %v2705
    %v3947 = vunpack.c.l.b16 %v2706
    %v3948 = vunpack.c.h.b16 %v2706
    %v3949 = vunpack.c.l.b16 %v2707
    %v3950 = vunpack.c.h.b16 %v2707
    %v3951 = vunpack.c.l.b16 %v2708
    %v3952 = vunpack.c.h.b16 %v2708
    %v3953 = vunpack.c.l.b16 %v2709
    %v3954 = vunpack.c.h.b16 %v2709
    %v3955 = vunpack.c.l.b16 %v2710
    %v3956 = vunpack.c.h.b16 %v2710
    %v3957 = vunpack.c.l.b16 %v2711
    %v3958 = vunpack.c.h.b16 %v2711
    %v3959 = vunpack.c.l.b16 %v2712
    %v3960 = vunpack.c.h.b16 %v2712
    %v3961 = vunpack.c.l.b16 %v2713
    %v3962 = vunpack.c.h.b16 %v2713
    %v3963 = vunpack.c.l.b16 %v2714
    %v3964 = vunpack.c.h.b16 %v2714
    %v3965 = vunpack.c.l.b16 %v2715
    %v3966 = vunpack.c.h.b16 %v2715
    %v3967 = vunpack.c.l.b16 %v2716
    %v3968 = vunpack.c.h.b16 %v2716
    %v3969 = vunpack.c.l.b16 %v2717
    %v3970 = vunpack.c.h.b16 %v2717
    %v3971 = vunpack.c.l.b16 %v2718
    %v3972 = vunpack.c.h.b16 %v2718
    %v3973 = vunpack.c.l.b16 %v2719
    %v3974 = vunpack.c.h.b16 %v2719
    %v3975 = vunpack.c.l.b16 %v2720
    %v3976 = vunpack.c.h.b16 %v2720
    %v3977 = vunpack.c.l.b16 %v2721
    %v3978 = vunpack.c.h.b16 %v2721
    %v3979 = vunpack.c.l.b16 %v2722
    %v3980 = vunpack.c.h.b16 %v2722
    %v3981 = vunpack.c.l.b16 %v2723
    %v3982 = vunpack.c.h.b16 %v2723
    %v3983 = vunpack.c.l.b16 %v2724
    %v3984 = vunpack.c.h.b16 %v2724
    %v3985 = vunpack.c.l.b16 %v2725
    %v3986 = vunpack.c.h.b16 %v2725
    %v3987 = vunpack.c.l.b16 %v2726
    %v3988 = vunpack.c.h.b16 %v2726
    %v3989 = vunpack.c.l.b16 %v2727
    %v3990 = vunpack.c.h.b16 %v2727
    %v3991 = vunpack.c.l.b16 %v2728
    %v3992 = vunpack.c.h.b16 %v2728
    %v3993 = vunpack.c.l.b16 %v2729
    %v3994 = vunpack.c.h.b16 %v2729
    %v3995 = vunpack.c.l.b16 %v2730
    %v3996 = vunpack.c.h.b16 %v2730
    %v3997 = vunpack.c.l.b16 %v2731
    %v3998 = vunpack.c.h.b16 %v2731
    %v3999 = vunpack.c.l.b16 %v2732
    %v4000 = vunpack.c.h.b16 %v2732
    %v4001 = vunpack.c.l.b16 %v2733
    %v4002 = vunpack.c.h.b16 %v2733
    %v4003 = vunpack.c.l.b16 %v2734
    %v4004 = vunpack.c.h.b16 %v2734
    %v4005 = vunpack.c.l.b16 %v2735
    %v4006 = vunpack.c.h.b16 %v2735
    %v4007 = vunpack.c.l.b16 %v2736
    %v4008 = vunpack.c.h.b16 %v2736
    %v4009 = vunpack.c.l.b16 %v2737
    %v4010 = vunpack.c.h.b16 %v2737
    %v4011 = vunpack.c.l.b16 %v2738
    %v4012 = vunpack.c.h.b16 %v2738
    %v4013 = vunpack.c.l.b16 %v2739
    %v4014 = vunpack.c.h.b16 %v2739
    %v4015 = vunpack.c.l.b16 %v2740
    %v4016 = vunpack.c.h.b16 %v2740
    %v4017 = vunpack.c.l.b16 %v2741
    %v4018 = vunpack.c.h.b16 %v2741
    %v4019 = vunpack.c.l.b16 %v2742
    %v4020 = vunpack.c.h.b16 %v2742
    %v4021 = vunpack.c.l.b16 %v2743
    %v4022 = vunpack.c.h.b16 %v2743
    %v4023 = vunpack.c.l.b16 %v2744
    %v4024 = vunpack.c.h.b16 %v2744
    %v4025 = vunpack.c.l.b16 %v2745
    %v4026 = vunpack.c.h.b16 %v2745
    %v4027 = vunpack.c.l.b16 %v2746
    %v4028 = vunpack.c.h.b16 %v2746
    %v4029 = vunpack.c.l.b16 %v2747
    %v4030 = vunpack.c.h.b16 %v2747
    %v4031 = vunpack.c.l.b16 %v2748
    %v4032 = vunpack.c.h.b16 %v2748
    %v4033 = vunpack.c.l.b16 %v2749
    %v4034 = vunpack.c.h.b16 %v2749
    %v4035 = vunpack.c.l.b16 %v2750
    %v4036 = vunpack.c.h.b16 %v2750
    %v4037 = vunpack.c.l.b16 %v2751
    %v4038 = vunpack.c.h.b16 %v2751
    %v4039 = vunpack.c.l.b16 %v2752
    %v4040 = vunpack.c.h.b16 %v2752
    %v4041 = vunpack.c.l.b16 %v2753
    %v4042 = vunpack.c.h.b16 %v2753
    %v4043 = vunpack.c.l.b16 %v2754
    %v4044 = vunpack.c.h.b16 %v2754
    %v4045 = vunpack.c.l.b16 %v2755
    %v4046 = vunpack.c.h.b16 %v2755
    %v4047 = vunpack.c.l.b16 %v2756
    %v4048 = vunpack.c.h.b16 %v2756
    %v4049 = vunpack.c.l.b16 %v2757
    %v4050 = vunpack.c.h.b16 %v2757
    %v4051 = vunpack.c.l.b16 %v2758
    %v4052 = vunpack.c.h.b16 %v2758
    %v4053 = vunpack.c.l.b16 %v2759
    %v4054 = vunpack.c.h.b16 %v2759
    %v4055 = vunpack.c.l.b16 %v2760
    %v4056 = vunpack.c.h.b16 %v2760
    %v4057 = vunpack.c.l.b16 %v2761
    %v4058 = vunpack.c.h.b16 %v2761
    %v4059 = vunpack.c.l.b16 %v2762
    %v4060 = vunpack.c.h.b16 %v2762
    %v4061 = vunpack.c.l.b16 %v2763
    %v4062 = vunpack.c.h.b16 %v2763
    %v4063 = vunpack.c.l.b16 %v2764
    %v4064 = vunpack.c.h.b16 %v2764
    %v4065 = vunpack.c.l.b16 %v2765
    %v4066 = vunpack.c.h.b16 %v2765
    %v4067 = vunpack.c.l.b16 %v2766
    %v4068 = vunpack.c.h.b16 %v2766
    %v4069 = vunpack.c.l.b16 %v2767
    %v4070 = vunpack.c.h.b16 %v2767
    %v4071 = vunpack.c.l.b16 %v2768
    %v4072 = vunpack.c.h.b16 %v2768
    %v4073 = vunpack.c.l.b16 %v2769
    %v4074 = vunpack.c.h.b16 %v2769
    %v4075 = vunpack.c.l.b16 %v2770
    %v4076 = vunpack.c.h.b16 %v2770
    %v4077 = vunpack.c.l.b16 %v2771
    %v4078 = vunpack.c.h.b16 %v2771
    %v4079 = vunpack.c.l.b16 %v2772
    %v4080 = vunpack.c.h.b16 %v2772
    %v4081 = vunpack.c.l.b16 %v2773
    %v4082 = vunpack.c.h.b16 %v2773
    %v4083 = vunpack.c.l.b16 %v2774
    %v4084 = vunpack.c.h.b16 %v2774
    %v4085 = vunpack.c.l.b16 %v2775
    %v4086 = vunpack.c.h.b16 %v2775
    %v4087 = vunpack.c.l.b16 %v2776
    %v4088 = vunpack.c.h.b16 %v2776
    %v4089 = vunpack.c.l.b16 %v2777
    %v4090 = vunpack.c.h.b16 %v2777
    %v4091 = vunpack.c.l.b16 %v2778
    %v4092 = vunpack.c.h.b16 %v2778
    %v4093 = vunpack.c.l.b16 %v2779
    %v4094 = vunpack.c.h.b16 %v2779
    %v4095 = vunpack.c.l.b16 %v2780
    %v4096 = vunpack.c.h.b16 %v2780
    %v4097 = vunpack.c.l.b16 %v2781
    %v4098 = vunpack.c.h.b16 %v2781
    %v4099 = vunpack.c.l.b16 %v2782
    %v4100 = vunpack.c.h.b16 %v2782
    %v4101 = vunpack.c.l.b16 %v2783
    %v4102 = vunpack.c.h.b16 %v2783
    %v4103 = vunpack.c.l.b16 %v2784
    %v4104 = vunpack.c.h.b16 %v2784
    %v4105 = vunpack.c.l.b16 %v2785
    %v4106 = vunpack.c.h.b16 %v2785
    %v4107 = vunpack.c.l.b16 %v2786
    %v4108 = vunpack.c.h.b16 %v2786
    %v4109 = vunpack.c.l.b16 %v2787
    %v4110 = vunpack.c.h.b16 %v2787
    %v4111 = vunpack.c.l.b16 %v2788
    %v4112 = vunpack.c.h.b16 %v2788
    %v4113 = vunpack.c.l.b16 %v2789
    %v4114 = vunpack.c.h.b16 %v2789
    %v4115 = vunpack.c.l.b16 %v2790
    %v4116 = vunpack.c.h.b16 %v2790
    %v4117 = vunpack.c.l.b16 %v2791
    %v4118 = vunpack.c.h.b16 %v2791
    %v4119 = vunpack.c.l.b16 %v2792
    %v4120 = vunpack.c.h.b16 %v2792
    %v4121 = vunpack.c.l.b16 %v2793
    %v4122 = vunpack.c.h.b16 %v2793
    %v4123 = vunpack.c.l.b16 %v2794
    %v4124 = vunpack.c.h.b16 %v2794
    %v4125 = vunpack.c.l.b16 %v2795
    %v4126 = vunpack.c.h.b16 %v2795
    %v4127 = vunpack.c.l.b16 %v2796
    %v4128 = vunpack.c.h.b16 %v2796
    %v4129 = vunpack.c.l.b16 %v2797
    %v4130 = vunpack.c.h.b16 %v2797
    %v4131 = vunpack.c.l.b16 %v2798
    %v4132 = vunpack.c.h.b16 %v2798
    %v4133 = vunpack.c.l.b16 %v2799
    %v4134 = vunpack.c.h.b16 %v2799
    %v4135 = vunpack.c.l.b16 %v2800
    %v4136 = vunpack.c.h.b16 %v2800
    %v4137 = vunpack.c.l.b16 %v2801
    %v4138 = vunpack.c.h.b16 %v2801
    %v4139 = vunpack.c.l.b16 %v2802
    %v4140 = vunpack.c.h.b16 %v2802
    %v4141 = vunpack.c.l.b16 %v2803
    %v4142 = vunpack.c.h.b16 %v2803
    %v4143 = vunpack.c.l.b16 %v2804
    %v4144 = vunpack.c.h.b16 %v2804
    %v4145 = vunpack.c.l.b16 %v2805
    %v4146 = vunpack.c.h.b16 %v2805
    %v4147 = vunpack.c.l.b16 %v2806
    %v4148 = vunpack.c.h.b16 %v2806
    %v4149 = vunpack.c.l.b16 %v2807
    %v4150 = vunpack.c.h.b16 %v2807
    %v4151 = vunpack.c.l.b16 %v2808
    %v4152 = vunpack.c.h.b16 %v2808
    %v4153 = vunpack.c.l.b16 %v2809
    %v4154 = vunpack.c.h.b16 %v2809
    %v4155 = vunpack.c.l.b16 %v2810
    %v4156 = vunpack.c.h.b16 %v2810
    %v4157 = vunpack.c.l.b16 %v2811
    %v4158 = vunpack.c.h.b16 %v2811
    %v4159 = vunpack.c.l.b16 %v2812
    %v4160 = vunpack.c.h.b16 %v2812
    %v4161 = vunpack.c.l.b16 %v2813
    %v4162 = vunpack.c.h.b16 %v2813
    %v4163 = vunpack.c.l.b16 %v2814
    %v4164 = vunpack.c.h.b16 %v2814
    %v4165 = vunpack.c.l.b16 %v2815
    %v4166 = vunpack.c.h.b16 %v2815
    %v4167 = vunpack.c.l.b16 %v2816
    %v4168 = vunpack.c.h.b16 %v2816
    %v4169 = vunpack.c.l.b16 %v2817
    %v4170 = vunpack.c.h.b16 %v2817
    %v4171 = vunpack.c.l.b16 %v2818
    %v4172 = vunpack.c.h.b16 %v2818
    %v4173 = vunpack.c.l.b16 %v2819
    %v4174 = vunpack.c.h.b16 %v2819
    %v4175 = vunpack.c.l.b16 %v2820
    %v4176 = vunpack.c.h.b16 %v2820
    %v4177 = vunpack.c.l.b16 %v2821
    %v4178 = vunpack.c.h.b16 %v2821
    %v4179 = vunpack.c.l.b16 %v2822
    %v4180 = vunpack.c.h.b16 %v2822
    %v4181 = vunpack.c.l.b16 %v2823
    %v4182 = vunpack.c.h.b16 %v2823
    %v4183 = vunpack.c.l.b16 %v2824
    %v4184 = vunpack.c.h.b16 %v2824
    %v4185 = vunpack.c.l.b16 %v2825
    %v4186 = vunpack.c.h.b16 %v2825
    %v4187 = vunpack.c.l.b16 %v2826
    %v4188 = vunpack.c.h.b16 %v2826
    %v4189 = vunpack.c.l.b16 %v2827
    %v4190 = vunpack.c.h.b16 %v2827
    %v4191 = vunpack.c.l.b16 %v2828
    %v4192 = vunpack.c.h.b16 %v2828
    %v4193 = vunpack.c.l.b16 %v2829
    %v4194 = vunpack.c.h.b16 %v2829
    %v4195 = vunpack.c.l.b16 %v2830
    %v4196 = vunpack.c.h.b16 %v2830
    %v4197 = vunpack.c.l.b16 %v2831
    %v4198 = vunpack.c.h.b16 %v2831
    %v4199 = vunpack.c.l.b16 %v2832
    %v4200 = vunpack.c.h.b16 %v2832
    %v4201 = vunpack.c.l.b16 %v2833
    %v4202 = vunpack.c.h.b16 %v2833
    %v4203 = vunpack.c.l.b16 %v2834
    %v4204 = vunpack.c.h.b16 %v2834
    %v4205 = vunpack.c.l.b16 %v2835
    %v4206 = vunpack.c.h.b16 %v2835
    %v4207 = vunpack.c.l.b16 %v2836
    %v4208 = vunpack.c.h.b16 %v2836
    %v4209 = vunpack.c.l.b16 %v2837
    %v4210 = vunpack.c.h.b16 %v2837
    %v4211 = vunpack.c.l.b16 %v2838
    %v4212 = vunpack.c.h.b16 %v2838
    %v4213 = vunpack.c.l.b16 %v2839
    %v4214 = vunpack.c.h.b16 %v2839
    %v4215 = vunpack.c.l.b16 %v2840
    %v4216 = vunpack.c.h.b16 %v2840
    %v4217 = vunpack.c.l.b16 %v2841
    %v4218 = vunpack.c.h.b16 %v2841
    %v4219 = vunpack.c.l.b16 %v2842
    %v4220 = vunpack.c.h.b16 %v2842
    %v4221 = vunpack.c.l.b16 %v2843
    %v4222 = vunpack.c.h.b16 %v2843
    %v4223 = vunpack.c.l.b16 %v2844
    %v4224 = vunpack.c.h.b16 %v2844
    %v4225 = vunpack.c.l.b16 %v2845
    %v4226 = vunpack.c.h.b16 %v2845
    %v4227 = vunpack.c.l.b16 %v2846
    %v4228 = vunpack.c.h.b16 %v2846
    %v4229 = vunpack.c.l.b16 %v2847
    %v4230 = vunpack.c.h.b16 %v2847
    %v4231 = vunpack.c.l.b16 %v2848
    %v4232 = vunpack.c.h.b16 %v2848
    %v4233 = vunpack.c.l.b16 %v2849
    %v4234 = vunpack.c.h.b16 %v2849
    %v4235 = vunpack.c.l.b16 %v2850
    %v4236 = vunpack.c.h.b16 %v2850
    %v4237 = vunpack.c.l.b16 %v2851
    %v4238 = vunpack.c.h.b16 %v2851
    %v4239 = vunpack.c.l.b16 %v2852
    %v4240 = vunpack.c.h.b16 %v2852
    %v4241 = vunpack.c.l.b16 %v2853
    %v4242 = vunpack.c.h.b16 %v2853
    %v4243 = vunpack.c.l.b16 %v2854
    %v4244 = vunpack.c.h.b16 %v2854
    %v4245 = vunpack.c.l.b16 %v2855
    %v4246 = vunpack.c.h.b16 %v2855
    %v4247 = vunpack.c.l.b16 %v2856
    %v4248 = vunpack.c.h.b16 %v2856
    %v4249 = vunpack.c.l.b16 %v2857
    %v4250 = vunpack.c.h.b16 %v2857
    %v4251 = vunpack.c.l.b16 %v2858
    %v4252 = vunpack.c.h.b16 %v2858
    %v4253 = vunpack.c.l.b16 %v2859
    %v4254 = vunpack.c.h.b16 %v2859
    %v4255 = vunpack.c.l.b16 %v2860
    %v4256 = vunpack.c.h.b16 %v2860
    %v4257 = vunpack.c.l.b16 %v2861
    %v4258 = vunpack.c.h.b16 %v2861
    %v4259 = vunpack.c.l.b16 %v2862
    %v4260 = vunpack.c.h.b16 %v2862
    %v4261 = vunpack.c.l.b16 %v2863
    %v4262 = vunpack.c.h.b16 %v2863
    %v4263 = vunpack.c.l.b16 %v2864
    %v4264 = vunpack.c.h.b16 %v2864
    %v4265 = vunpack.c.l.b16 %v2865
    %v4266 = vunpack.c.h.b16 %v2865
    %v4267 = vunpack.c.l.b16 %v2866
    %v4268 = vunpack.c.h.b16 %v2866
    %v4269 = vunpack.c.l.b16 %v2867
    %v4270 = vunpack.c.h.b16 %v2867
    %v4271 = vunpack.c.l.b16 %v2868
    %v4272 = vunpack.c.h.b16 %v2868
    %v4273 = vunpack.c.l.b16 %v2869
    %v4274 = vunpack.c.h.b16 %v2869
    %v4275 = vunpack.c.l.b16 %v2870
    %v4276 = vunpack.c.h.b16 %v2870
    %v4277 = vunpack.c.l.b16 %v2871
    %v4278 = vunpack.c.h.b16 %v2871
    %v4279 = vunpack.c.l.b16 %v2872
    %v4280 = vunpack.c.h.b16 %v2872
    %v4281 = vunpack.c.l.b16 %v2873
    %v4282 = vunpack.c.h.b16 %v2873
    %v4283 = vunpack.c.l.b16 %v2874
    %v4284 = vunpack.c.h.b16 %v2874
    %v4285 = vunpack.c.l.b16 %v2875
    %v4286 = vunpack.c.h.b16 %v2875
    %v4287 = vunpack.c.l.b16 %v2876
    %v4288 = vunpack.c.h.b16 %v2876
    %v4289 = vunpack.c.l.b16 %v2877
    %v4290 = vunpack.c.h.b16 %v2877
    %v4291 = vunpack.c.l.b16 %v2878
    %v4292 = vunpack.c.h.b16 %v2878
    %v4293 = vunpack.c.l.b16 %v2879
    %v4294 = vunpack.c.h.b16 %v2879
    %v4295 = vunpack.c.l.b16 %v2880
    %v4296 = vunpack.c.h.b16 %v2880
    %v4297 = vunpack.c.l.b16 %v2881
    %v4298 = vunpack.c.h.b16 %v2881
    %v4299 = vunpack.c.l.b16 %v2882
    %v4300 = vunpack.c.h.b16 %v2882
    %v4301 = vunpack.c.l.b16 %v2883
    %v4302 = vunpack.c.h.b16 %v2883
    %v4303 = vunpack.c.l.b16 %v2884
    %v4304 = vunpack.c.h.b16 %v2884
    %v4305 = vunpack.c.l.b16 %v2885
    %v4306 = vunpack.c.h.b16 %v2885
    %v4307 = vunpack.c.l.b16 %v2886
    %v4308 = vunpack.c.h.b16 %v2886
    %v4309 = vunpack.c.l.b16 %v2887
    %v4310 = vunpack.c.h.b16 %v2887
    %v4311 = vunpack.c.l.b16 %v2888
    %v4312 = vunpack.c.h.b16 %v2888
    %v4313 = vunpack.c.l.b16 %v2889
    %v4314 = vunpack.c.h.b16 %v2889
    %v4315 = vunpack.c.l.b16 %v2890
    %v4316 = vunpack.c.h.b16 %v2890
    %v4317 = vunpack.c.l.b16 %v2891
    %v4318 = vunpack.c.h.b16 %v2891
    %v4319 = vunpack.c.l.b16 %v2892
    %v4320 = vunpack.c.h.b16 %v2892
    %v4321 = vunpack.c.l.b16 %v2893
    %v4322 = vunpack.c.h.b16 %v2893
    %v4323 = vunpack.c.l.b16 %v2894
    %v4324 = vunpack.c.h.b16 %v2894
    %v4325 = vunpack.c.l.b16 %v2895
    %v4326 = vunpack.c.h.b16 %v2895
    %v4327 = vunpack.c.l.b16 %v2896
    %v4328 = vunpack.c.h.b16 %v2896
    %v4329 = vunpack.c.l.b16 %v2897
    %v4330 = vunpack.c.h.b16 %v2897
    %v4331 = vunpack.c.l.b16 %v2898
    %v4332 = vunpack.c.h.b16 %v2898
    %v4333 = vunpack.c.l.b16 %v2899
    %v4334 = vunpack.c.h.b16 %v2899
    %v4335 = vunpack.c.l.b16 %v2900
    %v4336 = vunpack.c.h.b16 %v2900
    %v4337 = vunpack.c.l.b16 %v2901
    %v4338 = vunpack.c.h.b16 %v2901
    %v4339 = vunpack.c.l.b16 %v2902
    %v4340 = vunpack.c.h.b16 %v2902
    %v4341 = vunpack.c.l.b16 %v2903
    %v4342 = vunpack.c.h.b16 %v2903
    %v4343 = vunpack.c.l.b16 %v2904
    %v4344 = vunpack.c.h.b16 %v2904
    %v4345 = vunpack.c.l.b16 %v2905
    %v4346 = vunpack.c.h.b16 %v2905
    %v4347 = vunpack.c.l.b16 %v2906
    %v4348 = vunpack.c.h.b16 %v2906
    %v4349 = vunpack.c.l.b16 %v2907
    %v4350 = vunpack.c.h.b16 %v2907
    %v4351 = vunpack.c.l.b16 %v2908
    %v4352 = vunpack.c.h.b16 %v2908
    %v4353 = vunpack.c.l.b16 %v2909
    %v4354 = vunpack.c.h.b16 %v2909
    %v4355 = vunpack.c.l.b16 %v2910
    %v4356 = vunpack.c.h.b16 %v2910
    %v4357 = vunpack.c.l.b16 %v2911
    %v4358 = vunpack.c.h.b16 %v2911
    %v4359 = vunpack.c.l.b16 %v2912
    %v4360 = vunpack.c.h.b16 %v2912
    %v4361 = vunpack.c.l.b16 %v2913
    %v4362 = vunpack.c.h.b16 %v2913
    %v4363 = vunpack.c.l.b16 %v2914
    %v4364 = vunpack.c.h.b16 %v2914
    %v4365 = vunpack.c.l.b16 %v2915
    %v4366 = vunpack.c.h.b16 %v2915
    %v4367 = vunpack.c.l.b16 %v2916
    %v4368 = vunpack.c.h.b16 %v2916
    %v4369 = vunpack.c.l.b16 %v2917
    %v4370 = vunpack.c.h.b16 %v2917
    %v4371 = vunpack.c.l.b16 %v2918
    %v4372 = vunpack.c.h.b16 %v2918
    %v4373 = vunpack.c.l.b16 %v2919
    %v4374 = vunpack.c.h.b16 %v2919
    %v4375 = vunpack.c.l.b16 %v2920
    %v4376 = vunpack.c.h.b16 %v2920
    %v4377 = vunpack.c.l.b16 %v2921
    %v4378 = vunpack.c.h.b16 %v2921
    %v4379 = vunpack.c.l.b16 %v2922
    %v4380 = vunpack.c.h.b16 %v2922
    %v4381 = vunpack.c.l.b16 %v2923
    %v4382 = vunpack.c.h.b16 %v2923
    %v4383 = vunpack.c.l.b16 %v2924
    %v4384 = vunpack.c.h.b16 %v2924
    %v4385 = vunpack.c.l.b16 %v2925
    %v4386 = vunpack.c.h.b16 %v2925
    %v4387 = vunpack.c.l.b16 %v2926
    %v4388 = vunpack.c.h.b16 %v2926
    %v4389 = vunpack.c.l.b16 %v2927
    %v4390 = vunpack.c.h.b16 %v2927
    %v4391 = vunpack.c.l.b16 %v2928
    %v4392 = vunpack.c.h.b16 %v2928
    %v4393 = vunpack.c.l.b16 %v2929
    %v4394 = vunpack.c.h.b16 %v2929
    %v4395 = vunpack.c.l.b16 %v2930
    %v4396 = vunpack.c.h.b16 %v2930
    %v4397 = vunpack.c.l.b16 %v2931
    %v4398 = vunpack.c.h.b16 %v2931
    %v4399 = vunpack.c.l.b16 %v2932
    %v4400 = vunpack.c.h.b16 %v2932
    %v4401 = vunpack.c.l.b16 %v2933
    %v4402 = vunpack.c.h.b16 %v2933
    %v4403 = vunpack.c.l.b16 %v2934
    %v4404 = vunpack.c.h.b16 %v2934
    %v4405 = vunpack.c.l.b16 %v2935
    %v4406 = vunpack.c.h.b16 %v2935
    %v4407 = vunpack.c.l.b16 %v2936
    %v4408 = vunpack.c.h.b16 %v2936
    %v4409 = vunpack.c.l.b16 %v2937
    %v4410 = vunpack.c.h.b16 %v2937
    %v4411 = vunpack.c.l.b16 %v2938
    %v4412 = vunpack.c.h.b16 %v2938
    %v4413 = vunpack.c.l.b16 %v2939
    %v4414 = vunpack.c.h.b16 %v2939
    %v4415 = vunpack.c.l.b16 %v2940
    %v4416 = vunpack.c.h.b16 %v2940
    %v4417 = vunpack.c.l.b16 %v2941
    %v4418 = vunpack.c.h.b16 %v2941
    %v4419 = vunpack.c.l.b16 %v2942
    %v4420 = vunpack.c.h.b16 %v2942
    %v4421 = vunpack.c.l.b16 %v2943
    %v4422 = vunpack.c.h.b16 %v2943
    %v4423 = vunpack.c.l.b16 %v2944
    %v4424 = vunpack.c.h.b16 %v2944
    %v4425 = vunpack.c.l.b16 %v2945
    %v4426 = vunpack.c.h.b16 %v2945
    %v4427 = vunpack.c.l.b16 %v2946
    %v4428 = vunpack.c.h.b16 %v2946
    %v4429 = vunpack.c.l.b16 %v2947
    %v4430 = vunpack.c.h.b16 %v2947
    %v4431 = vunpack.c.l.b16 %v2948
    %v4432 = vunpack.c.h.b16 %v2948
    %v4433 = vunpack.c.l.b16 %v2949
    %v4434 = vunpack.c.h.b16 %v2949
    %v4435 = vunpack.c.l.b16 %v2950
    %v4436 = vunpack.c.h.b16 %v2950
    %v4437 = vunpack.c.l.b16 %v2951
    %v4438 = vunpack.c.h.b16 %v2951
    %v4439 = vunpack.c.l.b16 %v2952
    %v4440 = vunpack.c.h.b16 %v2952
    %v4441 = vunpack.c.l.b16 %v2953
    %v4442 = vunpack.c.h.b16 %v2953
    %v4443 = vunpack.c.l.b16 %v2954
    %v4444 = vunpack.c.h.b16 %v2954
    %v4445 = vunpack.c.l.b16 %v2955
    %v4446 = vunpack.c.h.b16 %v2955
    %v4447 = vunpack.c.l.b16 %v2956
    %v4448 = vunpack.c.h.b16 %v2956
    %v4449 = vunpack.c.l.b16 %v2957
    %v4450 = vunpack.c.h.b16 %v2957
    %v4451 = vunpack.c.l.b16 %v2958
    %v4452 = vunpack.c.h.b16 %v2958
    %v4453 = vunpack.c.l.b16 %v2959
    %v4454 = vunpack.c.h.b16 %v2959
    %v4455 = vunpack.c.l.b16 %v2960
    %v4456 = vunpack.c.h.b16 %v2960
    %v4457 = vunpack.c.l.b16 %v2961
    %v4458 = vunpack.c.h.b16 %v2961
    %v4459 = vunpack.c.l.b16 %v2962
    %v4460 = vunpack.c.h.b16 %v2962
    %v4461 = vunpack.c.l.b16 %v2963
    %v4462 = vunpack.c.h.b16 %v2963
    %v4463 = vunpack.c.l.b16 %v2964
    %v4464 = vunpack.c.h.b16 %v2964
    %v4465 = vunpack.c.l.b16 %v2965
    %v4466 = vunpack.c.h.b16 %v2965
    %v4467 = vunpack.c.l.b16 %v2966
    %v4468 = vunpack.c.h.b16 %v2966
    %v4469 = vunpack.c.l.b16 %v2967
    %v4470 = vunpack.c.h.b16 %v2967
    %v4471 = vunpack.c.l.b16 %v2968
    %v4472 = vunpack.c.h.b16 %v2968
    %v4473 = vunpack.c.l.b16 %v2969
    %v4474 = vunpack.c.h.b16 %v2969
    %v4475 = vunpack.c.l.b16 %v2970
    %v4476 = vunpack.c.h.b16 %v2970
    %v4477 = vunpack.c.l.b16 %v2971
    %v4478 = vunpack.c.h.b16 %v2971
    %v4479 = vunpack.c.l.b16 %v2972
    %v4480 = vunpack.c.h.b16 %v2972
    %v4481 = vunpack.c.l.b16 %v2973
    %v4482 = vunpack.c.h.b16 %v2973
    %v4483 = vunpack.c.l.b16 %v2974
    %v4484 = vunpack.c.h.b16 %v2974
    %v4485 = vunpack.c.l.b16 %v2975
    %v4486 = vunpack.c.h.b16 %v2975
    %v4487 = vunpack.c.l.b16 %v2976
    %v4488 = vunpack.c.h.b16 %v2976
    %v4489 = vunpack.c.l.b16 %v2977
    %v4490 = vunpack.c.h.b16 %v2977
    %v4491 = vunpack.c.l.b16 %v2978
    %v4492 = vunpack.c.h.b16 %v2978
    %v4493 = vunpack.c.l.b16 %v2979
    %v4494 = vunpack.c.h.b16 %v2979
    %v4495 = vunpack.c.l.b16 %v2980
    %v4496 = vunpack.c.h.b16 %v2980
    %v4497 = vunpack.c.l.b16 %v2981
    %v4498 = vunpack.c.h.b16 %v2981
    %v4499 = vunpack.c.l.b16 %v2982
    %v4500 = vunpack.c.h.b16 %v2982
    %v4501 = vunpack.c.l.b16 %v2983
    %v4502 = vunpack.c.h.b16 %v2983
    %v4503 = vunpack.c.l.b16 %v2984
    %v4504 = vunpack.c.h.b16 %v2984
    %v4505 = vunpack.c.l.b16 %v2985
    %v4506 = vunpack.c.h.b16 %v2985
    %v4507 = vunpack.c.l.b16 %v2986
    %v4508 = vunpack.c.h.b16 %v2986
    %v4509 = vunpack.c.l.b16 %v2987
    %v4510 = vunpack.c.h.b16 %v2987
    %v4511 = vunpack.c.l.b16 %v2988
    %v4512 = vunpack.c.h.b16 %v2988
    %v4513 = vunpack.c.l.b16 %v2989
    %v4514 = vunpack.c.h.b16 %v2989
    %v4515 = vunpack.c.l.b16 %v2990
    %v4516 = vunpack.c.h.b16 %v2990
    %v4517 = vunpack.c.l.b16 %v2991
    %v4518 = vunpack.c.h.b16 %v2991
    %v4519 = vunpack.c.l.b16 %v2992
    %v4520 = vunpack.c.h.b16 %v2992
    %v4521 = vunpack.c.l.b16 %v2993
    %v4522 = vunpack.c.h.b16 %v2993
    %v4523 = vunpack.c.l.b16 %v2994
    %v4524 = vunpack.c.h.b16 %v2994
    %v4525 = vunpack.c.l.b16 %v2995
    %v4526 = vunpack.c.h.b16 %v2995
    %v4527 = vunpack.c.l.b16 %v2996
    %v4528 = vunpack.c.h.b16 %v2996
    %v4529 = vunpack.c.l.b16 %v2997
    %v4530 = vunpack.c.h.b16 %v2997
    %v4531 = vunpack.c.l.b16 %v2998
    %v4532 = vunpack.c.h.b16 %v2998
    %v4533 = vunpack.c.l.b16 %v2999
    %v4534 = vunpack.c.h.b16 %v2999
    %v4535 = vunpack.c.l.b16 %v3000
    %v4536 = vunpack.c.h.b16 %v3000
    %v4537 = vunpack.c.l.b16 %v3001
    %v4538 = vunpack.c.h.b16 %v3001
    %v4539 = vunpack.c.l.b16 %v3002
    %v4540 = vunpack.c.h.b16 %v3002
    %v4541 = vunpack.c.l.b16 %v3003
    %v4542 = vunpack.c.h.b16 %v3003
    %v4543 = vunpack.c.l.b16 %v3004
    %v4544 = vunpack.c.h.b16 %v3004
    %v4545 = vunpack.c.l.b16 %v3005
    %v4546 = vunpack.c.h.b16 %v3005
    %v4547 = vunpack.c.l.b16 %v3006
    %v4548 = vunpack.c.h.b16 %v3006
    %v4549 = vunpack.c.l.b16 %v3007
    %v4550 = vunpack.c.h.b16 %v3007
    %v4551 = vunpack.c.l.b16 %v3008
    %v4552 = vunpack.c.h.b16 %v3008
    %v4553 = vunpack.c.l.b16 %v3009
    %v4554 = vunpack.c.h.b16 %v3009
    %v4555 = vunpack.c.l.b16 %v3010
    %v4556 = vunpack.c.h.b16 %v3010
    %v4557 = vunpack.c.l.b16 %v3011
    %v4558 = vunpack.c.h.b16 %v3011
    %v4559 = vunpack.c.l.b16 %v3012
    %v4560 = vunpack.c.h.b16 %v3012
    %v4561 = vunpack.c.l.b16 %v3013
    %v4562 = vunpack.c.h.b16 %v3013
    %v4563 = vunpack.c.l.b16 %v3014
    %v4564 = vunpack.c.h.b16 %v3014
    %v4565 = vunpack.c.l.b16 %v3015
    %v4566 = vunpack.c.h.b16 %v3015
    %v4567 = vunpack.c.l.b16 %v3016
    %v4568 = vunpack.c.h.b16 %v3016
    %v4569 = vunpack.c.l.b16 %v3017
    %v4570 = vunpack.c.h.b16 %v3017
    %v4571 = vunpack.c.l.b16 %v3018
    %v4572 = vunpack.c.h.b16 %v3018
    %v4573 = vpack.c.b16 %v3557, %v3549
    %v4574 = vpack.c.b16 %v3558, %v3550
    %v4575 = vpack.c.b16 %v3559, %v3551
    %v4576 = vpack.c.b16 %v3560, %v3552
    %v4577 = vpack.c.b16 %v3561, %v3553
    %v4578 = vpack.c.b16 %v3562, %v3554
    %v4579 = vpack.c.b16 %v3563, %v3555
    %v4580 = vpack.c.b16 %v3564, %v3556
    %v4581 = vpack.c.b16 %v3573, %v3565
    %v4582 = vpack.c.b16 %v3574, %v3566
    %v4583 = vpack.c.b16 %v3575, %v3567
    %v4584 = vpack.c.b16 %v3576, %v3568
    %v4585 = vpack.c.b16 %v3577, %v3569
    %v4586 = vpack.c.b16 %v3578, %v3570
    %v4587 = vpack.c.b16 %v3579, %v3571
    %v4588 = vpack.c.b16 %v3580, %v3572
    %v4589 = vpack.c.b16 %v3589, %v3581
    %v4590 = vpack.c.b16 %v3590, %v3582
    %v4591 = vpack.c.b16 %v3591, %v3583
    %v4592 = vpack.c.b16 %v3592, %v3584
    %v4593 = vpack.c.b16 %v3593, %v3585
    %v4594 = vpack.c.b16 %v3594, %v3586
    %v4595 = vpack.c.b16 %v3595, %v3587
    %v4596 = vpack.c.b16 %v3596, %v3588
    %v4597 = vpack.c.b16 %v3605, %v3597
    %v4598 = vpack.c.b16 %v3606, %v3598
    %v4599 = vpack.c.b16 %v3607, %v3599
    %v4600 = vpack.c.b16 %v3608, %v3600
    %v4601 = vpack.c.b16 %v3609, %v3601
    %v4602 = vpack.c.b16 %v3610, %v3602
    %v4603 = vpack.c.b16 %v3611, %v3603
    %v4604 = vpack.c.b16 %v3612, %v3604
    %v4605 = vpack.c.b16 %v3621, %v3613
    %v4606 = vpack.c.b16 %v3622, %v3614
    %v4607 = vpack.c.b16 %v3623, %v3615
    %v4608 = vpack.c.b16 %v3624, %v3616
    %v4609 = vpack.c.b16 %v3625, %v3617
    %v4610 = vpack.c.b16 %v3626, %v3618
    %v4611 = vpack.c.b16 %v3627, %v3619
    %v4612 = vpack.c.b16 %v3628, %v3620
    %v4613 = vpack.c.b16 %v3637, %v3629
    %v4614 = vpack.c.b16 %v3638, %v3630
    %v4615 = vpack.c.b16 %v3639, %v3631
    %v4616 = vpack.c.b16 %v3640, %v3632
    %v4617 = vpack.c.b16 %v3641, %v3633
    %v4618 = vpack.c.b16 %v3642, %v3634
    %v4619 = vpack.c.b16 %v3643, %v3635
    %v4620 = vpack.c.b16 %v3644, %v3636
    %v4621 = vpack.c.b16 %v3653, %v3645
    %v4622 = vpack.c.b16 %v3654, %v3646
    %v4623 = vpack.c.b16 %v3655, %v3647
    %v4624 = vpack.c.b16 %v3656, %v3648
    %v4625 = vpack.c.b16 %v3657, %v3649
    %v4626 = vpack.c.b16 %v3658, %v3650
    %v4627 = vpack.c.b16 %v3659, %v3651
    %v4628 = vpack.c.b16 %v3660, %v3652
    %v4629 = vpack.c.b16 %v3669, %v3661
    %v4630 = vpack.c.b16 %v3670, %v3662
    %v4631 = vpack.c.b16 %v3671, %v3663
    %v4632 = vpack.c.b16 %v3672, %v3664
    %v4633 = vpack.c.b16 %v3673, %v3665
    %v4634 = vpack.c.b16 %v3674, %v3666
    %v4635 = vpack.c.b16 %v3675, %v3667
    %v4636 = vpack.c.b16 %v3676, %v3668
    %v4637 = vpack.c.b16 %v3685, %v3677
    %v4638 = vpack.c.b16 %v3686, %v3678
    %v4639 = vpack.c.b16 %v3687, %v3679
    %v4640 = vpack.c.b16 %v3688, %v3680
    %v4641 = vpack.c.b16 %v3689, %v3681
    %v4642 = vpack.c.b16 %v3690, %v3682
    %v4643 = vpack.c.b16 %v3691, %v3683
    %v4644 = vpack.c.b16 %v3692, %v3684
    %v4645 = vpack.c.b16 %v3701, %v3693
    %v4646 = vpack.c.b16 %v3702, %v3694
    %v4647 = vpack.c.b16 %v3703, %v3695
    %v4648 = vpack.c.b16 %v3704, %v3696
    %v4649 = vpack.c.b16 %v3705, %v3697
    %v4650 = vpack.c.b16 %v3706, %v3698
    %v4651 = vpack.c.b16 %v3707, %v3699
    %v4652 = vpack.c.b16 %v3708, %v3700
    %v4653 = vpack.c.b16 %v3717, %v3709
    %v4654 = vpack.c.b16 %v3718, %v3710
    %v4655 = vpack.c.b16 %v3719, %v3711
    %v4656 = vpack.c.b16 %v3720, %v3712
    %v4657 = vpack.c.b16 %v3721, %v3713
    %v4658 = vpack.c.b16 %v3722, %v3714
    %v4659 = vpack.c.b16 %v3723, %v3715
    %v4660 = vpack.c.b16 %v3724, %v3716
    %v4661 = vpack.c.b16 %v3733, %v3725
    %v4662 = vpack.c.b16 %v3734, %v3726
    %v4663 = vpack.c.b16 %v3735, %v3727
    %v4664 = vpack.c.b16 %v3736, %v3728
    %v4665 = vpack.c.b16 %v3737, %v3729
    %v4666 = vpack.c.b16 %v3738, %v3730
    %v4667 = vpack.c.b16 %v3739, %v3731
    %v4668 = vpack.c.b16 %v3740, %v3732
    %v4669 = vpack.c.b16 %v3749, %v3741
    %v4670 = vpack.c.b16 %v3750, %v3742
    %v4671 = vpack.c.b16 %v3751, %v3743
    %v4672 = vpack.c.b16 %v3752, %v3744
    %v4673 = vpack.c.b16 %v3753, %v3745
    %v4674 = vpack.c.b16 %v3754, %v3746
    %v4675 = vpack.c.b16 %v3755, %v3747
    %v4676 = vpack.c.b16 %v3756, %v3748
    %v4677 = vpack.c.b16 %v3765, %v3757
    %v4678 = vpack.c.b16 %v3766, %v3758
    %v4679 = vpack.c.b16 %v3767, %v3759
    %v4680 = vpack.c.b16 %v3768, %v3760
    %v4681 = vpack.c.b16 %v3769, %v3761
    %v4682 = vpack.c.b16 %v3770, %v3762
    %v4683 = vpack.c.b16 %v3771, %v3763
    %v4684 = vpack.c.b16 %v3772, %v3764
    %v4685 = vpack.c.b16 %v3781, %v3773
    %v4686 = vpack.c.b16 %v3782, %v3774
    %v4687 = vpack.c.b16 %v3783, %v3775
    %v4688 = vpack.c.b16 %v3784, %v3776
    %v4689 = vpack.c.b16 %v3785, %v3777
    %v4690 = vpack.c.b16 %v3786, %v3778
    %v4691 = vpack.c.b16 %v3787, %v3779
    %v4692 = vpack.c.b16 %v3788, %v3780
    %v4693 = vpack.c.b16 %v3797, %v3789
    %v4694 = vpack.c.b16 %v3798, %v3790
    %v4695 = vpack.c.b16 %v3799, %v3791
    %v4696 = vpack.c.b16 %v3800, %v3792
    %v4697 = vpack.c.b16 %v3801, %v3793
    %v4698 = vpack.c.b16 %v3802, %v3794
    %v4699 = vpack.c.b16 %v3803, %v3795
    %v4700 = vpack.c.b16 %v3804, %v3796
    %v4701 = vpack.c.b16 %v3813, %v3805
    %v4702 = vpack.c.b16 %v3814, %v3806
    %v4703 = vpack.c.b16 %v3815, %v3807
    %v4704 = vpack.c.b16 %v3816, %v3808
    %v4705 = vpack.c.b16 %v3817, %v3809
    %v4706 = vpack.c.b16 %v3818, %v3810
    %v4707 = vpack.c.b16 %v3819, %v3811
    %v4708 = vpack.c.b16 %v3820, %v3812
    %v4709 = vpack.c.b16 %v3829, %v3821
    %v4710 = vpack.c.b16 %v3830, %v3822
    %v4711 = vpack.c.b16 %v3831, %v3823
    %v4712 = vpack.c.b16 %v3832, %v3824
    %v4713 = vpack.c.b16 %v3833, %v3825
    %v4714 = vpack.c.b16 %v3834, %v3826
    %v4715 = vpack.c.b16 %v3835, %v3827
    %v4716 = vpack.c.b16 %v3836, %v3828
    %v4717 = vpack.c.b16 %v3845, %v3837
    %v4718 = vpack.c.b16 %v3846, %v3838
    %v4719 = vpack.c.b16 %v3847, %v3839
    %v4720 = vpack.c.b16 %v3848, %v3840
    %v4721 = vpack.c.b16 %v3849, %v3841
    %v4722 = vpack.c.b16 %v3850, %v3842
    %v4723 = vpack.c.b16 %v3851, %v3843
    %v4724 = vpack.c.b16 %v3852, %v3844
    %v4725 = vpack.c.b16 %v3861, %v3853
    %v4726 = vpack.c.b16 %v3862, %v3854
    %v4727 = vpack.c.b16 %v3863, %v3855
    %v4728 = vpack.c.b16 %v3864, %v3856
    %v4729 = vpack.c.b16 %v3865, %v3857
    %v4730 = vpack.c.b16 %v3866, %v3858
    %v4731 = vpack.c.b16 %v3867, %v3859
    %v4732 = vpack.c.b16 %v3868, %v3860
    %v4733 = vpack.c.b16 %v3877, %v3869
    %v4734 = vpack.c.b16 %v3878, %v3870
    %v4735 = vpack.c.b16 %v3879, %v3871
    %v4736 = vpack.c.b16 %v3880, %v3872
    %v4737 = vpack.c.b16 %v3881, %v3873
    %v4738 = vpack.c.b16 %v3882, %v3874
    %v4739 = vpack.c.b16 %v3883, %v3875
    %v4740 = vpack.c.b16 %v3884, %v3876
    %v4741 = vpack.c.b16 %v3893, %v3885
    %v4742 = vpack.c.b16 %v3894, %v3886
    %v4743 = vpack.c.b16 %v3895, %v3887
    %v4744 = vpack.c.b16 %v3896, %v3888
    %v4745 = vpack.c.b16 %v3897, %v3889
    %v4746 = vpack.c.b16 %v3898, %v3890
    %v4747 = vpack.c.b16 %v3899, %v3891
    %v4748 = vpack.c.b16 %v3900, %v3892
    %v4749 = vpack.c.b16 %v3909, %v3901
    %v4750 = vpack.c.b16 %v3910, %v3902
    %v4751 = vpack.c.b16 %v3911, %v3903
    %v4752 = vpack.c.b16 %v3912, %v3904
    %v4753 = vpack.c.b16 %v3913, %v3905
    %v4754 = vpack.c.b16 %v3914, %v3906
    %v4755 = vpack.c.b16 %v3915, %v3907
    %v4756 = vpack.c.b16 %v3916, %v3908
    %v4757 = vpack.c.b16 %v3925, %v3917
    %v4758 = vpack.c.b16 %v3926, %v3918
    %v4759 = vpack.c.b16 %v3927, %v3919
    %v4760 = vpack.c.b16 %v3928, %v3920
    %v4761 = vpack.c.b16 %v3929, %v3921
    %v4762 = vpack.c.b16 %v3930, %v3922
    %v4763 = vpack.c.b16 %v3931, %v3923
    %v4764 = vpack.c.b16 %v3932, %v3924
    %v4765 = vpack.c.b16 %v3941, %v3933
    %v4766 = vpack.c.b16 %v3942, %v3934
    %v4767 = vpack.c.b16 %v3943, %v3935
    %v4768 = vpack.c.b16 %v3944, %v3936
    %v4769 = vpack.c.b16 %v3945, %v3937
    %v4770 = vpack.c.b16 %v3946, %v3938
    %v4771 = vpack.c.b16 %v3947, %v3939
    %v4772 = vpack.c.b16 %v3948, %v3940
    %v4773 = vpack.c.b16 %v3957, %v3949
    %v4774 = vpack.c.b16 %v3958, %v3950
    %v4775 = vpack.c.b16 %v3959, %v3951
    %v4776 = vpack.c.b16 %v3960, %v3952
    %v4777 = vpack.c.b16 %v3961, %v3953
    %v4778 = vpack.c.b16 %v3962, %v3954
    %v4779 = vpack.c.b16 %v3963, %v3955
    %v4780 = vpack.c.b16 %v3964, %v3956
    %v4781 = vpack.c.b16 %v3973, %v3965
    %v4782 = vpack.c.b16 %v3974, %v3966
    %v4783 = vpack.c.b16 %v3975, %v3967
    %v4784 = vpack.c.b16 %v3976, %v3968
    %v4785 = vpack.c.b16 %v3977, %v3969
    %v4786 = vpack.c.b16 %v3978, %v3970
    %v4787 = vpack.c.b16 %v3979, %v3971
    %v4788 = vpack.c.b16 %v3980, %v3972
    %v4789 = vpack.c.b16 %v3989, %v3981
    %v4790 = vpack.c.b16 %v3990, %v3982
    %v4791 = vpack.c.b16 %v3991, %v3983
    %v4792 = vpack.c.b16 %v3992, %v3984
    %v4793 = vpack.c.b16 %v3993, %v3985
    %v4794 = vpack.c.b16 %v3994, %v3986
    %v4795 = vpack.c.b16 %v3995, %v3987
    %v4796 = vpack.c.b16 %v3996, %v3988
    %v4797 = vpack.c.b16 %v4005, %v3997
    %v4798 = vpack.c.b16 %v4006, %v3998
    %v4799 = vpack.c.b16 %v4007, %v3999
    %v4800 = vpack.c.b16 %v4008, %v4000
    %v4801 = vpack.c.b16 %v4009, %v4001
    %v4802 = vpack.c.b16 %v4010, %v4002
    %v4803 = vpack.c.b16 %v4011, %v4003
    %v4804 = vpack.c.b16 %v4012, %v4004
    %v4805 = vpack.c.b16 %v4021, %v4013
    %v4806 = vpack.c.b16 %v4022, %v4014
    %v4807 = vpack.c.b16 %v4023, %v4015
    %v4808 = vpack.c.b16 %v4024, %v4016
    %v4809 = vpack.c.b16 %v4025, %v4017
    %v4810 = vpack.c.b16 %v4026, %v4018
    %v4811 = vpack.c.b16 %v4027, %v4019
    %v4812 = vpack.c.b16 %v4028, %v4020
    %v4813 = vpack.c.b16 %v4037, %v4029
    %v4814 = vpack.c.b16 %v4038, %v4030
    %v4815 = vpack.c.b16 %v4039, %v4031
    %v4816 = vpack.c.b16 %v4040, %v4032
    %v4817 = vpack.c.b16 %v4041, %v4033
    %v4818 = vpack.c.b16 %v4042, %v4034
    %v4819 = vpack.c.b16 %v4043, %v4035
    %v4820 = vpack.c.b16 %v4044, %v4036
    %v4821 = vpack.c.b16 %v4053, %v4045
    %v4822 = vpack.c.b16 %v4054, %v4046
    %v4823 = vpack.c.b16 %v4055, %v4047
    %v4824 = vpack.c.b16 %v4056, %v4048
    %v4825 = vpack.c.b16 %v4057, %v4049
    %v4826 = vpack.c.b16 %v4058, %v4050
    %v4827 = vpack.c.b16 %v4059, %v4051
    %v4828 = vpack.c.b16 %v4060, %v4052
    %v4829 = vpack.c.b16 %v4069, %v4061
    %v4830 = vpack.c.b16 %v4070, %v4062
    %v4831 = vpack.c.b16 %v4071, %v4063
    %v4832 = vpack.c.b16 %v4072, %v4064
    %v4833 = vpack.c.b16 %v4073, %v4065
    %v4834 = vpack.c.b16 %v4074, %v4066
    %v4835 = vpack.c.b16 %v4075, %v4067
    %v4836 = vpack.c.b16 %v4076, %v4068
    %v4837 = vpack.c.b16 %v4085, %v4077
    %v4838 = vpack.c.b16 %v4086, %v4078
    %v4839 = vpack.c.b16 %v4087, %v4079
    %v4840 = vpack.c.b16 %v4088, %v4080
    %v4841 = vpack.c.b16 %v4089, %v4081
    %v4842 = vpack.c.b16 %v4090, %v4082
    %v4843 = vpack.c.b16 %v4091, %v4083
    %v4844 = vpack.c.b16 %v4092, %v4084
    %v4845 = vpack.c.b16 %v4101, %v4093
    %v4846 = vpack.c.b16 %v4102, %v4094
    %v4847 = vpack.c.b16 %v4103, %v4095
    %v4848 = vpack.c.b16 %v4104, %v4096
    %v4849 = vpack.c.b16 %v4105, %v4097
    %v4850 = vpack.c.b16 %v4106, %v4098
    %v4851 = vpack.c.b16 %v4107, %v4099
    %v4852 = vpack.c.b16 %v4108, %v4100
    %v4853 = vpack.c.b16 %v4117, %v4109
    %v4854 = vpack.c.b16 %v4118, %v4110
    %v4855 = vpack.c.b16 %v4119, %v4111
    %v4856 = vpack.c.b16 %v4120, %v4112
    %v4857 = vpack.c.b16 %v4121, %v4113
    %v4858 = vpack.c.b16 %v4122, %v4114
    %v4859 = vpack.c.b16 %v4123, %v4115
    %v4860 = vpack.c.b16 %v4124, %v4116
    %v4861 = vpack.c.b16 %v4133, %v4125
    %v4862 = vpack.c.b16 %v4134, %v4126
    %v4863 = vpack.c.b16 %v4135, %v4127
    %v4864 = vpack.c.b16 %v4136, %v4128
    %v4865 = vpack.c.b16 %v4137, %v4129
    %v4866 = vpack.c.b16 %v4138, %v4130
    %v4867 = vpack.c.b16 %v4139, %v4131
    %v4868 = vpack.c.b16 %v4140, %v4132
    %v4869 = vpack.c.b16 %v4149, %v4141
    %v4870 = vpack.c.b16 %v4150, %v4142
    %v4871 = vpack.c.b16 %v4151, %v4143
    %v4872 = vpack.c.b16 %v4152, %v4144
    %v4873 = vpack.c.b16 %v4153, %v4145
    %v4874 = vpack.c.b16 %v4154, %v4146
    %v4875 = vpack.c.b16 %v4155, %v4147
    %v4876 = vpack.c.b16 %v4156, %v4148
    %v4877 = vpack.c.b16 %v4165, %v4157
    %v4878 = vpack.c.b16 %v4166, %v4158
    %v4879 = vpack.c.b16 %v4167, %v4159
    %v4880 = vpack.c.b16 %v4168, %v4160
    %v4881 = vpack.c.b16 %v4169, %v4161
    %v4882 = vpack.c.b16 %v4170, %v4162
    %v4883 = vpack.c.b16 %v4171, %v4163
    %v4884 = vpack.c.b16 %v4172, %v4164
    %v4885 = vpack.c.b16 %v4181, %v4173
    %v4886 = vpack.c.b16 %v4182, %v4174
    %v4887 = vpack.c.b16 %v4183, %v4175
    %v4888 = vpack.c.b16 %v4184, %v4176
    %v4889 = vpack.c.b16 %v4185, %v4177
    %v4890 = vpack.c.b16 %v4186, %v4178
    %v4891 = vpack.c.b16 %v4187, %v4179
    %v4892 = vpack.c.b16 %v4188, %v4180
    %v4893 = vpack.c.b16 %v4197, %v4189
    %v4894 = vpack.c.b16 %v4198, %v4190
    %v4895 = vpack.c.b16 %v4199, %v4191
    %v4896 = vpack.c.b16 %v4200, %v4192
    %v4897 = vpack.c.b16 %v4201, %v4193
    %v4898 = vpack.c.b16 %v4202, %v4194
    %v4899 = vpack.c.b16 %v4203, %v4195
    %v4900 = vpack.c.b16 %v4204, %v4196
    %v4901 = vpack.c.b16 %v4213, %v4205
    %v4902 = vpack.c.b16 %v4214, %v4206
    %v4903 = vpack.c.b16 %v4215, %v4207
    %v4904 = vpack.c.b16 %v4216, %v4208
    %v4905 = vpack.c.b16 %v4217, %v4209
    %v4906 = vpack.c.b16 %v4218, %v4210
    %v4907 = vpack.c.b16 %v4219, %v4211
    %v4908 = vpack.c.b16 %v4220, %v4212
    %v4909 = vpack.c.b16 %v4229, %v4221
    %v4910 = vpack.c.b16 %v4230, %v4222
    %v4911 = vpack.c.b16 %v4231, %v4223
    %v4912 = vpack.c.b16 %v4232, %v4224
    %v4913 = vpack.c.b16 %v4233, %v4225
    %v4914 = vpack.c.b16 %v4234, %v4226
    %v4915 = vpack.c.b16 %v4235, %v4227
    %v4916 = vpack.c.b16 %v4236, %v4228
    %v4917 = vpack.c.b16 %v4245, %v4237
    %v4918 = vpack.c.b16 %v4246, %v4238
    %v4919 = vpack.c.b16 %v4247, %v4239
    %v4920 = vpack.c.b16 %v4248, %v4240
    %v4921 = vpack.c.b16 %v4249, %v4241
    %v4922 = vpack.c.b16 %v4250, %v4242
    %v4923 = vpack.c.b16 %v4251, %v4243
    %v4924 = vpack.c.b16 %v4252, %v4244
    %v4925 = vpack.c.b16 %v4261, %v4253
    %v4926 = vpack.c.b16 %v4262, %v4254
    %v4927 = vpack.c.b16 %v4263, %v4255
    %v4928 = vpack.c.b16 %v4264, %v4256
    %v4929 = vpack.c.b16 %v4265, %v4257
    %v4930 = vpack.c.b16 %v4266, %v4258
    %v4931 = vpack.c.b16 %v4267, %v4259
    %v4932 = vpack.c.b16 %v4268, %v4260
    %v4933 = vpack.c.b16 %v4277, %v4269
    %v4934 = vpack.c.b16 %v4278, %v4270
    %v4935 = vpack.c.b16 %v4279, %v4271
    %v4936 = vpack.c.b16 %v4280, %v4272
    %v4937 = vpack.c.b16 %v4281, %v4273
    %v4938 = vpack.c.b16 %v4282, %v4274
    %v4939 = vpack.c.b16 %v4283, %v4275
    %v4940 = vpack.c.b16 %v4284, %v4276
    %v4941 = vpack.c.b16 %v4293, %v4285
    %v4942 = vpack.c.b16 %v4294, %v4286
    %v4943 = vpack.c.b16 %v4295, %v4287
    %v4944 = vpack.c.b16 %v4296, %v4288
    %v4945 = vpack.c.b16 %v4297, %v4289
    %v4946 = vpack.c.b16 %v4298, %v4290
    %v4947 = vpack.c.b16 %v4299, %v4291
    %v4948 = vpack.c.b16 %v4300, %v4292
    %v4949 = vpack.c.b16 %v4309, %v4301
    %v4950 = vpack.c.b16 %v4310, %v4302
    %v4951 = vpack.c.b16 %v4311, %v4303
    %v4952 = vpack.c.b16 %v4312, %v4304
    %v4953 = vpack.c.b16 %v4313, %v4305
    %v4954 = vpack.c.b16 %v4314, %v4306
    %v4955 = vpack.c.b16 %v4315, %v4307
    %v4956 = vpack.c.b16 %v4316, %v4308
    %v4957 = vpack.c.b16 %v4325, %v4317
    %v4958 = vpack.c.b16 %v4326, %v4318
    %v4959 = vpack.c.b16 %v4327, %v4319
    %v4960 = vpack.c.b16 %v4328, %v4320
    %v4961 = vpack.c.b16 %v4329, %v4321
    %v4962 = vpack.c.b16 %v4330, %v4322
    %v4963 = vpack.c.b16 %v4331, %v4323
    %v4964 = vpack.c.b16 %v4332, %v4324
    %v4965 = vpack.c.b16 %v4341, %v4333
    %v4966 = vpack.c.b16 %v4342, %v4334
    %v4967 = vpack.c.b16 %v4343, %v4335
    %v4968 = vpack.c.b16 %v4344, %v4336
    %v4969 = vpack.c.b16 %v4345, %v4337
    %v4970 = vpack.c.b16 %v4346, %v4338
    %v4971 = vpack.c.b16 %v4347, %v4339
    %v4972 = vpack.c.b16 %v4348, %v4340
    %v4973 = vpack.c.b16 %v4357, %v4349
    %v4974 = vpack.c.b16 %v4358, %v4350
    %v4975 = vpack.c.b16 %v4359, %v4351
    %v4976 = vpack.c.b16 %v4360, %v4352
    %v4977 = vpack.c.b16 %v4361, %v4353
    %v4978 = vpack.c.b16 %v4362, %v4354
    %v4979 = vpack.c.b16 %v4363, %v4355
    %v4980 = vpack.c.b16 %v4364, %v4356
    %v4981 = vpack.c.b16 %v4373, %v4365
    %v4982 = vpack.c.b16 %v4374, %v4366
    %v4983 = vpack.c.b16 %v4375, %v4367
    %v4984 = vpack.c.b16 %v4376, %v4368
    %v4985 = vpack.c.b16 %v4377, %v4369
    %v4986 = vpack.c.b16 %v4378, %v4370
    %v4987 = vpack.c.b16 %v4379, %v4371
    %v4988 = vpack.c.b16 %v4380, %v4372
    %v4989 = vpack.c.b16 %v4389, %v4381
    %v4990 = vpack.c.b16 %v4390, %v4382
    %v4991 = vpack.c.b16 %v4391, %v4383
    %v4992 = vpack.c.b16 %v4392, %v4384
    %v4993 = vpack.c.b16 %v4393, %v4385
    %v4994 = vpack.c.b16 %v4394, %v4386
    %v4995 = vpack.c.b16 %v4395, %v4387
    %v4996 = vpack.c.b16 %v4396, %v4388
    %v4997 = vpack.c.b16 %v4405, %v4397
    %v4998 = vpack.c.b16 %v4406, %v4398
    %v4999 = vpack.c.b16 %v4407, %v4399
    %v5000 = vpack.c.b16 %v4408, %v4400
    %v5001 = vpack.c.b16 %v4409, %v4401
    %v5002 = vpack.c.b16 %v4410, %v4402
    %v5003 = vpack.c.b16 %v4411, %v4403
    %v5004 = vpack.c.b16 %v4412, %v4404
    %v5005 = vpack.c.b16 %v4421, %v4413
    %v5006 = vpack.c.b16 %v4422, %v4414
    %v5007 = vpack.c.b16 %v4423, %v4415
    %v5008 = vpack.c.b16 %v4424, %v4416
    %v5009 = vpack.c.b16 %v4425, %v4417
    %v5010 = vpack.c.b16 %v4426, %v4418
    %v5011 = vpack.c.b16 %v4427, %v4419
    %v5012 = vpack.c.b16 %v4428, %v4420
    %v5013 = vpack.c.b16 %v4437, %v4429
    %v5014 = vpack.c.b16 %v4438, %v4430
    %v5015 = vpack.c.b16 %v4439, %v4431
    %v5016 = vpack.c.b16 %v4440, %v4432
    %v5017 = vpack.c.b16 %v4441, %v4433
    %v5018 = vpack.c.b16 %v4442, %v4434
    %v5019 = vpack.c.b16 %v4443, %v4435
    %v5020 = vpack.c.b16 %v4444, %v4436
    %v5021 = vpack.c.b16 %v4453, %v4445
    %v5022 = vpack.c.b16 %v4454, %v4446
    %v5023 = vpack.c.b16 %v4455, %v4447
    %v5024 = vpack.c.b16 %v4456, %v4448
    %v5025 = vpack.c.b16 %v4457, %v4449
    %v5026 = vpack.c.b16 %v4458, %v4450
    %v5027 = vpack.c.b16 %v4459, %v4451
    %v5028 = vpack.c.b16 %v4460, %v4452
    %v5029 = vpack.c.b16 %v4469, %v4461
    %v5030 = vpack.c.b16 %v4470, %v4462
    %v5031 = vpack.c.b16 %v4471, %v4463
    %v5032 = vpack.c.b16 %v4472, %v4464
    %v5033 = vpack.c.b16 %v4473, %v4465
    %v5034 = vpack.c.b16 %v4474, %v4466
    %v5035 = vpack.c.b16 %v4475, %v4467
    %v5036 = vpack.c.b16 %v4476, %v4468
    %v5037 = vpack.c.b16 %v4485, %v4477
    %v5038 = vpack.c.b16 %v4486, %v4478
    %v5039 = vpack.c.b16 %v4487, %v4479
    %v5040 = vpack.c.b16 %v4488, %v4480
    %v5041 = vpack.c.b16 %v4489, %v4481
    %v5042 = vpack.c.b16 %v4490, %v4482
    %v5043 = vpack.c.b16 %v4491, %v4483
    %v5044 = vpack.c.b16 %v4492, %v4484
    %v5045 = vpack.c.b16 %v4501, %v4493
    %v5046 = vpack.c.b16 %v4502, %v4494
    %v5047 = vpack.c.b16 %v4503, %v4495
    %v5048 = vpack.c.b16 %v4504, %v4496
    %v5049 = vpack.c.b16 %v4505, %v4497
    %v5050 = vpack.c.b16 %v4506, %v4498
    %v5051 = vpack.c.b16 %v4507, %v4499
    %v5052 = vpack.c.b16 %v4508, %v4500
    %v5053 = vpack.c.b16 %v4517, %v4509
    %v5054 = vpack.c.b16 %v4518, %v4510
    %v5055 = vpack.c.b16 %v4519, %v4511
    %v5056 = vpack.c.b16 %v4520, %v4512
    %v5057 = vpack.c.b16 %v4521, %v4513
    %v5058 = vpack.c.b16 %v4522, %v4514
    %v5059 = vpack.c.b16 %v4523, %v4515
    %v5060 = vpack.c.b16 %v4524, %v4516
    %v5061 = vpack.c.b16 %v4533, %v4525
    %v5062 = vpack.c.b16 %v4534, %v4526
    %v5063 = vpack.c.b16 %v4535, %v4527
    %v5064 = vpack.c.b16 %v4536, %v4528
    %v5065 = vpack.c.b16 %v4537, %v4529
    %v5066 = vpack.c.b16 %v4538, %v4530
    %v5067 = vpack.c.b16 %v4539, %v4531
    %v5068 = vpack.c.b16 %v4540, %v4532
    %v5069 = vpack.c.b16 %v4549, %v4541
    %v5070 = vpack.c.b16 %v4550, %v4542
    %v5071 = vpack.c.b16 %v4551, %v4543
    %v5072 = vpack.c.b16 %v4552, %v4544
    %v5073 = vpack.c.b16 %v4553, %v4545
    %v5074 = vpack.c.b16 %v4554, %v4546
    %v5075 = vpack.c.b16 %v4555, %v4547
    %v5076 = vpack.c.b16 %v4556, %v4548
    %v5077 = vpack.c.b16 %v4565, %v4557
    %v5078 = vpack.c.b16 %v4566, %v4558
    %v5079 = vpack.c.b16 %v4567, %v4559
    %v5080 = vpack.c.b16 %v4568, %v4560
    %v5081 = vpack.c.b16 %v4569, %v4561
    %v5082 = vpack.c.b16 %v4570, %v4562
    %v5083 = vpack.c.b16 %v4571, %v4563
    %v5084 = vpack.c.b16 %v4572, %v4564
    %5597 = vmatpush.bf16.msra.mxu0 %v4629
    %5598 = vmatpush.bf16.msra.mxu0 %v4621
    %5599 = vmatpush.bf16.msra.mxu0 %v4613
    %5600 = vmatpush.bf16.msra.mxu0 %v4605
    %5601 = vmatpush.bf16.msra.mxu0 %v4597
    %5602 = vmatpush.bf16.msra.mxu0 %v4589
    %5603 = vmatpush.bf16.msra.mxu0 %v4581
    %5604 = vmatpush.bf16.msra.mxu0 %v4573
    %5605 = vmatmul.bf16.gmra.mxu0 %v2499
    %v5606 = vpop.f32.mrf.mxu0
    %v5607 = vadd.f32 %v3021, %v5606
    %v5608 = vpop.f32.mrf.mxu0
    %5609 = vdwg.mxu0
    %5610 = vmatpush.bf16.msra.mxu0 %v4693
    %5611 = vmatpush.bf16.msra.mxu0 %v4685
    %5612 = vmatpush.bf16.msra.mxu0 %v4677
    %5613 = vmatpush.bf16.msra.mxu0 %v4669
    %5614 = vmatpush.bf16.msra.mxu0 %v4661
    %5615 = vmatpush.bf16.msra.mxu0 %v4653
    %5616 = vmatpush.bf16.msra.mxu0 %v4645
    %5617 = vmatpush.bf16.msra.mxu0 %v4637
    %5618 = vmatmul.bf16.gmra.mxu0 %v2500
    %v5619 = vpop.f32.mrf.mxu0
    %v5620 = vadd.f32 %v5607, %v5619
    %v5621 = vpop.f32.mrf.mxu0
    %5622 = vdwg.mxu0
    %5623 = vmatpush.bf16.msra.mxu0 %v4757
    %5624 = vmatpush.bf16.msra.mxu0 %v4749
    %5625 = vmatpush.bf16.msra.mxu0 %v4741
    %5626 = vmatpush.bf16.msra.mxu0 %v4733
    %5627 = vmatpush.bf16.msra.mxu0 %v4725
    %5628 = vmatpush.bf16.msra.mxu0 %v4717
    %5629 = vmatpush.bf16.msra.mxu0 %v4709
    %5630 = vmatpush.bf16.msra.mxu0 %v4701
    %5631 = vmatmul.bf16.gmra.mxu0 %v2501
    %v5632 = vpop.f32.mrf.mxu0
    %v5633 = vadd.f32 %v5620, %v5632
    %v5634 = vpop.f32.mrf.mxu0
    %5635 = vdwg.mxu0
    %5636 = vmatpush.bf16.msra.mxu0 %v4821
    %5637 = vmatpush.bf16.msra.mxu0 %v4813
    %5638 = vmatpush.bf16.msra.mxu0 %v4805
    %5639 = vmatpush.bf16.msra.mxu0 %v4797
    %5640 = vmatpush.bf16.msra.mxu0 %v4789
    %5641 = vmatpush.bf16.msra.mxu0 %v4781
    %5642 = vmatpush.bf16.msra.mxu0 %v4773
    %5643 = vmatpush.bf16.msra.mxu0 %v4765
    %5644 = vmatmul.bf16.gmra.mxu0 %v2502
    %v5645 = vpop.f32.mrf.mxu0
    %v5646 = vadd.f32 %v5633, %v5645
    %v5647 = vpop.f32.mrf.mxu0
    %5648 = vdwg.mxu0
    %5649 = vmatpush.bf16.msra.mxu0 %v4885
    %5650 = vmatpush.bf16.msra.mxu0 %v4877
    %5651 = vmatpush.bf16.msra.mxu0 %v4869
    %5652 = vmatpush.bf16.msra.mxu0 %v4861
    %5653 = vmatpush.bf16.msra.mxu0 %v4853
    %5654 = vmatpush.bf16.msra.mxu0 %v4845
    %5655 = vmatpush.bf16.msra.mxu0 %v4837
    %5656 = vmatpush.bf16.msra.mxu0 %v4829
    %5657 = vmatmul.bf16.gmra.mxu0 %v2503
    %v5658 = vpop.f32.mrf.mxu0
    %v5659 = vadd.f32 %v5646, %v5658
    %v5660 = vpop.f32.mrf.mxu0
    %5661 = vdwg.mxu0
    %5662 = vmatpush.bf16.msra.mxu0 %v4949
    %5663 = vmatpush.bf16.msra.mxu0 %v4941
    %5664 = vmatpush.bf16.msra.mxu0 %v4933
    %5665 = vmatpush.bf16.msra.mxu0 %v4925
    %5666 = vmatpush.bf16.msra.mxu0 %v4917
    %5667 = vmatpush.bf16.msra.mxu0 %v4909
    %5668 = vmatpush.bf16.msra.mxu0 %v4901
    %5669 = vmatpush.bf16.msra.mxu0 %v4893
    %5670 = vmatmul.bf16.gmra.mxu0 %v2504
    %v5671 = vpop.f32.mrf.mxu0
    %v5672 = vadd.f32 %v5659, %v5671
    %v5673 = vpop.f32.mrf.mxu0
    %5674 = vdwg.mxu0
    %5675 = vmatpush.bf16.msra.mxu0 %v5013
    %5676 = vmatpush.bf16.msra.mxu0 %v5005
    %5677 = vmatpush.bf16.msra.mxu0 %v4997
    %5678 = vmatpush.bf16.msra.mxu0 %v4989
    %5679 = vmatpush.bf16.msra.mxu0 %v4981
    %5680 = vmatpush.bf16.msra.mxu0 %v4973
    %5681 = vmatpush.bf16.msra.mxu0 %v4965
    %5682 = vmatpush.bf16.msra.mxu0 %v4957
    %5683 = vmatmul.bf16.gmra.mxu0 %v2505
    %v5684 = vpop.f32.mrf.mxu0
    %v5685 = vadd.f32 %v5672, %v5684
    %v5686 = vpop.f32.mrf.mxu0
    %5687 = vdwg.mxu0
    %5688 = vmatpush.bf16.msra.mxu0 %v5077
    %5689 = vmatpush.bf16.msra.mxu0 %v5069
    %5690 = vmatpush.bf16.msra.mxu0 %v5061
    %5691 = vmatpush.bf16.msra.mxu0 %v5053
    %5692 = vmatpush.bf16.msra.mxu0 %v5045
    %5693 = vmatpush.bf16.msra.mxu0 %v5037
    %5694 = vmatpush.bf16.msra.mxu0 %v5029
    %5695 = vmatpush.bf16.msra.mxu0 %v5021
    %5696 = vmatmul.bf16.gmra.mxu0 %v2506
    %v5697 = vpop.f32.mrf.mxu0
    %v5698 = vadd.f32 %v5685, %v5697
    %v5699 = vpop.f32.mrf.mxu0
    %5700 = vdwg.mxu0
    %5701 = vmatpush.bf16.msra.mxu0 %v4630
    %5702 = vmatpush.bf16.msra.mxu0 %v4622
    %5703 = vmatpush.bf16.msra.mxu0 %v4614
    %5704 = vmatpush.bf16.msra.mxu0 %v4606
    %5705 = vmatpush.bf16.msra.mxu0 %v4598
    %5706 = vmatpush.bf16.msra.mxu0 %v4590
    %5707 = vmatpush.bf16.msra.mxu0 %v4582
    %5708 = vmatpush.bf16.msra.mxu0 %v4574
    %5709 = vmatmul.bf16.gmra.mxu0 %v2499
    %v5710 = vpop.f32.mrf.mxu0
    %v5711 = vadd.f32 %v3022, %v5710
    %v5712 = vpop.f32.mrf.mxu0
    %5713 = vdwg.mxu0
    %5714 = vmatpush.bf16.msra.mxu0 %v4694
    %5715 = vmatpush.bf16.msra.mxu0 %v4686
    %5716 = vmatpush.bf16.msra.mxu0 %v4678
    %5717 = vmatpush.bf16.msra.mxu0 %v4670
    %5718 = vmatpush.bf16.msra.mxu0 %v4662
    %5719 = vmatpush.bf16.msra.mxu0 %v4654
    %5720 = vmatpush.bf16.msra.mxu0 %v4646
    %5721 = vmatpush.bf16.msra.mxu0 %v4638
    %5722 = vmatmul.bf16.gmra.mxu0 %v2500
    %v5723 = vpop.f32.mrf.mxu0
    %v5724 = vadd.f32 %v5711, %v5723
    %v5725 = vpop.f32.mrf.mxu0
    %5726 = vdwg.mxu0
    %5727 = vmatpush.bf16.msra.mxu0 %v4758
    %5728 = vmatpush.bf16.msra.mxu0 %v4750
    %5729 = vmatpush.bf16.msra.mxu0 %v4742
    %5730 = vmatpush.bf16.msra.mxu0 %v4734
    %5731 = vmatpush.bf16.msra.mxu0 %v4726
    %5732 = vmatpush.bf16.msra.mxu0 %v4718
    %5733 = vmatpush.bf16.msra.mxu0 %v4710
    %5734 = vmatpush.bf16.msra.mxu0 %v4702
    %5735 = vmatmul.bf16.gmra.mxu0 %v2501
    %v5736 = vpop.f32.mrf.mxu0
    %v5737 = vadd.f32 %v5724, %v5736
    %v5738 = vpop.f32.mrf.mxu0
    %5739 = vdwg.mxu0
    %5740 = vmatpush.bf16.msra.mxu0 %v4822
    %5741 = vmatpush.bf16.msra.mxu0 %v4814
    %5742 = vmatpush.bf16.msra.mxu0 %v4806
    %5743 = vmatpush.bf16.msra.mxu0 %v4798
    %5744 = vmatpush.bf16.msra.mxu0 %v4790
    %5745 = vmatpush.bf16.msra.mxu0 %v4782
    %5746 = vmatpush.bf16.msra.mxu0 %v4774
    %5747 = vmatpush.bf16.msra.mxu0 %v4766
    %5748 = vmatmul.bf16.gmra.mxu0 %v2502
    %v5749 = vpop.f32.mrf.mxu0
    %v5750 = vadd.f32 %v5737, %v5749
    %v5751 = vpop.f32.mrf.mxu0
    %5752 = vdwg.mxu0
    %5753 = vmatpush.bf16.msra.mxu0 %v4886
    %5754 = vmatpush.bf16.msra.mxu0 %v4878
    %5755 = vmatpush.bf16.msra.mxu0 %v4870
    %5756 = vmatpush.bf16.msra.mxu0 %v4862
    %5757 = vmatpush.bf16.msra.mxu0 %v4854
    %5758 = vmatpush.bf16.msra.mxu0 %v4846
    %5759 = vmatpush.bf16.msra.mxu0 %v4838
    %5760 = vmatpush.bf16.msra.mxu0 %v4830
    %5761 = vmatmul.bf16.gmra.mxu0 %v2503
    %v5762 = vpop.f32.mrf.mxu0
    %v5763 = vadd.f32 %v5750, %v5762
    %v5764 = vpop.f32.mrf.mxu0
    %5765 = vdwg.mxu0
    %5766 = vmatpush.bf16.msra.mxu0 %v4950
    %5767 = vmatpush.bf16.msra.mxu0 %v4942
    %5768 = vmatpush.bf16.msra.mxu0 %v4934
    %5769 = vmatpush.bf16.msra.mxu0 %v4926
    %5770 = vmatpush.bf16.msra.mxu0 %v4918
    %5771 = vmatpush.bf16.msra.mxu0 %v4910
    %5772 = vmatpush.bf16.msra.mxu0 %v4902
    %5773 = vmatpush.bf16.msra.mxu0 %v4894
    %5774 = vmatmul.bf16.gmra.mxu0 %v2504
    %v5775 = vpop.f32.mrf.mxu0
    %v5776 = vadd.f32 %v5763, %v5775
    %v5777 = vpop.f32.mrf.mxu0
    %5778 = vdwg.mxu0
    %5779 = vmatpush.bf16.msra.mxu0 %v5014
    %5780 = vmatpush.bf16.msra.mxu0 %v5006
    %5781 = vmatpush.bf16.msra.mxu0 %v4998
    %5782 = vmatpush.bf16.msra.mxu0 %v4990
    %5783 = vmatpush.bf16.msra.mxu0 %v4982
    %5784 = vmatpush.bf16.msra.mxu0 %v4974
    %5785 = vmatpush.bf16.msra.mxu0 %v4966
    %5786 = vmatpush.bf16.msra.mxu0 %v4958
    %5787 = vmatmul.bf16.gmra.mxu0 %v2505
    %v5788 = vpop.f32.mrf.mxu0
    %v5789 = vadd.f32 %v5776, %v5788
    %v5790 = vpop.f32.mrf.mxu0
    %5791 = vdwg.mxu0
    %5792 = vmatpush.bf16.msra.mxu0 %v5078
    %5793 = vmatpush.bf16.msra.mxu0 %v5070
    %5794 = vmatpush.bf16.msra.mxu0 %v5062
    %5795 = vmatpush.bf16.msra.mxu0 %v5054
    %5796 = vmatpush.bf16.msra.mxu0 %v5046
    %5797 = vmatpush.bf16.msra.mxu0 %v5038
    %5798 = vmatpush.bf16.msra.mxu0 %v5030
    %5799 = vmatpush.bf16.msra.mxu0 %v5022
    %5800 = vmatmul.bf16.gmra.mxu0 %v2506
    %v5801 = vpop.f32.mrf.mxu0
    %v5802 = vadd.f32 %v5789, %v5801
    %v5803 = vpop.f32.mrf.mxu0
    %5804 = vdwg.mxu0
    %5805 = vmatpush.bf16.msra.mxu0 %v4631
    %5806 = vmatpush.bf16.msra.mxu0 %v4623
    %5807 = vmatpush.bf16.msra.mxu0 %v4615
    %5808 = vmatpush.bf16.msra.mxu0 %v4607
    %5809 = vmatpush.bf16.msra.mxu0 %v4599
    %5810 = vmatpush.bf16.msra.mxu0 %v4591
    %5811 = vmatpush.bf16.msra.mxu0 %v4583
    %5812 = vmatpush.bf16.msra.mxu0 %v4575
    %5813 = vmatmul.bf16.gmra.mxu0 %v2499
    %v5814 = vpop.f32.mrf.mxu0
    %v5815 = vadd.f32 %v3023, %v5814
    %v5816 = vpop.f32.mrf.mxu0
    %5817 = vdwg.mxu0
    %5818 = vmatpush.bf16.msra.mxu0 %v4695
    %5819 = vmatpush.bf16.msra.mxu0 %v4687
    %5820 = vmatpush.bf16.msra.mxu0 %v4679
    %5821 = vmatpush.bf16.msra.mxu0 %v4671
    %5822 = vmatpush.bf16.msra.mxu0 %v4663
    %5823 = vmatpush.bf16.msra.mxu0 %v4655
    %5824 = vmatpush.bf16.msra.mxu0 %v4647
    %5825 = vmatpush.bf16.msra.mxu0 %v4639
    %5826 = vmatmul.bf16.gmra.mxu0 %v2500
    %v5827 = vpop.f32.mrf.mxu0
    %v5828 = vadd.f32 %v5815, %v5827
    %v5829 = vpop.f32.mrf.mxu0
    %5830 = vdwg.mxu0
    %5831 = vmatpush.bf16.msra.mxu0 %v4759
    %5832 = vmatpush.bf16.msra.mxu0 %v4751
    %5833 = vmatpush.bf16.msra.mxu0 %v4743
    %5834 = vmatpush.bf16.msra.mxu0 %v4735
    %5835 = vmatpush.bf16.msra.mxu0 %v4727
    %5836 = vmatpush.bf16.msra.mxu0 %v4719
    %5837 = vmatpush.bf16.msra.mxu0 %v4711
    %5838 = vmatpush.bf16.msra.mxu0 %v4703
    %5839 = vmatmul.bf16.gmra.mxu0 %v2501
    %v5840 = vpop.f32.mrf.mxu0
    %v5841 = vadd.f32 %v5828, %v5840
    %v5842 = vpop.f32.mrf.mxu0
    %5843 = vdwg.mxu0
    %5844 = vmatpush.bf16.msra.mxu0 %v4823
    %5845 = vmatpush.bf16.msra.mxu0 %v4815
    %5846 = vmatpush.bf16.msra.mxu0 %v4807
    %5847 = vmatpush.bf16.msra.mxu0 %v4799
    %5848 = vmatpush.bf16.msra.mxu0 %v4791
    %5849 = vmatpush.bf16.msra.mxu0 %v4783
    %5850 = vmatpush.bf16.msra.mxu0 %v4775
    %5851 = vmatpush.bf16.msra.mxu0 %v4767
    %5852 = vmatmul.bf16.gmra.mxu0 %v2502
    %v5853 = vpop.f32.mrf.mxu0
    %v5854 = vadd.f32 %v5841, %v5853
    %v5855 = vpop.f32.mrf.mxu0
    %5856 = vdwg.mxu0
    %5857 = vmatpush.bf16.msra.mxu0 %v4887
    %5858 = vmatpush.bf16.msra.mxu0 %v4879
    %5859 = vmatpush.bf16.msra.mxu0 %v4871
    %5860 = vmatpush.bf16.msra.mxu0 %v4863
    %5861 = vmatpush.bf16.msra.mxu0 %v4855
    %5862 = vmatpush.bf16.msra.mxu0 %v4847
    %5863 = vmatpush.bf16.msra.mxu0 %v4839
    %5864 = vmatpush.bf16.msra.mxu0 %v4831
    %5865 = vmatmul.bf16.gmra.mxu0 %v2503
    %v5866 = vpop.f32.mrf.mxu0
    %v5867 = vadd.f32 %v5854, %v5866
    %v5868 = vpop.f32.mrf.mxu0
    %5869 = vdwg.mxu0
    %5870 = vmatpush.bf16.msra.mxu0 %v4951
    %5871 = vmatpush.bf16.msra.mxu0 %v4943
    %5872 = vmatpush.bf16.msra.mxu0 %v4935
    %5873 = vmatpush.bf16.msra.mxu0 %v4927
    %5874 = vmatpush.bf16.msra.mxu0 %v4919
    %5875 = vmatpush.bf16.msra.mxu0 %v4911
    %5876 = vmatpush.bf16.msra.mxu0 %v4903
    %5877 = vmatpush.bf16.msra.mxu0 %v4895
    %5878 = vmatmul.bf16.gmra.mxu0 %v2504
    %v5879 = vpop.f32.mrf.mxu0
    %v5880 = vadd.f32 %v5867, %v5879
    %v5881 = vpop.f32.mrf.mxu0
    %5882 = vdwg.mxu0
    %5883 = vmatpush.bf16.msra.mxu0 %v5015
    %5884 = vmatpush.bf16.msra.mxu0 %v5007
    %5885 = vmatpush.bf16.msra.mxu0 %v4999
    %5886 = vmatpush.bf16.msra.mxu0 %v4991
    %5887 = vmatpush.bf16.msra.mxu0 %v4983
    %5888 = vmatpush.bf16.msra.mxu0 %v4975
    %5889 = vmatpush.bf16.msra.mxu0 %v4967
    %5890 = vmatpush.bf16.msra.mxu0 %v4959
    %5891 = vmatmul.bf16.gmra.mxu0 %v2505
    %v5892 = vpop.f32.mrf.mxu0
    %v5893 = vadd.f32 %v5880, %v5892
    %v5894 = vpop.f32.mrf.mxu0
    %5895 = vdwg.mxu0
    %5896 = vmatpush.bf16.msra.mxu0 %v5079
    %5897 = vmatpush.bf16.msra.mxu0 %v5071
    %5898 = vmatpush.bf16.msra.mxu0 %v5063
    %5899 = vmatpush.bf16.msra.mxu0 %v5055
    %5900 = vmatpush.bf16.msra.mxu0 %v5047
    %5901 = vmatpush.bf16.msra.mxu0 %v5039
    %5902 = vmatpush.bf16.msra.mxu0 %v5031
    %5903 = vmatpush.bf16.msra.mxu0 %v5023
    %5904 = vmatmul.bf16.gmra.mxu0 %v2506
    %v5905 = vpop.f32.mrf.mxu0
    %v5906 = vadd.f32 %v5893, %v5905
    %v5907 = vpop.f32.mrf.mxu0
    %5908 = vdwg.mxu0
    %5909 = vmatpush.bf16.msra.mxu0 %v4632
    %5910 = vmatpush.bf16.msra.mxu0 %v4624
    %5911 = vmatpush.bf16.msra.mxu0 %v4616
    %5912 = vmatpush.bf16.msra.mxu0 %v4608
    %5913 = vmatpush.bf16.msra.mxu0 %v4600
    %5914 = vmatpush.bf16.msra.mxu0 %v4592
    %5915 = vmatpush.bf16.msra.mxu0 %v4584
    %5916 = vmatpush.bf16.msra.mxu0 %v4576
    %5917 = vmatmul.bf16.gmra.mxu0 %v2499
    %v5918 = vpop.f32.mrf.mxu0
    %v5919 = vadd.f32 %v3024, %v5918
    %v5920 = vpop.f32.mrf.mxu0
    %5921 = vdwg.mxu0
    %5922 = vmatpush.bf16.msra.mxu0 %v4696
    %5923 = vmatpush.bf16.msra.mxu0 %v4688
    %5924 = vmatpush.bf16.msra.mxu0 %v4680
    %5925 = vmatpush.bf16.msra.mxu0 %v4672
    %5926 = vmatpush.bf16.msra.mxu0 %v4664
    %5927 = vmatpush.bf16.msra.mxu0 %v4656
    %5928 = vmatpush.bf16.msra.mxu0 %v4648
    %5929 = vmatpush.bf16.msra.mxu0 %v4640
    %5930 = vmatmul.bf16.gmra.mxu0 %v2500
    %v5931 = vpop.f32.mrf.mxu0
    %v5932 = vadd.f32 %v5919, %v5931
    %v5933 = vpop.f32.mrf.mxu0
    %5934 = vdwg.mxu0
    %5935 = vmatpush.bf16.msra.mxu0 %v4760
    %5936 = vmatpush.bf16.msra.mxu0 %v4752
    %5937 = vmatpush.bf16.msra.mxu0 %v4744
    %5938 = vmatpush.bf16.msra.mxu0 %v4736
    %5939 = vmatpush.bf16.msra.mxu0 %v4728
    %5940 = vmatpush.bf16.msra.mxu0 %v4720
    %5941 = vmatpush.bf16.msra.mxu0 %v4712
    %5942 = vmatpush.bf16.msra.mxu0 %v4704
    %5943 = vmatmul.bf16.gmra.mxu0 %v2501
    %v5944 = vpop.f32.mrf.mxu0
    %v5945 = vadd.f32 %v5932, %v5944
    %v5946 = vpop.f32.mrf.mxu0
    %5947 = vdwg.mxu0
    %5948 = vmatpush.bf16.msra.mxu0 %v4824
    %5949 = vmatpush.bf16.msra.mxu0 %v4816
    %5950 = vmatpush.bf16.msra.mxu0 %v4808
    %5951 = vmatpush.bf16.msra.mxu0 %v4800
    %5952 = vmatpush.bf16.msra.mxu0 %v4792
    %5953 = vmatpush.bf16.msra.mxu0 %v4784
    %5954 = vmatpush.bf16.msra.mxu0 %v4776
    %5955 = vmatpush.bf16.msra.mxu0 %v4768
    %5956 = vmatmul.bf16.gmra.mxu0 %v2502
    %v5957 = vpop.f32.mrf.mxu0
    %v5958 = vadd.f32 %v5945, %v5957
    %v5959 = vpop.f32.mrf.mxu0
    %5960 = vdwg.mxu0
    %5961 = vmatpush.bf16.msra.mxu0 %v4888
    %5962 = vmatpush.bf16.msra.mxu0 %v4880
    %5963 = vmatpush.bf16.msra.mxu0 %v4872
    %5964 = vmatpush.bf16.msra.mxu0 %v4864
    %5965 = vmatpush.bf16.msra.mxu0 %v4856
    %5966 = vmatpush.bf16.msra.mxu0 %v4848
    %5967 = vmatpush.bf16.msra.mxu0 %v4840
    %5968 = vmatpush.bf16.msra.mxu0 %v4832
    %5969 = vmatmul.bf16.gmra.mxu0 %v2503
    %v5970 = vpop.f32.mrf.mxu0
    %v5971 = vadd.f32 %v5958, %v5970
    %v5972 = vpop.f32.mrf.mxu0
    %5973 = vdwg.mxu0
    %5974 = vmatpush.bf16.msra.mxu0 %v4952
    %5975 = vmatpush.bf16.msra.mxu0 %v4944
    %5976 = vmatpush.bf16.msra.mxu0 %v4936
    %5977 = vmatpush.bf16.msra.mxu0 %v4928
    %5978 = vmatpush.bf16.msra.mxu0 %v4920
    %5979 = vmatpush.bf16.msra.mxu0 %v4912
    %5980 = vmatpush.bf16.msra.mxu0 %v4904
    %5981 = vmatpush.bf16.msra.mxu0 %v4896
    %5982 = vmatmul.bf16.gmra.mxu0 %v2504
    %v5983 = vpop.f32.mrf.mxu0
    %v5984 = vadd.f32 %v5971, %v5983
    %v5985 = vpop.f32.mrf.mxu0
    %5986 = vdwg.mxu0
    %5987 = vmatpush.bf16.msra.mxu0 %v5016
    %5988 = vmatpush.bf16.msra.mxu0 %v5008
    %5989 = vmatpush.bf16.msra.mxu0 %v5000
    %5990 = vmatpush.bf16.msra.mxu0 %v4992
    %5991 = vmatpush.bf16.msra.mxu0 %v4984
    %5992 = vmatpush.bf16.msra.mxu0 %v4976
    %5993 = vmatpush.bf16.msra.mxu0 %v4968
    %5994 = vmatpush.bf16.msra.mxu0 %v4960
    %5995 = vmatmul.bf16.gmra.mxu0 %v2505
    %v5996 = vpop.f32.mrf.mxu0
    %v5997 = vadd.f32 %v5984, %v5996
    %v5998 = vpop.f32.mrf.mxu0
    %5999 = vdwg.mxu0
    %6000 = vmatpush.bf16.msra.mxu0 %v5080
    %6001 = vmatpush.bf16.msra.mxu0 %v5072
    %6002 = vmatpush.bf16.msra.mxu0 %v5064
    %6003 = vmatpush.bf16.msra.mxu0 %v5056
    %6004 = vmatpush.bf16.msra.mxu0 %v5048
    %6005 = vmatpush.bf16.msra.mxu0 %v5040
    %6006 = vmatpush.bf16.msra.mxu0 %v5032
    %6007 = vmatpush.bf16.msra.mxu0 %v5024
    %6008 = vmatmul.bf16.gmra.mxu0 %v2506
    %v6009 = vpop.f32.mrf.mxu0
    %v6010 = vadd.f32 %v5997, %v6009
    %v6011 = vpop.f32.mrf.mxu0
    %6012 = vdwg.mxu0
    %6013 = vmatpush.bf16.msra.mxu0 %v4633
    %6014 = vmatpush.bf16.msra.mxu0 %v4625
    %6015 = vmatpush.bf16.msra.mxu0 %v4617
    %6016 = vmatpush.bf16.msra.mxu0 %v4609
    %6017 = vmatpush.bf16.msra.mxu0 %v4601
    %6018 = vmatpush.bf16.msra.mxu0 %v4593
    %6019 = vmatpush.bf16.msra.mxu0 %v4585
    %6020 = vmatpush.bf16.msra.mxu0 %v4577
    %6021 = vmatmul.bf16.gmra.mxu0 %v2499
    %v6022 = vpop.f32.mrf.mxu0
    %v6023 = vadd.f32 %v3025, %v6022
    %v6024 = vpop.f32.mrf.mxu0
    %6025 = vdwg.mxu0
    %6026 = vmatpush.bf16.msra.mxu0 %v4697
    %6027 = vmatpush.bf16.msra.mxu0 %v4689
    %6028 = vmatpush.bf16.msra.mxu0 %v4681
    %6029 = vmatpush.bf16.msra.mxu0 %v4673
    %6030 = vmatpush.bf16.msra.mxu0 %v4665
    %6031 = vmatpush.bf16.msra.mxu0 %v4657
    %6032 = vmatpush.bf16.msra.mxu0 %v4649
    %6033 = vmatpush.bf16.msra.mxu0 %v4641
    %6034 = vmatmul.bf16.gmra.mxu0 %v2500
    %v6035 = vpop.f32.mrf.mxu0
    %v6036 = vadd.f32 %v6023, %v6035
    %v6037 = vpop.f32.mrf.mxu0
    %6038 = vdwg.mxu0
    %6039 = vmatpush.bf16.msra.mxu0 %v4761
    %6040 = vmatpush.bf16.msra.mxu0 %v4753
    %6041 = vmatpush.bf16.msra.mxu0 %v4745
    %6042 = vmatpush.bf16.msra.mxu0 %v4737
    %6043 = vmatpush.bf16.msra.mxu0 %v4729
    %6044 = vmatpush.bf16.msra.mxu0 %v4721
    %6045 = vmatpush.bf16.msra.mxu0 %v4713
    %6046 = vmatpush.bf16.msra.mxu0 %v4705
    %6047 = vmatmul.bf16.gmra.mxu0 %v2501
    %v6048 = vpop.f32.mrf.mxu0
    %v6049 = vadd.f32 %v6036, %v6048
    %v6050 = vpop.f32.mrf.mxu0
    %6051 = vdwg.mxu0
    %6052 = vmatpush.bf16.msra.mxu0 %v4825
    %6053 = vmatpush.bf16.msra.mxu0 %v4817
    %6054 = vmatpush.bf16.msra.mxu0 %v4809
    %6055 = vmatpush.bf16.msra.mxu0 %v4801
    %6056 = vmatpush.bf16.msra.mxu0 %v4793
    %6057 = vmatpush.bf16.msra.mxu0 %v4785
    %6058 = vmatpush.bf16.msra.mxu0 %v4777
    %6059 = vmatpush.bf16.msra.mxu0 %v4769
    %6060 = vmatmul.bf16.gmra.mxu0 %v2502
    %v6061 = vpop.f32.mrf.mxu0
    %v6062 = vadd.f32 %v6049, %v6061
    %v6063 = vpop.f32.mrf.mxu0
    %6064 = vdwg.mxu0
    %6065 = vmatpush.bf16.msra.mxu0 %v4889
    %6066 = vmatpush.bf16.msra.mxu0 %v4881
    %6067 = vmatpush.bf16.msra.mxu0 %v4873
    %6068 = vmatpush.bf16.msra.mxu0 %v4865
    %6069 = vmatpush.bf16.msra.mxu0 %v4857
    %6070 = vmatpush.bf16.msra.mxu0 %v4849
    %6071 = vmatpush.bf16.msra.mxu0 %v4841
    %6072 = vmatpush.bf16.msra.mxu0 %v4833
    %6073 = vmatmul.bf16.gmra.mxu0 %v2503
    %v6074 = vpop.f32.mrf.mxu0
    %v6075 = vadd.f32 %v6062, %v6074
    %v6076 = vpop.f32.mrf.mxu0
    %6077 = vdwg.mxu0
    %6078 = vmatpush.bf16.msra.mxu0 %v4953
    %6079 = vmatpush.bf16.msra.mxu0 %v4945
    %6080 = vmatpush.bf16.msra.mxu0 %v4937
    %6081 = vmatpush.bf16.msra.mxu0 %v4929
    %6082 = vmatpush.bf16.msra.mxu0 %v4921
    %6083 = vmatpush.bf16.msra.mxu0 %v4913
    %6084 = vmatpush.bf16.msra.mxu0 %v4905
    %6085 = vmatpush.bf16.msra.mxu0 %v4897
    %6086 = vmatmul.bf16.gmra.mxu0 %v2504
    %v6087 = vpop.f32.mrf.mxu0
    %v6088 = vadd.f32 %v6075, %v6087
    %v6089 = vpop.f32.mrf.mxu0
    %6090 = vdwg.mxu0
    %6091 = vmatpush.bf16.msra.mxu0 %v5017
    %6092 = vmatpush.bf16.msra.mxu0 %v5009
    %6093 = vmatpush.bf16.msra.mxu0 %v5001
    %6094 = vmatpush.bf16.msra.mxu0 %v4993
    %6095 = vmatpush.bf16.msra.mxu0 %v4985
    %6096 = vmatpush.bf16.msra.mxu0 %v4977
    %6097 = vmatpush.bf16.msra.mxu0 %v4969
    %6098 = vmatpush.bf16.msra.mxu0 %v4961
    %6099 = vmatmul.bf16.gmra.mxu0 %v2505
    %v6100 = vpop.f32.mrf.mxu0
    %v6101 = vadd.f32 %v6088, %v6100
    %v6102 = vpop.f32.mrf.mxu0
    %6103 = vdwg.mxu0
    %6104 = vmatpush.bf16.msra.mxu0 %v5081
    %6105 = vmatpush.bf16.msra.mxu0 %v5073
    %6106 = vmatpush.bf16.msra.mxu0 %v5065
    %6107 = vmatpush.bf16.msra.mxu0 %v5057
    %6108 = vmatpush.bf16.msra.mxu0 %v5049
    %6109 = vmatpush.bf16.msra.mxu0 %v5041
    %6110 = vmatpush.bf16.msra.mxu0 %v5033
    %6111 = vmatpush.bf16.msra.mxu0 %v5025
    %6112 = vmatmul.bf16.gmra.mxu0 %v2506
    %v6113 = vpop.f32.mrf.mxu0
    %v6114 = vadd.f32 %v6101, %v6113
    %v6115 = vpop.f32.mrf.mxu0
    %6116 = vdwg.mxu0
    %6117 = vmatpush.bf16.msra.mxu0 %v4634
    %6118 = vmatpush.bf16.msra.mxu0 %v4626
    %6119 = vmatpush.bf16.msra.mxu0 %v4618
    %6120 = vmatpush.bf16.msra.mxu0 %v4610
    %6121 = vmatpush.bf16.msra.mxu0 %v4602
    %6122 = vmatpush.bf16.msra.mxu0 %v4594
    %6123 = vmatpush.bf16.msra.mxu0 %v4586
    %6124 = vmatpush.bf16.msra.mxu0 %v4578
    %6125 = vmatmul.bf16.gmra.mxu0 %v2499
    %v6126 = vpop.f32.mrf.mxu0
    %v6127 = vadd.f32 %v3026, %v6126
    %v6128 = vpop.f32.mrf.mxu0
    %6129 = vdwg.mxu0
    %6130 = vmatpush.bf16.msra.mxu0 %v4698
    %6131 = vmatpush.bf16.msra.mxu0 %v4690
    %6132 = vmatpush.bf16.msra.mxu0 %v4682
    %6133 = vmatpush.bf16.msra.mxu0 %v4674
    %6134 = vmatpush.bf16.msra.mxu0 %v4666
    %6135 = vmatpush.bf16.msra.mxu0 %v4658
    %6136 = vmatpush.bf16.msra.mxu0 %v4650
    %6137 = vmatpush.bf16.msra.mxu0 %v4642
    %6138 = vmatmul.bf16.gmra.mxu0 %v2500
    %v6139 = vpop.f32.mrf.mxu0
    %v6140 = vadd.f32 %v6127, %v6139
    %v6141 = vpop.f32.mrf.mxu0
    %6142 = vdwg.mxu0
    %6143 = vmatpush.bf16.msra.mxu0 %v4762
    %6144 = vmatpush.bf16.msra.mxu0 %v4754
    %6145 = vmatpush.bf16.msra.mxu0 %v4746
    %6146 = vmatpush.bf16.msra.mxu0 %v4738
    %6147 = vmatpush.bf16.msra.mxu0 %v4730
    %6148 = vmatpush.bf16.msra.mxu0 %v4722
    %6149 = vmatpush.bf16.msra.mxu0 %v4714
    %6150 = vmatpush.bf16.msra.mxu0 %v4706
    %6151 = vmatmul.bf16.gmra.mxu0 %v2501
    %v6152 = vpop.f32.mrf.mxu0
    %v6153 = vadd.f32 %v6140, %v6152
    %v6154 = vpop.f32.mrf.mxu0
    %6155 = vdwg.mxu0
    %6156 = vmatpush.bf16.msra.mxu0 %v4826
    %6157 = vmatpush.bf16.msra.mxu0 %v4818
    %6158 = vmatpush.bf16.msra.mxu0 %v4810
    %6159 = vmatpush.bf16.msra.mxu0 %v4802
    %6160 = vmatpush.bf16.msra.mxu0 %v4794
    %6161 = vmatpush.bf16.msra.mxu0 %v4786
    %6162 = vmatpush.bf16.msra.mxu0 %v4778
    %6163 = vmatpush.bf16.msra.mxu0 %v4770
    %6164 = vmatmul.bf16.gmra.mxu0 %v2502
    %v6165 = vpop.f32.mrf.mxu0
    %v6166 = vadd.f32 %v6153, %v6165
    %v6167 = vpop.f32.mrf.mxu0
    %6168 = vdwg.mxu0
    %6169 = vmatpush.bf16.msra.mxu0 %v4890
    %6170 = vmatpush.bf16.msra.mxu0 %v4882
    %6171 = vmatpush.bf16.msra.mxu0 %v4874
    %6172 = vmatpush.bf16.msra.mxu0 %v4866
    %6173 = vmatpush.bf16.msra.mxu0 %v4858
    %6174 = vmatpush.bf16.msra.mxu0 %v4850
    %6175 = vmatpush.bf16.msra.mxu0 %v4842
    %6176 = vmatpush.bf16.msra.mxu0 %v4834
    %6177 = vmatmul.bf16.gmra.mxu0 %v2503
    %v6178 = vpop.f32.mrf.mxu0
    %v6179 = vadd.f32 %v6166, %v6178
    %v6180 = vpop.f32.mrf.mxu0
    %6181 = vdwg.mxu0
    %6182 = vmatpush.bf16.msra.mxu0 %v4954
    %6183 = vmatpush.bf16.msra.mxu0 %v4946
    %6184 = vmatpush.bf16.msra.mxu0 %v4938
    %6185 = vmatpush.bf16.msra.mxu0 %v4930
    %6186 = vmatpush.bf16.msra.mxu0 %v4922
    %6187 = vmatpush.bf16.msra.mxu0 %v4914
    %6188 = vmatpush.bf16.msra.mxu0 %v4906
    %6189 = vmatpush.bf16.msra.mxu0 %v4898
    %6190 = vmatmul.bf16.gmra.mxu0 %v2504
    %v6191 = vpop.f32.mrf.mxu0
    %v6192 = vadd.f32 %v6179, %v6191
    %v6193 = vpop.f32.mrf.mxu0
    %6194 = vdwg.mxu0
    %6195 = vmatpush.bf16.msra.mxu0 %v5018
    %6196 = vmatpush.bf16.msra.mxu0 %v5010
    %6197 = vmatpush.bf16.msra.mxu0 %v5002
    %6198 = vmatpush.bf16.msra.mxu0 %v4994
    %6199 = vmatpush.bf16.msra.mxu0 %v4986
    %6200 = vmatpush.bf16.msra.mxu0 %v4978
    %6201 = vmatpush.bf16.msra.mxu0 %v4970
    %6202 = vmatpush.bf16.msra.mxu0 %v4962
    %6203 = vmatmul.bf16.gmra.mxu0 %v2505
    %v6204 = vpop.f32.mrf.mxu0
    %v6205 = vadd.f32 %v6192, %v6204
    %v6206 = vpop.f32.mrf.mxu0
    %6207 = vdwg.mxu0
    %6208 = vmatpush.bf16.msra.mxu0 %v5082
    %6209 = vmatpush.bf16.msra.mxu0 %v5074
    %6210 = vmatpush.bf16.msra.mxu0 %v5066
    %6211 = vmatpush.bf16.msra.mxu0 %v5058
    %6212 = vmatpush.bf16.msra.mxu0 %v5050
    %6213 = vmatpush.bf16.msra.mxu0 %v5042
    %6214 = vmatpush.bf16.msra.mxu0 %v5034
    %6215 = vmatpush.bf16.msra.mxu0 %v5026
    %6216 = vmatmul.bf16.gmra.mxu0 %v2506
    %v6217 = vpop.f32.mrf.mxu0
    %v6218 = vadd.f32 %v6205, %v6217
    %v6219 = vpop.f32.mrf.mxu0
    %6220 = vdwg.mxu0
    %6221 = vmatpush.bf16.msra.mxu0 %v4635
    %6222 = vmatpush.bf16.msra.mxu0 %v4627
    %6223 = vmatpush.bf16.msra.mxu0 %v4619
    %6224 = vmatpush.bf16.msra.mxu0 %v4611
    %6225 = vmatpush.bf16.msra.mxu0 %v4603
    %6226 = vmatpush.bf16.msra.mxu0 %v4595
    %6227 = vmatpush.bf16.msra.mxu0 %v4587
    %6228 = vmatpush.bf16.msra.mxu0 %v4579
    %6229 = vmatmul.bf16.gmra.mxu0 %v2499
    %v6230 = vpop.f32.mrf.mxu0
    %v6231 = vadd.f32 %v3027, %v6230
    %v6232 = vpop.f32.mrf.mxu0
    %6233 = vdwg.mxu0
    %6234 = vmatpush.bf16.msra.mxu0 %v4699
    %6235 = vmatpush.bf16.msra.mxu0 %v4691
    %6236 = vmatpush.bf16.msra.mxu0 %v4683
    %6237 = vmatpush.bf16.msra.mxu0 %v4675
    %6238 = vmatpush.bf16.msra.mxu0 %v4667
    %6239 = vmatpush.bf16.msra.mxu0 %v4659
    %6240 = vmatpush.bf16.msra.mxu0 %v4651
    %6241 = vmatpush.bf16.msra.mxu0 %v4643
    %6242 = vmatmul.bf16.gmra.mxu0 %v2500
    %v6243 = vpop.f32.mrf.mxu0
    %v6244 = vadd.f32 %v6231, %v6243
    %v6245 = vpop.f32.mrf.mxu0
    %6246 = vdwg.mxu0
    %6247 = vmatpush.bf16.msra.mxu0 %v4763
    %6248 = vmatpush.bf16.msra.mxu0 %v4755
    %6249 = vmatpush.bf16.msra.mxu0 %v4747
    %6250 = vmatpush.bf16.msra.mxu0 %v4739
    %6251 = vmatpush.bf16.msra.mxu0 %v4731
    %6252 = vmatpush.bf16.msra.mxu0 %v4723
    %6253 = vmatpush.bf16.msra.mxu0 %v4715
    %6254 = vmatpush.bf16.msra.mxu0 %v4707
    %6255 = vmatmul.bf16.gmra.mxu0 %v2501
    %v6256 = vpop.f32.mrf.mxu0
    %v6257 = vadd.f32 %v6244, %v6256
    %v6258 = vpop.f32.mrf.mxu0
    %6259 = vdwg.mxu0
    %6260 = vmatpush.bf16.msra.mxu0 %v4827
    %6261 = vmatpush.bf16.msra.mxu0 %v4819
    %6262 = vmatpush.bf16.msra.mxu0 %v4811
    %6263 = vmatpush.bf16.msra.mxu0 %v4803
    %6264 = vmatpush.bf16.msra.mxu0 %v4795
    %6265 = vmatpush.bf16.msra.mxu0 %v4787
    %6266 = vmatpush.bf16.msra.mxu0 %v4779
    %6267 = vmatpush.bf16.msra.mxu0 %v4771
    %6268 = vmatmul.bf16.gmra.mxu0 %v2502
    %v6269 = vpop.f32.mrf.mxu0
    %v6270 = vadd.f32 %v6257, %v6269
    %v6271 = vpop.f32.mrf.mxu0
    %6272 = vdwg.mxu0
    %6273 = vmatpush.bf16.msra.mxu0 %v4891
    %6274 = vmatpush.bf16.msra.mxu0 %v4883
    %6275 = vmatpush.bf16.msra.mxu0 %v4875
    %6276 = vmatpush.bf16.msra.mxu0 %v4867
    %6277 = vmatpush.bf16.msra.mxu0 %v4859
    %6278 = vmatpush.bf16.msra.mxu0 %v4851
    %6279 = vmatpush.bf16.msra.mxu0 %v4843
    %6280 = vmatpush.bf16.msra.mxu0 %v4835
    %6281 = vmatmul.bf16.gmra.mxu0 %v2503
    %v6282 = vpop.f32.mrf.mxu0
    %v6283 = vadd.f32 %v6270, %v6282
    %v6284 = vpop.f32.mrf.mxu0
    %6285 = vdwg.mxu0
    %6286 = vmatpush.bf16.msra.mxu0 %v4955
    %6287 = vmatpush.bf16.msra.mxu0 %v4947
    %6288 = vmatpush.bf16.msra.mxu0 %v4939
    %6289 = vmatpush.bf16.msra.mxu0 %v4931
    %6290 = vmatpush.bf16.msra.mxu0 %v4923
    %6291 = vmatpush.bf16.msra.mxu0 %v4915
    %6292 = vmatpush.bf16.msra.mxu0 %v4907
    %6293 = vmatpush.bf16.msra.mxu0 %v4899
    %6294 = vmatmul.bf16.gmra.mxu0 %v2504
    %v6295 = vpop.f32.mrf.mxu0
    %v6296 = vadd.f32 %v6283, %v6295
    %v6297 = vpop.f32.mrf.mxu0
    %6298 = vdwg.mxu0
    %6299 = vmatpush.bf16.msra.mxu0 %v5019
    %6300 = vmatpush.bf16.msra.mxu0 %v5011
    %6301 = vmatpush.bf16.msra.mxu0 %v5003
    %6302 = vmatpush.bf16.msra.mxu0 %v4995
    %6303 = vmatpush.bf16.msra.mxu0 %v4987
    %6304 = vmatpush.bf16.msra.mxu0 %v4979
    %6305 = vmatpush.bf16.msra.mxu0 %v4971
    %6306 = vmatpush.bf16.msra.mxu0 %v4963
    %6307 = vmatmul.bf16.gmra.mxu0 %v2505
    %v6308 = vpop.f32.mrf.mxu0
    %v6309 = vadd.f32 %v6296, %v6308
    %v6310 = vpop.f32.mrf.mxu0
    %6311 = vdwg.mxu0
    %6312 = vmatpush.bf16.msra.mxu0 %v5083
    %6313 = vmatpush.bf16.msra.mxu0 %v5075
    %6314 = vmatpush.bf16.msra.mxu0 %v5067
    %6315 = vmatpush.bf16.msra.mxu0 %v5059
    %6316 = vmatpush.bf16.msra.mxu0 %v5051
    %6317 = vmatpush.bf16.msra.mxu0 %v5043
    %6318 = vmatpush.bf16.msra.mxu0 %v5035
    %6319 = vmatpush.bf16.msra.mxu0 %v5027
    %6320 = vmatmul.bf16.gmra.mxu0 %v2506
    %v6321 = vpop.f32.mrf.mxu0
    %v6322 = vadd.f32 %v6309, %v6321
    %v6323 = vpop.f32.mrf.mxu0
    %6324 = vdwg.mxu0
    %6325 = vmatpush.bf16.msra.mxu0 %v4636
    %6326 = vmatpush.bf16.msra.mxu0 %v4628
    %6327 = vmatpush.bf16.msra.mxu0 %v4620
    %6328 = vmatpush.bf16.msra.mxu0 %v4612
    %6329 = vmatpush.bf16.msra.mxu0 %v4604
    %6330 = vmatpush.bf16.msra.mxu0 %v4596
    %6331 = vmatpush.bf16.msra.mxu0 %v4588
    %6332 = vmatpush.bf16.msra.mxu0 %v4580
    %6333 = vmatmul.bf16.gmra.mxu0 %v2499
    %v6334 = vpop.f32.mrf.mxu0
    %v6335 = vadd.f32 %v3028, %v6334
    %v6336 = vpop.f32.mrf.mxu0
    %6337 = vdwg.mxu0
    %6338 = vmatpush.bf16.msra.mxu0 %v4700
    %6339 = vmatpush.bf16.msra.mxu0 %v4692
    %6340 = vmatpush.bf16.msra.mxu0 %v4684
    %6341 = vmatpush.bf16.msra.mxu0 %v4676
    %6342 = vmatpush.bf16.msra.mxu0 %v4668
    %6343 = vmatpush.bf16.msra.mxu0 %v4660
    %6344 = vmatpush.bf16.msra.mxu0 %v4652
    %6345 = vmatpush.bf16.msra.mxu0 %v4644
    %6346 = vmatmul.bf16.gmra.mxu0 %v2500
    %v6347 = vpop.f32.mrf.mxu0
    %v6348 = vadd.f32 %v6335, %v6347
    %v6349 = vpop.f32.mrf.mxu0
    %6350 = vdwg.mxu0
    %6351 = vmatpush.bf16.msra.mxu0 %v4764
    %6352 = vmatpush.bf16.msra.mxu0 %v4756
    %6353 = vmatpush.bf16.msra.mxu0 %v4748
    %6354 = vmatpush.bf16.msra.mxu0 %v4740
    %6355 = vmatpush.bf16.msra.mxu0 %v4732
    %6356 = vmatpush.bf16.msra.mxu0 %v4724
    %6357 = vmatpush.bf16.msra.mxu0 %v4716
    %6358 = vmatpush.bf16.msra.mxu0 %v4708
    %6359 = vmatmul.bf16.gmra.mxu0 %v2501
    %v6360 = vpop.f32.mrf.mxu0
    %v6361 = vadd.f32 %v6348, %v6360
    %v6362 = vpop.f32.mrf.mxu0
    %6363 = vdwg.mxu0
    %6364 = vmatpush.bf16.msra.mxu0 %v4828
    %6365 = vmatpush.bf16.msra.mxu0 %v4820
    %6366 = vmatpush.bf16.msra.mxu0 %v4812
    %6367 = vmatpush.bf16.msra.mxu0 %v4804
    %6368 = vmatpush.bf16.msra.mxu0 %v4796
    %6369 = vmatpush.bf16.msra.mxu0 %v4788
    %6370 = vmatpush.bf16.msra.mxu0 %v4780
    %6371 = vmatpush.bf16.msra.mxu0 %v4772
    %6372 = vmatmul.bf16.gmra.mxu0 %v2502
    %v6373 = vpop.f32.mrf.mxu0
    %v6374 = vadd.f32 %v6361, %v6373
    %v6375 = vpop.f32.mrf.mxu0
    %6376 = vdwg.mxu0
    %6377 = vmatpush.bf16.msra.mxu0 %v4892
    %6378 = vmatpush.bf16.msra.mxu0 %v4884
    %6379 = vmatpush.bf16.msra.mxu0 %v4876
    %6380 = vmatpush.bf16.msra.mxu0 %v4868
    %6381 = vmatpush.bf16.msra.mxu0 %v4860
    %6382 = vmatpush.bf16.msra.mxu0 %v4852
    %6383 = vmatpush.bf16.msra.mxu0 %v4844
    %6384 = vmatpush.bf16.msra.mxu0 %v4836
    %6385 = vmatmul.bf16.gmra.mxu0 %v2503
    %v6386 = vpop.f32.mrf.mxu0
    %v6387 = vadd.f32 %v6374, %v6386
    %v6388 = vpop.f32.mrf.mxu0
    %6389 = vdwg.mxu0
    %6390 = vmatpush.bf16.msra.mxu0 %v4956
    %6391 = vmatpush.bf16.msra.mxu0 %v4948
    %6392 = vmatpush.bf16.msra.mxu0 %v4940
    %6393 = vmatpush.bf16.msra.mxu0 %v4932
    %6394 = vmatpush.bf16.msra.mxu0 %v4924
    %6395 = vmatpush.bf16.msra.mxu0 %v4916
    %6396 = vmatpush.bf16.msra.mxu0 %v4908
    %6397 = vmatpush.bf16.msra.mxu0 %v4900
    %6398 = vmatmul.bf16.gmra.mxu0 %v2504
    %v6399 = vpop.f32.mrf.mxu0
    %v6400 = vadd.f32 %v6387, %v6399
    %v6401 = vpop.f32.mrf.mxu0
    %6402 = vdwg.mxu0
    %6403 = vmatpush.bf16.msra.mxu0 %v5020
    %6404 = vmatpush.bf16.msra.mxu0 %v5012
    %6405 = vmatpush.bf16.msra.mxu0 %v5004
    %6406 = vmatpush.bf16.msra.mxu0 %v4996
    %6407 = vmatpush.bf16.msra.mxu0 %v4988
    %6408 = vmatpush.bf16.msra.mxu0 %v4980
    %6409 = vmatpush.bf16.msra.mxu0 %v4972
    %6410 = vmatpush.bf16.msra.mxu0 %v4964
    %6411 = vmatmul.bf16.gmra.mxu0 %v2505
    %v6412 = vpop.f32.mrf.mxu0
    %v6413 = vadd.f32 %v6400, %v6412
    %v6414 = vpop.f32.mrf.mxu0
    %6415 = vdwg.mxu0
    %6416 = vmatpush.bf16.msra.mxu0 %v5084
    %6417 = vmatpush.bf16.msra.mxu0 %v5076
    %6418 = vmatpush.bf16.msra.mxu0 %v5068
    %6419 = vmatpush.bf16.msra.mxu0 %v5060
    %6420 = vmatpush.bf16.msra.mxu0 %v5052
    %6421 = vmatpush.bf16.msra.mxu0 %v5044
    %6422 = vmatpush.bf16.msra.mxu0 %v5036
    %6423 = vmatpush.bf16.msra.mxu0 %v5028
    %6424 = vmatmul.bf16.gmra.mxu0 %v2506
    %v6425 = vpop.f32.mrf.mxu0
    %v6426 = vadd.f32 %v6413, %v6425
    %v6427 = vpop.f32.mrf.mxu0
    %6428 = vdwg.mxu0
    %vm6429 = vcmp.ge.f32.partialorder %v5698, 0.0
    %vm6430 = vcmp.ge.f32.partialorder %v5802, 0.0
    %vm6431 = vcmp.ge.f32.partialorder %v5906, 0.0
    %vm6432 = vcmp.ge.f32.partialorder %v6010, 0.0
    %vm6433 = vcmp.ge.f32.partialorder %v6114, 0.0
    %vm6434 = vcmp.ge.f32.partialorder %v6218, 0.0
    %vm6435 = vcmp.ge.f32.partialorder %v6322, 0.0
    %vm6436 = vcmp.ge.f32.partialorder %v6426, 0.0
    %v6437 = vmul.f32 %v5698, 0.2
    %v6438 = vmul.f32 %v5802, 0.2
    %v6439 = vmul.f32 %v5906, 0.2
    %v6440 = vmul.f32 %v6010, 0.2
    %v6441 = vmul.f32 %v6114, 0.2
    %v6442 = vmul.f32 %v6218, 0.2
    %v6443 = vmul.f32 %v6322, 0.2
    %v6444 = vmul.f32 %v6426, 0.2
    %v6445 = vsel %vm6429, %v5698, %v6437
    %v6446 = vsel %vm6430, %v5802, %v6438
    %v6447 = vsel %vm6431, %v5906, %v6439
    %v6448 = vsel %vm6432, %v6010, %v6440
    %v6449 = vsel %vm6433, %v6114, %v6441
    %v6450 = vsel %vm6434, %v6218, %v6442
    %v6451 = vsel %vm6435, %v6322, %v6443
    %v6452 = vsel %vm6436, %v6426, %v6444
    %v6453 = vld [vmem:[#allocation16] sm:$0xff]
    %v6454 = vld [vmem:[#allocation17] sm:$0xff]
    %v6455 = vrot.slane %v6445, 4
    %v6456 = vadd.f32 %v6445, %v6455
    %v6457 = vrot.slane %v6456, 2
    %v6458 = vadd.f32 %v6456, %v6457
    %v6459 = vrot.slane %v6458, 1
    %v6460 = vadd.f32 %v6458, %v6459
    %v6461 = vrot.slane %v6446, 4
    %v6462 = vadd.f32 %v6446, %v6461
    %v6463 = vrot.slane %v6462, 2
    %v6464 = vadd.f32 %v6462, %v6463
    %v6465 = vrot.slane %v6464, 1
    %v6466 = vadd.f32 %v6464, %v6465
    %v6467 = vrot.slane %v6447, 4
    %v6468 = vadd.f32 %v6447, %v6467
    %v6469 = vrot.slane %v6468, 2
    %v6470 = vadd.f32 %v6468, %v6469
    %v6471 = vrot.slane %v6470, 1
    %v6472 = vadd.f32 %v6470, %v6471
    %v6473 = vrot.slane %v6448, 4
    %v6474 = vadd.f32 %v6448, %v6473
    %v6475 = vrot.slane %v6474, 2
    %v6476 = vadd.f32 %v6474, %v6475
    %v6477 = vrot.slane %v6476, 1
    %v6478 = vadd.f32 %v6476, %v6477
    %v6479 = vrot.slane %v6449, 4
    %v6480 = vadd.f32 %v6449, %v6479
    %v6481 = vrot.slane %v6480, 2
    %v6482 = vadd.f32 %v6480, %v6481
    %v6483 = vrot.slane %v6482, 1
    %v6484 = vadd.f32 %v6482, %v6483
    %v6485 = vrot.slane %v6450, 4
    %v6486 = vadd.f32 %v6450, %v6485
    %v6487 = vrot.slane %v6486, 2
    %v6488 = vadd.f32 %v6486, %v6487
    %v6489 = vrot.slane %v6488, 1
    %v6490 = vadd.f32 %v6488, %v6489
    %v6491 = vrot.slane %v6451, 4
    %v6492 = vadd.f32 %v6451, %v6491
    %v6493 = vrot.slane %v6492, 2
    %v6494 = vadd.f32 %v6492, %v6493
    %v6495 = vrot.slane %v6494, 1
    %v6496 = vadd.f32 %v6494, %v6495
    %v6497 = vrot.slane %v6452, 4
    %v6498 = vadd.f32 %v6452, %v6497
    %v6499 = vrot.slane %v6498, 2
    %v6500 = vadd.f32 %v6498, %v6499
    %v6501 = vrot.slane %v6500, 1
    %v6502 = vadd.f32 %v6500, %v6501
    %v6503 = vmul.f32 %v6460, %v2244
    %v6504 = vmul.f32 %v6466, %v2244
    %v6505 = vmul.f32 %v6472, %v2244
    %v6506 = vmul.f32 %v6478, %v2244
    %v6507 = vmul.f32 %v6484, %v2244
    %v6508 = vmul.f32 %v6490, %v2244
    %v6509 = vmul.f32 %v6496, %v2244
    %v6510 = vmul.f32 %v6502, %v2244
    %v6511 = vmul.f32 %v6445, %v6445
    %v6512 = vmul.f32 %v6446, %v6446
    %v6513 = vmul.f32 %v6447, %v6447
    %v6514 = vmul.f32 %v6448, %v6448
    %v6515 = vmul.f32 %v6449, %v6449
    %v6516 = vmul.f32 %v6450, %v6450
    %v6517 = vmul.f32 %v6451, %v6451
    %v6518 = vmul.f32 %v6452, %v6452
    %v6519 = vrot.slane %v6511, 4
    %v6520 = vadd.f32 %v6511, %v6519
    %v6521 = vrot.slane %v6520, 2
    %v6522 = vadd.f32 %v6520, %v6521
    %v6523 = vrot.slane %v6522, 1
    %v6524 = vadd.f32 %v6522, %v6523
    %v6525 = vrot.slane %v6512, 4
    %v6526 = vadd.f32 %v6512, %v6525
    %v6527 = vrot.slane %v6526, 2
    %v6528 = vadd.f32 %v6526, %v6527
    %v6529 = vrot.slane %v6528, 1
    %v6530 = vadd.f32 %v6528, %v6529
    %v6531 = vrot.slane %v6513, 4
    %v6532 = vadd.f32 %v6513, %v6531
    %v6533 = vrot.slane %v6532, 2
    %v6534 = vadd.f32 %v6532, %v6533
    %v6535 = vrot.slane %v6534, 1
    %v6536 = vadd.f32 %v6534, %v6535
    %v6537 = vrot.slane %v6514, 4
    %v6538 = vadd.f32 %v6514, %v6537
    %v6539 = vrot.slane %v6538, 2
    %v6540 = vadd.f32 %v6538, %v6539
    %v6541 = vrot.slane %v6540, 1
    %v6542 = vadd.f32 %v6540, %v6541
    %v6543 = vrot.slane %v6515, 4
    %v6544 = vadd.f32 %v6515, %v6543
    %v6545 = vrot.slane %v6544, 2
    %v6546 = vadd.f32 %v6544, %v6545
    %v6547 = vrot.slane %v6546, 1
    %v6548 = vadd.f32 %v6546, %v6547
    %v6549 = vrot.slane %v6516, 4
    %v6550 = vadd.f32 %v6516, %v6549
    %v6551 = vrot.slane %v6550, 2
    %v6552 = vadd.f32 %v6550, %v6551
    %v6553 = vrot.slane %v6552, 1
    %v6554 = vadd.f32 %v6552, %v6553
    %v6555 = vrot.slane %v6517, 4
    %v6556 = vadd.f32 %v6517, %v6555
    %v6557 = vrot.slane %v6556, 2
    %v6558 = vadd.f32 %v6556, %v6557
    %v6559 = vrot.slane %v6558, 1
    %v6560 = vadd.f32 %v6558, %v6559
    %v6561 = vrot.slane %v6518, 4
    %v6562 = vadd.f32 %v6518, %v6561
    %v6563 = vrot.slane %v6562, 2
    %v6564 = vadd.f32 %v6562, %v6563
    %v6565 = vrot.slane %v6564, 1
    %v6566 = vadd.f32 %v6564, %v6565
    %v6567 = vmul.f32 %v6524, %v2244
    %v6568 = vmul.f32 %v6530, %v2244
    %v6569 = vmul.f32 %v6536, %v2244
    %v6570 = vmul.f32 %v6542, %v2244
    %v6571 = vmul.f32 %v6548, %v2244
    %v6572 = vmul.f32 %v6554, %v2244
    %v6573 = vmul.f32 %v6560, %v2244
    %v6574 = vmul.f32 %v6566, %v2244
    %v6575 = vmul.f32 %v6503, %v6503
    %v6576 = vmul.f32 %v6504, %v6504
    %v6577 = vmul.f32 %v6505, %v6505
    %v6578 = vmul.f32 %v6506, %v6506
    %v6579 = vmul.f32 %v6507, %v6507
    %v6580 = vmul.f32 %v6508, %v6508
    %v6581 = vmul.f32 %v6509, %v6509
    %v6582 = vmul.f32 %v6510, %v6510
    %v6583 = vsub.f32 %v6567, %v6575
    %v6584 = vsub.f32 %v6568, %v6576
    %v6585 = vsub.f32 %v6569, %v6577
    %v6586 = vsub.f32 %v6570, %v6578
    %v6587 = vsub.f32 %v6571, %v6579
    %v6588 = vsub.f32 %v6572, %v6580
    %v6589 = vsub.f32 %v6573, %v6581
    %v6590 = vsub.f32 %v6574, %v6582
    %v6591 = vmax.f32 %v6583, 0.0
    %v6592 = vmax.f32 %v6584, 0.0
    %v6593 = vmax.f32 %v6585, 0.0
    %v6594 = vmax.f32 %v6586, 0.0
    %v6595 = vmax.f32 %v6587, 0.0
    %v6596 = vmax.f32 %v6588, 0.0
    %v6597 = vmax.f32 %v6589, 0.0
    %v6598 = vmax.f32 %v6590, 0.0
    %v6599 = vadd.f32 %v6591, 1e-05
    %v6600 = vadd.f32 %v6592, 1e-05
    %v6601 = vadd.f32 %v6593, 1e-05
    %v6602 = vadd.f32 %v6594, 1e-05
    %v6603 = vadd.f32 %v6595, 1e-05
    %v6604 = vadd.f32 %v6596, 1e-05
    %v6605 = vadd.f32 %v6597, 1e-05
    %v6606 = vadd.f32 %v6598, 1e-05
    %v6607 = vrsqrt.pop %v6599
    %v6608 = vmul.f32 %v6607, %v6599
    %v6609 = vmul.f32 %v6608, %v6607
    %v6610 = vmul.f32 0.5, %v6609
    %v6611 = vsub.f32 1.5, %v6610
    %v6612 = vmul.f32 %v6607, %v6611
    %vm6613 = vweird.f32 %v6599
    %vm6614 = vweird.f32 %v6607
    %vm6615 = vmor %vm6613, %vm6614
    %v6616 = vsel %vm6615, %v6607, %v6612
    %v6617 = vrsqrt.pop %v6600
    %v6618 = vmul.f32 %v6617, %v6600
    %v6619 = vmul.f32 %v6618, %v6617
    %v6620 = vmul.f32 0.5, %v6619
    %v6621 = vsub.f32 1.5, %v6620
    %v6622 = vmul.f32 %v6617, %v6621
    %vm6623 = vweird.f32 %v6600
    %vm6624 = vweird.f32 %v6617
    %vm6625 = vmor %vm6623, %vm6624
    %v6626 = vsel %vm6625, %v6617, %v6622
    %v6627 = vrsqrt.pop %v6601
    %v6628 = vmul.f32 %v6627, %v6601
    %v6629 = vmul.f32 %v6628, %v6627
    %v6630 = vmul.f32 0.5, %v6629
    %v6631 = vsub.f32 1.5, %v6630
    %v6632 = vmul.f32 %v6627, %v6631
    %vm6633 = vweird.f32 %v6601
    %vm6634 = vweird.f32 %v6627
    %vm6635 = vmor %vm6633, %vm6634
    %v6636 = vsel %vm6635, %v6627, %v6632
    %v6637 = vrsqrt.pop %v6602
    %v6638 = vmul.f32 %v6637, %v6602
    %v6639 = vmul.f32 %v6638, %v6637
    %v6640 = vmul.f32 0.5, %v6639
    %v6641 = vsub.f32 1.5, %v6640
    %v6642 = vmul.f32 %v6637, %v6641
    %vm6643 = vweird.f32 %v6602
    %vm6644 = vweird.f32 %v6637
    %vm6645 = vmor %vm6643, %vm6644
    %v6646 = vsel %vm6645, %v6637, %v6642
    %v6647 = vrsqrt.pop %v6603
    %v6648 = vmul.f32 %v6647, %v6603
    %v6649 = vmul.f32 %v6648, %v6647
    %v6650 = vmul.f32 0.5, %v6649
    %v6651 = vsub.f32 1.5, %v6650
    %v6652 = vmul.f32 %v6647, %v6651
    %vm6653 = vweird.f32 %v6603
    %vm6654 = vweird.f32 %v6647
    %vm6655 = vmor %vm6653, %vm6654
    %v6656 = vsel %vm6655, %v6647, %v6652
    %v6657 = vrsqrt.pop %v6604
    %v6658 = vmul.f32 %v6657, %v6604
    %v6659 = vmul.f32 %v6658, %v6657
    %v6660 = vmul.f32 0.5, %v6659
    %v6661 = vsub.f32 1.5, %v6660
    %v6662 = vmul.f32 %v6657, %v6661
    %vm6663 = vweird.f32 %v6604
    %vm6664 = vweird.f32 %v6657
    %vm6665 = vmor %vm6663, %vm6664
    %v6666 = vsel %vm6665, %v6657, %v6662
    %v6667 = vrsqrt.pop %v6605
    %v6668 = vmul.f32 %v6667, %v6605
    %v6669 = vmul.f32 %v6668, %v6667
    %v6670 = vmul.f32 0.5, %v6669
    %v6671 = vsub.f32 1.5, %v6670
    %v6672 = vmul.f32 %v6667, %v6671
    %vm6673 = vweird.f32 %v6605
    %vm6674 = vweird.f32 %v6667
    %vm6675 = vmor %vm6673, %vm6674
    %v6676 = vsel %vm6675, %v6667, %v6672
    %v6677 = vrsqrt.pop %v6606
    %v6678 = vmul.f32 %v6677, %v6606
    %v6679 = vmul.f32 %v6678, %v6677
    %v6680 = vmul.f32 0.5, %v6679
    %v6681 = vsub.f32 1.5, %v6680
    %v6682 = vmul.f32 %v6677, %v6681
    %vm6683 = vweird.f32 %v6606
    %vm6684 = vweird.f32 %v6677
    %vm6685 = vmor %vm6683, %vm6684
    %v6686 = vsel %vm6685, %v6677, %v6682
    %v6687 = vsub.f32 %v6445, %v6503
    %v6688 = vsub.f32 %v6446, %v6504
    %v6689 = vsub.f32 %v6447, %v6505
    %v6690 = vsub.f32 %v6448, %v6506
    %v6691 = vsub.f32 %v6449, %v6507
    %v6692 = vsub.f32 %v6450, %v6508
    %v6693 = vsub.f32 %v6451, %v6509
    %v6694 = vsub.f32 %v6452, %v6510
    %v6695 = vmul.f32 %v6687, %v6616
    %v6696 = vmul.f32 %v6688, %v6626
    %v6697 = vmul.f32 %v6689, %v6636
    %v6698 = vmul.f32 %v6690, %v6646
    %v6699 = vmul.f32 %v6691, %v6656
    %v6700 = vmul.f32 %v6692, %v6666
    %v6701 = vmul.f32 %v6693, %v6676
    %v6702 = vmul.f32 %v6694, %v6686
    %v6704 = vperm.slane %v6453, 0
    %v6705 = vperm.slane %v6453, 1
    %v6706 = vperm.slane %v6453, 2
    %v6707 = vperm.slane %v6453, 3
    %v6708 = vperm.slane %v6453, 4
    %v6709 = vperm.slane %v6453, 5
    %v6710 = vperm.slane %v6453, 6
    %v6711 = vperm.slane %v6453, 7
    %v6720 = vmul.f32 %v6695, %v6704
    %v6721 = vmul.f32 %v6696, %v6705
    %v6722 = vmul.f32 %v6697, %v6706
    %v6723 = vmul.f32 %v6698, %v6707
    %v6724 = vmul.f32 %v6699, %v6708
    %v6725 = vmul.f32 %v6700, %v6709
    %v6726 = vmul.f32 %v6701, %v6710
    %v6727 = vmul.f32 %v6702, %v6711
    %v6729 = vperm.slane %v6454, 0
    %v6730 = vperm.slane %v6454, 1
    %v6731 = vperm.slane %v6454, 2
    %v6732 = vperm.slane %v6454, 3
    %v6733 = vperm.slane %v6454, 4
    %v6734 = vperm.slane %v6454, 5
    %v6735 = vperm.slane %v6454, 6
    %v6736 = vperm.slane %v6454, 7
    %v6745 = vadd.f32 %v6720, %v6729
    %v6746 = vadd.f32 %v6721, %v6730
    %v6747 = vadd.f32 %v6722, %v6731
    %v6748 = vadd.f32 %v6723, %v6732
    %v6749 = vadd.f32 %v6724, %v6733
    %v6750 = vadd.f32 %v6725, %v6734
    %v6751 = vadd.f32 %v6726, %v6735
    %v6752 = vadd.f32 %v6727, %v6736
    %s6753 = smul.u32 %s2495, 4
    %s6754 = sshll.u32 %s6753, 4
    %6755 = dma.done %s172, %s6754
    %v6756 = vpack.c.bf16 %v6745, %v6745
    %v6757 = vpack.c.bf16 %v6746, %v6746
    %v6758 = vpack.c.bf16 %v6747, %v6747
    %v6759 = vpack.c.bf16 %v6748, %v6748
    %v6760 = vpack.c.bf16 %v6749, %v6749
    %v6761 = vpack.c.bf16 %v6750, %v6750
    %v6762 = vpack.c.bf16 %v6751, %v6751
    %v6763 = vpack.c.bf16 %v6752, %v6752
    %v6764 = vld [vmem:[#allocation3] sm:$0xff]
    %v6765 = vld [vmem:[#allocation3 + $0x8] sm:$0xff]
    %v6766 = vld [vmem:[#allocation3 + $0x10] sm:$0xff]
    %v6767 = vld [vmem:[#allocation3 + $0x18] sm:$0xff]
    %v6768 = vld [vmem:[#allocation3 + $0x20] sm:$0xff]
    %v6769 = vld [vmem:[#allocation3 + $0x28] sm:$0xff]
    %v6770 = vld [vmem:[#allocation3 + $0x30] sm:$0xff]
    %v6771 = vld [vmem:[#allocation3 + $0x38] sm:$0xff]
    %v6772 = vld [vmem:[#allocation3 + $0x40] sm:$0xff]
    %v6773 = vld [vmem:[#allocation3 + $0x48] sm:$0xff]
    %v6774 = vld [vmem:[#allocation3 + $0x50] sm:$0xff]
    %v6775 = vld [vmem:[#allocation3 + $0x58] sm:$0xff]
    %v6776 = vld [vmem:[#allocation3 + $0x60] sm:$0xff]
    %v6777 = vld [vmem:[#allocation3 + $0x68] sm:$0xff]
    %v6778 = vld [vmem:[#allocation3 + $0x70] sm:$0xff]
    %v6779 = vld [vmem:[#allocation3 + $0x78] sm:$0xff]
    %v6780 = vld [vmem:[#allocation3 + $0x80] sm:$0xff]
    %v6781 = vld [vmem:[#allocation3 + $0x88] sm:$0xff]
    %v6782 = vld [vmem:[#allocation3 + $0x90] sm:$0xff]
    %v6783 = vld [vmem:[#allocation3 + $0x98] sm:$0xff]
    %v6784 = vld [vmem:[#allocation3 + $0xa0] sm:$0xff]
    %v6785 = vld [vmem:[#allocation3 + $0xa8] sm:$0xff]
    %v6786 = vld [vmem:[#allocation3 + $0xb0] sm:$0xff]
    %v6787 = vld [vmem:[#allocation3 + $0xb8] sm:$0xff]
    %v6788 = vld [vmem:[#allocation3 + $0xc0] sm:$0xff]
    %v6789 = vld [vmem:[#allocation3 + $0xc8] sm:$0xff]
    %v6790 = vld [vmem:[#allocation3 + $0xd0] sm:$0xff]
    %v6791 = vld [vmem:[#allocation3 + $0xd8] sm:$0xff]
    %v6792 = vld [vmem:[#allocation3 + $0xe0] sm:$0xff]
    %v6793 = vld [vmem:[#allocation3 + $0xe8] sm:$0xff]
    %v6794 = vld [vmem:[#allocation3 + $0xf0] sm:$0xff]
    %v6795 = vld [vmem:[#allocation3 + $0xf8] sm:$0xff]
    %v6796 = vld [vmem:[#allocation3 + $0x100] sm:$0xff]
    %v6797 = vld [vmem:[#allocation3 + $0x108] sm:$0xff]
    %v6798 = vld [vmem:[#allocation3 + $0x110] sm:$0xff]
    %v6799 = vld [vmem:[#allocation3 + $0x118] sm:$0xff]
    %v6800 = vld [vmem:[#allocation3 + $0x120] sm:$0xff]
    %v6801 = vld [vmem:[#allocation3 + $0x128] sm:$0xff]
    %v6802 = vld [vmem:[#allocation3 + $0x130] sm:$0xff]
    %v6803 = vld [vmem:[#allocation3 + $0x138] sm:$0xff]
    %v6804 = vld [vmem:[#allocation3 + $0x140] sm:$0xff]
    %v6805 = vld [vmem:[#allocation3 + $0x148] sm:$0xff]
    %v6806 = vld [vmem:[#allocation3 + $0x150] sm:$0xff]
    %v6807 = vld [vmem:[#allocation3 + $0x158] sm:$0xff]
    %v6808 = vld [vmem:[#allocation3 + $0x160] sm:$0xff]
    %v6809 = vld [vmem:[#allocation3 + $0x168] sm:$0xff]
    %v6810 = vld [vmem:[#allocation3 + $0x170] sm:$0xff]
    %v6811 = vld [vmem:[#allocation3 + $0x178] sm:$0xff]
    %v6812 = vld [vmem:[#allocation3 + $0x180] sm:$0xff]
    %v6813 = vld [vmem:[#allocation3 + $0x188] sm:$0xff]
    %v6814 = vld [vmem:[#allocation3 + $0x190] sm:$0xff]
    %v6815 = vld [vmem:[#allocation3 + $0x198] sm:$0xff]
    %v6816 = vld [vmem:[#allocation3 + $0x1a0] sm:$0xff]
    %v6817 = vld [vmem:[#allocation3 + $0x1a8] sm:$0xff]
    %v6818 = vld [vmem:[#allocation3 + $0x1b0] sm:$0xff]
    %v6819 = vld [vmem:[#allocation3 + $0x1b8] sm:$0xff]
    %v6820 = vld [vmem:[#allocation3 + $0x1c0] sm:$0xff]
    %v6821 = vld [vmem:[#allocation3 + $0x1c8] sm:$0xff]
    %v6822 = vld [vmem:[#allocation3 + $0x1d0] sm:$0xff]
    %v6823 = vld [vmem:[#allocation3 + $0x1d8] sm:$0xff]
    %v6824 = vld [vmem:[#allocation3 + $0x1e0] sm:$0xff]
    %v6825 = vld [vmem:[#allocation3 + $0x1e8] sm:$0xff]
    %v6826 = vld [vmem:[#allocation3 + $0x1f0] sm:$0xff]
    %v6827 = vld [vmem:[#allocation3 + $0x1f8] sm:$0xff]
    %v6828 = vld [vmem:[#allocation3 + $0x200] sm:$0xff]
    %v6829 = vld [vmem:[#allocation3 + $0x208] sm:$0xff]
    %v6830 = vld [vmem:[#allocation3 + $0x210] sm:$0xff]
    %v6831 = vld [vmem:[#allocation3 + $0x218] sm:$0xff]
    %v6832 = vld [vmem:[#allocation3 + $0x220] sm:$0xff]
    %v6833 = vld [vmem:[#allocation3 + $0x228] sm:$0xff]
    %v6834 = vld [vmem:[#allocation3 + $0x230] sm:$0xff]
    %v6835 = vld [vmem:[#allocation3 + $0x238] sm:$0xff]
    %v6836 = vld [vmem:[#allocation3 + $0x240] sm:$0xff]
    %v6837 = vld [vmem:[#allocation3 + $0x248] sm:$0xff]
    %v6838 = vld [vmem:[#allocation3 + $0x250] sm:$0xff]
    %v6839 = vld [vmem:[#allocation3 + $0x258] sm:$0xff]
    %v6840 = vld [vmem:[#allocation3 + $0x260] sm:$0xff]
    %v6841 = vld [vmem:[#allocation3 + $0x268] sm:$0xff]
    %v6842 = vld [vmem:[#allocation3 + $0x270] sm:$0xff]
    %v6843 = vld [vmem:[#allocation3 + $0x278] sm:$0xff]
    %v6844 = vld [vmem:[#allocation3 + $0x280] sm:$0xff]
    %v6845 = vld [vmem:[#allocation3 + $0x288] sm:$0xff]
    %v6846 = vld [vmem:[#allocation3 + $0x290] sm:$0xff]
    %v6847 = vld [vmem:[#allocation3 + $0x298] sm:$0xff]
    %v6848 = vld [vmem:[#allocation3 + $0x2a0] sm:$0xff]
    %v6849 = vld [vmem:[#allocation3 + $0x2a8] sm:$0xff]
    %v6850 = vld [vmem:[#allocation3 + $0x2b0] sm:$0xff]
    %v6851 = vld [vmem:[#allocation3 + $0x2b8] sm:$0xff]
    %v6852 = vld [vmem:[#allocation3 + $0x2c0] sm:$0xff]
    %v6853 = vld [vmem:[#allocation3 + $0x2c8] sm:$0xff]
    %v6854 = vld [vmem:[#allocation3 + $0x2d0] sm:$0xff]
    %v6855 = vld [vmem:[#allocation3 + $0x2d8] sm:$0xff]
    %v6856 = vld [vmem:[#allocation3 + $0x2e0] sm:$0xff]
    %v6857 = vld [vmem:[#allocation3 + $0x2e8] sm:$0xff]
    %v6858 = vld [vmem:[#allocation3 + $0x2f0] sm:$0xff]
    %v6859 = vld [vmem:[#allocation3 + $0x2f8] sm:$0xff]
    %v6860 = vld [vmem:[#allocation3 + $0x300] sm:$0xff]
    %v6861 = vld [vmem:[#allocation3 + $0x308] sm:$0xff]
    %v6862 = vld [vmem:[#allocation3 + $0x310] sm:$0xff]
    %v6863 = vld [vmem:[#allocation3 + $0x318] sm:$0xff]
    %v6864 = vld [vmem:[#allocation3 + $0x320] sm:$0xff]
    %v6865 = vld [vmem:[#allocation3 + $0x328] sm:$0xff]
    %v6866 = vld [vmem:[#allocation3 + $0x330] sm:$0xff]
    %v6867 = vld [vmem:[#allocation3 + $0x338] sm:$0xff]
    %v6868 = vld [vmem:[#allocation3 + $0x340] sm:$0xff]
    %v6869 = vld [vmem:[#allocation3 + $0x348] sm:$0xff]
    %v6870 = vld [vmem:[#allocation3 + $0x350] sm:$0xff]
    %v6871 = vld [vmem:[#allocation3 + $0x358] sm:$0xff]
    %v6872 = vld [vmem:[#allocation3 + $0x360] sm:$0xff]
    %v6873 = vld [vmem:[#allocation3 + $0x368] sm:$0xff]
    %v6874 = vld [vmem:[#allocation3 + $0x370] sm:$0xff]
    %v6875 = vld [vmem:[#allocation3 + $0x378] sm:$0xff]
    %v6876 = vld [vmem:[#allocation3 + $0x380] sm:$0xff]
    %v6877 = vld [vmem:[#allocation3 + $0x388] sm:$0xff]
    %v6878 = vld [vmem:[#allocation3 + $0x390] sm:$0xff]
    %v6879 = vld [vmem:[#allocation3 + $0x398] sm:$0xff]
    %v6880 = vld [vmem:[#allocation3 + $0x3a0] sm:$0xff]
    %v6881 = vld [vmem:[#allocation3 + $0x3a8] sm:$0xff]
    %v6882 = vld [vmem:[#allocation3 + $0x3b0] sm:$0xff]
    %v6883 = vld [vmem:[#allocation3 + $0x3b8] sm:$0xff]
    %v6884 = vld [vmem:[#allocation3 + $0x3c0] sm:$0xff]
    %v6885 = vld [vmem:[#allocation3 + $0x3c8] sm:$0xff]
    %v6886 = vld [vmem:[#allocation3 + $0x3d0] sm:$0xff]
    %v6887 = vld [vmem:[#allocation3 + $0x3d8] sm:$0xff]
    %v6888 = vld [vmem:[#allocation3 + $0x3e0] sm:$0xff]
    %v6889 = vld [vmem:[#allocation3 + $0x3e8] sm:$0xff]
    %v6890 = vld [vmem:[#allocation3 + $0x3f0] sm:$0xff]
    %v6891 = vld [vmem:[#allocation3 + $0x3f8] sm:$0xff]
    %v6892 = vld [vmem:[#allocation3 + $0x400] sm:$0xff]
    %v6893 = vld [vmem:[#allocation3 + $0x408] sm:$0xff]
    %v6894 = vld [vmem:[#allocation3 + $0x410] sm:$0xff]
    %v6895 = vld [vmem:[#allocation3 + $0x418] sm:$0xff]
    %v6896 = vld [vmem:[#allocation3 + $0x420] sm:$0xff]
    %v6897 = vld [vmem:[#allocation3 + $0x428] sm:$0xff]
    %v6898 = vld [vmem:[#allocation3 + $0x430] sm:$0xff]
    %v6899 = vld [vmem:[#allocation3 + $0x438] sm:$0xff]
    %v6900 = vld [vmem:[#allocation3 + $0x440] sm:$0xff]
    %v6901 = vld [vmem:[#allocation3 + $0x448] sm:$0xff]
    %v6902 = vld [vmem:[#allocation3 + $0x450] sm:$0xff]
    %v6903 = vld [vmem:[#allocation3 + $0x458] sm:$0xff]
    %v6904 = vld [vmem:[#allocation3 + $0x460] sm:$0xff]
    %v6905 = vld [vmem:[#allocation3 + $0x468] sm:$0xff]
    %v6906 = vld [vmem:[#allocation3 + $0x470] sm:$0xff]
    %v6907 = vld [vmem:[#allocation3 + $0x478] sm:$0xff]
    %v6908 = vld [vmem:[#allocation3 + $0x480] sm:$0xff]
    %v6909 = vld [vmem:[#allocation3 + $0x488] sm:$0xff]
    %v6910 = vld [vmem:[#allocation3 + $0x490] sm:$0xff]
    %v6911 = vld [vmem:[#allocation3 + $0x498] sm:$0xff]
    %v6912 = vld [vmem:[#allocation3 + $0x4a0] sm:$0xff]
    %v6913 = vld [vmem:[#allocation3 + $0x4a8] sm:$0xff]
    %v6914 = vld [vmem:[#allocation3 + $0x4b0] sm:$0xff]
    %v6915 = vld [vmem:[#allocation3 + $0x4b8] sm:$0xff]
    %v6916 = vld [vmem:[#allocation3 + $0x4c0] sm:$0xff]
    %v6917 = vld [vmem:[#allocation3 + $0x4c8] sm:$0xff]
    %v6918 = vld [vmem:[#allocation3 + $0x4d0] sm:$0xff]
    %v6919 = vld [vmem:[#allocation3 + $0x4d8] sm:$0xff]
    %v6920 = vld [vmem:[#allocation3 + $0x4e0] sm:$0xff]
    %v6921 = vld [vmem:[#allocation3 + $0x4e8] sm:$0xff]
    %v6922 = vld [vmem:[#allocation3 + $0x4f0] sm:$0xff]
    %v6923 = vld [vmem:[#allocation3 + $0x4f8] sm:$0xff]
    %v6924 = vld [vmem:[#allocation3 + $0x500] sm:$0xff]
    %v6925 = vld [vmem:[#allocation3 + $0x508] sm:$0xff]
    %v6926 = vld [vmem:[#allocation3 + $0x510] sm:$0xff]
    %v6927 = vld [vmem:[#allocation3 + $0x518] sm:$0xff]
    %v6928 = vld [vmem:[#allocation3 + $0x520] sm:$0xff]
    %v6929 = vld [vmem:[#allocation3 + $0x528] sm:$0xff]
    %v6930 = vld [vmem:[#allocation3 + $0x530] sm:$0xff]
    %v6931 = vld [vmem:[#allocation3 + $0x538] sm:$0xff]
    %v6932 = vld [vmem:[#allocation3 + $0x540] sm:$0xff]
    %v6933 = vld [vmem:[#allocation3 + $0x548] sm:$0xff]
    %v6934 = vld [vmem:[#allocation3 + $0x550] sm:$0xff]
    %v6935 = vld [vmem:[#allocation3 + $0x558] sm:$0xff]
    %v6936 = vld [vmem:[#allocation3 + $0x560] sm:$0xff]
    %v6937 = vld [vmem:[#allocation3 + $0x568] sm:$0xff]
    %v6938 = vld [vmem:[#allocation3 + $0x570] sm:$0xff]
    %v6939 = vld [vmem:[#allocation3 + $0x578] sm:$0xff]
    %v6940 = vld [vmem:[#allocation3 + $0x580] sm:$0xff]
    %v6941 = vld [vmem:[#allocation3 + $0x588] sm:$0xff]
    %v6942 = vld [vmem:[#allocation3 + $0x590] sm:$0xff]
    %v6943 = vld [vmem:[#allocation3 + $0x598] sm:$0xff]
    %v6944 = vld [vmem:[#allocation3 + $0x5a0] sm:$0xff]
    %v6945 = vld [vmem:[#allocation3 + $0x5a8] sm:$0xff]
    %v6946 = vld [vmem:[#allocation3 + $0x5b0] sm:$0xff]
    %v6947 = vld [vmem:[#allocation3 + $0x5b8] sm:$0xff]
    %v6948 = vld [vmem:[#allocation3 + $0x5c0] sm:$0xff]
    %v6949 = vld [vmem:[#allocation3 + $0x5c8] sm:$0xff]
    %v6950 = vld [vmem:[#allocation3 + $0x5d0] sm:$0xff]
    %v6951 = vld [vmem:[#allocation3 + $0x5d8] sm:$0xff]
    %v6952 = vld [vmem:[#allocation3 + $0x5e0] sm:$0xff]
    %v6953 = vld [vmem:[#allocation3 + $0x5e8] sm:$0xff]
    %v6954 = vld [vmem:[#allocation3 + $0x5f0] sm:$0xff]
    %v6955 = vld [vmem:[#allocation3 + $0x5f8] sm:$0xff]
    %v6956 = vld [vmem:[#allocation3 + $0x600] sm:$0xff]
    %v6957 = vld [vmem:[#allocation3 + $0x608] sm:$0xff]
    %v6958 = vld [vmem:[#allocation3 + $0x610] sm:$0xff]
    %v6959 = vld [vmem:[#allocation3 + $0x618] sm:$0xff]
    %v6960 = vld [vmem:[#allocation3 + $0x620] sm:$0xff]
    %v6961 = vld [vmem:[#allocation3 + $0x628] sm:$0xff]
    %v6962 = vld [vmem:[#allocation3 + $0x630] sm:$0xff]
    %v6963 = vld [vmem:[#allocation3 + $0x638] sm:$0xff]
    %v6964 = vld [vmem:[#allocation3 + $0x640] sm:$0xff]
    %v6965 = vld [vmem:[#allocation3 + $0x648] sm:$0xff]
    %v6966 = vld [vmem:[#allocation3 + $0x650] sm:$0xff]
    %v6967 = vld [vmem:[#allocation3 + $0x658] sm:$0xff]
    %v6968 = vld [vmem:[#allocation3 + $0x660] sm:$0xff]
    %v6969 = vld [vmem:[#allocation3 + $0x668] sm:$0xff]
    %v6970 = vld [vmem:[#allocation3 + $0x670] sm:$0xff]
    %v6971 = vld [vmem:[#allocation3 + $0x678] sm:$0xff]
    %v6972 = vld [vmem:[#allocation3 + $0x680] sm:$0xff]
    %v6973 = vld [vmem:[#allocation3 + $0x688] sm:$0xff]
    %v6974 = vld [vmem:[#allocation3 + $0x690] sm:$0xff]
    %v6975 = vld [vmem:[#allocation3 + $0x698] sm:$0xff]
    %v6976 = vld [vmem:[#allocation3 + $0x6a0] sm:$0xff]
    %v6977 = vld [vmem:[#allocation3 + $0x6a8] sm:$0xff]
    %v6978 = vld [vmem:[#allocation3 + $0x6b0] sm:$0xff]
    %v6979 = vld [vmem:[#allocation3 + $0x6b8] sm:$0xff]
    %v6980 = vld [vmem:[#allocation3 + $0x6c0] sm:$0xff]
    %v6981 = vld [vmem:[#allocation3 + $0x6c8] sm:$0xff]
    %v6982 = vld [vmem:[#allocation3 + $0x6d0] sm:$0xff]
    %v6983 = vld [vmem:[#allocation3 + $0x6d8] sm:$0xff]
    %v6984 = vld [vmem:[#allocation3 + $0x6e0] sm:$0xff]
    %v6985 = vld [vmem:[#allocation3 + $0x6e8] sm:$0xff]
    %v6986 = vld [vmem:[#allocation3 + $0x6f0] sm:$0xff]
    %v6987 = vld [vmem:[#allocation3 + $0x6f8] sm:$0xff]
    %v6988 = vld [vmem:[#allocation3 + $0x700] sm:$0xff]
    %v6989 = vld [vmem:[#allocation3 + $0x708] sm:$0xff]
    %v6990 = vld [vmem:[#allocation3 + $0x710] sm:$0xff]
    %v6991 = vld [vmem:[#allocation3 + $0x718] sm:$0xff]
    %v6992 = vld [vmem:[#allocation3 + $0x720] sm:$0xff]
    %v6993 = vld [vmem:[#allocation3 + $0x728] sm:$0xff]
    %v6994 = vld [vmem:[#allocation3 + $0x730] sm:$0xff]
    %v6995 = vld [vmem:[#allocation3 + $0x738] sm:$0xff]
    %v6996 = vld [vmem:[#allocation3 + $0x740] sm:$0xff]
    %v6997 = vld [vmem:[#allocation3 + $0x748] sm:$0xff]
    %v6998 = vld [vmem:[#allocation3 + $0x750] sm:$0xff]
    %v6999 = vld [vmem:[#allocation3 + $0x758] sm:$0xff]
    %v7000 = vld [vmem:[#allocation3 + $0x760] sm:$0xff]
    %v7001 = vld [vmem:[#allocation3 + $0x768] sm:$0xff]
    %v7002 = vld [vmem:[#allocation3 + $0x770] sm:$0xff]
    %v7003 = vld [vmem:[#allocation3 + $0x778] sm:$0xff]
    %v7004 = vld [vmem:[#allocation3 + $0x780] sm:$0xff]
    %v7005 = vld [vmem:[#allocation3 + $0x788] sm:$0xff]
    %v7006 = vld [vmem:[#allocation3 + $0x790] sm:$0xff]
    %v7007 = vld [vmem:[#allocation3 + $0x798] sm:$0xff]
    %v7008 = vld [vmem:[#allocation3 + $0x7a0] sm:$0xff]
    %v7009 = vld [vmem:[#allocation3 + $0x7a8] sm:$0xff]
    %v7010 = vld [vmem:[#allocation3 + $0x7b0] sm:$0xff]
    %v7011 = vld [vmem:[#allocation3 + $0x7b8] sm:$0xff]
    %v7012 = vld [vmem:[#allocation3 + $0x7c0] sm:$0xff]
    %v7013 = vld [vmem:[#allocation3 + $0x7c8] sm:$0xff]
    %v7014 = vld [vmem:[#allocation3 + $0x7d0] sm:$0xff]
    %v7015 = vld [vmem:[#allocation3 + $0x7d8] sm:$0xff]
    %v7016 = vld [vmem:[#allocation3 + $0x7e0] sm:$0xff]
    %v7017 = vld [vmem:[#allocation3 + $0x7e8] sm:$0xff]
    %v7018 = vld [vmem:[#allocation3 + $0x7f0] sm:$0xff]
    %v7019 = vld [vmem:[#allocation3 + $0x7f8] sm:$0xff]
    %v7020 = vld [vmem:[#allocation19] sm:$0xf]
    %v7022 = vperm.slane %v7020, 0
    %v7023 = vperm.slane %v7020, 1
    %v7024 = vperm.slane %v7020, 2
    %v7025 = vperm.slane %v7020, 3
    %v7286 = vunpack.c.l.b16 %v6764
    %v7287 = vunpack.c.h.b16 %v6764
    %v7288 = vunpack.c.l.b16 %v6765
    %v7289 = vunpack.c.h.b16 %v6765
    %v7290 = vunpack.c.l.b16 %v6766
    %v7291 = vunpack.c.h.b16 %v6766
    %v7292 = vunpack.c.l.b16 %v6767
    %v7293 = vunpack.c.h.b16 %v6767
    %v7294 = vunpack.c.l.b16 %v6768
    %v7295 = vunpack.c.h.b16 %v6768
    %v7296 = vunpack.c.l.b16 %v6769
    %v7297 = vunpack.c.h.b16 %v6769
    %v7298 = vunpack.c.l.b16 %v6770
    %v7299 = vunpack.c.h.b16 %v6770
    %v7300 = vunpack.c.l.b16 %v6771
    %v7301 = vunpack.c.h.b16 %v6771
    %v7302 = vunpack.c.l.b16 %v6772
    %v7303 = vunpack.c.h.b16 %v6772
    %v7304 = vunpack.c.l.b16 %v6773
    %v7305 = vunpack.c.h.b16 %v6773
    %v7306 = vunpack.c.l.b16 %v6774
    %v7307 = vunpack.c.h.b16 %v6774
    %v7308 = vunpack.c.l.b16 %v6775
    %v7309 = vunpack.c.h.b16 %v6775
    %v7310 = vunpack.c.l.b16 %v6776
    %v7311 = vunpack.c.h.b16 %v6776
    %v7312 = vunpack.c.l.b16 %v6777
    %v7313 = vunpack.c.h.b16 %v6777
    %v7314 = vunpack.c.l.b16 %v6778
    %v7315 = vunpack.c.h.b16 %v6778
    %v7316 = vunpack.c.l.b16 %v6779
    %v7317 = vunpack.c.h.b16 %v6779
    %v7318 = vunpack.c.l.b16 %v6780
    %v7319 = vunpack.c.h.b16 %v6780
    %v7320 = vunpack.c.l.b16 %v6781
    %v7321 = vunpack.c.h.b16 %v6781
    %v7322 = vunpack.c.l.b16 %v6782
    %v7323 = vunpack.c.h.b16 %v6782
    %v7324 = vunpack.c.l.b16 %v6783
    %v7325 = vunpack.c.h.b16 %v6783
    %v7326 = vunpack.c.l.b16 %v6784
    %v7327 = vunpack.c.h.b16 %v6784
    %v7328 = vunpack.c.l.b16 %v6785
    %v7329 = vunpack.c.h.b16 %v6785
    %v7330 = vunpack.c.l.b16 %v6786
    %v7331 = vunpack.c.h.b16 %v6786
    %v7332 = vunpack.c.l.b16 %v6787
    %v7333 = vunpack.c.h.b16 %v6787
    %v7334 = vunpack.c.l.b16 %v6788
    %v7335 = vunpack.c.h.b16 %v6788
    %v7336 = vunpack.c.l.b16 %v6789
    %v7337 = vunpack.c.h.b16 %v6789
    %v7338 = vunpack.c.l.b16 %v6790
    %v7339 = vunpack.c.h.b16 %v6790
    %v7340 = vunpack.c.l.b16 %v6791
    %v7341 = vunpack.c.h.b16 %v6791
    %v7342 = vunpack.c.l.b16 %v6792
    %v7343 = vunpack.c.h.b16 %v6792
    %v7344 = vunpack.c.l.b16 %v6793
    %v7345 = vunpack.c.h.b16 %v6793
    %v7346 = vunpack.c.l.b16 %v6794
    %v7347 = vunpack.c.h.b16 %v6794
    %v7348 = vunpack.c.l.b16 %v6795
    %v7349 = vunpack.c.h.b16 %v6795
    %v7350 = vunpack.c.l.b16 %v6796
    %v7351 = vunpack.c.h.b16 %v6796
    %v7352 = vunpack.c.l.b16 %v6797
    %v7353 = vunpack.c.h.b16 %v6797
    %v7354 = vunpack.c.l.b16 %v6798
    %v7355 = vunpack.c.h.b16 %v6798
    %v7356 = vunpack.c.l.b16 %v6799
    %v7357 = vunpack.c.h.b16 %v6799
    %v7358 = vunpack.c.l.b16 %v6800
    %v7359 = vunpack.c.h.b16 %v6800
    %v7360 = vunpack.c.l.b16 %v6801
    %v7361 = vunpack.c.h.b16 %v6801
    %v7362 = vunpack.c.l.b16 %v6802
    %v7363 = vunpack.c.h.b16 %v6802
    %v7364 = vunpack.c.l.b16 %v6803
    %v7365 = vunpack.c.h.b16 %v6803
    %v7366 = vunpack.c.l.b16 %v6804
    %v7367 = vunpack.c.h.b16 %v6804
    %v7368 = vunpack.c.l.b16 %v6805
    %v7369 = vunpack.c.h.b16 %v6805
    %v7370 = vunpack.c.l.b16 %v6806
    %v7371 = vunpack.c.h.b16 %v6806
    %v7372 = vunpack.c.l.b16 %v6807
    %v7373 = vunpack.c.h.b16 %v6807
    %v7374 = vunpack.c.l.b16 %v6808
    %v7375 = vunpack.c.h.b16 %v6808
    %v7376 = vunpack.c.l.b16 %v6809
    %v7377 = vunpack.c.h.b16 %v6809
    %v7378 = vunpack.c.l.b16 %v6810
    %v7379 = vunpack.c.h.b16 %v6810
    %v7380 = vunpack.c.l.b16 %v6811
    %v7381 = vunpack.c.h.b16 %v6811
    %v7382 = vunpack.c.l.b16 %v6812
    %v7383 = vunpack.c.h.b16 %v6812
    %v7384 = vunpack.c.l.b16 %v6813
    %v7385 = vunpack.c.h.b16 %v6813
    %v7386 = vunpack.c.l.b16 %v6814
    %v7387 = vunpack.c.h.b16 %v6814
    %v7388 = vunpack.c.l.b16 %v6815
    %v7389 = vunpack.c.h.b16 %v6815
    %v7390 = vunpack.c.l.b16 %v6816
    %v7391 = vunpack.c.h.b16 %v6816
    %v7392 = vunpack.c.l.b16 %v6817
    %v7393 = vunpack.c.h.b16 %v6817
    %v7394 = vunpack.c.l.b16 %v6818
    %v7395 = vunpack.c.h.b16 %v6818
    %v7396 = vunpack.c.l.b16 %v6819
    %v7397 = vunpack.c.h.b16 %v6819
    %v7398 = vunpack.c.l.b16 %v6820
    %v7399 = vunpack.c.h.b16 %v6820
    %v7400 = vunpack.c.l.b16 %v6821
    %v7401 = vunpack.c.h.b16 %v6821
    %v7402 = vunpack.c.l.b16 %v6822
    %v7403 = vunpack.c.h.b16 %v6822
    %v7404 = vunpack.c.l.b16 %v6823
    %v7405 = vunpack.c.h.b16 %v6823
    %v7406 = vunpack.c.l.b16 %v6824
    %v7407 = vunpack.c.h.b16 %v6824
    %v7408 = vunpack.c.l.b16 %v6825
    %v7409 = vunpack.c.h.b16 %v6825
    %v7410 = vunpack.c.l.b16 %v6826
    %v7411 = vunpack.c.h.b16 %v6826
    %v7412 = vunpack.c.l.b16 %v6827
    %v7413 = vunpack.c.h.b16 %v6827
    %v7414 = vunpack.c.l.b16 %v6828
    %v7415 = vunpack.c.h.b16 %v6828
    %v7416 = vunpack.c.l.b16 %v6829
    %v7417 = vunpack.c.h.b16 %v6829
    %v7418 = vunpack.c.l.b16 %v6830
    %v7419 = vunpack.c.h.b16 %v6830
    %v7420 = vunpack.c.l.b16 %v6831
    %v7421 = vunpack.c.h.b16 %v6831
    %v7422 = vunpack.c.l.b16 %v6832
    %v7423 = vunpack.c.h.b16 %v6832
    %v7424 = vunpack.c.l.b16 %v6833
    %v7425 = vunpack.c.h.b16 %v6833
    %v7426 = vunpack.c.l.b16 %v6834
    %v7427 = vunpack.c.h.b16 %v6834
    %v7428 = vunpack.c.l.b16 %v6835
    %v7429 = vunpack.c.h.b16 %v6835
    %v7430 = vunpack.c.l.b16 %v6836
    %v7431 = vunpack.c.h.b16 %v6836
    %v7432 = vunpack.c.l.b16 %v6837
    %v7433 = vunpack.c.h.b16 %v6837
    %v7434 = vunpack.c.l.b16 %v6838
    %v7435 = vunpack.c.h.b16 %v6838
    %v7436 = vunpack.c.l.b16 %v6839
    %v7437 = vunpack.c.h.b16 %v6839
    %v7438 = vunpack.c.l.b16 %v6840
    %v7439 = vunpack.c.h.b16 %v6840
    %v7440 = vunpack.c.l.b16 %v6841
    %v7441 = vunpack.c.h.b16 %v6841
    %v7442 = vunpack.c.l.b16 %v6842
    %v7443 = vunpack.c.h.b16 %v6842
    %v7444 = vunpack.c.l.b16 %v6843
    %v7445 = vunpack.c.h.b16 %v6843
    %v7446 = vunpack.c.l.b16 %v6844
    %v7447 = vunpack.c.h.b16 %v6844
    %v7448 = vunpack.c.l.b16 %v6845
    %v7449 = vunpack.c.h.b16 %v6845
    %v7450 = vunpack.c.l.b16 %v6846
    %v7451 = vunpack.c.h.b16 %v6846
    %v7452 = vunpack.c.l.b16 %v6847
    %v7453 = vunpack.c.h.b16 %v6847
    %v7454 = vunpack.c.l.b16 %v6848
    %v7455 = vunpack.c.h.b16 %v6848
    %v7456 = vunpack.c.l.b16 %v6849
    %v7457 = vunpack.c.h.b16 %v6849
    %v7458 = vunpack.c.l.b16 %v6850
    %v7459 = vunpack.c.h.b16 %v6850
    %v7460 = vunpack.c.l.b16 %v6851
    %v7461 = vunpack.c.h.b16 %v6851
    %v7462 = vunpack.c.l.b16 %v6852
    %v7463 = vunpack.c.h.b16 %v6852
    %v7464 = vunpack.c.l.b16 %v6853
    %v7465 = vunpack.c.h.b16 %v6853
    %v7466 = vunpack.c.l.b16 %v6854
    %v7467 = vunpack.c.h.b16 %v6854
    %v7468 = vunpack.c.l.b16 %v6855
    %v7469 = vunpack.c.h.b16 %v6855
    %v7470 = vunpack.c.l.b16 %v6856
    %v7471 = vunpack.c.h.b16 %v6856
    %v7472 = vunpack.c.l.b16 %v6857
    %v7473 = vunpack.c.h.b16 %v6857
    %v7474 = vunpack.c.l.b16 %v6858
    %v7475 = vunpack.c.h.b16 %v6858
    %v7476 = vunpack.c.l.b16 %v6859
    %v7477 = vunpack.c.h.b16 %v6859
    %v7478 = vunpack.c.l.b16 %v6860
    %v7479 = vunpack.c.h.b16 %v6860
    %v7480 = vunpack.c.l.b16 %v6861
    %v7481 = vunpack.c.h.b16 %v6861
    %v7482 = vunpack.c.l.b16 %v6862
    %v7483 = vunpack.c.h.b16 %v6862
    %v7484 = vunpack.c.l.b16 %v6863
    %v7485 = vunpack.c.h.b16 %v6863
    %v7486 = vunpack.c.l.b16 %v6864
    %v7487 = vunpack.c.h.b16 %v6864
    %v7488 = vunpack.c.l.b16 %v6865
    %v7489 = vunpack.c.h.b16 %v6865
    %v7490 = vunpack.c.l.b16 %v6866
    %v7491 = vunpack.c.h.b16 %v6866
    %v7492 = vunpack.c.l.b16 %v6867
    %v7493 = vunpack.c.h.b16 %v6867
    %v7494 = vunpack.c.l.b16 %v6868
    %v7495 = vunpack.c.h.b16 %v6868
    %v7496 = vunpack.c.l.b16 %v6869
    %v7497 = vunpack.c.h.b16 %v6869
    %v7498 = vunpack.c.l.b16 %v6870
    %v7499 = vunpack.c.h.b16 %v6870
    %v7500 = vunpack.c.l.b16 %v6871
    %v7501 = vunpack.c.h.b16 %v6871
    %v7502 = vunpack.c.l.b16 %v6872
    %v7503 = vunpack.c.h.b16 %v6872
    %v7504 = vunpack.c.l.b16 %v6873
    %v7505 = vunpack.c.h.b16 %v6873
    %v7506 = vunpack.c.l.b16 %v6874
    %v7507 = vunpack.c.h.b16 %v6874
    %v7508 = vunpack.c.l.b16 %v6875
    %v7509 = vunpack.c.h.b16 %v6875
    %v7510 = vunpack.c.l.b16 %v6876
    %v7511 = vunpack.c.h.b16 %v6876
    %v7512 = vunpack.c.l.b16 %v6877
    %v7513 = vunpack.c.h.b16 %v6877
    %v7514 = vunpack.c.l.b16 %v6878
    %v7515 = vunpack.c.h.b16 %v6878
    %v7516 = vunpack.c.l.b16 %v6879
    %v7517 = vunpack.c.h.b16 %v6879
    %v7518 = vunpack.c.l.b16 %v6880
    %v7519 = vunpack.c.h.b16 %v6880
    %v7520 = vunpack.c.l.b16 %v6881
    %v7521 = vunpack.c.h.b16 %v6881
    %v7522 = vunpack.c.l.b16 %v6882
    %v7523 = vunpack.c.h.b16 %v6882
    %v7524 = vunpack.c.l.b16 %v6883
    %v7525 = vunpack.c.h.b16 %v6883
    %v7526 = vunpack.c.l.b16 %v6884
    %v7527 = vunpack.c.h.b16 %v6884
    %v7528 = vunpack.c.l.b16 %v6885
    %v7529 = vunpack.c.h.b16 %v6885
    %v7530 = vunpack.c.l.b16 %v6886
    %v7531 = vunpack.c.h.b16 %v6886
    %v7532 = vunpack.c.l.b16 %v6887
    %v7533 = vunpack.c.h.b16 %v6887
    %v7534 = vunpack.c.l.b16 %v6888
    %v7535 = vunpack.c.h.b16 %v6888
    %v7536 = vunpack.c.l.b16 %v6889
    %v7537 = vunpack.c.h.b16 %v6889
    %v7538 = vunpack.c.l.b16 %v6890
    %v7539 = vunpack.c.h.b16 %v6890
    %v7540 = vunpack.c.l.b16 %v6891
    %v7541 = vunpack.c.h.b16 %v6891
    %v7542 = vunpack.c.l.b16 %v6892
    %v7543 = vunpack.c.h.b16 %v6892
    %v7544 = vunpack.c.l.b16 %v6893
    %v7545 = vunpack.c.h.b16 %v6893
    %v7546 = vunpack.c.l.b16 %v6894
    %v7547 = vunpack.c.h.b16 %v6894
    %v7548 = vunpack.c.l.b16 %v6895
    %v7549 = vunpack.c.h.b16 %v6895
    %v7550 = vunpack.c.l.b16 %v6896
    %v7551 = vunpack.c.h.b16 %v6896
    %v7552 = vunpack.c.l.b16 %v6897
    %v7553 = vunpack.c.h.b16 %v6897
    %v7554 = vunpack.c.l.b16 %v6898
    %v7555 = vunpack.c.h.b16 %v6898
    %v7556 = vunpack.c.l.b16 %v6899
    %v7557 = vunpack.c.h.b16 %v6899
    %v7558 = vunpack.c.l.b16 %v6900
    %v7559 = vunpack.c.h.b16 %v6900
    %v7560 = vunpack.c.l.b16 %v6901
    %v7561 = vunpack.c.h.b16 %v6901
    %v7562 = vunpack.c.l.b16 %v6902
    %v7563 = vunpack.c.h.b16 %v6902
    %v7564 = vunpack.c.l.b16 %v6903
    %v7565 = vunpack.c.h.b16 %v6903
    %v7566 = vunpack.c.l.b16 %v6904
    %v7567 = vunpack.c.h.b16 %v6904
    %v7568 = vunpack.c.l.b16 %v6905
    %v7569 = vunpack.c.h.b16 %v6905
    %v7570 = vunpack.c.l.b16 %v6906
    %v7571 = vunpack.c.h.b16 %v6906
    %v7572 = vunpack.c.l.b16 %v6907
    %v7573 = vunpack.c.h.b16 %v6907
    %v7574 = vunpack.c.l.b16 %v6908
    %v7575 = vunpack.c.h.b16 %v6908
    %v7576 = vunpack.c.l.b16 %v6909
    %v7577 = vunpack.c.h.b16 %v6909
    %v7578 = vunpack.c.l.b16 %v6910
    %v7579 = vunpack.c.h.b16 %v6910
    %v7580 = vunpack.c.l.b16 %v6911
    %v7581 = vunpack.c.h.b16 %v6911
    %v7582 = vunpack.c.l.b16 %v6912
    %v7583 = vunpack.c.h.b16 %v6912
    %v7584 = vunpack.c.l.b16 %v6913
    %v7585 = vunpack.c.h.b16 %v6913
    %v7586 = vunpack.c.l.b16 %v6914
    %v7587 = vunpack.c.h.b16 %v6914
    %v7588 = vunpack.c.l.b16 %v6915
    %v7589 = vunpack.c.h.b16 %v6915
    %v7590 = vunpack.c.l.b16 %v6916
    %v7591 = vunpack.c.h.b16 %v6916
    %v7592 = vunpack.c.l.b16 %v6917
    %v7593 = vunpack.c.h.b16 %v6917
    %v7594 = vunpack.c.l.b16 %v6918
    %v7595 = vunpack.c.h.b16 %v6918
    %v7596 = vunpack.c.l.b16 %v6919
    %v7597 = vunpack.c.h.b16 %v6919
    %v7598 = vunpack.c.l.b16 %v6920
    %v7599 = vunpack.c.h.b16 %v6920
    %v7600 = vunpack.c.l.b16 %v6921
    %v7601 = vunpack.c.h.b16 %v6921
    %v7602 = vunpack.c.l.b16 %v6922
    %v7603 = vunpack.c.h.b16 %v6922
    %v7604 = vunpack.c.l.b16 %v6923
    %v7605 = vunpack.c.h.b16 %v6923
    %v7606 = vunpack.c.l.b16 %v6924
    %v7607 = vunpack.c.h.b16 %v6924
    %v7608 = vunpack.c.l.b16 %v6925
    %v7609 = vunpack.c.h.b16 %v6925
    %v7610 = vunpack.c.l.b16 %v6926
    %v7611 = vunpack.c.h.b16 %v6926
    %v7612 = vunpack.c.l.b16 %v6927
    %v7613 = vunpack.c.h.b16 %v6927
    %v7614 = vunpack.c.l.b16 %v6928
    %v7615 = vunpack.c.h.b16 %v6928
    %v7616 = vunpack.c.l.b16 %v6929
    %v7617 = vunpack.c.h.b16 %v6929
    %v7618 = vunpack.c.l.b16 %v6930
    %v7619 = vunpack.c.h.b16 %v6930
    %v7620 = vunpack.c.l.b16 %v6931
    %v7621 = vunpack.c.h.b16 %v6931
    %v7622 = vunpack.c.l.b16 %v6932
    %v7623 = vunpack.c.h.b16 %v6932
    %v7624 = vunpack.c.l.b16 %v6933
    %v7625 = vunpack.c.h.b16 %v6933
    %v7626 = vunpack.c.l.b16 %v6934
    %v7627 = vunpack.c.h.b16 %v6934
    %v7628 = vunpack.c.l.b16 %v6935
    %v7629 = vunpack.c.h.b16 %v6935
    %v7630 = vunpack.c.l.b16 %v6936
    %v7631 = vunpack.c.h.b16 %v6936
    %v7632 = vunpack.c.l.b16 %v6937
    %v7633 = vunpack.c.h.b16 %v6937
    %v7634 = vunpack.c.l.b16 %v6938
    %v7635 = vunpack.c.h.b16 %v6938
    %v7636 = vunpack.c.l.b16 %v6939
    %v7637 = vunpack.c.h.b16 %v6939
    %v7638 = vunpack.c.l.b16 %v6940
    %v7639 = vunpack.c.h.b16 %v6940
    %v7640 = vunpack.c.l.b16 %v6941
    %v7641 = vunpack.c.h.b16 %v6941
    %v7642 = vunpack.c.l.b16 %v6942
    %v7643 = vunpack.c.h.b16 %v6942
    %v7644 = vunpack.c.l.b16 %v6943
    %v7645 = vunpack.c.h.b16 %v6943
    %v7646 = vunpack.c.l.b16 %v6944
    %v7647 = vunpack.c.h.b16 %v6944
    %v7648 = vunpack.c.l.b16 %v6945
    %v7649 = vunpack.c.h.b16 %v6945
    %v7650 = vunpack.c.l.b16 %v6946
    %v7651 = vunpack.c.h.b16 %v6946
    %v7652 = vunpack.c.l.b16 %v6947
    %v7653 = vunpack.c.h.b16 %v6947
    %v7654 = vunpack.c.l.b16 %v6948
    %v7655 = vunpack.c.h.b16 %v6948
    %v7656 = vunpack.c.l.b16 %v6949
    %v7657 = vunpack.c.h.b16 %v6949
    %v7658 = vunpack.c.l.b16 %v6950
    %v7659 = vunpack.c.h.b16 %v6950
    %v7660 = vunpack.c.l.b16 %v6951
    %v7661 = vunpack.c.h.b16 %v6951
    %v7662 = vunpack.c.l.b16 %v6952
    %v7663 = vunpack.c.h.b16 %v6952
    %v7664 = vunpack.c.l.b16 %v6953
    %v7665 = vunpack.c.h.b16 %v6953
    %v7666 = vunpack.c.l.b16 %v6954
    %v7667 = vunpack.c.h.b16 %v6954
    %v7668 = vunpack.c.l.b16 %v6955
    %v7669 = vunpack.c.h.b16 %v6955
    %v7670 = vunpack.c.l.b16 %v6956
    %v7671 = vunpack.c.h.b16 %v6956
    %v7672 = vunpack.c.l.b16 %v6957
    %v7673 = vunpack.c.h.b16 %v6957
    %v7674 = vunpack.c.l.b16 %v6958
    %v7675 = vunpack.c.h.b16 %v6958
    %v7676 = vunpack.c.l.b16 %v6959
    %v7677 = vunpack.c.h.b16 %v6959
    %v7678 = vunpack.c.l.b16 %v6960
    %v7679 = vunpack.c.h.b16 %v6960
    %v7680 = vunpack.c.l.b16 %v6961
    %v7681 = vunpack.c.h.b16 %v6961
    %v7682 = vunpack.c.l.b16 %v6962
    %v7683 = vunpack.c.h.b16 %v6962
    %v7684 = vunpack.c.l.b16 %v6963
    %v7685 = vunpack.c.h.b16 %v6963
    %v7686 = vunpack.c.l.b16 %v6964
    %v7687 = vunpack.c.h.b16 %v6964
    %v7688 = vunpack.c.l.b16 %v6965
    %v7689 = vunpack.c.h.b16 %v6965
    %v7690 = vunpack.c.l.b16 %v6966
    %v7691 = vunpack.c.h.b16 %v6966
    %v7692 = vunpack.c.l.b16 %v6967
    %v7693 = vunpack.c.h.b16 %v6967
    %v7694 = vunpack.c.l.b16 %v6968
    %v7695 = vunpack.c.h.b16 %v6968
    %v7696 = vunpack.c.l.b16 %v6969
    %v7697 = vunpack.c.h.b16 %v6969
    %v7698 = vunpack.c.l.b16 %v6970
    %v7699 = vunpack.c.h.b16 %v6970
    %v7700 = vunpack.c.l.b16 %v6971
    %v7701 = vunpack.c.h.b16 %v6971
    %v7702 = vunpack.c.l.b16 %v6972
    %v7703 = vunpack.c.h.b16 %v6972
    %v7704 = vunpack.c.l.b16 %v6973
    %v7705 = vunpack.c.h.b16 %v6973
    %v7706 = vunpack.c.l.b16 %v6974
    %v7707 = vunpack.c.h.b16 %v6974
    %v7708 = vunpack.c.l.b16 %v6975
    %v7709 = vunpack.c.h.b16 %v6975
    %v7710 = vunpack.c.l.b16 %v6976
    %v7711 = vunpack.c.h.b16 %v6976
    %v7712 = vunpack.c.l.b16 %v6977
    %v7713 = vunpack.c.h.b16 %v6977
    %v7714 = vunpack.c.l.b16 %v6978
    %v7715 = vunpack.c.h.b16 %v6978
    %v7716 = vunpack.c.l.b16 %v6979
    %v7717 = vunpack.c.h.b16 %v6979
    %v7718 = vunpack.c.l.b16 %v6980
    %v7719 = vunpack.c.h.b16 %v6980
    %v7720 = vunpack.c.l.b16 %v6981
    %v7721 = vunpack.c.h.b16 %v6981
    %v7722 = vunpack.c.l.b16 %v6982
    %v7723 = vunpack.c.h.b16 %v6982
    %v7724 = vunpack.c.l.b16 %v6983
    %v7725 = vunpack.c.h.b16 %v6983
    %v7726 = vunpack.c.l.b16 %v6984
    %v7727 = vunpack.c.h.b16 %v6984
    %v7728 = vunpack.c.l.b16 %v6985
    %v7729 = vunpack.c.h.b16 %v6985
    %v7730 = vunpack.c.l.b16 %v6986
    %v7731 = vunpack.c.h.b16 %v6986
    %v7732 = vunpack.c.l.b16 %v6987
    %v7733 = vunpack.c.h.b16 %v6987
    %v7734 = vunpack.c.l.b16 %v6988
    %v7735 = vunpack.c.h.b16 %v6988
    %v7736 = vunpack.c.l.b16 %v6989
    %v7737 = vunpack.c.h.b16 %v6989
    %v7738 = vunpack.c.l.b16 %v6990
    %v7739 = vunpack.c.h.b16 %v6990
    %v7740 = vunpack.c.l.b16 %v6991
    %v7741 = vunpack.c.h.b16 %v6991
    %v7742 = vunpack.c.l.b16 %v6992
    %v7743 = vunpack.c.h.b16 %v6992
    %v7744 = vunpack.c.l.b16 %v6993
    %v7745 = vunpack.c.h.b16 %v6993
    %v7746 = vunpack.c.l.b16 %v6994
    %v7747 = vunpack.c.h.b16 %v6994
    %v7748 = vunpack.c.l.b16 %v6995
    %v7749 = vunpack.c.h.b16 %v6995
    %v7750 = vunpack.c.l.b16 %v6996
    %v7751 = vunpack.c.h.b16 %v6996
    %v7752 = vunpack.c.l.b16 %v6997
    %v7753 = vunpack.c.h.b16 %v6997
    %v7754 = vunpack.c.l.b16 %v6998
    %v7755 = vunpack.c.h.b16 %v6998
    %v7756 = vunpack.c.l.b16 %v6999
    %v7757 = vunpack.c.h.b16 %v6999
    %v7758 = vunpack.c.l.b16 %v7000
    %v7759 = vunpack.c.h.b16 %v7000
    %v7760 = vunpack.c.l.b16 %v7001
    %v7761 = vunpack.c.h.b16 %v7001
    %v7762 = vunpack.c.l.b16 %v7002
    %v7763 = vunpack.c.h.b16 %v7002
    %v7764 = vunpack.c.l.b16 %v7003
    %v7765 = vunpack.c.h.b16 %v7003
    %v7766 = vunpack.c.l.b16 %v7004
    %v7767 = vunpack.c.h.b16 %v7004
    %v7768 = vunpack.c.l.b16 %v7005
    %v7769 = vunpack.c.h.b16 %v7005
    %v7770 = vunpack.c.l.b16 %v7006
    %v7771 = vunpack.c.h.b16 %v7006
    %v7772 = vunpack.c.l.b16 %v7007
    %v7773 = vunpack.c.h.b16 %v7007
    %v7774 = vunpack.c.l.b16 %v7008
    %v7775 = vunpack.c.h.b16 %v7008
    %v7776 = vunpack.c.l.b16 %v7009
    %v7777 = vunpack.c.h.b16 %v7009
    %v7778 = vunpack.c.l.b16 %v7010
    %v7779 = vunpack.c.h.b16 %v7010
    %v7780 = vunpack.c.l.b16 %v7011
    %v7781 = vunpack.c.h.b16 %v7011
    %v7782 = vunpack.c.l.b16 %v7012
    %v7783 = vunpack.c.h.b16 %v7012
    %v7784 = vunpack.c.l.b16 %v7013
    %v7785 = vunpack.c.h.b16 %v7013
    %v7786 = vunpack.c.l.b16 %v7014
    %v7787 = vunpack.c.h.b16 %v7014
    %v7788 = vunpack.c.l.b16 %v7015
    %v7789 = vunpack.c.h.b16 %v7015
    %v7790 = vunpack.c.l.b16 %v7016
    %v7791 = vunpack.c.h.b16 %v7016
    %v7792 = vunpack.c.l.b16 %v7017
    %v7793 = vunpack.c.h.b16 %v7017
    %v7794 = vunpack.c.l.b16 %v7018
    %v7795 = vunpack.c.h.b16 %v7018
    %v7796 = vunpack.c.l.b16 %v7019
    %v7797 = vunpack.c.h.b16 %v7019
    %v7798 = vpack.c.b16 %v7290, %v7286
    %v7799 = vpack.c.b16 %v7291, %v7287
    %v7800 = vpack.c.b16 %v7292, %v7288
    %v7801 = vpack.c.b16 %v7293, %v7289
    %v7802 = vpack.c.b16 %v7298, %v7294
    %v7803 = vpack.c.b16 %v7299, %v7295
    %v7804 = vpack.c.b16 %v7300, %v7296
    %v7805 = vpack.c.b16 %v7301, %v7297
    %v7806 = vpack.c.b16 %v7306, %v7302
    %v7807 = vpack.c.b16 %v7307, %v7303
    %v7808 = vpack.c.b16 %v7308, %v7304
    %v7809 = vpack.c.b16 %v7309, %v7305
    %v7810 = vpack.c.b16 %v7314, %v7310
    %v7811 = vpack.c.b16 %v7315, %v7311
    %v7812 = vpack.c.b16 %v7316, %v7312
    %v7813 = vpack.c.b16 %v7317, %v7313
    %v7814 = vpack.c.b16 %v7322, %v7318
    %v7815 = vpack.c.b16 %v7323, %v7319
    %v7816 = vpack.c.b16 %v7324, %v7320
    %v7817 = vpack.c.b16 %v7325, %v7321
    %v7818 = vpack.c.b16 %v7330, %v7326
    %v7819 = vpack.c.b16 %v7331, %v7327
    %v7820 = vpack.c.b16 %v7332, %v7328
    %v7821 = vpack.c.b16 %v7333, %v7329
    %v7822 = vpack.c.b16 %v7338, %v7334
    %v7823 = vpack.c.b16 %v7339, %v7335
    %v7824 = vpack.c.b16 %v7340, %v7336
    %v7825 = vpack.c.b16 %v7341, %v7337
    %v7826 = vpack.c.b16 %v7346, %v7342
    %v7827 = vpack.c.b16 %v7347, %v7343
    %v7828 = vpack.c.b16 %v7348, %v7344
    %v7829 = vpack.c.b16 %v7349, %v7345
    %v7830 = vpack.c.b16 %v7354, %v7350
    %v7831 = vpack.c.b16 %v7355, %v7351
    %v7832 = vpack.c.b16 %v7356, %v7352
    %v7833 = vpack.c.b16 %v7357, %v7353
    %v7834 = vpack.c.b16 %v7362, %v7358
    %v7835 = vpack.c.b16 %v7363, %v7359
    %v7836 = vpack.c.b16 %v7364, %v7360
    %v7837 = vpack.c.b16 %v7365, %v7361
    %v7838 = vpack.c.b16 %v7370, %v7366
    %v7839 = vpack.c.b16 %v7371, %v7367
    %v7840 = vpack.c.b16 %v7372, %v7368
    %v7841 = vpack.c.b16 %v7373, %v7369
    %v7842 = vpack.c.b16 %v7378, %v7374
    %v7843 = vpack.c.b16 %v7379, %v7375
    %v7844 = vpack.c.b16 %v7380, %v7376
    %v7845 = vpack.c.b16 %v7381, %v7377
    %v7846 = vpack.c.b16 %v7386, %v7382
    %v7847 = vpack.c.b16 %v7387, %v7383
    %v7848 = vpack.c.b16 %v7388, %v7384
    %v7849 = vpack.c.b16 %v7389, %v7385
    %v7850 = vpack.c.b16 %v7394, %v7390
    %v7851 = vpack.c.b16 %v7395, %v7391
    %v7852 = vpack.c.b16 %v7396, %v7392
    %v7853 = vpack.c.b16 %v7397, %v7393
    %v7854 = vpack.c.b16 %v7402, %v7398
    %v7855 = vpack.c.b16 %v7403, %v7399
    %v7856 = vpack.c.b16 %v7404, %v7400
    %v7857 = vpack.c.b16 %v7405, %v7401
    %v7858 = vpack.c.b16 %v7410, %v7406
    %v7859 = vpack.c.b16 %v7411, %v7407
    %v7860 = vpack.c.b16 %v7412, %v7408
    %v7861 = vpack.c.b16 %v7413, %v7409
    %v7862 = vpack.c.b16 %v7418, %v7414
    %v7863 = vpack.c.b16 %v7419, %v7415
    %v7864 = vpack.c.b16 %v7420, %v7416
    %v7865 = vpack.c.b16 %v7421, %v7417
    %v7866 = vpack.c.b16 %v7426, %v7422
    %v7867 = vpack.c.b16 %v7427, %v7423
    %v7868 = vpack.c.b16 %v7428, %v7424
    %v7869 = vpack.c.b16 %v7429, %v7425
    %v7870 = vpack.c.b16 %v7434, %v7430
    %v7871 = vpack.c.b16 %v7435, %v7431
    %v7872 = vpack.c.b16 %v7436, %v7432
    %v7873 = vpack.c.b16 %v7437, %v7433
    %v7874 = vpack.c.b16 %v7442, %v7438
    %v7875 = vpack.c.b16 %v7443, %v7439
    %v7876 = vpack.c.b16 %v7444, %v7440
    %v7877 = vpack.c.b16 %v7445, %v7441
    %v7878 = vpack.c.b16 %v7450, %v7446
    %v7879 = vpack.c.b16 %v7451, %v7447
    %v7880 = vpack.c.b16 %v7452, %v7448
    %v7881 = vpack.c.b16 %v7453, %v7449
    %v7882 = vpack.c.b16 %v7458, %v7454
    %v7883 = vpack.c.b16 %v7459, %v7455
    %v7884 = vpack.c.b16 %v7460, %v7456
    %v7885 = vpack.c.b16 %v7461, %v7457
    %v7886 = vpack.c.b16 %v7466, %v7462
    %v7887 = vpack.c.b16 %v7467, %v7463
    %v7888 = vpack.c.b16 %v7468, %v7464
    %v7889 = vpack.c.b16 %v7469, %v7465
    %v7890 = vpack.c.b16 %v7474, %v7470
    %v7891 = vpack.c.b16 %v7475, %v7471
    %v7892 = vpack.c.b16 %v7476, %v7472
    %v7893 = vpack.c.b16 %v7477, %v7473
    %v7894 = vpack.c.b16 %v7482, %v7478
    %v7895 = vpack.c.b16 %v7483, %v7479
    %v7896 = vpack.c.b16 %v7484, %v7480
    %v7897 = vpack.c.b16 %v7485, %v7481
    %v7898 = vpack.c.b16 %v7490, %v7486
    %v7899 = vpack.c.b16 %v7491, %v7487
    %v7900 = vpack.c.b16 %v7492, %v7488
    %v7901 = vpack.c.b16 %v7493, %v7489
    %v7902 = vpack.c.b16 %v7498, %v7494
    %v7903 = vpack.c.b16 %v7499, %v7495
    %v7904 = vpack.c.b16 %v7500, %v7496
    %v7905 = vpack.c.b16 %v7501, %v7497
    %v7906 = vpack.c.b16 %v7506, %v7502
    %v7907 = vpack.c.b16 %v7507, %v7503
    %v7908 = vpack.c.b16 %v7508, %v7504
    %v7909 = vpack.c.b16 %v7509, %v7505
    %v7910 = vpack.c.b16 %v7514, %v7510
    %v7911 = vpack.c.b16 %v7515, %v7511
    %v7912 = vpack.c.b16 %v7516, %v7512
    %v7913 = vpack.c.b16 %v7517, %v7513
    %v7914 = vpack.c.b16 %v7522, %v7518
    %v7915 = vpack.c.b16 %v7523, %v7519
    %v7916 = vpack.c.b16 %v7524, %v7520
    %v7917 = vpack.c.b16 %v7525, %v7521
    %v7918 = vpack.c.b16 %v7530, %v7526
    %v7919 = vpack.c.b16 %v7531, %v7527
    %v7920 = vpack.c.b16 %v7532, %v7528
    %v7921 = vpack.c.b16 %v7533, %v7529
    %v7922 = vpack.c.b16 %v7538, %v7534
    %v7923 = vpack.c.b16 %v7539, %v7535
    %v7924 = vpack.c.b16 %v7540, %v7536
    %v7925 = vpack.c.b16 %v7541, %v7537
    %v7926 = vpack.c.b16 %v7546, %v7542
    %v7927 = vpack.c.b16 %v7547, %v7543
    %v7928 = vpack.c.b16 %v7548, %v7544
    %v7929 = vpack.c.b16 %v7549, %v7545
    %v7930 = vpack.c.b16 %v7554, %v7550
    %v7931 = vpack.c.b16 %v7555, %v7551
    %v7932 = vpack.c.b16 %v7556, %v7552
    %v7933 = vpack.c.b16 %v7557, %v7553
    %v7934 = vpack.c.b16 %v7562, %v7558
    %v7935 = vpack.c.b16 %v7563, %v7559
    %v7936 = vpack.c.b16 %v7564, %v7560
    %v7937 = vpack.c.b16 %v7565, %v7561
    %v7938 = vpack.c.b16 %v7570, %v7566
    %v7939 = vpack.c.b16 %v7571, %v7567
    %v7940 = vpack.c.b16 %v7572, %v7568
    %v7941 = vpack.c.b16 %v7573, %v7569
    %v7942 = vpack.c.b16 %v7578, %v7574
    %v7943 = vpack.c.b16 %v7579, %v7575
    %v7944 = vpack.c.b16 %v7580, %v7576
    %v7945 = vpack.c.b16 %v7581, %v7577
    %v7946 = vpack.c.b16 %v7586, %v7582
    %v7947 = vpack.c.b16 %v7587, %v7583
    %v7948 = vpack.c.b16 %v7588, %v7584
    %v7949 = vpack.c.b16 %v7589, %v7585
    %v7950 = vpack.c.b16 %v7594, %v7590
    %v7951 = vpack.c.b16 %v7595, %v7591
    %v7952 = vpack.c.b16 %v7596, %v7592
    %v7953 = vpack.c.b16 %v7597, %v7593
    %v7954 = vpack.c.b16 %v7602, %v7598
    %v7955 = vpack.c.b16 %v7603, %v7599
    %v7956 = vpack.c.b16 %v7604, %v7600
    %v7957 = vpack.c.b16 %v7605, %v7601
    %v7958 = vpack.c.b16 %v7610, %v7606
    %v7959 = vpack.c.b16 %v7611, %v7607
    %v7960 = vpack.c.b16 %v7612, %v7608
    %v7961 = vpack.c.b16 %v7613, %v7609
    %v7962 = vpack.c.b16 %v7618, %v7614
    %v7963 = vpack.c.b16 %v7619, %v7615
    %v7964 = vpack.c.b16 %v7620, %v7616
    %v7965 = vpack.c.b16 %v7621, %v7617
    %v7966 = vpack.c.b16 %v7626, %v7622
    %v7967 = vpack.c.b16 %v7627, %v7623
    %v7968 = vpack.c.b16 %v7628, %v7624
    %v7969 = vpack.c.b16 %v7629, %v7625
    %v7970 = vpack.c.b16 %v7634, %v7630
    %v7971 = vpack.c.b16 %v7635, %v7631
    %v7972 = vpack.c.b16 %v7636, %v7632
    %v7973 = vpack.c.b16 %v7637, %v7633
    %v7974 = vpack.c.b16 %v7642, %v7638
    %v7975 = vpack.c.b16 %v7643, %v7639
    %v7976 = vpack.c.b16 %v7644, %v7640
    %v7977 = vpack.c.b16 %v7645, %v7641
    %v7978 = vpack.c.b16 %v7650, %v7646
    %v7979 = vpack.c.b16 %v7651, %v7647
    %v7980 = vpack.c.b16 %v7652, %v7648
    %v7981 = vpack.c.b16 %v7653, %v7649
    %v7982 = vpack.c.b16 %v7658, %v7654
    %v7983 = vpack.c.b16 %v7659, %v7655
    %v7984 = vpack.c.b16 %v7660, %v7656
    %v7985 = vpack.c.b16 %v7661, %v7657
    %v7986 = vpack.c.b16 %v7666, %v7662
    %v7987 = vpack.c.b16 %v7667, %v7663
    %v7988 = vpack.c.b16 %v7668, %v7664
    %v7989 = vpack.c.b16 %v7669, %v7665
    %v7990 = vpack.c.b16 %v7674, %v7670
    %v7991 = vpack.c.b16 %v7675, %v7671
    %v7992 = vpack.c.b16 %v7676, %v7672
    %v7993 = vpack.c.b16 %v7677, %v7673
    %v7994 = vpack.c.b16 %v7682, %v7678
    %v7995 = vpack.c.b16 %v7683, %v7679
    %v7996 = vpack.c.b16 %v7684, %v7680
    %v7997 = vpack.c.b16 %v7685, %v7681
    %v7998 = vpack.c.b16 %v7690, %v7686
    %v7999 = vpack.c.b16 %v7691, %v7687
    %v8000 = vpack.c.b16 %v7692, %v7688
    %v8001 = vpack.c.b16 %v7693, %v7689
    %v8002 = vpack.c.b16 %v7698, %v7694
    %v8003 = vpack.c.b16 %v7699, %v7695
    %v8004 = vpack.c.b16 %v7700, %v7696
    %v8005 = vpack.c.b16 %v7701, %v7697
    %v8006 = vpack.c.b16 %v7706, %v7702
    %v8007 = vpack.c.b16 %v7707, %v7703
    %v8008 = vpack.c.b16 %v7708, %v7704
    %v8009 = vpack.c.b16 %v7709, %v7705
    %v8010 = vpack.c.b16 %v7714, %v7710
    %v8011 = vpack.c.b16 %v7715, %v7711
    %v8012 = vpack.c.b16 %v7716, %v7712
    %v8013 = vpack.c.b16 %v7717, %v7713
    %v8014 = vpack.c.b16 %v7722, %v7718
    %v8015 = vpack.c.b16 %v7723, %v7719
    %v8016 = vpack.c.b16 %v7724, %v7720
    %v8017 = vpack.c.b16 %v7725, %v7721
    %v8018 = vpack.c.b16 %v7730, %v7726
    %v8019 = vpack.c.b16 %v7731, %v7727
    %v8020 = vpack.c.b16 %v7732, %v7728
    %v8021 = vpack.c.b16 %v7733, %v7729
    %v8022 = vpack.c.b16 %v7738, %v7734
    %v8023 = vpack.c.b16 %v7739, %v7735
    %v8024 = vpack.c.b16 %v7740, %v7736
    %v8025 = vpack.c.b16 %v7741, %v7737
    %v8026 = vpack.c.b16 %v7746, %v7742
    %v8027 = vpack.c.b16 %v7747, %v7743
    %v8028 = vpack.c.b16 %v7748, %v7744
    %v8029 = vpack.c.b16 %v7749, %v7745
    %v8030 = vpack.c.b16 %v7754, %v7750
    %v8031 = vpack.c.b16 %v7755, %v7751
    %v8032 = vpack.c.b16 %v7756, %v7752
    %v8033 = vpack.c.b16 %v7757, %v7753
    %v8034 = vpack.c.b16 %v7762, %v7758
    %v8035 = vpack.c.b16 %v7763, %v7759
    %v8036 = vpack.c.b16 %v7764, %v7760
    %v8037 = vpack.c.b16 %v7765, %v7761
    %v8038 = vpack.c.b16 %v7770, %v7766
    %v8039 = vpack.c.b16 %v7771, %v7767
    %v8040 = vpack.c.b16 %v7772, %v7768
    %v8041 = vpack.c.b16 %v7773, %v7769
    %v8042 = vpack.c.b16 %v7778, %v7774
    %v8043 = vpack.c.b16 %v7779, %v7775
    %v8044 = vpack.c.b16 %v7780, %v7776
    %v8045 = vpack.c.b16 %v7781, %v7777
    %v8046 = vpack.c.b16 %v7786, %v7782
    %v8047 = vpack.c.b16 %v7787, %v7783
    %v8048 = vpack.c.b16 %v7788, %v7784
    %v8049 = vpack.c.b16 %v7789, %v7785
    %v8050 = vpack.c.b16 %v7794, %v7790
    %v8051 = vpack.c.b16 %v7795, %v7791
    %v8052 = vpack.c.b16 %v7796, %v7792
    %v8053 = vpack.c.b16 %v7797, %v7793
    %8310 = vmatpush.bf16.msra.mxu0 %v7826
    %8311 = vmatpush.bf16.msra.mxu0 %v7822
    %8312 = vmatpush.bf16.msra.mxu0 %v7818
    %8313 = vmatpush.bf16.msra.mxu0 %v7814
    %8314 = vmatpush.bf16.msra.mxu0 %v7810
    %8315 = vmatpush.bf16.msra.mxu0 %v7806
    %8316 = vmatpush.bf16.msra.mxu0 %v7802
    %8317 = vmatpush.bf16.msra.mxu0 %v7798
    %8318 = vmatmul.bf16.gmra.mxu0 %v6756
    %v8319 = vpop.f32.mrf.mxu0
    %v8320 = vadd.f32 %v7022, %v8319
    %v8321 = vpop.f32.mrf.mxu0
    %8322 = vdwg.mxu0
    %8323 = vmatpush.bf16.msra.mxu0 %v7858
    %8324 = vmatpush.bf16.msra.mxu0 %v7854
    %8325 = vmatpush.bf16.msra.mxu0 %v7850
    %8326 = vmatpush.bf16.msra.mxu0 %v7846
    %8327 = vmatpush.bf16.msra.mxu0 %v7842
    %8328 = vmatpush.bf16.msra.mxu0 %v7838
    %8329 = vmatpush.bf16.msra.mxu0 %v7834
    %8330 = vmatpush.bf16.msra.mxu0 %v7830
    %8331 = vmatmul.bf16.gmra.mxu0 %v6757
    %v8332 = vpop.f32.mrf.mxu0
    %v8333 = vadd.f32 %v8320, %v8332
    %v8334 = vpop.f32.mrf.mxu0
    %8335 = vdwg.mxu0
    %8336 = vmatpush.bf16.msra.mxu0 %v7890
    %8337 = vmatpush.bf16.msra.mxu0 %v7886
    %8338 = vmatpush.bf16.msra.mxu0 %v7882
    %8339 = vmatpush.bf16.msra.mxu0 %v7878
    %8340 = vmatpush.bf16.msra.mxu0 %v7874
    %8341 = vmatpush.bf16.msra.mxu0 %v7870
    %8342 = vmatpush.bf16.msra.mxu0 %v7866
    %8343 = vmatpush.bf16.msra.mxu0 %v7862
    %8344 = vmatmul.bf16.gmra.mxu0 %v6758
    %v8345 = vpop.f32.mrf.mxu0
    %v8346 = vadd.f32 %v8333, %v8345
    %v8347 = vpop.f32.mrf.mxu0
    %8348 = vdwg.mxu0
    %8349 = vmatpush.bf16.msra.mxu0 %v7922
    %8350 = vmatpush.bf16.msra.mxu0 %v7918
    %8351 = vmatpush.bf16.msra.mxu0 %v7914
    %8352 = vmatpush.bf16.msra.mxu0 %v7910
    %8353 = vmatpush.bf16.msra.mxu0 %v7906
    %8354 = vmatpush.bf16.msra.mxu0 %v7902
    %8355 = vmatpush.bf16.msra.mxu0 %v7898
    %8356 = vmatpush.bf16.msra.mxu0 %v7894
    %8357 = vmatmul.bf16.gmra.mxu0 %v6759
    %v8358 = vpop.f32.mrf.mxu0
    %v8359 = vadd.f32 %v8346, %v8358
    %v8360 = vpop.f32.mrf.mxu0
    %8361 = vdwg.mxu0
    %8362 = vmatpush.bf16.msra.mxu0 %v7954
    %8363 = vmatpush.bf16.msra.mxu0 %v7950
    %8364 = vmatpush.bf16.msra.mxu0 %v7946
    %8365 = vmatpush.bf16.msra.mxu0 %v7942
    %8366 = vmatpush.bf16.msra.mxu0 %v7938
    %8367 = vmatpush.bf16.msra.mxu0 %v7934
    %8368 = vmatpush.bf16.msra.mxu0 %v7930
    %8369 = vmatpush.bf16.msra.mxu0 %v7926
    %8370 = vmatmul.bf16.gmra.mxu0 %v6760
    %v8371 = vpop.f32.mrf.mxu0
    %v8372 = vadd.f32 %v8359, %v8371
    %v8373 = vpop.f32.mrf.mxu0
    %8374 = vdwg.mxu0
    %8375 = vmatpush.bf16.msra.mxu0 %v7986
    %8376 = vmatpush.bf16.msra.mxu0 %v7982
    %8377 = vmatpush.bf16.msra.mxu0 %v7978
    %8378 = vmatpush.bf16.msra.mxu0 %v7974
    %8379 = vmatpush.bf16.msra.mxu0 %v7970
    %8380 = vmatpush.bf16.msra.mxu0 %v7966
    %8381 = vmatpush.bf16.msra.mxu0 %v7962
    %8382 = vmatpush.bf16.msra.mxu0 %v7958
    %8383 = vmatmul.bf16.gmra.mxu0 %v6761
    %v8384 = vpop.f32.mrf.mxu0
    %v8385 = vadd.f32 %v8372, %v8384
    %v8386 = vpop.f32.mrf.mxu0
    %8387 = vdwg.mxu0
    %8388 = vmatpush.bf16.msra.mxu0 %v8018
    %8389 = vmatpush.bf16.msra.mxu0 %v8014
    %8390 = vmatpush.bf16.msra.mxu0 %v8010
    %8391 = vmatpush.bf16.msra.mxu0 %v8006
    %8392 = vmatpush.bf16.msra.mxu0 %v8002
    %8393 = vmatpush.bf16.msra.mxu0 %v7998
    %8394 = vmatpush.bf16.msra.mxu0 %v7994
    %8395 = vmatpush.bf16.msra.mxu0 %v7990
    %8396 = vmatmul.bf16.gmra.mxu0 %v6762
    %v8397 = vpop.f32.mrf.mxu0
    %v8398 = vadd.f32 %v8385, %v8397
    %v8399 = vpop.f32.mrf.mxu0
    %8400 = vdwg.mxu0
    %8401 = vmatpush.bf16.msra.mxu0 %v8050
    %8402 = vmatpush.bf16.msra.mxu0 %v8046
    %8403 = vmatpush.bf16.msra.mxu0 %v8042
    %8404 = vmatpush.bf16.msra.mxu0 %v8038
    %8405 = vmatpush.bf16.msra.mxu0 %v8034
    %8406 = vmatpush.bf16.msra.mxu0 %v8030
    %8407 = vmatpush.bf16.msra.mxu0 %v8026
    %8408 = vmatpush.bf16.msra.mxu0 %v8022
    %8409 = vmatmul.bf16.gmra.mxu0 %v6763
    %v8410 = vpop.f32.mrf.mxu0
    %v8411 = vadd.f32 %v8398, %v8410
    %v8412 = vpop.f32.mrf.mxu0
    %8413 = vdwg.mxu0
    %8414 = vmatpush.bf16.msra.mxu0 %v7827
    %8415 = vmatpush.bf16.msra.mxu0 %v7823
    %8416 = vmatpush.bf16.msra.mxu0 %v7819
    %8417 = vmatpush.bf16.msra.mxu0 %v7815
    %8418 = vmatpush.bf16.msra.mxu0 %v7811
    %8419 = vmatpush.bf16.msra.mxu0 %v7807
    %8420 = vmatpush.bf16.msra.mxu0 %v7803
    %8421 = vmatpush.bf16.msra.mxu0 %v7799
    %8422 = vmatmul.bf16.gmra.mxu0 %v6756
    %v8423 = vpop.f32.mrf.mxu0
    %v8424 = vadd.f32 %v7023, %v8423
    %v8425 = vpop.f32.mrf.mxu0
    %8426 = vdwg.mxu0
    %8427 = vmatpush.bf16.msra.mxu0 %v7859
    %8428 = vmatpush.bf16.msra.mxu0 %v7855
    %8429 = vmatpush.bf16.msra.mxu0 %v7851
    %8430 = vmatpush.bf16.msra.mxu0 %v7847
    %8431 = vmatpush.bf16.msra.mxu0 %v7843
    %8432 = vmatpush.bf16.msra.mxu0 %v7839
    %8433 = vmatpush.bf16.msra.mxu0 %v7835
    %8434 = vmatpush.bf16.msra.mxu0 %v7831
    %8435 = vmatmul.bf16.gmra.mxu0 %v6757
    %v8436 = vpop.f32.mrf.mxu0
    %v8437 = vadd.f32 %v8424, %v8436
    %v8438 = vpop.f32.mrf.mxu0
    %8439 = vdwg.mxu0
    %8440 = vmatpush.bf16.msra.mxu0 %v7891
    %8441 = vmatpush.bf16.msra.mxu0 %v7887
    %8442 = vmatpush.bf16.msra.mxu0 %v7883
    %8443 = vmatpush.bf16.msra.mxu0 %v7879
    %8444 = vmatpush.bf16.msra.mxu0 %v7875
    %8445 = vmatpush.bf16.msra.mxu0 %v7871
    %8446 = vmatpush.bf16.msra.mxu0 %v7867
    %8447 = vmatpush.bf16.msra.mxu0 %v7863
    %8448 = vmatmul.bf16.gmra.mxu0 %v6758
    %v8449 = vpop.f32.mrf.mxu0
    %v8450 = vadd.f32 %v8437, %v8449
    %v8451 = vpop.f32.mrf.mxu0
    %8452 = vdwg.mxu0
    %8453 = vmatpush.bf16.msra.mxu0 %v7923
    %8454 = vmatpush.bf16.msra.mxu0 %v7919
    %8455 = vmatpush.bf16.msra.mxu0 %v7915
    %8456 = vmatpush.bf16.msra.mxu0 %v7911
    %8457 = vmatpush.bf16.msra.mxu0 %v7907
    %8458 = vmatpush.bf16.msra.mxu0 %v7903
    %8459 = vmatpush.bf16.msra.mxu0 %v7899
    %8460 = vmatpush.bf16.msra.mxu0 %v7895
    %8461 = vmatmul.bf16.gmra.mxu0 %v6759
    %v8462 = vpop.f32.mrf.mxu0
    %v8463 = vadd.f32 %v8450, %v8462
    %v8464 = vpop.f32.mrf.mxu0
    %8465 = vdwg.mxu0
    %8466 = vmatpush.bf16.msra.mxu0 %v7955
    %8467 = vmatpush.bf16.msra.mxu0 %v7951
    %8468 = vmatpush.bf16.msra.mxu0 %v7947
    %8469 = vmatpush.bf16.msra.mxu0 %v7943
    %8470 = vmatpush.bf16.msra.mxu0 %v7939
    %8471 = vmatpush.bf16.msra.mxu0 %v7935
    %8472 = vmatpush.bf16.msra.mxu0 %v7931
    %8473 = vmatpush.bf16.msra.mxu0 %v7927
    %8474 = vmatmul.bf16.gmra.mxu0 %v6760
    %v8475 = vpop.f32.mrf.mxu0
    %v8476 = vadd.f32 %v8463, %v8475
    %v8477 = vpop.f32.mrf.mxu0
    %8478 = vdwg.mxu0
    %8479 = vmatpush.bf16.msra.mxu0 %v7987
    %8480 = vmatpush.bf16.msra.mxu0 %v7983
    %8481 = vmatpush.bf16.msra.mxu0 %v7979
    %8482 = vmatpush.bf16.msra.mxu0 %v7975
    %8483 = vmatpush.bf16.msra.mxu0 %v7971
    %8484 = vmatpush.bf16.msra.mxu0 %v7967
    %8485 = vmatpush.bf16.msra.mxu0 %v7963
    %8486 = vmatpush.bf16.msra.mxu0 %v7959
    %8487 = vmatmul.bf16.gmra.mxu0 %v6761
    %v8488 = vpop.f32.mrf.mxu0
    %v8489 = vadd.f32 %v8476, %v8488
    %v8490 = vpop.f32.mrf.mxu0
    %8491 = vdwg.mxu0
    %8492 = vmatpush.bf16.msra.mxu0 %v8019
    %8493 = vmatpush.bf16.msra.mxu0 %v8015
    %8494 = vmatpush.bf16.msra.mxu0 %v8011
    %8495 = vmatpush.bf16.msra.mxu0 %v8007
    %8496 = vmatpush.bf16.msra.mxu0 %v8003
    %8497 = vmatpush.bf16.msra.mxu0 %v7999
    %8498 = vmatpush.bf16.msra.mxu0 %v7995
    %8499 = vmatpush.bf16.msra.mxu0 %v7991
    %8500 = vmatmul.bf16.gmra.mxu0 %v6762
    %v8501 = vpop.f32.mrf.mxu0
    %v8502 = vadd.f32 %v8489, %v8501
    %v8503 = vpop.f32.mrf.mxu0
    %8504 = vdwg.mxu0
    %8505 = vmatpush.bf16.msra.mxu0 %v8051
    %8506 = vmatpush.bf16.msra.mxu0 %v8047
    %8507 = vmatpush.bf16.msra.mxu0 %v8043
    %8508 = vmatpush.bf16.msra.mxu0 %v8039
    %8509 = vmatpush.bf16.msra.mxu0 %v8035
    %8510 = vmatpush.bf16.msra.mxu0 %v8031
    %8511 = vmatpush.bf16.msra.mxu0 %v8027
    %8512 = vmatpush.bf16.msra.mxu0 %v8023
    %8513 = vmatmul.bf16.gmra.mxu0 %v6763
    %v8514 = vpop.f32.mrf.mxu0
    %v8515 = vadd.f32 %v8502, %v8514
    %v8516 = vpop.f32.mrf.mxu0
    %8517 = vdwg.mxu0
    %8518 = vmatpush.bf16.msra.mxu0 %v7828
    %8519 = vmatpush.bf16.msra.mxu0 %v7824
    %8520 = vmatpush.bf16.msra.mxu0 %v7820
    %8521 = vmatpush.bf16.msra.mxu0 %v7816
    %8522 = vmatpush.bf16.msra.mxu0 %v7812
    %8523 = vmatpush.bf16.msra.mxu0 %v7808
    %8524 = vmatpush.bf16.msra.mxu0 %v7804
    %8525 = vmatpush.bf16.msra.mxu0 %v7800
    %8526 = vmatmul.bf16.gmra.mxu0 %v6756
    %v8527 = vpop.f32.mrf.mxu0
    %v8528 = vadd.f32 %v7024, %v8527
    %v8529 = vpop.f32.mrf.mxu0
    %8530 = vdwg.mxu0
    %8531 = vmatpush.bf16.msra.mxu0 %v7860
    %8532 = vmatpush.bf16.msra.mxu0 %v7856
    %8533 = vmatpush.bf16.msra.mxu0 %v7852
    %8534 = vmatpush.bf16.msra.mxu0 %v7848
    %8535 = vmatpush.bf16.msra.mxu0 %v7844
    %8536 = vmatpush.bf16.msra.mxu0 %v7840
    %8537 = vmatpush.bf16.msra.mxu0 %v7836
    %8538 = vmatpush.bf16.msra.mxu0 %v7832
    %8539 = vmatmul.bf16.gmra.mxu0 %v6757
    %v8540 = vpop.f32.mrf.mxu0
    %v8541 = vadd.f32 %v8528, %v8540
    %v8542 = vpop.f32.mrf.mxu0
    %8543 = vdwg.mxu0
    %8544 = vmatpush.bf16.msra.mxu0 %v7892
    %8545 = vmatpush.bf16.msra.mxu0 %v7888
    %8546 = vmatpush.bf16.msra.mxu0 %v7884
    %8547 = vmatpush.bf16.msra.mxu0 %v7880
    %8548 = vmatpush.bf16.msra.mxu0 %v7876
    %8549 = vmatpush.bf16.msra.mxu0 %v7872
    %8550 = vmatpush.bf16.msra.mxu0 %v7868
    %8551 = vmatpush.bf16.msra.mxu0 %v7864
    %8552 = vmatmul.bf16.gmra.mxu0 %v6758
    %v8553 = vpop.f32.mrf.mxu0
    %v8554 = vadd.f32 %v8541, %v8553
    %v8555 = vpop.f32.mrf.mxu0
    %8556 = vdwg.mxu0
    %8557 = vmatpush.bf16.msra.mxu0 %v7924
    %8558 = vmatpush.bf16.msra.mxu0 %v7920
    %8559 = vmatpush.bf16.msra.mxu0 %v7916
    %8560 = vmatpush.bf16.msra.mxu0 %v7912
    %8561 = vmatpush.bf16.msra.mxu0 %v7908
    %8562 = vmatpush.bf16.msra.mxu0 %v7904
    %8563 = vmatpush.bf16.msra.mxu0 %v7900
    %8564 = vmatpush.bf16.msra.mxu0 %v7896
    %8565 = vmatmul.bf16.gmra.mxu0 %v6759
    %v8566 = vpop.f32.mrf.mxu0
    %v8567 = vadd.f32 %v8554, %v8566
    %v8568 = vpop.f32.mrf.mxu0
    %8569 = vdwg.mxu0
    %8570 = vmatpush.bf16.msra.mxu0 %v7956
    %8571 = vmatpush.bf16.msra.mxu0 %v7952
    %8572 = vmatpush.bf16.msra.mxu0 %v7948
    %8573 = vmatpush.bf16.msra.mxu0 %v7944
    %8574 = vmatpush.bf16.msra.mxu0 %v7940
    %8575 = vmatpush.bf16.msra.mxu0 %v7936
    %8576 = vmatpush.bf16.msra.mxu0 %v7932
    %8577 = vmatpush.bf16.msra.mxu0 %v7928
    %8578 = vmatmul.bf16.gmra.mxu0 %v6760
    %v8579 = vpop.f32.mrf.mxu0
    %v8580 = vadd.f32 %v8567, %v8579
    %v8581 = vpop.f32.mrf.mxu0
    %8582 = vdwg.mxu0
    %8583 = vmatpush.bf16.msra.mxu0 %v7988
    %8584 = vmatpush.bf16.msra.mxu0 %v7984
    %8585 = vmatpush.bf16.msra.mxu0 %v7980
    %8586 = vmatpush.bf16.msra.mxu0 %v7976
    %8587 = vmatpush.bf16.msra.mxu0 %v7972
    %8588 = vmatpush.bf16.msra.mxu0 %v7968
    %8589 = vmatpush.bf16.msra.mxu0 %v7964
    %8590 = vmatpush.bf16.msra.mxu0 %v7960
    %8591 = vmatmul.bf16.gmra.mxu0 %v6761
    %v8592 = vpop.f32.mrf.mxu0
    %v8593 = vadd.f32 %v8580, %v8592
    %v8594 = vpop.f32.mrf.mxu0
    %8595 = vdwg.mxu0
    %8596 = vmatpush.bf16.msra.mxu0 %v8020
    %8597 = vmatpush.bf16.msra.mxu0 %v8016
    %8598 = vmatpush.bf16.msra.mxu0 %v8012
    %8599 = vmatpush.bf16.msra.mxu0 %v8008
    %8600 = vmatpush.bf16.msra.mxu0 %v8004
    %8601 = vmatpush.bf16.msra.mxu0 %v8000
    %8602 = vmatpush.bf16.msra.mxu0 %v7996
    %8603 = vmatpush.bf16.msra.mxu0 %v7992
    %8604 = vmatmul.bf16.gmra.mxu0 %v6762
    %v8605 = vpop.f32.mrf.mxu0
    %v8606 = vadd.f32 %v8593, %v8605
    %v8607 = vpop.f32.mrf.mxu0
    %8608 = vdwg.mxu0
    %8609 = vmatpush.bf16.msra.mxu0 %v8052
    %8610 = vmatpush.bf16.msra.mxu0 %v8048
    %8611 = vmatpush.bf16.msra.mxu0 %v8044
    %8612 = vmatpush.bf16.msra.mxu0 %v8040
    %8613 = vmatpush.bf16.msra.mxu0 %v8036
    %8614 = vmatpush.bf16.msra.mxu0 %v8032
    %8615 = vmatpush.bf16.msra.mxu0 %v8028
    %8616 = vmatpush.bf16.msra.mxu0 %v8024
    %8617 = vmatmul.bf16.gmra.mxu0 %v6763
    %v8618 = vpop.f32.mrf.mxu0
    %v8619 = vadd.f32 %v8606, %v8618
    %v8620 = vpop.f32.mrf.mxu0
    %8621 = vdwg.mxu0
    %8622 = vmatpush.bf16.msra.mxu0 %v7829
    %8623 = vmatpush.bf16.msra.mxu0 %v7825
    %8624 = vmatpush.bf16.msra.mxu0 %v7821
    %8625 = vmatpush.bf16.msra.mxu0 %v7817
    %8626 = vmatpush.bf16.msra.mxu0 %v7813
    %8627 = vmatpush.bf16.msra.mxu0 %v7809
    %8628 = vmatpush.bf16.msra.mxu0 %v7805
    %8629 = vmatpush.bf16.msra.mxu0 %v7801
    %8630 = vmatmul.bf16.gmra.mxu0 %v6756
    %v8631 = vpop.f32.mrf.mxu0
    %v8632 = vadd.f32 %v7025, %v8631
    %v8633 = vpop.f32.mrf.mxu0
    %8634 = vdwg.mxu0
    %8635 = vmatpush.bf16.msra.mxu0 %v7861
    %8636 = vmatpush.bf16.msra.mxu0 %v7857
    %8637 = vmatpush.bf16.msra.mxu0 %v7853
    %8638 = vmatpush.bf16.msra.mxu0 %v7849
    %8639 = vmatpush.bf16.msra.mxu0 %v7845
    %8640 = vmatpush.bf16.msra.mxu0 %v7841
    %8641 = vmatpush.bf16.msra.mxu0 %v7837
    %8642 = vmatpush.bf16.msra.mxu0 %v7833
    %8643 = vmatmul.bf16.gmra.mxu0 %v6757
    %v8644 = vpop.f32.mrf.mxu0
    %v8645 = vadd.f32 %v8632, %v8644
    %v8646 = vpop.f32.mrf.mxu0
    %8647 = vdwg.mxu0
    %8648 = vmatpush.bf16.msra.mxu0 %v7893
    %8649 = vmatpush.bf16.msra.mxu0 %v7889
    %8650 = vmatpush.bf16.msra.mxu0 %v7885
    %8651 = vmatpush.bf16.msra.mxu0 %v7881
    %8652 = vmatpush.bf16.msra.mxu0 %v7877
    %8653 = vmatpush.bf16.msra.mxu0 %v7873
    %8654 = vmatpush.bf16.msra.mxu0 %v7869
    %8655 = vmatpush.bf16.msra.mxu0 %v7865
    %8656 = vmatmul.bf16.gmra.mxu0 %v6758
    %v8657 = vpop.f32.mrf.mxu0
    %v8658 = vadd.f32 %v8645, %v8657
    %v8659 = vpop.f32.mrf.mxu0
    %8660 = vdwg.mxu0
    %8661 = vmatpush.bf16.msra.mxu0 %v7925
    %8662 = vmatpush.bf16.msra.mxu0 %v7921
    %8663 = vmatpush.bf16.msra.mxu0 %v7917
    %8664 = vmatpush.bf16.msra.mxu0 %v7913
    %8665 = vmatpush.bf16.msra.mxu0 %v7909
    %8666 = vmatpush.bf16.msra.mxu0 %v7905
    %8667 = vmatpush.bf16.msra.mxu0 %v7901
    %8668 = vmatpush.bf16.msra.mxu0 %v7897
    %8669 = vmatmul.bf16.gmra.mxu0 %v6759
    %v8670 = vpop.f32.mrf.mxu0
    %v8671 = vadd.f32 %v8658, %v8670
    %v8672 = vpop.f32.mrf.mxu0
    %8673 = vdwg.mxu0
    %8674 = vmatpush.bf16.msra.mxu0 %v7957
    %8675 = vmatpush.bf16.msra.mxu0 %v7953
    %8676 = vmatpush.bf16.msra.mxu0 %v7949
    %8677 = vmatpush.bf16.msra.mxu0 %v7945
    %8678 = vmatpush.bf16.msra.mxu0 %v7941
    %8679 = vmatpush.bf16.msra.mxu0 %v7937
    %8680 = vmatpush.bf16.msra.mxu0 %v7933
    %8681 = vmatpush.bf16.msra.mxu0 %v7929
    %8682 = vmatmul.bf16.gmra.mxu0 %v6760
    %v8683 = vpop.f32.mrf.mxu0
    %v8684 = vadd.f32 %v8671, %v8683
    %v8685 = vpop.f32.mrf.mxu0
    %8686 = vdwg.mxu0
    %8687 = vmatpush.bf16.msra.mxu0 %v7989
    %8688 = vmatpush.bf16.msra.mxu0 %v7985
    %8689 = vmatpush.bf16.msra.mxu0 %v7981
    %8690 = vmatpush.bf16.msra.mxu0 %v7977
    %8691 = vmatpush.bf16.msra.mxu0 %v7973
    %8692 = vmatpush.bf16.msra.mxu0 %v7969
    %8693 = vmatpush.bf16.msra.mxu0 %v7965
    %8694 = vmatpush.bf16.msra.mxu0 %v7961
    %8695 = vmatmul.bf16.gmra.mxu0 %v6761
    %v8696 = vpop.f32.mrf.mxu0
    %v8697 = vadd.f32 %v8684, %v8696
    %v8698 = vpop.f32.mrf.mxu0
    %8699 = vdwg.mxu0
    %8700 = vmatpush.bf16.msra.mxu0 %v8021
    %8701 = vmatpush.bf16.msra.mxu0 %v8017
    %8702 = vmatpush.bf16.msra.mxu0 %v8013
    %8703 = vmatpush.bf16.msra.mxu0 %v8009
    %8704 = vmatpush.bf16.msra.mxu0 %v8005
    %8705 = vmatpush.bf16.msra.mxu0 %v8001
    %8706 = vmatpush.bf16.msra.mxu0 %v7997
    %8707 = vmatpush.bf16.msra.mxu0 %v7993
    %8708 = vmatmul.bf16.gmra.mxu0 %v6762
    %v8709 = vpop.f32.mrf.mxu0
    %v8710 = vadd.f32 %v8697, %v8709
    %v8711 = vpop.f32.mrf.mxu0
    %8712 = vdwg.mxu0
    %8713 = vmatpush.bf16.msra.mxu0 %v8053
    %8714 = vmatpush.bf16.msra.mxu0 %v8049
    %8715 = vmatpush.bf16.msra.mxu0 %v8045
    %8716 = vmatpush.bf16.msra.mxu0 %v8041
    %8717 = vmatpush.bf16.msra.mxu0 %v8037
    %8718 = vmatpush.bf16.msra.mxu0 %v8033
    %8719 = vmatpush.bf16.msra.mxu0 %v8029
    %8720 = vmatpush.bf16.msra.mxu0 %v8025
    %8721 = vmatmul.bf16.gmra.mxu0 %v6763
    %v8722 = vpop.f32.mrf.mxu0
    %v8723 = vadd.f32 %v8710, %v8722
    %v8724 = vpop.f32.mrf.mxu0
    %8725 = vdwg.mxu0
    %8726 = vst [vmem:[#allocation20] sm:$0xff] %v8411
    %8727 = vst [vmem:[#allocation20 + $0x8] sm:$0xff] %v8515
    %8728 = vst [vmem:[#allocation20 + $0x10] sm:$0xff] %v8619
    %8729 = vst [vmem:[#allocation20 + $0x18] sm:$0xff] %v8723
    // Predicated region
    $region82: #{tpu_custom_call.1} parent=1 // pred_check
      _
    $region83: #{tpu_custom_call.1} parent=1 // pred_check_branch
      %8731 = sbr.rel (0) target = $region85
    $region84: #{tpu_custom_call.1} parent=1 // pred_region
      %8733 = vsyncadd [#allocation7], 0
      %s8735 = sshll.u32 [#allocation20], 4
      %s8736 = int_to_ptr.vmem [resolvable:$true] %s8735
      %s8737 = sshll.u32 %s11, 4
      %s8738 = int_to_ptr.hbm [resolvable:$true] %s8737
      %8740 = dma.vmem_to_hbm [thread:$0]  %s8736, 512, %s8738, [#allocation7]
    $region85: #{tpu_custom_call.1} parent=1 // pred_fallthru
      _
    // Predicated region
    $region86: #{tpu_custom_call.1} parent=1 // pred_check
      _
    $region87: #{tpu_custom_call.1} parent=1 // pred_check_branch
      %8742 = sbr.rel (0) target = $region89
    $region88: #{tpu_custom_call.1} parent=1 // pred_region
      %8744 = dma.done [#allocation7], 512
    $region89: #{tpu_custom_call.1} parent=1 // pred_fallthru
      _
    %8745 = vsyncpa [#allocation6], 1
    %8746 = vsyncpa [#allocation9], 1
    %8747 = vsyncpa [#allocation12], 1
    %8748 = vsyncpa [#allocation15], 1
    %8749 = vsyncpa [#allocation18], 1
    %8750 = vsyncpa [#allocation7], 1
  %8751 = vsyncmov [#allocation4]
  %s8752 = vpop.sfrf %8751
  %p8753 = scmp.eq.s32.totalorder %s8752, 0
  %p8754 = pneg %p8753
  %8756 = shalt.err (%p8754)
  %s8757 = scalar_lea.sflag [#allocation4], 1
  %8758 = vsyncmov %s8757
  %s8759 = vpop.sfrf %8758
  %p8760 = scmp.eq.s32.totalorder %s8759, 0
  %p8761 = pneg %p8760
  %8763 = shalt.err (%p8761)

</llo_original>
